<compile_context>
chip_gen: v7x
topology: tpu7x:2x2x1
jax: 0.10.0
libtpu: 0.0.40
codegen_flags: <defaults>
</compile_context>

<pallas_src>
import functools

import numpy as np
import jax
import jax.numpy as jnp
from jax.experimental import pallas as pl
from jax.experimental.pallas import tpu as pltpu


# ----------------------------------------------------------------------------
# Pallas kernel: whole FGCN forward for one batch group per grid step.
# ----------------------------------------------------------------------------
def fgcn_kernel(
    x_ref,        # (1, C, B*L)        bf16
    w12_ref,      # (C/2 + C/4, C)     bf16   [bn1_s*w1 ; bn2_s*w2]
    b12_ref,      # (C/2 + C/4, 1)     f32    [bn1_b ; bn2_b]
    ea_w_ref,     # (C/4, k + 2*C/4)   bf16   [(l0@ea_c1)^T | adj1^T | adj2^T]
    ea_b_ref,     # (1, k + C/4)       f32    [(l0@ea_c1_b)^T | ea_bn_b^T]
    wl1c2_ref,    # (k, C/4)           bf16   ((ea_bn_s*ea_c2)@ea_l1)^T
    w_tail_ref,   # (C, C/2)           bf16   (bn3_s*w3)@(bnwg_s*wg)
    tail_b_ref,   # (C, 2)             f32    [w3'@bnwg_b | bn3_b]
    out_ref,      # (1, C, B*L)        f32
    *,
    batch_block,
    spatial,
):
    f32, bf16 = jnp.float32, jnp.bfloat16
    B, L = batch_block, spatial
    c2 = w_tail_ref.shape[1]
    c4 = ea_w_ref.shape[0]
    k = wl1c2_ref.shape[0]

    x16 = x_ref[0]                                   # (C, B*L) bf16

    # conv1 + conv2 (BN folded, fused same-RHS matmul) + per-channel bias.
    xb = jnp.dot(w12_ref[...], x16, preferred_element_type=f32) + b12_ref[...]
    xs16 = xb[:c2, :].astype(bf16)                   # (C/2, B*L)
    bm = xb[c2:, :]                                  # (C/4, B*L) f32 (for colsum)
    bm16 = bm.astype(bf16)

    # Per-batch bilinear z_idt_b = xs_b @ bm_b^T, as a dot_general contracting
    # the lane axis (no transposed copy of bm), row-stacked over batch.
    dn = (((1,), (1,)), ((), ()))
    z_idt = jnp.concatenate(
        [jax.lax.dot_general(xs16[:, b * L:(b + 1) * L],
                             bm16[:, b * L:(b + 1) * L],
                             dimension_numbers=dn, preferred_element_type=f32)
         for b in range(B)],
        axis=0,
    )                                                # (B*C/2, C/4)
    z16 = z_idt.astype(bf16)

    # ---------------- EA + adjacency, entirely in the z_idt layout ----------
    # One stacked matmul yields: pre-sigmoid attention logits (linear_0 folded
    # into EA conv1), conv_adj1, and conv_adj2.
    tri = jnp.dot(z16, ea_w_ref[...], preferred_element_type=f32)
    logits = tri[:, :k] + ea_b_ref[:, :k]
    z2 = tri[:, k:k + c4]
    z3 = jnp.maximum(tri[:, k + c4:], 0.0)

    attn = jax.nn.sigmoid(logits)
    denom = 1e-9 + jnp.sum(attn, axis=-1, keepdims=True)
    attn = attn * pl.reciprocal(denom, approx=True)

    # linear_1 and conv2(+bn) fused into one (k, C/4) weight.
    t = jnp.dot(attn.astype(bf16), wl1c2_ref[...],
                preferred_element_type=f32) + ea_b_ref[:, k:]
    z1 = jnp.maximum(t + z_idt, 0.0)

    zz = (z2 * z3 + z1 + z_idt).astype(bf16)         # (B*C/2, C/4)

    # ------------------------- Reassociated tail ----------------------------
    # u_b = zz_b @ bm_b per batch, then a single fused (bn3*conv3)@(bnwg*wg)
    # matmul at K = C/2; bn_wg bias reappears as (w3'@b_wg) * colsum_k(bm).
    u = jnp.concatenate(
        [jnp.dot(zz[b * c2:(b + 1) * c2, :], bm16[:, b * L:(b + 1) * L],
                 preferred_element_type=f32)
         for b in range(B)],
        axis=-1,
    ).astype(bf16)                                   # (C/2, B*L)
    colsum = jnp.sum(bm, axis=0, keepdims=True)      # (1, B*L) f32
    y = (jnp.dot(w_tail_ref[...], u, preferred_element_type=f32)
         + tail_b_ref[:, 0:1] * colsum + tail_b_ref[:, 1:2])

    # Residual + relu; x re-read here (no long-lived f32 activation copy).
    out_ref[0] = jnp.maximum(x_ref[0].astype(f32) + y, 0.0)


# ----------------------------------------------------------------------------
# Wrapper: layout plumbing, BN folding, weight fusing (all outside the kernel).
# ----------------------------------------------------------------------------
def _pick_batch_block(n, L):
    """Prefer the smallest divisor B of n with B*L >= 256 while keeping >= 2
    grid steps (both v7x TensorCores busy); fall back to >= 128 lanes."""
    divisors = [b for b in range(1, n + 1) if n % b == 0]
    for want_lanes in (256, 128):
        for b in divisors:
            if b * L >= want_lanes and n // b >= 2:
                return b
    for b in divisors:
        if b * L >= 128:
            return b
    return n


def _prep_weights(params):
    f32, bf16 = jnp.float32, jnp.bfloat16

    # conv1/conv2 with BN folded, stacked (same RHS).
    w12 = jnp.concatenate([params["bn1_s"] * params["w1"],
                           params["bn2_s"] * params["w2"]], axis=0).astype(bf16)
    b12 = jnp.concatenate([params["bn1_b"], params["bn2_b"]], axis=0).astype(f32)

    # EA: fold linear_0 into conv1 (pre-sigmoid logits), fuse linear_1 with
    # conv2(+bn).  All products in f32, single bf16 cast.
    w_attn = jnp.dot(params["ea_l0_w"], params["ea_c1_w"])        # (k, C/4)
    b_attn = jnp.dot(params["ea_l0_w"], params["ea_c1_b"])        # (k, 1)
    ea_c2f = params["ea_bn_s"] * params["ea_c2_w"]                # (C/4, C/4)
    wl1c2 = jnp.dot(ea_c2f, params["ea_l1_w"]).T.astype(bf16)     # (k, C/4)

    ea_w = jnp.concatenate([w_attn.T, params["adj1_w"].T, params["adj2_w"].T],
                           axis=1).astype(bf16)                   # (C/4, k+2C/4)
    ea_b = jnp.concatenate([b_attn.T, params["ea_bn_b"].T],
                           axis=1).astype(f32)                    # (1, k+C/4)

    # Tail: fuse (bn3*conv3)@(bn_wg*conv_wg); bias reassociation.
    wgf = params["bnwg_s"] * params["wg_w"]                       # (C/2, C/2)
    w3f = params["bn3_s"] * params["w3"]                          # (C, C/2)
    w_tail = jnp.dot(w3f, wgf).astype(bf16)                       # (C, C/2)
    tail_b = jnp.concatenate([jnp.dot(w3f, params["bnwg_b"]),
                              params["bn3_b"]], axis=1).astype(f32)  # (C, 2)

    return [w12, b12, ea_w, ea_b, wl1c2, w_tail, tail_b]


def fgcn_forward(x_nchw, params, batch_block=None):
    n, c, h, w = x_nchw.shape
    L = h * w
    B = batch_block or _pick_batch_block(n, L)
    assert n % B == 0
    G = n // B
    BL = B * L
    f32, bf16 = jnp.float32, jnp.bfloat16

    # Pack batch into lanes: (N,C,H,W) -> (G, C, B*L); cast to bf16 here so the
    # kernel's dominant HBM read is half-width.
    # TODO(synk): if FGCN sits in a layer stack, keep activations in this
    # packed (G, C, B*L) layout across layers to avoid the extra HBM passes of
    # the pack/unpack transposes around the kernel.
    x = (x_nchw.reshape(G, B, c, L)
         .transpose(0, 2, 1, 3)
         .reshape(G, c, BL)
         .astype(bf16))

    weights = _prep_weights(params)

    in_specs = [pl.BlockSpec((1, c, BL), lambda i: (i, 0, 0))]
    for a in weights:
        # Constant index_map -> weights stay resident across grid steps.
        in_specs.append(pl.BlockSpec(a.shape, lambda i: (0, 0)))

    kernel = functools.partial(fgcn_kernel, batch_block=B, spatial=L)

    out = pl.pallas_call(
        kernel,
        out_shape=jax.ShapeDtypeStruct((G, c, BL), f32),
        grid=(G,),
        in_specs=in_specs,
        out_specs=pl.BlockSpec((1, c, BL), lambda i: (i, 0, 0)),
        compiler_params=pltpu.CompilerParams(
            dimension_semantics=("parallel",),
            vmem_limit_bytes=32 * 1024 * 1024,   # safe on v7x's 64 MiB VMEM
        ),
    )(x, *weights)

    # Unpack: (G, C, B*L) -> (N, C, H, W).
    return (out.reshape(G, c, B, L)
            .transpose(0, 2, 1, 3)
            .reshape(n, c, h, w))


# ----------------------------------------------------------------------------
# Deterministic parameter init (PyTorch-like fan-in uniform; BN folded to
# inference-mode scale/bias).
# TODO(synk): training-mode BatchNorm (batch statistics) is not implemented;
# this uses folded running statistics (eval-mode semantics).
# ----------------------------------------------------------------------------
def init_params(key, in_ch):
    c, c2, c4, k = in_ch, in_ch // 2, in_ch // 4, 128
    assert c4 == 128, "EA(128) in the reference module requires in_ch == 512"
    keys = iter(jax.random.split(key, 64))

    def u(shape, fan_in):
        bound = 1.0 / np.sqrt(fan_in)
        return jax.random.uniform(next(keys), shape, jnp.float32, -bound, bound)

    def bn(cdim):
        gamma = 1.0 + 0.1 * jax.random.normal(next(keys), (cdim, 1), jnp.float32)
        beta = 0.1 * jax.random.normal(next(keys), (cdim, 1), jnp.float32)
        rmean = 0.1 * jax.random.normal(next(keys), (cdim, 1), jnp.float32)
        rvar = 1.0 + 0.1 * jnp.abs(jax.random.normal(next(keys), (cdim, 1), jnp.float32))
        scale = gamma / jnp.sqrt(rvar + 1e-5)
        bias = beta - rmean * scale
        return scale, bias

    p = {}
    p["w1"] = u((c2, c), c)
    p["bn1_s"], p["bn1_b"] = bn(c2)
    p["w2"] = u((c4, c), c)
    p["bn2_s"], p["bn2_b"] = bn(c4)
    # EA(128): conv1 (bias), linear_0, linear_1, conv2 (+bn)
    p["ea_c1_w"] = u((c4, c4), c4)
    p["ea_c1_b"] = u((c4, 1), c4)
    p["ea_l0_w"] = u((k, c4), c4)
    p["ea_l1_w"] = u((c4, k), k)
    p["ea_c2_w"] = u((c4, c4), c4)
    p["ea_bn_s"], p["ea_bn_b"] = bn(c4)
    p["adj1_w"] = u((c4, c4), c4)
    p["adj2_w"] = u((c4, c4), c4)
    p["wg_w"] = u((c2, c2), c2)
    p["bnwg_s"], p["bnwg_b"] = bn(c2)
    p["w3"] = u((c, c2), c2)
    p["bn3_s"], p["bn3_b"] = bn(c)
    return p


# ----------------------------------------------------------------------------
# Pure-JAX reference (unfused / unfolded, f32 highest precision).
# ----------------------------------------------------------------------------
def fgcn_reference(x_nchw, p):
    hi = jax.lax.Precision.HIGHEST
    n, c, h, w = x_nchw.shape
    L = h * w
    x = x_nchw.reshape(n, c, L).astype(jnp.float32)
    mm = lambda W, X: jnp.einsum("oc,ncl->nol", W, X, precision=hi)

    xs = mm(p["w1"], x) * p["bn1_s"][None] + p["bn1_b"][None]
    bm = mm(p["w2"], x) * p["bn2_s"][None] + p["bn2_b"][None]
    z_idt = jnp.einsum("ncl,nkl->nck", xs, bm, precision=hi)   # (n, C/2, C/4)
    z = jnp.swapaxes(z_idt, 1, 2)                              # (n, C/4, C/2)

    idn = z
    t = mm(p["ea_c1_w"], z) + p["ea_c1_b"][None]
    attn = jax.nn.sigmoid(mm(p["ea_l0_w"], t))
    attn = attn / (1e-9 + jnp.sum(attn, axis=1, keepdims=True))
    t = mm(p["ea_l1_w"], attn)
    t = mm(p["ea_c2_w"], t) * p["ea_bn_s"][None] + p["ea_bn_b"][None]
    z1 = jnp.maximum(t + idn, 0.0)

    z2 = mm(p["adj1_w"], z)
    z3 = jnp.maximum(mm(p["adj2_w"], z), 0.0)
    zz = z2 * z3 + z1
    zz = jnp.swapaxes(zz, 1, 2) + z_idt
    zz = mm(p["wg_w"], zz) * p["bnwg_s"][None] + p["bnwg_b"][None]
    y = jnp.einsum("nck,nkl->ncl", zz, bm, precision=hi)
    y = mm(p["w3"], y) * p["bn3_s"][None] + p["bn3_b"][None]
    return jnp.maximum(x + y, 0.0).reshape(n, c, h, w)


if __name__ == "__main__":
    # EA(128) => in_ch == 512.  N=8, L=64 -> batch_block=4 (256 lanes, full
    # MXU width on v6e/v7x) and 2 parallel grid steps (both v7x TCs busy).
    N, IN_CH, H, W = 8, 512, 8, 8
    key = jax.random.PRNGKey(0)
    kx, kp = jax.random.split(key)
    x = jax.random.normal(kx, (N, IN_CH, H, W), dtype=jnp.float32)
    params = init_params(kp, IN_CH)

    out = jax.block_until_ready(fgcn_forward(x, params))
    ref = jax.block_until_ready(fgcn_reference(x, params))

    assert out.shape == (N, IN_CH, H, W)
    assert bool(jnp.all(jnp.isfinite(out)))
    # bf16 MXU passes (and bf16 activation input) vs f32-highest reference:
    # tolerance scaled to magnitude.
    max_ref = float(jnp.max(jnp.abs(ref)))
    np.testing.assert_allclose(np.asarray(out), np.asarray(ref),
                               rtol=3e-2, atol=3e-2 * max_ref)

    print("KERNEL_OK")
</pallas_src>

<mosaic_0001>
module attributes {stable_mosaic.version = 11 : i64} {
  func.func @fgcn_kernel(%arg0: i32, %arg1: memref<1x512x256xbf16, #tpu.memory_space<vmem>>, %arg2: memref<384x512xbf16, #tpu.memory_space<vmem>>, %arg3: memref<384x1xf32, #tpu.memory_space<vmem>>, %arg4: memref<128x384xbf16, #tpu.memory_space<vmem>>, %arg5: memref<1x256xf32, #tpu.memory_space<vmem>>, %arg6: memref<128x128xbf16, #tpu.memory_space<vmem>>, %arg7: memref<512x256xbf16, #tpu.memory_space<vmem>>, %arg8: memref<512x2xf32, #tpu.memory_space<vmem>>, %arg9: memref<1x512x256xf32, #tpu.memory_space<vmem>>) attributes {dimension_semantics = [#tpu.dimension_semantics<parallel>], iteration_bounds = array<i64: 2>, scalar_prefetch = 0 : i64, scratch_operands = 0 : i64, tpu.core_type = #tpu.core_type<tc>, window_params = [{transform_indices = @transform_0, window_bounds = array<i64: 1, 512, 256>}, {pipeline_mode = #tpu.pipeline_mode<synchronous>, transform_indices = @transform_1, window_bounds = array<i64: 384, 512>}, {pipeline_mode = #tpu.pipeline_mode<synchronous>, transform_indices = @transform_2, window_bounds = array<i64: 384, 1>}, {pipeline_mode = #tpu.pipeline_mode<synchronous>, transform_indices = @transform_3, window_bounds = array<i64: 128, 384>}, {pipeline_mode = #tpu.pipeline_mode<synchronous>, transform_indices = @transform_4, window_bounds = array<i64: 1, 256>}, {pipeline_mode = #tpu.pipeline_mode<synchronous>, transform_indices = @transform_5, window_bounds = array<i64: 128, 128>}, {pipeline_mode = #tpu.pipeline_mode<synchronous>, transform_indices = @transform_6, window_bounds = array<i64: 512, 256>}, {pipeline_mode = #tpu.pipeline_mode<synchronous>, transform_indices = @transform_7, window_bounds = array<i64: 512, 2>}, {transform_indices = @transform_8, window_bounds = array<i64: 1, 512, 256>}]} {
    %c0 = arith.constant 0 : index
    %c0_0 = arith.constant 0 : index
    %c0_1 = arith.constant 0 : index
    %0 = vector.load %arg1[%c0, %c0_0, %c0_1] : memref<1x512x256xbf16, #tpu.memory_space<vmem>>, vector<1x512x256xbf16>
    %1 = vector.shape_cast %0 : vector<1x512x256xbf16> to vector<512x256xbf16>
    %c0_2 = arith.constant 0 : index
    %c0_3 = arith.constant 0 : index
    %2 = vector.load %arg2[%c0_2, %c0_3] : memref<384x512xbf16, #tpu.memory_space<vmem>>, vector<384x512xbf16>
    %cst = arith.constant dense<0.000000e+00> : vector<384x256xf32>
    %3 = tpu.matmul %2, %1, %cst {dimension_numbers = #tpu.dot_dimension_numbers<[1], [0], [0], [1], [0, 0, 1, 1], [], []>} : vector<384x512xbf16>, vector<512x256xbf16>, vector<384x256xf32> -> vector<384x256xf32>
    %c0_4 = arith.constant 0 : index
    %c0_5 = arith.constant 0 : index
    %4 = vector.load %arg3[%c0_4, %c0_5] : memref<384x1xf32, #tpu.memory_space<vmem>>, vector<384x1xf32>
    %5 = vector.broadcast %4 : vector<384x1xf32> to vector<384x256xf32>
    %6 = arith.addf %3, %5 : vector<384x256xf32>
    %7 = vector.extract_strided_slice %6 {offsets = [0, 0], sizes = [256, 256], strides = [1, 1]} : vector<384x256xf32> to vector<256x256xf32>
    %8 = arith.truncf %7 : vector<256x256xf32> to vector<256x256xbf16>
    %9 = vector.extract_strided_slice %6 {offsets = [256, 0], sizes = [128, 256], strides = [1, 1]} : vector<384x256xf32> to vector<128x256xf32>
    %10 = arith.truncf %9 : vector<128x256xf32> to vector<128x256xbf16>
    %11 = vector.extract_strided_slice %8 {offsets = [0, 0], sizes = [256, 64], strides = [1, 1]} : vector<256x256xbf16> to vector<256x64xbf16>
    %12 = vector.extract_strided_slice %10 {offsets = [0, 0], sizes = [128, 64], strides = [1, 1]} : vector<128x256xbf16> to vector<128x64xbf16>
    %cst_6 = arith.constant dense<0.000000e+00> : vector<256x128xf32>
    %13 = tpu.matmul %11, %12, %cst_6 {dimension_numbers = #tpu.dot_dimension_numbers<[1], [1], [0], [0], [0, 0, 1, 0], [], []>} : vector<256x64xbf16>, vector<128x64xbf16>, vector<256x128xf32> -> vector<256x128xf32>
    %14 = vector.extract_strided_slice %8 {offsets = [0, 64], sizes = [256, 64], strides = [1, 1]} : vector<256x256xbf16> to vector<256x64xbf16>
    %15 = vector.extract_strided_slice %10 {offsets = [0, 64], sizes = [128, 64], strides = [1, 1]} : vector<128x256xbf16> to vector<128x64xbf16>
    %cst_7 = arith.constant dense<0.000000e+00> : vector<256x128xf32>
    %16 = tpu.matmul %14, %15, %cst_7 {dimension_numbers = #tpu.dot_dimension_numbers<[1], [1], [0], [0], [0, 0, 1, 0], [], []>} : vector<256x64xbf16>, vector<128x64xbf16>, vector<256x128xf32> -> vector<256x128xf32>
    %17 = vector.extract_strided_slice %8 {offsets = [0, 128], sizes = [256, 64], strides = [1, 1]} : vector<256x256xbf16> to vector<256x64xbf16>
    %18 = vector.extract_strided_slice %10 {offsets = [0, 128], sizes = [128, 64], strides = [1, 1]} : vector<128x256xbf16> to vector<128x64xbf16>
    %cst_8 = arith.constant dense<0.000000e+00> : vector<256x128xf32>
    %19 = tpu.matmul %17, %18, %cst_8 {dimension_numbers = #tpu.dot_dimension_numbers<[1], [1], [0], [0], [0, 0, 1, 0], [], []>} : vector<256x64xbf16>, vector<128x64xbf16>, vector<256x128xf32> -> vector<256x128xf32>
    %20 = vector.extract_strided_slice %8 {offsets = [0, 192], sizes = [256, 64], strides = [1, 1]} : vector<256x256xbf16> to vector<256x64xbf16>
    %21 = vector.extract_strided_slice %10 {offsets = [0, 192], sizes = [128, 64], strides = [1, 1]} : vector<128x256xbf16> to vector<128x64xbf16>
    %cst_9 = arith.constant dense<0.000000e+00> : vector<256x128xf32>
    %22 = tpu.matmul %20, %21, %cst_9 {dimension_numbers = #tpu.dot_dimension_numbers<[1], [1], [0], [0], [0, 0, 1, 0], [], []>} : vector<256x64xbf16>, vector<128x64xbf16>, vector<256x128xf32> -> vector<256x128xf32>
    %23 = tpu.concatenate %13, %16, %19, %22 in 0 : vector<256x128xf32>, vector<256x128xf32>, vector<256x128xf32>, vector<256x128xf32> -> vector<1024x128xf32>
    %24 = arith.truncf %23 : vector<1024x128xf32> to vector<1024x128xbf16>
    %c0_10 = arith.constant 0 : index
    %c0_11 = arith.constant 0 : index
    %25 = vector.load %arg4[%c0_10, %c0_11] : memref<128x384xbf16, #tpu.memory_space<vmem>>, vector<128x384xbf16>
    %cst_12 = arith.constant dense<0.000000e+00> : vector<1024x384xf32>
    %26 = tpu.matmul %24, %25, %cst_12 {dimension_numbers = #tpu.dot_dimension_numbers<[1], [0], [0], [1], [0, 0, 1, 1], [], []>} : vector<1024x128xbf16>, vector<128x384xbf16>, vector<1024x384xf32> -> vector<1024x384xf32>
    %27 = vector.extract_strided_slice %26 {offsets = [0, 0], sizes = [1024, 128], strides = [1, 1]} : vector<1024x384xf32> to vector<1024x128xf32>
    %c0_13 = arith.constant 0 : index
    %c0_14 = arith.constant 0 : index
    %28 = vector.load %arg5[%c0_13, %c0_14] : memref<1x256xf32, #tpu.memory_space<vmem>>, vector<1x128xf32>
    %29 = vector.broadcast %28 : vector<1x128xf32> to vector<1024x128xf32>
    %30 = arith.addf %27, %29 : vector<1024x128xf32>
    %31 = vector.extract_strided_slice %26 {offsets = [0, 128], sizes = [1024, 128], strides = [1, 1]} : vector<1024x384xf32> to vector<1024x128xf32>
    %32 = vector.extract_strided_slice %26 {offsets = [0, 256], sizes = [1024, 128], strides = [1, 1]} : vector<1024x384xf32> to vector<1024x128xf32>
    %cst_15 = arith.constant 0.000000e+00 : f32
    %33 = vector.broadcast %cst_15 : f32 to vector<1024x128xf32>
    %34 = arith.maximumf %32, %33 : vector<1024x128xf32>
    %35 = arith.negf %30 : vector<1024x128xf32>
    %36 = math.exp %35 : vector<1024x128xf32>
    %cst_16 = arith.constant 1.000000e+00 : f32
    %37 = vector.broadcast %cst_16 : f32 to vector<1024x128xf32>
    %38 = arith.addf %37, %36 : vector<1024x128xf32>
    %39 = arith.divf %37, %38 : vector<1024x128xf32>
    %cst_17 = arith.constant dense<0.000000e+00> : vector<1024xf32>
    %40 = vector.multi_reduction <add>, %39, %cst_17 [1] : vector<1024x128xf32> to vector<1024xf32>
    %41 = vector.shape_cast %40 : vector<1024xf32> to vector<1024x1xf32>
    %cst_18 = arith.constant 9.99999971E-10 : f32
    %42 = vector.broadcast %cst_18 : f32 to vector<1024x1xf32>
    %43 = arith.addf %42, %41 : vector<1024x1xf32>
    %44 = tpu.reciprocal %43 {approx = true} : vector<1024x1xf32> -> vector<1024x1xf32>
    %45 = vector.broadcast %44 : vector<1024x1xf32> to vector<1024x128xf32>
    %46 = arith.mulf %39, %45 : vector<1024x128xf32>
    %47 = arith.truncf %46 : vector<1024x128xf32> to vector<1024x128xbf16>
    %c0_19 = arith.constant 0 : index
    %c0_20 = arith.constant 0 : index
    %48 = vector.load %arg6[%c0_19, %c0_20] : memref<128x128xbf16, #tpu.memory_space<vmem>>, vector<128x128xbf16>
    %cst_21 = arith.constant dense<0.000000e+00> : vector<1024x128xf32>
    %49 = tpu.matmul %47, %48, %cst_21 {dimension_numbers = #tpu.dot_dimension_numbers<[1], [0], [0], [1], [0, 0, 1, 1], [], []>} : vector<1024x128xbf16>, vector<128x128xbf16>, vector<1024x128xf32> -> vector<1024x128xf32>
    %c0_22 = arith.constant 0 : index
    %c128 = arith.constant 128 : index
    %50 = vector.load %arg5[%c0_22, %c128] : memref<1x256xf32, #tpu.memory_space<vmem>>, vector<1x128xf32>
    %51 = vector.broadcast %50 : vector<1x128xf32> to vector<1024x128xf32>
    %52 = arith.addf %49, %51 : vector<1024x128xf32>
    %53 = arith.addf %52, %23 : vector<1024x128xf32>
    %cst_23 = arith.constant 0.000000e+00 : f32
    %54 = vector.broadcast %cst_23 : f32 to vector<1024x128xf32>
    %55 = arith.maximumf %53, %54 : vector<1024x128xf32>
    %56 = arith.mulf %31, %34 : vector<1024x128xf32>
    %57 = arith.addf %56, %55 : vector<1024x128xf32>
    %58 = arith.addf %57, %23 : vector<1024x128xf32>
    %59 = arith.truncf %58 : vector<1024x128xf32> to vector<1024x128xbf16>
    %60 = vector.extract_strided_slice %59 {offsets = [0, 0], sizes = [256, 128], strides = [1, 1]} : vector<1024x128xbf16> to vector<256x128xbf16>
    %61 = vector.extract_strided_slice %10 {offsets = [0, 0], sizes = [128, 64], strides = [1, 1]} : vector<128x256xbf16> to vector<128x64xbf16>
    %cst_24 = arith.constant dense<0.000000e+00> : vector<256x64xf32>
    %62 = tpu.matmul %60, %61, %cst_24 {dimension_numbers = #tpu.dot_dimension_numbers<[1], [0], [0], [1], [0, 0, 1, 1], [], []>} : vector<256x128xbf16>, vector<128x64xbf16>, vector<256x64xf32> -> vector<256x64xf32>
    %63 = vector.extract_strided_slice %59 {offsets = [256, 0], sizes = [256, 128], strides = [1, 1]} : vector<1024x128xbf16> to vector<256x128xbf16>
    %64 = vector.extract_strided_slice %10 {offsets = [0, 64], sizes = [128, 64], strides = [1, 1]} : vector<128x256xbf16> to vector<128x64xbf16>
    %cst_25 = arith.constant dense<0.000000e+00> : vector<256x64xf32>
    %65 = tpu.matmul %63, %64, %cst_25 {dimension_numbers = #tpu.dot_dimension_numbers<[1], [0], [0], [1], [0, 0, 1, 1], [], []>} : vector<256x128xbf16>, vector<128x64xbf16>, vector<256x64xf32> -> vector<256x64xf32>
    %66 = vector.extract_strided_slice %59 {offsets = [512, 0], sizes = [256, 128], strides = [1, 1]} : vector<1024x128xbf16> to vector<256x128xbf16>
    %67 = vector.extract_strided_slice %10 {offsets = [0, 128], sizes = [128, 64], strides = [1, 1]} : vector<128x256xbf16> to vector<128x64xbf16>
    %cst_26 = arith.constant dense<0.000000e+00> : vector<256x64xf32>
    %68 = tpu.matmul %66, %67, %cst_26 {dimension_numbers = #tpu.dot_dimension_numbers<[1], [0], [0], [1], [0, 0, 1, 1], [], []>} : vector<256x128xbf16>, vector<128x64xbf16>, vector<256x64xf32> -> vector<256x64xf32>
    %69 = vector.extract_strided_slice %59 {offsets = [768, 0], sizes = [256, 128], strides = [1, 1]} : vector<1024x128xbf16> to vector<256x128xbf16>
    %70 = vector.extract_strided_slice %10 {offsets = [0, 192], sizes = [128, 64], strides = [1, 1]} : vector<128x256xbf16> to vector<128x64xbf16>
    %cst_27 = arith.constant dense<0.000000e+00> : vector<256x64xf32>
    %71 = tpu.matmul %69, %70, %cst_27 {dimension_numbers = #tpu.dot_dimension_numbers<[1], [0], [0], [1], [0, 0, 1, 1], [], []>} : vector<256x128xbf16>, vector<128x64xbf16>, vector<256x64xf32> -> vector<256x64xf32>
    %72 = tpu.concatenate %62, %65, %68, %71 in 1 : vector<256x64xf32>, vector<256x64xf32>, vector<256x64xf32>, vector<256x64xf32> -> vector<256x256xf32>
    %73 = arith.truncf %72 : vector<256x256xf32> to vector<256x256xbf16>
    %cst_28 = arith.constant dense<0.000000e+00> : vector<256xf32>
    %74 = vector.multi_reduction <add>, %9, %cst_28 [0] : vector<128x256xf32> to vector<256xf32>
    %75 = vector.shape_cast %74 : vector<256xf32> to vector<1x256xf32>
    %c0_29 = arith.constant 0 : index
    %c0_30 = arith.constant 0 : index
    %76 = vector.load %arg7[%c0_29, %c0_30] : memref<512x256xbf16, #tpu.memory_space<vmem>>, vector<512x256xbf16>
    %cst_31 = arith.constant dense<0.000000e+00> : vector<512x256xf32>
    %77 = tpu.matmul %76, %73, %cst_31 {dimension_numbers = #tpu.dot_dimension_numbers<[1], [0], [0], [1], [0, 0, 1, 1], [], []>} : vector<512x256xbf16>, vector<256x256xbf16>, vector<512x256xf32> -> vector<512x256xf32>
    %c0_32 = arith.constant 0 : index
    %c0_33 = arith.constant 0 : index
    %78 = vector.load %arg8[%c0_32, %c0_33] : memref<512x2xf32, #tpu.memory_space<vmem>>, vector<512x1xf32>
    %79 = vector.broadcast %78 : vector<512x1xf32> to vector<512x256xf32>
    %80 = vector.broadcast %75 : vector<1x256xf32> to vector<512x256xf32>
    %81 = arith.mulf %79, %80 : vector<512x256xf32>
    %82 = arith.addf %77, %81 : vector<512x256xf32>
    %c0_34 = arith.constant 0 : index
    %c1 = arith.constant 1 : index
    %83 = vector.load %arg8[%c0_34, %c1] : memref<512x2xf32, #tpu.memory_space<vmem>>, vector<512x1xf32>
    %84 = vector.broadcast %83 : vector<512x1xf32> to vector<512x256xf32>
    %85 = arith.addf %82, %84 : vector<512x256xf32>
    %c0_35 = arith.constant 0 : index
    %c0_36 = arith.constant 0 : index
    %c0_37 = arith.constant 0 : index
    %86 = vector.load %arg1[%c0_35, %c0_36, %c0_37] : memref<1x512x256xbf16, #tpu.memory_space<vmem>>, vector<1x512x256xbf16>
    %87 = vector.shape_cast %86 : vector<1x512x256xbf16> to vector<512x256xbf16>
    %88 = arith.extf %87 : vector<512x256xbf16> to vector<512x256xf32>
    %89 = arith.addf %88, %85 : vector<512x256xf32>
    %cst_38 = arith.constant 0.000000e+00 : f32
    %90 = vector.broadcast %cst_38 : f32 to vector<512x256xf32>
    %91 = arith.maximumf %89, %90 : vector<512x256xf32>
    %c0_39 = arith.constant 0 : index
    %c0_40 = arith.constant 0 : index
    %c0_41 = arith.constant 0 : index
    %92 = vector.load %arg9[%c0_39, %c0_40, %c0_41] : memref<1x512x256xf32, #tpu.memory_space<vmem>>, vector<1x512x256xf32>
    %93 = vector.shape_cast %92 : vector<1x512x256xf32> to vector<512x256xf32>
    %94 = vector.shape_cast %91 : vector<512x256xf32> to vector<1x512x256xf32>
    tpu.vector_store %arg9[%c0_39, %c0_40, %c0_41], %94 {strides = array<i32>} : memref<1x512x256xf32, #tpu.memory_space<vmem>>, vector<1x512x256xf32>,
    return
  }
  func.func @transform_0(%arg0: i32) -> (i32, i32, i32) {
    %c0_i32 = arith.constant 0 : i32
    %c0_i32_0 = arith.constant 0 : i32
    %c0_i32_1 = arith.constant 0 : i32
    return %arg0, %c0_i32, %c0_i32_0 : i32, i32, i32
  }
  func.func @transform_1(%arg0: i32) -> (i32, i32) {
    %c0_i32 = arith.constant 0 : i32
    %c0_i32_0 = arith.constant 0 : i32
    %c0_i32_1 = arith.constant 0 : i32
    return %c0_i32, %c0_i32_0 : i32, i32
  }
  func.func @transform_2(%arg0: i32) -> (i32, i32) {
    %c0_i32 = arith.constant 0 : i32
    %c0_i32_0 = arith.constant 0 : i32
    %c0_i32_1 = arith.constant 0 : i32
    return %c0_i32, %c0_i32_0 : i32, i32
  }
  func.func @transform_3(%arg0: i32) -> (i32, i32) {
    %c0_i32 = arith.constant 0 : i32
    %c0_i32_0 = arith.constant 0 : i32
    %c0_i32_1 = arith.constant 0 : i32
    return %c0_i32, %c0_i32_0 : i32, i32
  }
  func.func @transform_4(%arg0: i32) -> (i32, i32) {
    %c0_i32 = arith.constant 0 : i32
    %c0_i32_0 = arith.constant 0 : i32
    %c0_i32_1 = arith.constant 0 : i32
    return %c0_i32, %c0_i32_0 : i32, i32
  }
  func.func @transform_5(%arg0: i32) -> (i32, i32) {
    %c0_i32 = arith.constant 0 : i32
    %c0_i32_0 = arith.constant 0 : i32
    %c0_i32_1 = arith.constant 0 : i32
    return %c0_i32, %c0_i32_0 : i32, i32
  }
  func.func @transform_6(%arg0: i32) -> (i32, i32) {
    %c0_i32 = arith.constant 0 : i32
    %c0_i32_0 = arith.constant 0 : i32
    %c0_i32_1 = arith.constant 0 : i32
    return %c0_i32, %c0_i32_0 : i32, i32
  }
  func.func @transform_7(%arg0: i32) -> (i32, i32) {
    %c0_i32 = arith.constant 0 : i32
    %c0_i32_0 = arith.constant 0 : i32
    %c0_i32_1 = arith.constant 0 : i32
    return %c0_i32, %c0_i32_0 : i32, i32
  }
  func.func @transform_8(%arg0: i32) -> (i32, i32, i32) {
    %c0_i32 = arith.constant 0 : i32
    %c0_i32_0 = arith.constant 0 : i32
    %c0_i32_1 = arith.constant 0 : i32
    return %arg0, %c0_i32, %c0_i32_0 : i32, i32, i32
  }
}

</mosaic_0001>

<llo_original>
// kernel: tpu_custom_call.1
$region0: #{tpu_custom_call.1}
  #allocation0 [shape = 'u32[]', space=smem, size = 0x4, offset = 0x4, fixed_abs, tag = 'smem constant byte address 0x4 - core index']
  #allocation1 [shape = 'u32[144,128]{1,0:T(1,128)}', space=vmem, size = 0x12000, scoped, tag = 'internal scratch']
  %s0 = inlined_call_operand.hbm [shape: bf16[2,512,256], index: 0, kind: input, shape index: {}]
  %s1 = inlined_call_operand.vmem [shape: bf16[384,512], index: 1, kind: input, shape index: {}]
  %s2 = inlined_call_operand.vmem [shape: f32[384,1], index: 2, kind: input, shape index: {}]
  %s3 = inlined_call_operand.hbm [shape: bf16[128,384], index: 3, kind: input, shape index: {}]
  %s4 = inlined_call_operand.vmem [shape: f32[1,256], index: 4, kind: input, shape index: {}]
  %s5 = inlined_call_operand.vmem [shape: bf16[128,128], index: 5, kind: input, shape index: {}]
  %s6 = inlined_call_operand.hbm [shape: bf16[512,256], index: 6, kind: input, shape index: {}]
  %s7 = inlined_call_operand.vmem [shape: f32[512,2], index: 7, kind: input, shape index: {}]
  %s8 = inlined_call_operand.hbm [shape: f32[2,512,256], index: 8, kind: output, shape index: {}]
  %s9 = sld [smem:[#allocation0]]
  $region77: #{tpu_custom_call.1} parent=0
    _
  %s11 = ssub.s32 1, %s9
  %s12 = scalar_select 0, %s11, %s9
  $region1: #{tpu_custom_call.1} parent=0
    #allocation2 [shape = 'u8[524288]{0}', space=vmem, size = 0x80000, scoped, tag = 'input window, operand 0']
    #allocation3 [shape = 's32[2]{0}', space=sflag, size = 0x8, scoped, tag = 'scoped memory for tpu_custom_call.1']
    #allocation4 [shape = 's32[2]{0}', space=sflag, size = 0x8, scoped, tag = 'scoped memory for tpu_custom_call.1']
    #allocation5 [shape = 'u8[98304]{0}', space=vmem, size = 0x18000, scoped, tag = 'input window, operand 3, single buffered']
    #allocation6 [shape = 's32[1]{0}', space=sflag, size = 0x4, scoped, tag = 'scoped memory for tpu_custom_call.1']
    #allocation7 [shape = 'u8[262144]{0}', space=vmem, size = 0x40000, scoped, tag = 'input window, operand 6, single buffered']
    #allocation8 [shape = 'u8[1048576]{0}', space=vmem, size = 0x100000, scoped, tag = 'output window, operand 0']
    %13 = vsyncpa [#allocation3], 0
    %s14 = scalar_lea.sflag [#allocation3], 1
    %15 = vsyncpa %s14, 0
    %16 = vsyncpa [#allocation6], 0
    %17 = vsyncpa [#allocation4], 0
    %s18 = scalar_lea.sflag [#allocation4], 1
    %19 = vsyncpa %s18, 0
    loop: start=0, step=1, limit=4
    $region2: #{tpu_custom_call.1} parent=1 // loop_pre_header
      _
    $region3: #{tpu_custom_call.1} parent=1 // loop_header
      %s21 = sphi 0, %s25
      %p22 = scmp.ge.s32.totalorder %s21, 4
      %s31 = sphi 0, %s33
      %s34 = sphi 0, %s31
      %s35 = sphi 0, %s34
      %s51 = sphi 0, %s35
      %s55 = sphi 0, %s55
      %s57 = sphi 0, %s55
      %s58 = sphi 0, %s57
      %s72 = sphi 0, %s58
      %s76 = sphi 0, %s76
      %s78 = sphi 0, %s76
      %s79 = sphi 0, %s78
      %s93 = sphi 0, %s79
      %s97 = sphi 0, %s97
      %s99 = sphi 0, %s97
      %s100 = sphi 0, %s99
      %s114 = sphi 0, %s100
      %s118 = sphi 0, %s118
      %s120 = sphi 0, %s118
      %s121 = sphi 0, %s120
      %s135 = sphi 0, %s121
      %s139 = sphi 0, %s139
      %s141 = sphi 0, %s139
      %s142 = sphi 0, %s141
      %s156 = sphi 0, %s142
      %s160 = sphi 0, %s160
      %s162 = sphi 0, %s160
      %s163 = sphi 0, %s162
      %s177 = sphi 0, %s163
      %s181 = sphi 0, %s181
      %s183 = sphi 0, %s181
      %s184 = sphi 0, %s183
      %s198 = sphi 0, %s184
      %s204 = sphi 0, %s206
      %s207 = sphi 0, %s204
      %s208 = sphi 0, %s207
      %s224 = sphi 0, %s208
    $region4: #{tpu_custom_call.1} parent=1 // loop_header_branch
      %24 = sbr.rel (%p22) target = $region8
    $region5: #{tpu_custom_call.1} parent=1 // loop_body
      %s26 = ssub.s32 %s21, 1
      %s27 = ssub.s32 %s21, 2
      %s28 = sadd.s32 %s21, 1
      %s29 = ssub.s32 %s21, %s28
      %p30 = scmp.eq.s32.totalorder %s29, 0
      %s32 = sadd.s32 %s31, 1
      %s33 = scalar_select %p30, %s31, %s32
      %p36 = pneg %p30
      %p37 = scmp.eq.s32.totalorder %s21, 1
      %p38 = por %p36, %p37
      %p39 = scmp.ne.s32.totalorder %s31, %s34
      %p40 = scmp.eq.s32.totalorder %s21, 0
      %p41 = por %p39, %p40
      %p42 = scmp.ne.s32.totalorder %s31, %s34
      %p43 = scmp.eq.s32.totalorder %s26, 1
      %p44 = por %p42, %p43
      %p45 = scmp.ne.s32.totalorder %s34, %s35
      %p46 = scmp.eq.s32.totalorder %s26, 0
      %p47 = por %p45, %p46
      %p48 = scmp.ne.s32.totalorder %s34, %s35
      %p49 = scmp.eq.s32.totalorder %s27, 1
      %p50 = por %p48, %p49
      %p52 = scmp.ne.s32.totalorder %s35, %s51
      %p53 = scmp.eq.s32.totalorder %s27, 0
      %p54 = por %p52, %p53
      %s56 = sadd.s32 %s55, 1
      %p59 = scmp.eq.s32.totalorder %s21, 1
      %p60 = scmp.ne.s32.totalorder %s55, %s57
      %p61 = scmp.eq.s32.totalorder %s21, 0
      %p62 = por %p60, %p61
      %p63 = scmp.ne.s32.totalorder %s55, %s57
      %p64 = scmp.eq.s32.totalorder %s26, 1
      %p65 = por %p63, %p64
      %p66 = scmp.ne.s32.totalorder %s57, %s58
      %p67 = scmp.eq.s32.totalorder %s26, 0
      %p68 = por %p66, %p67
      %p69 = scmp.ne.s32.totalorder %s57, %s58
      %p70 = scmp.eq.s32.totalorder %s27, 1
      %p71 = por %p69, %p70
      %p73 = scmp.ne.s32.totalorder %s58, %s72
      %p74 = scmp.eq.s32.totalorder %s27, 0
      %p75 = por %p73, %p74
      %s77 = sadd.s32 %s76, 1
      %p80 = scmp.eq.s32.totalorder %s21, 1
      %p81 = scmp.ne.s32.totalorder %s76, %s78
      %p82 = scmp.eq.s32.totalorder %s21, 0
      %p83 = por %p81, %p82
      %p84 = scmp.ne.s32.totalorder %s76, %s78
      %p85 = scmp.eq.s32.totalorder %s26, 1
      %p86 = por %p84, %p85
      %p87 = scmp.ne.s32.totalorder %s78, %s79
      %p88 = scmp.eq.s32.totalorder %s26, 0
      %p89 = por %p87, %p88
      %p90 = scmp.ne.s32.totalorder %s78, %s79
      %p91 = scmp.eq.s32.totalorder %s27, 1
      %p92 = por %p90, %p91
      %p94 = scmp.ne.s32.totalorder %s79, %s93
      %p95 = scmp.eq.s32.totalorder %s27, 0
      %p96 = por %p94, %p95
      %s98 = sadd.s32 %s97, 1
      %p101 = scmp.eq.s32.totalorder %s21, 1
      %p102 = scmp.ne.s32.totalorder %s97, %s99
      %p103 = scmp.eq.s32.totalorder %s21, 0
      %p104 = por %p102, %p103
      %p105 = scmp.ne.s32.totalorder %s97, %s99
      %p106 = scmp.eq.s32.totalorder %s26, 1
      %p107 = por %p105, %p106
      %p108 = scmp.ne.s32.totalorder %s99, %s100
      %p109 = scmp.eq.s32.totalorder %s26, 0
      %p110 = por %p108, %p109
      %p111 = scmp.ne.s32.totalorder %s99, %s100
      %p112 = scmp.eq.s32.totalorder %s27, 1
      %p113 = por %p111, %p112
      %p115 = scmp.ne.s32.totalorder %s100, %s114
      %p116 = scmp.eq.s32.totalorder %s27, 0
      %p117 = por %p115, %p116
      %s119 = sadd.s32 %s118, 1
      %p122 = scmp.eq.s32.totalorder %s21, 1
      %p123 = scmp.ne.s32.totalorder %s118, %s120
      %p124 = scmp.eq.s32.totalorder %s21, 0
      %p125 = por %p123, %p124
      %p126 = scmp.ne.s32.totalorder %s118, %s120
      %p127 = scmp.eq.s32.totalorder %s26, 1
      %p128 = por %p126, %p127
      %p129 = scmp.ne.s32.totalorder %s120, %s121
      %p130 = scmp.eq.s32.totalorder %s26, 0
      %p131 = por %p129, %p130
      %p132 = scmp.ne.s32.totalorder %s120, %s121
      %p133 = scmp.eq.s32.totalorder %s27, 1
      %p134 = por %p132, %p133
      %p136 = scmp.ne.s32.totalorder %s121, %s135
      %p137 = scmp.eq.s32.totalorder %s27, 0
      %p138 = por %p136, %p137
      %s140 = sadd.s32 %s139, 1
      %p143 = scmp.eq.s32.totalorder %s21, 1
      %p144 = scmp.ne.s32.totalorder %s139, %s141
      %p145 = scmp.eq.s32.totalorder %s21, 0
      %p146 = por %p144, %p145
      %p147 = scmp.ne.s32.totalorder %s139, %s141
      %p148 = scmp.eq.s32.totalorder %s26, 1
      %p149 = por %p147, %p148
      %p150 = scmp.ne.s32.totalorder %s141, %s142
      %p151 = scmp.eq.s32.totalorder %s26, 0
      %p152 = por %p150, %p151
      %p153 = scmp.ne.s32.totalorder %s141, %s142
      %p154 = scmp.eq.s32.totalorder %s27, 1
      %p155 = por %p153, %p154
      %p157 = scmp.ne.s32.totalorder %s142, %s156
      %p158 = scmp.eq.s32.totalorder %s27, 0
      %p159 = por %p157, %p158
      %s161 = sadd.s32 %s160, 1
      %p164 = scmp.eq.s32.totalorder %s21, 1
      %p165 = scmp.ne.s32.totalorder %s160, %s162
      %p166 = scmp.eq.s32.totalorder %s21, 0
      %p167 = por %p165, %p166
      %p168 = scmp.ne.s32.totalorder %s160, %s162
      %p169 = scmp.eq.s32.totalorder %s26, 1
      %p170 = por %p168, %p169
      %p171 = scmp.ne.s32.totalorder %s162, %s163
      %p172 = scmp.eq.s32.totalorder %s26, 0
      %p173 = por %p171, %p172
      %p174 = scmp.ne.s32.totalorder %s162, %s163
      %p175 = scmp.eq.s32.totalorder %s27, 1
      %p176 = por %p174, %p175
      %p178 = scmp.ne.s32.totalorder %s163, %s177
      %p179 = scmp.eq.s32.totalorder %s27, 0
      %p180 = por %p178, %p179
      %s182 = sadd.s32 %s181, 1
      %p185 = scmp.eq.s32.totalorder %s21, 1
      %p186 = scmp.ne.s32.totalorder %s181, %s183
      %p187 = scmp.eq.s32.totalorder %s21, 0
      %p188 = por %p186, %p187
      %p189 = scmp.ne.s32.totalorder %s181, %s183
      %p190 = scmp.eq.s32.totalorder %s26, 1
      %p191 = por %p189, %p190
      %p192 = scmp.ne.s32.totalorder %s183, %s184
      %p193 = scmp.eq.s32.totalorder %s26, 0
      %p194 = por %p192, %p193
      %p195 = scmp.ne.s32.totalorder %s183, %s184
      %p196 = scmp.eq.s32.totalorder %s27, 1
      %p197 = por %p195, %p196
      %p199 = scmp.ne.s32.totalorder %s184, %s198
      %p200 = scmp.eq.s32.totalorder %s27, 0
      %p201 = por %p199, %p200
      %s202 = ssub.s32 %s21, %s28
      %p203 = scmp.eq.s32.totalorder %s202, 0
      %s205 = sadd.s32 %s204, 1
      %s206 = scalar_select %p203, %s204, %s205
      %p209 = pneg %p203
      %p210 = scmp.eq.s32.totalorder %s21, 1
      %p211 = por %p209, %p210
      %p212 = scmp.ne.s32.totalorder %s204, %s207
      %p213 = scmp.eq.s32.totalorder %s21, 0
      %p214 = por %p212, %p213
      %p215 = scmp.ne.s32.totalorder %s204, %s207
      %p216 = scmp.eq.s32.totalorder %s26, 1
      %p217 = por %p215, %p216
      %p218 = scmp.ne.s32.totalorder %s207, %s208
      %p219 = scmp.eq.s32.totalorder %s26, 0
      %p220 = por %p218, %p219
      %p221 = scmp.ne.s32.totalorder %s207, %s208
      %p222 = scmp.eq.s32.totalorder %s27, 1
      %p223 = por %p221, %p222
      %p225 = scmp.ne.s32.totalorder %s208, %s224
      %p226 = scmp.eq.s32.totalorder %s27, 0
      %p227 = por %p225, %p226
      %p228 = scmp.le.s32.totalorder 1, %s21
      %p229 = scmp.lt.s32.totalorder %s21, 3
      %p230 = pnand %p228, %p229
      %p231 = pneg %p230
      // Predicated region
      $region9: #{tpu_custom_call.1} parent=5 // pred_check
        _
      $region10: #{tpu_custom_call.1} parent=5 // pred_check_branch
        %233 = sbr.rel (%p230) target = $region12
      $region11: #{tpu_custom_call.1} parent=5 // pred_region
        %s234 = ssub.s32 %s21, 1
        // Predicated region
        $region13: #{tpu_custom_call.1} parent=11 // pred_check
          %p235 = pneg %p68
        $region14: #{tpu_custom_call.1} parent=11 // pred_check_branch
          %237 = sbr.rel (%p235) target = $region16
        $region15: #{tpu_custom_call.1} parent=11 // pred_region
          _
        $region16: #{tpu_custom_call.1} parent=11 // pred_fallthru
          _
        // Predicated region
        $region17: #{tpu_custom_call.1} parent=11 // pred_check
          %p238 = pneg %p89
        $region18: #{tpu_custom_call.1} parent=11 // pred_check_branch
          %240 = sbr.rel (%p238) target = $region20
        $region19: #{tpu_custom_call.1} parent=11 // pred_region
          _
        $region20: #{tpu_custom_call.1} parent=11 // pred_fallthru
          _
        // Predicated region
        $region21: #{tpu_custom_call.1} parent=11 // pred_check
          %p241 = pneg %p110
        $region22: #{tpu_custom_call.1} parent=11 // pred_check_branch
          %243 = sbr.rel (%p241) target = $region24
        $region23: #{tpu_custom_call.1} parent=11 // pred_region
          %s245 = ssub.s32 3072, 3072
          %246 = vsyncadd [#allocation6], %s245
          %s247 = sshll.u32 [#allocation5], 4
          %s248 = int_to_ptr.vmem [resolvable:$true] %s247
          %253 = dma.hbm_to_vmem [thread:$0]  %s3, 3072, %s248, [#allocation6], 192, 192, 12
        $region24: #{tpu_custom_call.1} parent=11 // pred_fallthru
          _
        // Predicated region
        $region25: #{tpu_custom_call.1} parent=11 // pred_check
          %p254 = pneg %p131
        $region26: #{tpu_custom_call.1} parent=11 // pred_check_branch
          %256 = sbr.rel (%p254) target = $region28
        $region27: #{tpu_custom_call.1} parent=11 // pred_region
          _
        $region28: #{tpu_custom_call.1} parent=11 // pred_fallthru
          _
        // Predicated region
        $region29: #{tpu_custom_call.1} parent=11 // pred_check
          %p257 = pneg %p152
        $region30: #{tpu_custom_call.1} parent=11 // pred_check_branch
          %259 = sbr.rel (%p257) target = $region32
        $region31: #{tpu_custom_call.1} parent=11 // pred_region
          _
        $region32: #{tpu_custom_call.1} parent=11 // pred_fallthru
          _
        // Predicated region
        $region33: #{tpu_custom_call.1} parent=11 // pred_check
          %p260 = pneg %p173
        $region34: #{tpu_custom_call.1} parent=11 // pred_check_branch
          %262 = sbr.rel (%p260) target = $region36
        $region35: #{tpu_custom_call.1} parent=11 // pred_region
          %s264 = ssub.s32 8192, 8192
          %265 = vsyncadd [#allocation6], %s264
          %s266 = sshll.u32 [#allocation7], 4
          %s267 = int_to_ptr.vmem [resolvable:$true] %s266
          %272 = dma.hbm_to_vmem [thread:$0]  %s6, 8192, %s267, [#allocation6], 128, 128, 8
        $region36: #{tpu_custom_call.1} parent=11 // pred_fallthru
          _
        // Predicated region
        $region37: #{tpu_custom_call.1} parent=11 // pred_check
          %p273 = pneg %p194
        $region38: #{tpu_custom_call.1} parent=11 // pred_check_branch
          %275 = sbr.rel (%p273) target = $region40
        $region39: #{tpu_custom_call.1} parent=11 // pred_region
          _
        $region40: #{tpu_custom_call.1} parent=11 // pred_fallthru
          _
      $region12: #{tpu_custom_call.1} parent=5 // pred_fallthru
        _
      %p276 = scmp.lt.s32.totalorder %s21, 2
      // Predicated region
      $region41: #{tpu_custom_call.1} parent=5 // pred_check
        %p277 = pneg %p276
      $region42: #{tpu_custom_call.1} parent=5 // pred_check_branch
        %279 = sbr.rel (%p277) target = $region44
      $region43: #{tpu_custom_call.1} parent=5 // pred_region
        // Predicated region
        $region45: #{tpu_custom_call.1} parent=43 // pred_check
          %p280 = pneg %p41
        $region46: #{tpu_custom_call.1} parent=43 // pred_check_branch
          %282 = sbr.rel (%p280) target = $region48
        $region47: #{tpu_custom_call.1} parent=43 // pred_region
          %s283 = sand.u32 %s31, 1
          %s284 = scalar_lea.sflag [#allocation3], %s283
          %s285 = sand.u32 %s31, 1
          %s286 = smul.addr %s285, 512
          %s287 = scalar_lea.vmem [#allocation2], %s286
          %s289 = ssub.s32 8192, 8192
          %290 = vsyncadd %s284, %s289
          %s291 = smul.addr %s21, 128
          %s292 = smul.addr %s291, 64
          %s293 = scalar_lea.hbm %s0, %s292
          %s294 = sshll.u32 %s287, 4
          %s295 = int_to_ptr.vmem [resolvable:$true] %s294
          %300 = dma.hbm_to_vmem [thread:$0]  %s293, 8192, %s295, %s284, 128, 128, 8
        $region48: #{tpu_custom_call.1} parent=43 // pred_fallthru
          _
      $region44: #{tpu_custom_call.1} parent=5 // pred_fallthru
        _
      %p301 = scmp.le.s32.totalorder 1, %s21
      %p302 = scmp.lt.s32.totalorder %s21, 3
      %p303 = pnand %p301, %p302
      %p304 = pneg %p303
      // Predicated region
      $region49: #{tpu_custom_call.1} parent=5 // pred_check
        _
      $region50: #{tpu_custom_call.1} parent=5 // pred_check_branch
        %306 = sbr.rel (%p303) target = $region52
      $region51: #{tpu_custom_call.1} parent=5 // pred_region
        %s307 = ssub.s32 %s21, 1
        %s308 = sand.u32 %s34, 1
        %s309 = scalar_lea.sflag [#allocation3], %s308
        %s310 = sand.u32 %s34, 1
        %s311 = smul.addr %s310, 512
        %s312 = scalar_lea.vmem [#allocation2], %s311
        // Predicated region
        $region53: #{tpu_custom_call.1} parent=51 // pred_check
          %p313 = pneg %p47
        $region54: #{tpu_custom_call.1} parent=51 // pred_check_branch
          %315 = sbr.rel (%p313) target = $region56
        $region55: #{tpu_custom_call.1} parent=51 // pred_region
          %316 = dma.done %s309, 8192
        $region56: #{tpu_custom_call.1} parent=51 // pred_fallthru
          _
        // Predicated region
        $region57: #{tpu_custom_call.1} parent=51 // pred_check
          %p317 = pneg %p110
        $region58: #{tpu_custom_call.1} parent=51 // pred_check_branch
          %319 = sbr.rel (%p317) target = $region60
        $region59: #{tpu_custom_call.1} parent=51 // pred_region
          %320 = dma.done [#allocation6], 3072
        $region60: #{tpu_custom_call.1} parent=51 // pred_fallthru
          _
        // Predicated region
        $region61: #{tpu_custom_call.1} parent=51 // pred_check
          %p321 = pneg %p173
        $region62: #{tpu_custom_call.1} parent=51 // pred_check_branch
          %323 = sbr.rel (%p321) target = $region64
        $region63: #{tpu_custom_call.1} parent=51 // pred_region
          %324 = dma.done [#allocation6], 8192
        $region64: #{tpu_custom_call.1} parent=51 // pred_fallthru
          _
        %s325 = sand.u32 %s34, 1
        %s326 = scalar_lea.sflag [#allocation3], %s325
        %s327 = sand.u32 %s34, 1
        %s328 = smul.addr %s327, 512
        %s329 = scalar_lea.vmem [#allocation2], %s328
        %p330 = pneg %p47
        %p331 = pneg %p44
        %p332 = pneg %p68
        %p333 = pneg %p65
        %p334 = pneg %p89
        %p335 = pneg %p86
        %p336 = pneg %p110
        %p337 = pneg %p107
        %p338 = pneg %p131
        %p339 = pneg %p128
        %p340 = pneg %p152
        %p341 = pneg %p149
        %p342 = pneg %p173
        %p343 = pneg %p170
        %p344 = pneg %p194
        %p345 = pneg %p191
        %p346 = pneg %p220
        %p347 = pneg %p217
        %s348 = sand.u32 %s207, 1
        %s349 = scalar_lea.sflag [#allocation4], %s348
        %s350 = sand.u32 %s207, 1
        %s351 = smul.addr %s350, 1024
        %s352 = scalar_lea.vmem [#allocation8], %s351
        %v354 = vld [vmem:[%s312] sm:$0xff]
        %v355 = vld [vmem:[%s312 + $0x8] sm:$0xff]
        %v356 = vld [vmem:[%s312 + $0x10] sm:$0xff]
        %v357 = vld [vmem:[%s312 + $0x18] sm:$0xff]
        %v358 = vld [vmem:[%s312 + $0x20] sm:$0xff]
        %v359 = vld [vmem:[%s312 + $0x28] sm:$0xff]
        %v360 = vld [vmem:[%s312 + $0x30] sm:$0xff]
        %v361 = vld [vmem:[%s312 + $0x38] sm:$0xff]
        %v362 = vld [vmem:[%s312 + $0x40] sm:$0xff]
        %v363 = vld [vmem:[%s312 + $0x48] sm:$0xff]
        %v364 = vld [vmem:[%s312 + $0x50] sm:$0xff]
        %v365 = vld [vmem:[%s312 + $0x58] sm:$0xff]
        %v366 = vld [vmem:[%s312 + $0x60] sm:$0xff]
        %v367 = vld [vmem:[%s312 + $0x68] sm:$0xff]
        %v368 = vld [vmem:[%s312 + $0x70] sm:$0xff]
        %v369 = vld [vmem:[%s312 + $0x78] sm:$0xff]
        %v370 = vld [vmem:[%s312 + $0x80] sm:$0xff]
        %v371 = vld [vmem:[%s312 + $0x88] sm:$0xff]
        %v372 = vld [vmem:[%s312 + $0x90] sm:$0xff]
        %v373 = vld [vmem:[%s312 + $0x98] sm:$0xff]
        %v374 = vld [vmem:[%s312 + $0xa0] sm:$0xff]
        %v375 = vld [vmem:[%s312 + $0xa8] sm:$0xff]
        %v376 = vld [vmem:[%s312 + $0xb0] sm:$0xff]
        %v377 = vld [vmem:[%s312 + $0xb8] sm:$0xff]
        %v378 = vld [vmem:[%s312 + $0xc0] sm:$0xff]
        %v379 = vld [vmem:[%s312 + $0xc8] sm:$0xff]
        %v380 = vld [vmem:[%s312 + $0xd0] sm:$0xff]
        %v381 = vld [vmem:[%s312 + $0xd8] sm:$0xff]
        %v382 = vld [vmem:[%s312 + $0xe0] sm:$0xff]
        %v383 = vld [vmem:[%s312 + $0xe8] sm:$0xff]
        %v384 = vld [vmem:[%s312 + $0xf0] sm:$0xff]
        %v385 = vld [vmem:[%s312 + $0xf8] sm:$0xff]
        %v386 = vld [vmem:[%s312 + $0x100] sm:$0xff]
        %v387 = vld [vmem:[%s312 + $0x108] sm:$0xff]
        %v388 = vld [vmem:[%s312 + $0x110] sm:$0xff]
        %v389 = vld [vmem:[%s312 + $0x118] sm:$0xff]
        %v390 = vld [vmem:[%s312 + $0x120] sm:$0xff]
        %v391 = vld [vmem:[%s312 + $0x128] sm:$0xff]
        %v392 = vld [vmem:[%s312 + $0x130] sm:$0xff]
        %v393 = vld [vmem:[%s312 + $0x138] sm:$0xff]
        %v394 = vld [vmem:[%s312 + $0x140] sm:$0xff]
        %v395 = vld [vmem:[%s312 + $0x148] sm:$0xff]
        %v396 = vld [vmem:[%s312 + $0x150] sm:$0xff]
        %v397 = vld [vmem:[%s312 + $0x158] sm:$0xff]
        %v398 = vld [vmem:[%s312 + $0x160] sm:$0xff]
        %v399 = vld [vmem:[%s312 + $0x168] sm:$0xff]
        %v400 = vld [vmem:[%s312 + $0x170] sm:$0xff]
        %v401 = vld [vmem:[%s312 + $0x178] sm:$0xff]
        %v402 = vld [vmem:[%s312 + $0x180] sm:$0xff]
        %v403 = vld [vmem:[%s312 + $0x188] sm:$0xff]
        %v404 = vld [vmem:[%s312 + $0x190] sm:$0xff]
        %v405 = vld [vmem:[%s312 + $0x198] sm:$0xff]
        %v406 = vld [vmem:[%s312 + $0x1a0] sm:$0xff]
        %v407 = vld [vmem:[%s312 + $0x1a8] sm:$0xff]
        %v408 = vld [vmem:[%s312 + $0x1b0] sm:$0xff]
        %v409 = vld [vmem:[%s312 + $0x1b8] sm:$0xff]
        %v410 = vld [vmem:[%s312 + $0x1c0] sm:$0xff]
        %v411 = vld [vmem:[%s312 + $0x1c8] sm:$0xff]
        %v412 = vld [vmem:[%s312 + $0x1d0] sm:$0xff]
        %v413 = vld [vmem:[%s312 + $0x1d8] sm:$0xff]
        %v414 = vld [vmem:[%s312 + $0x1e0] sm:$0xff]
        %v415 = vld [vmem:[%s312 + $0x1e8] sm:$0xff]
        %v416 = vld [vmem:[%s312 + $0x1f0] sm:$0xff]
        %v417 = vld [vmem:[%s312 + $0x1f8] sm:$0xff]
        %v418 = vld [vmem:[%s1] sm:$0xff]
        %v419 = vld [vmem:[%s1 + $0x8] sm:$0xff]
        %v420 = vld [vmem:[%s1 + $0x10] sm:$0xff]
        %v421 = vld [vmem:[%s1 + $0x18] sm:$0xff]
        %v422 = vld [vmem:[%s1 + $0x20] sm:$0xff]
        %v423 = vld [vmem:[%s1 + $0x28] sm:$0xff]
        %v424 = vld [vmem:[%s1 + $0x30] sm:$0xff]
        %v425 = vld [vmem:[%s1 + $0x38] sm:$0xff]
        %v426 = vld [vmem:[%s1 + $0x40] sm:$0xff]
        %v427 = vld [vmem:[%s1 + $0x48] sm:$0xff]
        %v428 = vld [vmem:[%s1 + $0x50] sm:$0xff]
        %v429 = vld [vmem:[%s1 + $0x58] sm:$0xff]
        %v430 = vld [vmem:[%s1 + $0x60] sm:$0xff]
        %v431 = vld [vmem:[%s1 + $0x68] sm:$0xff]
        %v432 = vld [vmem:[%s1 + $0x70] sm:$0xff]
        %v433 = vld [vmem:[%s1 + $0x78] sm:$0xff]
        %v434 = vld [vmem:[%s1 + $0x80] sm:$0xff]
        %v435 = vld [vmem:[%s1 + $0x88] sm:$0xff]
        %v436 = vld [vmem:[%s1 + $0x90] sm:$0xff]
        %v437 = vld [vmem:[%s1 + $0x98] sm:$0xff]
        %v438 = vld [vmem:[%s1 + $0xa0] sm:$0xff]
        %v439 = vld [vmem:[%s1 + $0xa8] sm:$0xff]
        %v440 = vld [vmem:[%s1 + $0xb0] sm:$0xff]
        %v441 = vld [vmem:[%s1 + $0xb8] sm:$0xff]
        %v442 = vld [vmem:[%s1 + $0xc0] sm:$0xff]
        %v443 = vld [vmem:[%s1 + $0xc8] sm:$0xff]
        %v444 = vld [vmem:[%s1 + $0xd0] sm:$0xff]
        %v445 = vld [vmem:[%s1 + $0xd8] sm:$0xff]
        %v446 = vld [vmem:[%s1 + $0xe0] sm:$0xff]
        %v447 = vld [vmem:[%s1 + $0xe8] sm:$0xff]
        %v448 = vld [vmem:[%s1 + $0xf0] sm:$0xff]
        %v449 = vld [vmem:[%s1 + $0xf8] sm:$0xff]
        %v450 = vld [vmem:[%s1 + $0x100] sm:$0xff]
        %v451 = vld [vmem:[%s1 + $0x108] sm:$0xff]
        %v452 = vld [vmem:[%s1 + $0x110] sm:$0xff]
        %v453 = vld [vmem:[%s1 + $0x118] sm:$0xff]
        %v454 = vld [vmem:[%s1 + $0x120] sm:$0xff]
        %v455 = vld [vmem:[%s1 + $0x128] sm:$0xff]
        %v456 = vld [vmem:[%s1 + $0x130] sm:$0xff]
        %v457 = vld [vmem:[%s1 + $0x138] sm:$0xff]
        %v458 = vld [vmem:[%s1 + $0x140] sm:$0xff]
        %v459 = vld [vmem:[%s1 + $0x148] sm:$0xff]
        %v460 = vld [vmem:[%s1 + $0x150] sm:$0xff]
        %v461 = vld [vmem:[%s1 + $0x158] sm:$0xff]
        %v462 = vld [vmem:[%s1 + $0x160] sm:$0xff]
        %v463 = vld [vmem:[%s1 + $0x168] sm:$0xff]
        %v464 = vld [vmem:[%s1 + $0x170] sm:$0xff]
        %v465 = vld [vmem:[%s1 + $0x178] sm:$0xff]
        %v466 = vld [vmem:[%s1 + $0x180] sm:$0xff]
        %v467 = vld [vmem:[%s1 + $0x188] sm:$0xff]
        %v468 = vld [vmem:[%s1 + $0x190] sm:$0xff]
        %v469 = vld [vmem:[%s1 + $0x198] sm:$0xff]
        %v470 = vld [vmem:[%s1 + $0x1a0] sm:$0xff]
        %v471 = vld [vmem:[%s1 + $0x1a8] sm:$0xff]
        %v472 = vld [vmem:[%s1 + $0x1b0] sm:$0xff]
        %v473 = vld [vmem:[%s1 + $0x1b8] sm:$0xff]
        %v474 = vld [vmem:[%s1 + $0x1c0] sm:$0xff]
        %v475 = vld [vmem:[%s1 + $0x1c8] sm:$0xff]
        %v476 = vld [vmem:[%s1 + $0x1d0] sm:$0xff]
        %v477 = vld [vmem:[%s1 + $0x1d8] sm:$0xff]
        %v478 = vld [vmem:[%s1 + $0x1e0] sm:$0xff]
        %v479 = vld [vmem:[%s1 + $0x1e8] sm:$0xff]
        %v480 = vld [vmem:[%s1 + $0x1f0] sm:$0xff]
        %v481 = vld [vmem:[%s1 + $0x1f8] sm:$0xff]
        %v482 = vld [vmem:[%s1 + $0x200] sm:$0xff]
        %v483 = vld [vmem:[%s1 + $0x208] sm:$0xff]
        %v484 = vld [vmem:[%s1 + $0x210] sm:$0xff]
        %v485 = vld [vmem:[%s1 + $0x218] sm:$0xff]
        %v486 = vld [vmem:[%s1 + $0x220] sm:$0xff]
        %v487 = vld [vmem:[%s1 + $0x228] sm:$0xff]
        %v488 = vld [vmem:[%s1 + $0x230] sm:$0xff]
        %v489 = vld [vmem:[%s1 + $0x238] sm:$0xff]
        %v490 = vld [vmem:[%s1 + $0x240] sm:$0xff]
        %v491 = vld [vmem:[%s1 + $0x248] sm:$0xff]
        %v492 = vld [vmem:[%s1 + $0x250] sm:$0xff]
        %v493 = vld [vmem:[%s1 + $0x258] sm:$0xff]
        %v494 = vld [vmem:[%s1 + $0x260] sm:$0xff]
        %v495 = vld [vmem:[%s1 + $0x268] sm:$0xff]
        %v496 = vld [vmem:[%s1 + $0x270] sm:$0xff]
        %v497 = vld [vmem:[%s1 + $0x278] sm:$0xff]
        %v498 = vld [vmem:[%s1 + $0x280] sm:$0xff]
        %v499 = vld [vmem:[%s1 + $0x288] sm:$0xff]
        %v500 = vld [vmem:[%s1 + $0x290] sm:$0xff]
        %v501 = vld [vmem:[%s1 + $0x298] sm:$0xff]
        %v502 = vld [vmem:[%s1 + $0x2a0] sm:$0xff]
        %v503 = vld [vmem:[%s1 + $0x2a8] sm:$0xff]
        %v504 = vld [vmem:[%s1 + $0x2b0] sm:$0xff]
        %v505 = vld [vmem:[%s1 + $0x2b8] sm:$0xff]
        %v506 = vld [vmem:[%s1 + $0x2c0] sm:$0xff]
        %v507 = vld [vmem:[%s1 + $0x2c8] sm:$0xff]
        %v508 = vld [vmem:[%s1 + $0x2d0] sm:$0xff]
        %v509 = vld [vmem:[%s1 + $0x2d8] sm:$0xff]
        %v510 = vld [vmem:[%s1 + $0x2e0] sm:$0xff]
        %v511 = vld [vmem:[%s1 + $0x2e8] sm:$0xff]
        %v512 = vld [vmem:[%s1 + $0x2f0] sm:$0xff]
        %v513 = vld [vmem:[%s1 + $0x2f8] sm:$0xff]
        %v514 = vld [vmem:[%s2] sm:$0xff]
        %v515 = vld [vmem:[%s2 + $0x8] sm:$0xff]
        %v516 = vld [vmem:[%s2 + $0x10] sm:$0xff]
        %v517 = vld [vmem:[%s2 + $0x18] sm:$0xff]
        %v518 = vld [vmem:[%s2 + $0x20] sm:$0xff]
        %v519 = vld [vmem:[%s2 + $0x28] sm:$0xff]
        %v520 = vld [vmem:[%s2 + $0x30] sm:$0xff]
        %v521 = vld [vmem:[%s2 + $0x38] sm:$0xff]
        %v522 = vld [vmem:[%s2 + $0x40] sm:$0xff]
        %v523 = vld [vmem:[%s2 + $0x48] sm:$0xff]
        %v524 = vld [vmem:[%s2 + $0x50] sm:$0xff]
        %v525 = vld [vmem:[%s2 + $0x58] sm:$0xff]
        %v526 = vld [vmem:[%s2 + $0x60] sm:$0xff]
        %v527 = vld [vmem:[%s2 + $0x68] sm:$0xff]
        %v528 = vld [vmem:[%s2 + $0x70] sm:$0xff]
        %v529 = vld [vmem:[%s2 + $0x78] sm:$0xff]
        %v530 = vld [vmem:[%s2 + $0x80] sm:$0xff]
        %v531 = vld [vmem:[%s2 + $0x88] sm:$0xff]
        %v532 = vld [vmem:[%s2 + $0x90] sm:$0xff]
        %v533 = vld [vmem:[%s2 + $0x98] sm:$0xff]
        %v534 = vld [vmem:[%s2 + $0xa0] sm:$0xff]
        %v535 = vld [vmem:[%s2 + $0xa8] sm:$0xff]
        %v536 = vld [vmem:[%s2 + $0xb0] sm:$0xff]
        %v537 = vld [vmem:[%s2 + $0xb8] sm:$0xff]
        %v538 = vld [vmem:[%s2 + $0xc0] sm:$0xff]
        %v539 = vld [vmem:[%s2 + $0xc8] sm:$0xff]
        %v540 = vld [vmem:[%s2 + $0xd0] sm:$0xff]
        %v541 = vld [vmem:[%s2 + $0xd8] sm:$0xff]
        %v542 = vld [vmem:[%s2 + $0xe0] sm:$0xff]
        %v543 = vld [vmem:[%s2 + $0xe8] sm:$0xff]
        %v544 = vld [vmem:[%s2 + $0xf0] sm:$0xff]
        %v545 = vld [vmem:[%s2 + $0xf8] sm:$0xff]
        %v546 = vld [vmem:[%s2 + $0x100] sm:$0xff]
        %v547 = vld [vmem:[%s2 + $0x108] sm:$0xff]
        %v548 = vld [vmem:[%s2 + $0x110] sm:$0xff]
        %v549 = vld [vmem:[%s2 + $0x118] sm:$0xff]
        %v550 = vld [vmem:[%s2 + $0x120] sm:$0xff]
        %v551 = vld [vmem:[%s2 + $0x128] sm:$0xff]
        %v552 = vld [vmem:[%s2 + $0x130] sm:$0xff]
        %v553 = vld [vmem:[%s2 + $0x138] sm:$0xff]
        %v554 = vld [vmem:[%s2 + $0x140] sm:$0xff]
        %v555 = vld [vmem:[%s2 + $0x148] sm:$0xff]
        %v556 = vld [vmem:[%s2 + $0x150] sm:$0xff]
        %v557 = vld [vmem:[%s2 + $0x158] sm:$0xff]
        %v558 = vld [vmem:[%s2 + $0x160] sm:$0xff]
        %v559 = vld [vmem:[%s2 + $0x168] sm:$0xff]
        %v560 = vld [vmem:[%s2 + $0x170] sm:$0xff]
        %v561 = vld [vmem:[%s2 + $0x178] sm:$0xff]
        %563 = vset.pattern.permute.xlu0 0
        %564 = vperm.xlu0 %563, %v514
        %v565 = vpop.permute.xlu0 %564
        %568 = vset.pattern.permute.xlu0 0
        %569 = vperm.xlu0 %568, %v515
        %v570 = vpop.permute.xlu0 %569
        %573 = vset.pattern.permute.xlu0 0
        %574 = vperm.xlu0 %573, %v516
        %v575 = vpop.permute.xlu0 %574
        %578 = vset.pattern.permute.xlu0 0
        %579 = vperm.xlu0 %578, %v517
        %v580 = vpop.permute.xlu0 %579
        %583 = vset.pattern.permute.xlu0 0
        %584 = vperm.xlu0 %583, %v518
        %v585 = vpop.permute.xlu0 %584
        %588 = vset.pattern.permute.xlu0 0
        %589 = vperm.xlu0 %588, %v519
        %v590 = vpop.permute.xlu0 %589
        %593 = vset.pattern.permute.xlu0 0
        %594 = vperm.xlu0 %593, %v520
        %v595 = vpop.permute.xlu0 %594
        %598 = vset.pattern.permute.xlu0 0
        %599 = vperm.xlu0 %598, %v521
        %v600 = vpop.permute.xlu0 %599
        %603 = vset.pattern.permute.xlu0 0
        %604 = vperm.xlu0 %603, %v522
        %v605 = vpop.permute.xlu0 %604
        %608 = vset.pattern.permute.xlu0 0
        %609 = vperm.xlu0 %608, %v523
        %v610 = vpop.permute.xlu0 %609
        %613 = vset.pattern.permute.xlu0 0
        %614 = vperm.xlu0 %613, %v524
        %v615 = vpop.permute.xlu0 %614
        %618 = vset.pattern.permute.xlu0 0
        %619 = vperm.xlu0 %618, %v525
        %v620 = vpop.permute.xlu0 %619
        %623 = vset.pattern.permute.xlu0 0
        %624 = vperm.xlu0 %623, %v526
        %v625 = vpop.permute.xlu0 %624
        %628 = vset.pattern.permute.xlu0 0
        %629 = vperm.xlu0 %628, %v527
        %v630 = vpop.permute.xlu0 %629
        %633 = vset.pattern.permute.xlu0 0
        %634 = vperm.xlu0 %633, %v528
        %v635 = vpop.permute.xlu0 %634
        %638 = vset.pattern.permute.xlu0 0
        %639 = vperm.xlu0 %638, %v529
        %v640 = vpop.permute.xlu0 %639
        %643 = vset.pattern.permute.xlu0 0
        %644 = vperm.xlu0 %643, %v530
        %v645 = vpop.permute.xlu0 %644
        %648 = vset.pattern.permute.xlu0 0
        %649 = vperm.xlu0 %648, %v531
        %v650 = vpop.permute.xlu0 %649
        %653 = vset.pattern.permute.xlu0 0
        %654 = vperm.xlu0 %653, %v532
        %v655 = vpop.permute.xlu0 %654
        %658 = vset.pattern.permute.xlu0 0
        %659 = vperm.xlu0 %658, %v533
        %v660 = vpop.permute.xlu0 %659
        %663 = vset.pattern.permute.xlu0 0
        %664 = vperm.xlu0 %663, %v534
        %v665 = vpop.permute.xlu0 %664
        %668 = vset.pattern.permute.xlu0 0
        %669 = vperm.xlu0 %668, %v535
        %v670 = vpop.permute.xlu0 %669
        %673 = vset.pattern.permute.xlu0 0
        %674 = vperm.xlu0 %673, %v536
        %v675 = vpop.permute.xlu0 %674
        %678 = vset.pattern.permute.xlu0 0
        %679 = vperm.xlu0 %678, %v537
        %v680 = vpop.permute.xlu0 %679
        %683 = vset.pattern.permute.xlu0 0
        %684 = vperm.xlu0 %683, %v538
        %v685 = vpop.permute.xlu0 %684
        %688 = vset.pattern.permute.xlu0 0
        %689 = vperm.xlu0 %688, %v539
        %v690 = vpop.permute.xlu0 %689
        %693 = vset.pattern.permute.xlu0 0
        %694 = vperm.xlu0 %693, %v540
        %v695 = vpop.permute.xlu0 %694
        %698 = vset.pattern.permute.xlu0 0
        %699 = vperm.xlu0 %698, %v541
        %v700 = vpop.permute.xlu0 %699
        %703 = vset.pattern.permute.xlu0 0
        %704 = vperm.xlu0 %703, %v542
        %v705 = vpop.permute.xlu0 %704
        %708 = vset.pattern.permute.xlu0 0
        %709 = vperm.xlu0 %708, %v543
        %v710 = vpop.permute.xlu0 %709
        %713 = vset.pattern.permute.xlu0 0
        %714 = vperm.xlu0 %713, %v544
        %v715 = vpop.permute.xlu0 %714
        %718 = vset.pattern.permute.xlu0 0
        %719 = vperm.xlu0 %718, %v545
        %v720 = vpop.permute.xlu0 %719
        %723 = vset.pattern.permute.xlu0 0
        %724 = vperm.xlu0 %723, %v546
        %v725 = vpop.permute.xlu0 %724
        %728 = vset.pattern.permute.xlu0 0
        %729 = vperm.xlu0 %728, %v547
        %v730 = vpop.permute.xlu0 %729
        %733 = vset.pattern.permute.xlu0 0
        %734 = vperm.xlu0 %733, %v548
        %v735 = vpop.permute.xlu0 %734
        %738 = vset.pattern.permute.xlu0 0
        %739 = vperm.xlu0 %738, %v549
        %v740 = vpop.permute.xlu0 %739
        %743 = vset.pattern.permute.xlu0 0
        %744 = vperm.xlu0 %743, %v550
        %v745 = vpop.permute.xlu0 %744
        %748 = vset.pattern.permute.xlu0 0
        %749 = vperm.xlu0 %748, %v551
        %v750 = vpop.permute.xlu0 %749
        %753 = vset.pattern.permute.xlu0 0
        %754 = vperm.xlu0 %753, %v552
        %v755 = vpop.permute.xlu0 %754
        %758 = vset.pattern.permute.xlu0 0
        %759 = vperm.xlu0 %758, %v553
        %v760 = vpop.permute.xlu0 %759
        %763 = vset.pattern.permute.xlu0 0
        %764 = vperm.xlu0 %763, %v554
        %v765 = vpop.permute.xlu0 %764
        %768 = vset.pattern.permute.xlu0 0
        %769 = vperm.xlu0 %768, %v555
        %v770 = vpop.permute.xlu0 %769
        %773 = vset.pattern.permute.xlu0 0
        %774 = vperm.xlu0 %773, %v556
        %v775 = vpop.permute.xlu0 %774
        %778 = vset.pattern.permute.xlu0 0
        %779 = vperm.xlu0 %778, %v557
        %v780 = vpop.permute.xlu0 %779
        %783 = vset.pattern.permute.xlu0 0
        %784 = vperm.xlu0 %783, %v558
        %v785 = vpop.permute.xlu0 %784
        %788 = vset.pattern.permute.xlu0 0
        %789 = vperm.xlu0 %788, %v559
        %v790 = vpop.permute.xlu0 %789
        %793 = vset.pattern.permute.xlu0 0
        %794 = vperm.xlu0 %793, %v560
        %v795 = vpop.permute.xlu0 %794
        %798 = vset.pattern.permute.xlu0 0
        %799 = vperm.xlu0 %798, %v561
        %v800 = vpop.permute.xlu0 %799
        %v898 = vunpack.c.l.b16 %v418
        %v899 = vunpack.c.h.b16 %v418
        %v900 = vunpack.c.l.b16 %v419
        %v901 = vunpack.c.h.b16 %v419
        %v902 = vunpack.c.l.b16 %v420
        %v903 = vunpack.c.h.b16 %v420
        %v904 = vunpack.c.l.b16 %v421
        %v905 = vunpack.c.h.b16 %v421
        %v906 = vunpack.c.l.b16 %v422
        %v907 = vunpack.c.h.b16 %v422
        %v908 = vunpack.c.l.b16 %v423
        %v909 = vunpack.c.h.b16 %v423
        %v910 = vunpack.c.l.b16 %v424
        %v911 = vunpack.c.h.b16 %v424
        %v912 = vunpack.c.l.b16 %v425
        %v913 = vunpack.c.h.b16 %v425
        %v914 = vunpack.c.l.b16 %v426
        %v915 = vunpack.c.h.b16 %v426
        %v916 = vunpack.c.l.b16 %v427
        %v917 = vunpack.c.h.b16 %v427
        %v918 = vunpack.c.l.b16 %v428
        %v919 = vunpack.c.h.b16 %v428
        %v920 = vunpack.c.l.b16 %v429
        %v921 = vunpack.c.h.b16 %v429
        %v922 = vunpack.c.l.b16 %v430
        %v923 = vunpack.c.h.b16 %v430
        %v924 = vunpack.c.l.b16 %v431
        %v925 = vunpack.c.h.b16 %v431
        %v926 = vunpack.c.l.b16 %v432
        %v927 = vunpack.c.h.b16 %v432
        %v928 = vunpack.c.l.b16 %v433
        %v929 = vunpack.c.h.b16 %v433
        %v930 = vunpack.c.l.b16 %v434
        %v931 = vunpack.c.h.b16 %v434
        %v932 = vunpack.c.l.b16 %v435
        %v933 = vunpack.c.h.b16 %v435
        %v934 = vunpack.c.l.b16 %v436
        %v935 = vunpack.c.h.b16 %v436
        %v936 = vunpack.c.l.b16 %v437
        %v937 = vunpack.c.h.b16 %v437
        %v938 = vunpack.c.l.b16 %v438
        %v939 = vunpack.c.h.b16 %v438
        %v940 = vunpack.c.l.b16 %v439
        %v941 = vunpack.c.h.b16 %v439
        %v942 = vunpack.c.l.b16 %v440
        %v943 = vunpack.c.h.b16 %v440
        %v944 = vunpack.c.l.b16 %v441
        %v945 = vunpack.c.h.b16 %v441
        %v946 = vunpack.c.l.b16 %v442
        %v947 = vunpack.c.h.b16 %v442
        %v948 = vunpack.c.l.b16 %v443
        %v949 = vunpack.c.h.b16 %v443
        %v950 = vunpack.c.l.b16 %v444
        %v951 = vunpack.c.h.b16 %v444
        %v952 = vunpack.c.l.b16 %v445
        %v953 = vunpack.c.h.b16 %v445
        %v954 = vunpack.c.l.b16 %v446
        %v955 = vunpack.c.h.b16 %v446
        %v956 = vunpack.c.l.b16 %v447
        %v957 = vunpack.c.h.b16 %v447
        %v958 = vunpack.c.l.b16 %v448
        %v959 = vunpack.c.h.b16 %v448
        %v960 = vunpack.c.l.b16 %v449
        %v961 = vunpack.c.h.b16 %v449
        %v962 = vunpack.c.l.b16 %v450
        %v963 = vunpack.c.h.b16 %v450
        %v964 = vunpack.c.l.b16 %v451
        %v965 = vunpack.c.h.b16 %v451
        %v966 = vunpack.c.l.b16 %v452
        %v967 = vunpack.c.h.b16 %v452
        %v968 = vunpack.c.l.b16 %v453
        %v969 = vunpack.c.h.b16 %v453
        %v970 = vunpack.c.l.b16 %v454
        %v971 = vunpack.c.h.b16 %v454
        %v972 = vunpack.c.l.b16 %v455
        %v973 = vunpack.c.h.b16 %v455
        %v974 = vunpack.c.l.b16 %v456
        %v975 = vunpack.c.h.b16 %v456
        %v976 = vunpack.c.l.b16 %v457
        %v977 = vunpack.c.h.b16 %v457
        %v978 = vunpack.c.l.b16 %v458
        %v979 = vunpack.c.h.b16 %v458
        %v980 = vunpack.c.l.b16 %v459
        %v981 = vunpack.c.h.b16 %v459
        %v982 = vunpack.c.l.b16 %v460
        %v983 = vunpack.c.h.b16 %v460
        %v984 = vunpack.c.l.b16 %v461
        %v985 = vunpack.c.h.b16 %v461
        %v986 = vunpack.c.l.b16 %v462
        %v987 = vunpack.c.h.b16 %v462
        %v988 = vunpack.c.l.b16 %v463
        %v989 = vunpack.c.h.b16 %v463
        %v990 = vunpack.c.l.b16 %v464
        %v991 = vunpack.c.h.b16 %v464
        %v992 = vunpack.c.l.b16 %v465
        %v993 = vunpack.c.h.b16 %v465
        %v994 = vunpack.c.l.b16 %v466
        %v995 = vunpack.c.h.b16 %v466
        %v996 = vunpack.c.l.b16 %v467
        %v997 = vunpack.c.h.b16 %v467
        %v998 = vunpack.c.l.b16 %v468
        %v999 = vunpack.c.h.b16 %v468
        %v1000 = vunpack.c.l.b16 %v469
        %v1001 = vunpack.c.h.b16 %v469
        %v1002 = vunpack.c.l.b16 %v470
        %v1003 = vunpack.c.h.b16 %v470
        %v1004 = vunpack.c.l.b16 %v471
        %v1005 = vunpack.c.h.b16 %v471
        %v1006 = vunpack.c.l.b16 %v472
        %v1007 = vunpack.c.h.b16 %v472
        %v1008 = vunpack.c.l.b16 %v473
        %v1009 = vunpack.c.h.b16 %v473
        %v1010 = vunpack.c.l.b16 %v474
        %v1011 = vunpack.c.h.b16 %v474
        %v1012 = vunpack.c.l.b16 %v475
        %v1013 = vunpack.c.h.b16 %v475
        %v1014 = vunpack.c.l.b16 %v476
        %v1015 = vunpack.c.h.b16 %v476
        %v1016 = vunpack.c.l.b16 %v477
        %v1017 = vunpack.c.h.b16 %v477
        %v1018 = vunpack.c.l.b16 %v478
        %v1019 = vunpack.c.h.b16 %v478
        %v1020 = vunpack.c.l.b16 %v479
        %v1021 = vunpack.c.h.b16 %v479
        %v1022 = vunpack.c.l.b16 %v480
        %v1023 = vunpack.c.h.b16 %v480
        %v1024 = vunpack.c.l.b16 %v481
        %v1025 = vunpack.c.h.b16 %v481
        %v1026 = vunpack.c.l.b16 %v482
        %v1027 = vunpack.c.h.b16 %v482
        %v1028 = vunpack.c.l.b16 %v483
        %v1029 = vunpack.c.h.b16 %v483
        %v1030 = vunpack.c.l.b16 %v484
        %v1031 = vunpack.c.h.b16 %v484
        %v1032 = vunpack.c.l.b16 %v485
        %v1033 = vunpack.c.h.b16 %v485
        %v1034 = vunpack.c.l.b16 %v486
        %v1035 = vunpack.c.h.b16 %v486
        %v1036 = vunpack.c.l.b16 %v487
        %v1037 = vunpack.c.h.b16 %v487
        %v1038 = vunpack.c.l.b16 %v488
        %v1039 = vunpack.c.h.b16 %v488
        %v1040 = vunpack.c.l.b16 %v489
        %v1041 = vunpack.c.h.b16 %v489
        %v1042 = vunpack.c.l.b16 %v490
        %v1043 = vunpack.c.h.b16 %v490
        %v1044 = vunpack.c.l.b16 %v491
        %v1045 = vunpack.c.h.b16 %v491
        %v1046 = vunpack.c.l.b16 %v492
        %v1047 = vunpack.c.h.b16 %v492
        %v1048 = vunpack.c.l.b16 %v493
        %v1049 = vunpack.c.h.b16 %v493
        %v1050 = vunpack.c.l.b16 %v494
        %v1051 = vunpack.c.h.b16 %v494
        %v1052 = vunpack.c.l.b16 %v495
        %v1053 = vunpack.c.h.b16 %v495
        %v1054 = vunpack.c.l.b16 %v496
        %v1055 = vunpack.c.h.b16 %v496
        %v1056 = vunpack.c.l.b16 %v497
        %v1057 = vunpack.c.h.b16 %v497
        %v1058 = vunpack.c.l.b16 %v498
        %v1059 = vunpack.c.h.b16 %v498
        %v1060 = vunpack.c.l.b16 %v499
        %v1061 = vunpack.c.h.b16 %v499
        %v1062 = vunpack.c.l.b16 %v500
        %v1063 = vunpack.c.h.b16 %v500
        %v1064 = vunpack.c.l.b16 %v501
        %v1065 = vunpack.c.h.b16 %v501
        %v1066 = vunpack.c.l.b16 %v502
        %v1067 = vunpack.c.h.b16 %v502
        %v1068 = vunpack.c.l.b16 %v503
        %v1069 = vunpack.c.h.b16 %v503
        %v1070 = vunpack.c.l.b16 %v504
        %v1071 = vunpack.c.h.b16 %v504
        %v1072 = vunpack.c.l.b16 %v505
        %v1073 = vunpack.c.h.b16 %v505
        %v1074 = vunpack.c.l.b16 %v506
        %v1075 = vunpack.c.h.b16 %v506
        %v1076 = vunpack.c.l.b16 %v507
        %v1077 = vunpack.c.h.b16 %v507
        %v1078 = vunpack.c.l.b16 %v508
        %v1079 = vunpack.c.h.b16 %v508
        %v1080 = vunpack.c.l.b16 %v509
        %v1081 = vunpack.c.h.b16 %v509
        %v1082 = vunpack.c.l.b16 %v510
        %v1083 = vunpack.c.h.b16 %v510
        %v1084 = vunpack.c.l.b16 %v511
        %v1085 = vunpack.c.h.b16 %v511
        %v1086 = vunpack.c.l.b16 %v512
        %v1087 = vunpack.c.h.b16 %v512
        %v1088 = vunpack.c.l.b16 %v513
        %v1089 = vunpack.c.h.b16 %v513
        %v1090 = vpack.c.b16 %v902, %v898
        %v1091 = vpack.c.b16 %v903, %v899
        %v1092 = vpack.c.b16 %v904, %v900
        %v1093 = vpack.c.b16 %v905, %v901
        %v1094 = vpack.c.b16 %v910, %v906
        %v1095 = vpack.c.b16 %v911, %v907
        %v1096 = vpack.c.b16 %v912, %v908
        %v1097 = vpack.c.b16 %v913, %v909
        %v1098 = vpack.c.b16 %v918, %v914
        %v1099 = vpack.c.b16 %v919, %v915
        %v1100 = vpack.c.b16 %v920, %v916
        %v1101 = vpack.c.b16 %v921, %v917
        %v1102 = vpack.c.b16 %v926, %v922
        %v1103 = vpack.c.b16 %v927, %v923
        %v1104 = vpack.c.b16 %v928, %v924
        %v1105 = vpack.c.b16 %v929, %v925
        %v1106 = vpack.c.b16 %v934, %v930
        %v1107 = vpack.c.b16 %v935, %v931
        %v1108 = vpack.c.b16 %v936, %v932
        %v1109 = vpack.c.b16 %v937, %v933
        %v1110 = vpack.c.b16 %v942, %v938
        %v1111 = vpack.c.b16 %v943, %v939
        %v1112 = vpack.c.b16 %v944, %v940
        %v1113 = vpack.c.b16 %v945, %v941
        %v1114 = vpack.c.b16 %v950, %v946
        %v1115 = vpack.c.b16 %v951, %v947
        %v1116 = vpack.c.b16 %v952, %v948
        %v1117 = vpack.c.b16 %v953, %v949
        %v1118 = vpack.c.b16 %v958, %v954
        %v1119 = vpack.c.b16 %v959, %v955
        %v1120 = vpack.c.b16 %v960, %v956
        %v1121 = vpack.c.b16 %v961, %v957
        %v1122 = vpack.c.b16 %v966, %v962
        %v1123 = vpack.c.b16 %v967, %v963
        %v1124 = vpack.c.b16 %v968, %v964
        %v1125 = vpack.c.b16 %v969, %v965
        %v1126 = vpack.c.b16 %v974, %v970
        %v1127 = vpack.c.b16 %v975, %v971
        %v1128 = vpack.c.b16 %v976, %v972
        %v1129 = vpack.c.b16 %v977, %v973
        %v1130 = vpack.c.b16 %v982, %v978
        %v1131 = vpack.c.b16 %v983, %v979
        %v1132 = vpack.c.b16 %v984, %v980
        %v1133 = vpack.c.b16 %v985, %v981
        %v1134 = vpack.c.b16 %v990, %v986
        %v1135 = vpack.c.b16 %v991, %v987
        %v1136 = vpack.c.b16 %v992, %v988
        %v1137 = vpack.c.b16 %v993, %v989
        %v1138 = vpack.c.b16 %v998, %v994
        %v1139 = vpack.c.b16 %v999, %v995
        %v1140 = vpack.c.b16 %v1000, %v996
        %v1141 = vpack.c.b16 %v1001, %v997
        %v1142 = vpack.c.b16 %v1006, %v1002
        %v1143 = vpack.c.b16 %v1007, %v1003
        %v1144 = vpack.c.b16 %v1008, %v1004
        %v1145 = vpack.c.b16 %v1009, %v1005
        %v1146 = vpack.c.b16 %v1014, %v1010
        %v1147 = vpack.c.b16 %v1015, %v1011
        %v1148 = vpack.c.b16 %v1016, %v1012
        %v1149 = vpack.c.b16 %v1017, %v1013
        %v1150 = vpack.c.b16 %v1022, %v1018
        %v1151 = vpack.c.b16 %v1023, %v1019
        %v1152 = vpack.c.b16 %v1024, %v1020
        %v1153 = vpack.c.b16 %v1025, %v1021
        %v1154 = vpack.c.b16 %v1030, %v1026
        %v1155 = vpack.c.b16 %v1031, %v1027
        %v1156 = vpack.c.b16 %v1032, %v1028
        %v1157 = vpack.c.b16 %v1033, %v1029
        %v1158 = vpack.c.b16 %v1038, %v1034
        %v1159 = vpack.c.b16 %v1039, %v1035
        %v1160 = vpack.c.b16 %v1040, %v1036
        %v1161 = vpack.c.b16 %v1041, %v1037
        %v1162 = vpack.c.b16 %v1046, %v1042
        %v1163 = vpack.c.b16 %v1047, %v1043
        %v1164 = vpack.c.b16 %v1048, %v1044
        %v1165 = vpack.c.b16 %v1049, %v1045
        %v1166 = vpack.c.b16 %v1054, %v1050
        %v1167 = vpack.c.b16 %v1055, %v1051
        %v1168 = vpack.c.b16 %v1056, %v1052
        %v1169 = vpack.c.b16 %v1057, %v1053
        %v1170 = vpack.c.b16 %v1062, %v1058
        %v1171 = vpack.c.b16 %v1063, %v1059
        %v1172 = vpack.c.b16 %v1064, %v1060
        %v1173 = vpack.c.b16 %v1065, %v1061
        %v1174 = vpack.c.b16 %v1070, %v1066
        %v1175 = vpack.c.b16 %v1071, %v1067
        %v1176 = vpack.c.b16 %v1072, %v1068
        %v1177 = vpack.c.b16 %v1073, %v1069
        %v1178 = vpack.c.b16 %v1078, %v1074
        %v1179 = vpack.c.b16 %v1079, %v1075
        %v1180 = vpack.c.b16 %v1080, %v1076
        %v1181 = vpack.c.b16 %v1081, %v1077
        %v1182 = vpack.c.b16 %v1086, %v1082
        %v1183 = vpack.c.b16 %v1087, %v1083
        %v1184 = vpack.c.b16 %v1088, %v1084
        %v1185 = vpack.c.b16 %v1089, %v1085
        %v1346 = vunpack.c.l.b16 %v354
        %v1347 = vunpack.c.h.b16 %v354
        %v1348 = vunpack.c.l.b16 %v355
        %v1349 = vunpack.c.h.b16 %v355
        %v1350 = vunpack.c.l.b16 %v356
        %v1351 = vunpack.c.h.b16 %v356
        %v1352 = vunpack.c.l.b16 %v357
        %v1353 = vunpack.c.h.b16 %v357
        %v1354 = vunpack.c.l.b16 %v358
        %v1355 = vunpack.c.h.b16 %v358
        %v1356 = vunpack.c.l.b16 %v359
        %v1357 = vunpack.c.h.b16 %v359
        %v1358 = vunpack.c.l.b16 %v360
        %v1359 = vunpack.c.h.b16 %v360
        %v1360 = vunpack.c.l.b16 %v361
        %v1361 = vunpack.c.h.b16 %v361
        %v1362 = vunpack.c.l.b16 %v362
        %v1363 = vunpack.c.h.b16 %v362
        %v1364 = vunpack.c.l.b16 %v363
        %v1365 = vunpack.c.h.b16 %v363
        %v1366 = vunpack.c.l.b16 %v364
        %v1367 = vunpack.c.h.b16 %v364
        %v1368 = vunpack.c.l.b16 %v365
        %v1369 = vunpack.c.h.b16 %v365
        %v1370 = vunpack.c.l.b16 %v366
        %v1371 = vunpack.c.h.b16 %v366
        %v1372 = vunpack.c.l.b16 %v367
        %v1373 = vunpack.c.h.b16 %v367
        %v1374 = vunpack.c.l.b16 %v368
        %v1375 = vunpack.c.h.b16 %v368
        %v1376 = vunpack.c.l.b16 %v369
        %v1377 = vunpack.c.h.b16 %v369
        %v1378 = vunpack.c.l.b16 %v370
        %v1379 = vunpack.c.h.b16 %v370
        %v1380 = vunpack.c.l.b16 %v371
        %v1381 = vunpack.c.h.b16 %v371
        %v1382 = vunpack.c.l.b16 %v372
        %v1383 = vunpack.c.h.b16 %v372
        %v1384 = vunpack.c.l.b16 %v373
        %v1385 = vunpack.c.h.b16 %v373
        %v1386 = vunpack.c.l.b16 %v374
        %v1387 = vunpack.c.h.b16 %v374
        %v1388 = vunpack.c.l.b16 %v375
        %v1389 = vunpack.c.h.b16 %v375
        %v1390 = vunpack.c.l.b16 %v376
        %v1391 = vunpack.c.h.b16 %v376
        %v1392 = vunpack.c.l.b16 %v377
        %v1393 = vunpack.c.h.b16 %v377
        %v1394 = vunpack.c.l.b16 %v378
        %v1395 = vunpack.c.h.b16 %v378
        %v1396 = vunpack.c.l.b16 %v379
        %v1397 = vunpack.c.h.b16 %v379
        %v1398 = vunpack.c.l.b16 %v380
        %v1399 = vunpack.c.h.b16 %v380
        %v1400 = vunpack.c.l.b16 %v381
        %v1401 = vunpack.c.h.b16 %v381
        %v1402 = vunpack.c.l.b16 %v382
        %v1403 = vunpack.c.h.b16 %v382
        %v1404 = vunpack.c.l.b16 %v383
        %v1405 = vunpack.c.h.b16 %v383
        %v1406 = vunpack.c.l.b16 %v384
        %v1407 = vunpack.c.h.b16 %v384
        %v1408 = vunpack.c.l.b16 %v385
        %v1409 = vunpack.c.h.b16 %v385
        %v1410 = vunpack.c.l.b16 %v386
        %v1411 = vunpack.c.h.b16 %v386
        %v1412 = vunpack.c.l.b16 %v387
        %v1413 = vunpack.c.h.b16 %v387
        %v1414 = vunpack.c.l.b16 %v388
        %v1415 = vunpack.c.h.b16 %v388
        %v1416 = vunpack.c.l.b16 %v389
        %v1417 = vunpack.c.h.b16 %v389
        %v1418 = vunpack.c.l.b16 %v390
        %v1419 = vunpack.c.h.b16 %v390
        %v1420 = vunpack.c.l.b16 %v391
        %v1421 = vunpack.c.h.b16 %v391
        %v1422 = vunpack.c.l.b16 %v392
        %v1423 = vunpack.c.h.b16 %v392
        %v1424 = vunpack.c.l.b16 %v393
        %v1425 = vunpack.c.h.b16 %v393
        %v1426 = vunpack.c.l.b16 %v394
        %v1427 = vunpack.c.h.b16 %v394
        %v1428 = vunpack.c.l.b16 %v395
        %v1429 = vunpack.c.h.b16 %v395
        %v1430 = vunpack.c.l.b16 %v396
        %v1431 = vunpack.c.h.b16 %v396
        %v1432 = vunpack.c.l.b16 %v397
        %v1433 = vunpack.c.h.b16 %v397
        %v1434 = vunpack.c.l.b16 %v398
        %v1435 = vunpack.c.h.b16 %v398
        %v1436 = vunpack.c.l.b16 %v399
        %v1437 = vunpack.c.h.b16 %v399
        %v1438 = vunpack.c.l.b16 %v400
        %v1439 = vunpack.c.h.b16 %v400
        %v1440 = vunpack.c.l.b16 %v401
        %v1441 = vunpack.c.h.b16 %v401
        %v1442 = vunpack.c.l.b16 %v402
        %v1443 = vunpack.c.h.b16 %v402
        %v1444 = vunpack.c.l.b16 %v403
        %v1445 = vunpack.c.h.b16 %v403
        %v1446 = vunpack.c.l.b16 %v404
        %v1447 = vunpack.c.h.b16 %v404
        %v1448 = vunpack.c.l.b16 %v405
        %v1449 = vunpack.c.h.b16 %v405
        %v1450 = vunpack.c.l.b16 %v406
        %v1451 = vunpack.c.h.b16 %v406
        %v1452 = vunpack.c.l.b16 %v407
        %v1453 = vunpack.c.h.b16 %v407
        %v1454 = vunpack.c.l.b16 %v408
        %v1455 = vunpack.c.h.b16 %v408
        %v1456 = vunpack.c.l.b16 %v409
        %v1457 = vunpack.c.h.b16 %v409
        %v1458 = vunpack.c.l.b16 %v410
        %v1459 = vunpack.c.h.b16 %v410
        %v1460 = vunpack.c.l.b16 %v411
        %v1461 = vunpack.c.h.b16 %v411
        %v1462 = vunpack.c.l.b16 %v412
        %v1463 = vunpack.c.h.b16 %v412
        %v1464 = vunpack.c.l.b16 %v413
        %v1465 = vunpack.c.h.b16 %v413
        %v1466 = vunpack.c.l.b16 %v414
        %v1467 = vunpack.c.h.b16 %v414
        %v1468 = vunpack.c.l.b16 %v415
        %v1469 = vunpack.c.h.b16 %v415
        %v1470 = vunpack.c.l.b16 %v416
        %v1471 = vunpack.c.h.b16 %v416
        %v1472 = vunpack.c.l.b16 %v417
        %v1473 = vunpack.c.h.b16 %v417
        %v1474 = vpack.c.b16 %v1348, %v1346
        %v1475 = vpack.c.b16 %v1349, %v1347
        %v1476 = vpack.c.b16 %v1352, %v1350
        %v1477 = vpack.c.b16 %v1353, %v1351
        %v1478 = vpack.c.b16 %v1356, %v1354
        %v1479 = vpack.c.b16 %v1357, %v1355
        %v1480 = vpack.c.b16 %v1360, %v1358
        %v1481 = vpack.c.b16 %v1361, %v1359
        %v1482 = vpack.c.b16 %v1364, %v1362
        %v1483 = vpack.c.b16 %v1365, %v1363
        %v1484 = vpack.c.b16 %v1368, %v1366
        %v1485 = vpack.c.b16 %v1369, %v1367
        %v1486 = vpack.c.b16 %v1372, %v1370
        %v1487 = vpack.c.b16 %v1373, %v1371
        %v1488 = vpack.c.b16 %v1376, %v1374
        %v1489 = vpack.c.b16 %v1377, %v1375
        %v1490 = vpack.c.b16 %v1380, %v1378
        %v1491 = vpack.c.b16 %v1381, %v1379
        %v1492 = vpack.c.b16 %v1384, %v1382
        %v1493 = vpack.c.b16 %v1385, %v1383
        %v1494 = vpack.c.b16 %v1388, %v1386
        %v1495 = vpack.c.b16 %v1389, %v1387
        %v1496 = vpack.c.b16 %v1392, %v1390
        %v1497 = vpack.c.b16 %v1393, %v1391
        %v1498 = vpack.c.b16 %v1396, %v1394
        %v1499 = vpack.c.b16 %v1397, %v1395
        %v1500 = vpack.c.b16 %v1400, %v1398
        %v1501 = vpack.c.b16 %v1401, %v1399
        %v1502 = vpack.c.b16 %v1404, %v1402
        %v1503 = vpack.c.b16 %v1405, %v1403
        %v1504 = vpack.c.b16 %v1408, %v1406
        %v1505 = vpack.c.b16 %v1409, %v1407
        %v1506 = vpack.c.b16 %v1412, %v1410
        %v1507 = vpack.c.b16 %v1413, %v1411
        %v1508 = vpack.c.b16 %v1416, %v1414
        %v1509 = vpack.c.b16 %v1417, %v1415
        %v1510 = vpack.c.b16 %v1420, %v1418
        %v1511 = vpack.c.b16 %v1421, %v1419
        %v1512 = vpack.c.b16 %v1424, %v1422
        %v1513 = vpack.c.b16 %v1425, %v1423
        %v1514 = vpack.c.b16 %v1428, %v1426
        %v1515 = vpack.c.b16 %v1429, %v1427
        %v1516 = vpack.c.b16 %v1432, %v1430
        %v1517 = vpack.c.b16 %v1433, %v1431
        %v1518 = vpack.c.b16 %v1436, %v1434
        %v1519 = vpack.c.b16 %v1437, %v1435
        %v1520 = vpack.c.b16 %v1440, %v1438
        %v1521 = vpack.c.b16 %v1441, %v1439
        %v1522 = vpack.c.b16 %v1444, %v1442
        %v1523 = vpack.c.b16 %v1445, %v1443
        %v1524 = vpack.c.b16 %v1448, %v1446
        %v1525 = vpack.c.b16 %v1449, %v1447
        %v1526 = vpack.c.b16 %v1452, %v1450
        %v1527 = vpack.c.b16 %v1453, %v1451
        %v1528 = vpack.c.b16 %v1456, %v1454
        %v1529 = vpack.c.b16 %v1457, %v1455
        %v1530 = vpack.c.b16 %v1460, %v1458
        %v1531 = vpack.c.b16 %v1461, %v1459
        %v1532 = vpack.c.b16 %v1464, %v1462
        %v1533 = vpack.c.b16 %v1465, %v1463
        %v1534 = vpack.c.b16 %v1468, %v1466
        %v1535 = vpack.c.b16 %v1469, %v1467
        %v1536 = vpack.c.b16 %v1472, %v1470
        %v1537 = vpack.c.b16 %v1473, %v1471
        %1602 = vmatprep.subr.bf16.mxu0 %v1475
        %1603 = vmatpush1.bf16.msra.mxu0 %v1474
        %1604 = vmatprep.subr.bf16.mxu0 %v1477
        %1605 = vmatpush1.bf16.msra.mxu0 %v1476
        %1606 = vmatprep.subr.bf16.mxu0 %v1479
        %1607 = vmatpush1.bf16.msra.mxu0 %v1478
        %1608 = vmatprep.subr.bf16.mxu0 %v1481
        %1609 = vmatpush1.bf16.msra.mxu0 %v1480
        %1610 = vmatprep.subr.bf16.mxu0 %v1483
        %1611 = vmatpush1.bf16.msra.mxu0 %v1482
        %1612 = vmatprep.subr.bf16.mxu0 %v1485
        %1613 = vmatpush1.bf16.msra.mxu0 %v1484
        %1614 = vmatprep.subr.bf16.mxu0 %v1487
        %1615 = vmatpush1.bf16.msra.mxu0 %v1486
        %1616 = vmatprep.subr.bf16.mxu0 %v1489
        %1617 = vmatpush1.bf16.msra.mxu0 %v1488
        %1618 = vmatprep.subr.bf16.mxu0 %v1491
        %1619 = vmatpush1.bf16.msra.mxu0 %v1490
        %1620 = vmatprep.subr.bf16.mxu0 %v1493
        %1621 = vmatpush1.bf16.msra.mxu0 %v1492
        %1622 = vmatprep.subr.bf16.mxu0 %v1495
        %1623 = vmatpush1.bf16.msra.mxu0 %v1494
        %1624 = vmatprep.subr.bf16.mxu0 %v1497
        %1625 = vmatpush1.bf16.msra.mxu0 %v1496
        %1626 = vmatprep.subr.bf16.mxu0 %v1499
        %1627 = vmatpush1.bf16.msra.mxu0 %v1498
        %1628 = vmatprep.subr.bf16.mxu0 %v1501
        %1629 = vmatpush1.bf16.msra.mxu0 %v1500
        %1630 = vmatprep.subr.bf16.mxu0 %v1503
        %1631 = vmatpush1.bf16.msra.mxu0 %v1502
        %1632 = vmatprep.subr.bf16.mxu0 %v1505
        %1633 = vmatpush1.bf16.msra.mxu0 %v1504
        %1634 = vmatprep.mubr.bf16.mxu0 %v1091
        %1635 = vmatmul.mubr.bf16.gmra.mrb[0].mxu0 %v1090
        %v1636 = vpop.f32.mrb[0].mxu0
        %v1637 = vadd.f32 %v565, %v1636
        %v1638 = vpop.f32.mrb[0].mxu0
        %v1639 = vadd.f32 %v565, %v1638
        %v1640 = vpop.f32.mrb[0].mxu0
        %v1641 = vadd.f32 %v570, %v1640
        %v1642 = vpop.f32.mrb[0].mxu0
        %v1643 = vadd.f32 %v570, %v1642
        %1644 = vmatprep.mubr.bf16.mxu0 %v1095
        %1645 = vmatmul.mubr.bf16.gmra.mrb[0].mxu0 %v1094
        %v1646 = vpop.f32.mrb[0].mxu0
        %v1647 = vadd.f32 %v575, %v1646
        %v1648 = vpop.f32.mrb[0].mxu0
        %v1649 = vadd.f32 %v575, %v1648
        %v1650 = vpop.f32.mrb[0].mxu0
        %v1651 = vadd.f32 %v580, %v1650
        %v1652 = vpop.f32.mrb[0].mxu0
        %v1653 = vadd.f32 %v580, %v1652
        %1654 = vmatprep.mubr.bf16.mxu0 %v1099
        %1655 = vmatmul.mubr.bf16.gmra.mrb[0].mxu0 %v1098
        %v1656 = vpop.f32.mrb[0].mxu0
        %v1657 = vadd.f32 %v585, %v1656
        %v1658 = vpop.f32.mrb[0].mxu0
        %v1659 = vadd.f32 %v585, %v1658
        %v1660 = vpop.f32.mrb[0].mxu0
        %v1661 = vadd.f32 %v590, %v1660
        %v1662 = vpop.f32.mrb[0].mxu0
        %v1663 = vadd.f32 %v590, %v1662
        %1664 = vmatprep.mubr.bf16.mxu0 %v1103
        %1665 = vmatmul.mubr.bf16.gmra.mrb[0].mxu0 %v1102
        %v1666 = vpop.f32.mrb[0].mxu0
        %v1667 = vadd.f32 %v595, %v1666
        %v1668 = vpop.f32.mrb[0].mxu0
        %v1669 = vadd.f32 %v595, %v1668
        %v1670 = vpop.f32.mrb[0].mxu0
        %v1671 = vadd.f32 %v600, %v1670
        %v1672 = vpop.f32.mrb[0].mxu0
        %v1673 = vadd.f32 %v600, %v1672
        %1674 = vmatprep.mubr.bf16.mxu0 %v1107
        %1675 = vmatmul.mubr.bf16.gmra.mrb[0].mxu0 %v1106
        %v1676 = vpop.f32.mrb[0].mxu0
        %v1677 = vadd.f32 %v605, %v1676
        %v1678 = vpop.f32.mrb[0].mxu0
        %v1679 = vadd.f32 %v605, %v1678
        %v1680 = vpop.f32.mrb[0].mxu0
        %v1681 = vadd.f32 %v610, %v1680
        %v1682 = vpop.f32.mrb[0].mxu0
        %v1683 = vadd.f32 %v610, %v1682
        %1684 = vmatprep.mubr.bf16.mxu0 %v1111
        %1685 = vmatmul.mubr.bf16.gmra.mrb[0].mxu0 %v1110
        %v1686 = vpop.f32.mrb[0].mxu0
        %v1687 = vadd.f32 %v615, %v1686
        %v1688 = vpop.f32.mrb[0].mxu0
        %v1689 = vadd.f32 %v615, %v1688
        %v1690 = vpop.f32.mrb[0].mxu0
        %v1691 = vadd.f32 %v620, %v1690
        %v1692 = vpop.f32.mrb[0].mxu0
        %v1693 = vadd.f32 %v620, %v1692
        %1694 = vmatprep.mubr.bf16.mxu0 %v1115
        %1695 = vmatmul.mubr.bf16.gmra.mrb[0].mxu0 %v1114
        %v1696 = vpop.f32.mrb[0].mxu0
        %v1697 = vadd.f32 %v625, %v1696
        %v1698 = vpop.f32.mrb[0].mxu0
        %v1699 = vadd.f32 %v625, %v1698
        %v1700 = vpop.f32.mrb[0].mxu0
        %v1701 = vadd.f32 %v630, %v1700
        %v1702 = vpop.f32.mrb[0].mxu0
        %v1703 = vadd.f32 %v630, %v1702
        %1704 = vmatprep.mubr.bf16.mxu0 %v1119
        %1705 = vmatmul.mubr.bf16.gmra.mrb[0].mxu0 %v1118
        %v1706 = vpop.f32.mrb[0].mxu0
        %v1707 = vadd.f32 %v635, %v1706
        %v1708 = vpop.f32.mrb[0].mxu0
        %v1709 = vadd.f32 %v635, %v1708
        %v1710 = vpop.f32.mrb[0].mxu0
        %v1711 = vadd.f32 %v640, %v1710
        %v1712 = vpop.f32.mrb[0].mxu0
        %v1713 = vadd.f32 %v640, %v1712
        %1714 = vmatprep.mubr.bf16.mxu0 %v1123
        %1715 = vmatmul.mubr.bf16.gmra.mrb[0].mxu0 %v1122
        %v1716 = vpop.f32.mrb[0].mxu0
        %v1717 = vadd.f32 %v645, %v1716
        %v1718 = vpop.f32.mrb[0].mxu0
        %v1719 = vadd.f32 %v645, %v1718
        %v1720 = vpop.f32.mrb[0].mxu0
        %v1721 = vadd.f32 %v650, %v1720
        %v1722 = vpop.f32.mrb[0].mxu0
        %v1723 = vadd.f32 %v650, %v1722
        %1724 = vmatprep.mubr.bf16.mxu0 %v1127
        %1725 = vmatmul.mubr.bf16.gmra.mrb[0].mxu0 %v1126
        %v1726 = vpop.f32.mrb[0].mxu0
        %v1727 = vadd.f32 %v655, %v1726
        %v1728 = vpop.f32.mrb[0].mxu0
        %v1729 = vadd.f32 %v655, %v1728
        %v1730 = vpop.f32.mrb[0].mxu0
        %v1731 = vadd.f32 %v660, %v1730
        %v1732 = vpop.f32.mrb[0].mxu0
        %v1733 = vadd.f32 %v660, %v1732
        %1734 = vmatprep.mubr.bf16.mxu0 %v1131
        %1735 = vmatmul.mubr.bf16.gmra.mrb[0].mxu0 %v1130
        %v1736 = vpop.f32.mrb[0].mxu0
        %v1737 = vadd.f32 %v665, %v1736
        %v1738 = vpop.f32.mrb[0].mxu0
        %v1739 = vadd.f32 %v665, %v1738
        %v1740 = vpop.f32.mrb[0].mxu0
        %v1741 = vadd.f32 %v670, %v1740
        %v1742 = vpop.f32.mrb[0].mxu0
        %v1743 = vadd.f32 %v670, %v1742
        %1744 = vmatprep.mubr.bf16.mxu0 %v1135
        %1745 = vmatmul.mubr.bf16.gmra.mrb[0].mxu0 %v1134
        %v1746 = vpop.f32.mrb[0].mxu0
        %v1747 = vadd.f32 %v675, %v1746
        %v1748 = vpop.f32.mrb[0].mxu0
        %v1749 = vadd.f32 %v675, %v1748
        %v1750 = vpop.f32.mrb[0].mxu0
        %v1751 = vadd.f32 %v680, %v1750
        %v1752 = vpop.f32.mrb[0].mxu0
        %v1753 = vadd.f32 %v680, %v1752
        %1754 = vmatprep.mubr.bf16.mxu0 %v1139
        %1755 = vmatmul.mubr.bf16.gmra.mrb[0].mxu0 %v1138
        %v1756 = vpop.f32.mrb[0].mxu0
        %v1757 = vadd.f32 %v685, %v1756
        %v1758 = vpop.f32.mrb[0].mxu0
        %v1759 = vadd.f32 %v685, %v1758
        %v1760 = vpop.f32.mrb[0].mxu0
        %v1761 = vadd.f32 %v690, %v1760
        %v1762 = vpop.f32.mrb[0].mxu0
        %v1763 = vadd.f32 %v690, %v1762
        %1764 = vmatprep.mubr.bf16.mxu0 %v1143
        %1765 = vmatmul.mubr.bf16.gmra.mrb[0].mxu0 %v1142
        %v1766 = vpop.f32.mrb[0].mxu0
        %v1767 = vadd.f32 %v695, %v1766
        %v1768 = vpop.f32.mrb[0].mxu0
        %v1769 = vadd.f32 %v695, %v1768
        %v1770 = vpop.f32.mrb[0].mxu0
        %v1771 = vadd.f32 %v700, %v1770
        %v1772 = vpop.f32.mrb[0].mxu0
        %v1773 = vadd.f32 %v700, %v1772
        %1774 = vmatprep.mubr.bf16.mxu0 %v1147
        %1775 = vmatmul.mubr.bf16.gmra.mrb[0].mxu0 %v1146
        %v1776 = vpop.f32.mrb[0].mxu0
        %v1777 = vadd.f32 %v705, %v1776
        %v1778 = vpop.f32.mrb[0].mxu0
        %v1779 = vadd.f32 %v705, %v1778
        %v1780 = vpop.f32.mrb[0].mxu0
        %v1781 = vadd.f32 %v710, %v1780
        %v1782 = vpop.f32.mrb[0].mxu0
        %v1783 = vadd.f32 %v710, %v1782
        %1784 = vmatprep.mubr.bf16.mxu0 %v1151
        %1785 = vmatmul.mubr.bf16.gmra.mrb[0].mxu0 %v1150
        %v1786 = vpop.f32.mrb[0].mxu0
        %v1787 = vadd.f32 %v715, %v1786
        %v1788 = vpop.f32.mrb[0].mxu0
        %v1789 = vadd.f32 %v715, %v1788
        %v1790 = vpop.f32.mrb[0].mxu0
        %v1791 = vadd.f32 %v720, %v1790
        %v1792 = vpop.f32.mrb[0].mxu0
        %v1793 = vadd.f32 %v720, %v1792
        %1794 = vmatprep.mubr.bf16.mxu0 %v1155
        %1795 = vmatmul.mubr.bf16.gmra.mrb[0].mxu0 %v1154
        %v1796 = vpop.f32.mrb[0].mxu0
        %v1797 = vadd.f32 %v725, %v1796
        %v1798 = vpop.f32.mrb[0].mxu0
        %v1799 = vadd.f32 %v725, %v1798
        %v1800 = vpop.f32.mrb[0].mxu0
        %v1801 = vadd.f32 %v730, %v1800
        %v1802 = vpop.f32.mrb[0].mxu0
        %v1803 = vadd.f32 %v730, %v1802
        %1804 = vmatprep.mubr.bf16.mxu0 %v1159
        %1805 = vmatmul.mubr.bf16.gmra.mrb[0].mxu0 %v1158
        %v1806 = vpop.f32.mrb[0].mxu0
        %v1807 = vadd.f32 %v735, %v1806
        %v1808 = vpop.f32.mrb[0].mxu0
        %v1809 = vadd.f32 %v735, %v1808
        %v1810 = vpop.f32.mrb[0].mxu0
        %v1811 = vadd.f32 %v740, %v1810
        %v1812 = vpop.f32.mrb[0].mxu0
        %v1813 = vadd.f32 %v740, %v1812
        %1814 = vmatprep.mubr.bf16.mxu0 %v1163
        %1815 = vmatmul.mubr.bf16.gmra.mrb[0].mxu0 %v1162
        %v1816 = vpop.f32.mrb[0].mxu0
        %v1817 = vadd.f32 %v745, %v1816
        %v1818 = vpop.f32.mrb[0].mxu0
        %v1819 = vadd.f32 %v745, %v1818
        %v1820 = vpop.f32.mrb[0].mxu0
        %v1821 = vadd.f32 %v750, %v1820
        %v1822 = vpop.f32.mrb[0].mxu0
        %v1823 = vadd.f32 %v750, %v1822
        %1824 = vmatprep.mubr.bf16.mxu0 %v1167
        %1825 = vmatmul.mubr.bf16.gmra.mrb[0].mxu0 %v1166
        %v1826 = vpop.f32.mrb[0].mxu0
        %v1827 = vadd.f32 %v755, %v1826
        %v1828 = vpop.f32.mrb[0].mxu0
        %v1829 = vadd.f32 %v755, %v1828
        %v1830 = vpop.f32.mrb[0].mxu0
        %v1831 = vadd.f32 %v760, %v1830
        %v1832 = vpop.f32.mrb[0].mxu0
        %v1833 = vadd.f32 %v760, %v1832
        %1834 = vmatprep.mubr.bf16.mxu0 %v1171
        %1835 = vmatmul.mubr.bf16.gmra.mrb[0].mxu0 %v1170
        %v1836 = vpop.f32.mrb[0].mxu0
        %v1837 = vadd.f32 %v765, %v1836
        %v1838 = vpop.f32.mrb[0].mxu0
        %v1839 = vadd.f32 %v765, %v1838
        %v1840 = vpop.f32.mrb[0].mxu0
        %v1841 = vadd.f32 %v770, %v1840
        %v1842 = vpop.f32.mrb[0].mxu0
        %v1843 = vadd.f32 %v770, %v1842
        %1844 = vmatprep.mubr.bf16.mxu0 %v1175
        %1845 = vmatmul.mubr.bf16.gmra.mrb[0].mxu0 %v1174
        %v1846 = vpop.f32.mrb[0].mxu0
        %v1847 = vadd.f32 %v775, %v1846
        %v1848 = vpop.f32.mrb[0].mxu0
        %v1849 = vadd.f32 %v775, %v1848
        %v1850 = vpop.f32.mrb[0].mxu0
        %v1851 = vadd.f32 %v780, %v1850
        %v1852 = vpop.f32.mrb[0].mxu0
        %v1853 = vadd.f32 %v780, %v1852
        %1854 = vmatprep.mubr.bf16.mxu0 %v1179
        %1855 = vmatmul.mubr.bf16.gmra.mrb[0].mxu0 %v1178
        %v1856 = vpop.f32.mrb[0].mxu0
        %v1857 = vadd.f32 %v785, %v1856
        %v1858 = vpop.f32.mrb[0].mxu0
        %v1859 = vadd.f32 %v785, %v1858
        %v1860 = vpop.f32.mrb[0].mxu0
        %v1861 = vadd.f32 %v790, %v1860
        %v1862 = vpop.f32.mrb[0].mxu0
        %v1863 = vadd.f32 %v790, %v1862
        %1864 = vmatprep.mubr.bf16.mxu0 %v1183
        %1865 = vmatmul.mubr.bf16.gmra.mrb[0].mxu0 %v1182
        %v1866 = vpop.f32.mrb[0].mxu0
        %v1867 = vadd.f32 %v795, %v1866
        %v1868 = vpop.f32.mrb[0].mxu0
        %v1869 = vadd.f32 %v795, %v1868
        %v1870 = vpop.f32.mrb[0].mxu0
        %v1871 = vadd.f32 %v800, %v1870
        %v1872 = vpop.f32.mrb[0].mxu0
        %v1873 = vadd.f32 %v800, %v1872
        %1874 = vdwg.mxu0
        %1875 = vmatprep.subr.bf16.mxu0 %v1507
        %1876 = vmatpush1.bf16.msra.mxu0 %v1506
        %1877 = vmatprep.subr.bf16.mxu0 %v1509
        %1878 = vmatpush1.bf16.msra.mxu0 %v1508
        %1879 = vmatprep.subr.bf16.mxu0 %v1511
        %1880 = vmatpush1.bf16.msra.mxu0 %v1510
        %1881 = vmatprep.subr.bf16.mxu0 %v1513
        %1882 = vmatpush1.bf16.msra.mxu0 %v1512
        %1883 = vmatprep.subr.bf16.mxu0 %v1515
        %1884 = vmatpush1.bf16.msra.mxu0 %v1514
        %1885 = vmatprep.subr.bf16.mxu0 %v1517
        %1886 = vmatpush1.bf16.msra.mxu0 %v1516
        %1887 = vmatprep.subr.bf16.mxu0 %v1519
        %1888 = vmatpush1.bf16.msra.mxu0 %v1518
        %1889 = vmatprep.subr.bf16.mxu0 %v1521
        %1890 = vmatpush1.bf16.msra.mxu0 %v1520
        %1891 = vmatprep.subr.bf16.mxu0 %v1523
        %1892 = vmatpush1.bf16.msra.mxu0 %v1522
        %1893 = vmatprep.subr.bf16.mxu0 %v1525
        %1894 = vmatpush1.bf16.msra.mxu0 %v1524
        %1895 = vmatprep.subr.bf16.mxu0 %v1527
        %1896 = vmatpush1.bf16.msra.mxu0 %v1526
        %1897 = vmatprep.subr.bf16.mxu0 %v1529
        %1898 = vmatpush1.bf16.msra.mxu0 %v1528
        %1899 = vmatprep.subr.bf16.mxu0 %v1531
        %1900 = vmatpush1.bf16.msra.mxu0 %v1530
        %1901 = vmatprep.subr.bf16.mxu0 %v1533
        %1902 = vmatpush1.bf16.msra.mxu0 %v1532
        %1903 = vmatprep.subr.bf16.mxu0 %v1535
        %1904 = vmatpush1.bf16.msra.mxu0 %v1534
        %1905 = vmatprep.subr.bf16.mxu0 %v1537
        %1906 = vmatpush1.bf16.msra.mxu0 %v1536
        %1907 = vmatprep.mubr.bf16.mxu0 %v1093
        %1908 = vmatmul.mubr.bf16.gmra.mrb[0].mxu0 %v1092
        %v1909 = vpop.f32.mrb[0].mxu0
        %v1910 = vadd.f32 %v1637, %v1909
        %v1911 = vpop.f32.mrb[0].mxu0
        %v1912 = vadd.f32 %v1639, %v1911
        %v1913 = vpop.f32.mrb[0].mxu0
        %v1914 = vadd.f32 %v1641, %v1913
        %v1915 = vpop.f32.mrb[0].mxu0
        %v1916 = vadd.f32 %v1643, %v1915
        %1917 = vmatprep.mubr.bf16.mxu0 %v1097
        %1918 = vmatmul.mubr.bf16.gmra.mrb[0].mxu0 %v1096
        %v1919 = vpop.f32.mrb[0].mxu0
        %v1920 = vadd.f32 %v1647, %v1919
        %v1921 = vpop.f32.mrb[0].mxu0
        %v1922 = vadd.f32 %v1649, %v1921
        %v1923 = vpop.f32.mrb[0].mxu0
        %v1924 = vadd.f32 %v1651, %v1923
        %v1925 = vpop.f32.mrb[0].mxu0
        %v1926 = vadd.f32 %v1653, %v1925
        %1927 = vmatprep.mubr.bf16.mxu0 %v1101
        %1928 = vmatmul.mubr.bf16.gmra.mrb[0].mxu0 %v1100
        %v1929 = vpop.f32.mrb[0].mxu0
        %v1930 = vadd.f32 %v1657, %v1929
        %v1931 = vpop.f32.mrb[0].mxu0
        %v1932 = vadd.f32 %v1659, %v1931
        %v1933 = vpop.f32.mrb[0].mxu0
        %v1934 = vadd.f32 %v1661, %v1933
        %v1935 = vpop.f32.mrb[0].mxu0
        %v1936 = vadd.f32 %v1663, %v1935
        %1937 = vmatprep.mubr.bf16.mxu0 %v1105
        %1938 = vmatmul.mubr.bf16.gmra.mrb[0].mxu0 %v1104
        %v1939 = vpop.f32.mrb[0].mxu0
        %v1940 = vadd.f32 %v1667, %v1939
        %v1941 = vpop.f32.mrb[0].mxu0
        %v1942 = vadd.f32 %v1669, %v1941
        %v1943 = vpop.f32.mrb[0].mxu0
        %v1944 = vadd.f32 %v1671, %v1943
        %v1945 = vpop.f32.mrb[0].mxu0
        %v1946 = vadd.f32 %v1673, %v1945
        %1947 = vmatprep.mubr.bf16.mxu0 %v1109
        %1948 = vmatmul.mubr.bf16.gmra.mrb[0].mxu0 %v1108
        %v1949 = vpop.f32.mrb[0].mxu0
        %v1950 = vadd.f32 %v1677, %v1949
        %v1951 = vpop.f32.mrb[0].mxu0
        %v1952 = vadd.f32 %v1679, %v1951
        %v1953 = vpop.f32.mrb[0].mxu0
        %v1954 = vadd.f32 %v1681, %v1953
        %v1955 = vpop.f32.mrb[0].mxu0
        %v1956 = vadd.f32 %v1683, %v1955
        %1957 = vmatprep.mubr.bf16.mxu0 %v1113
        %1958 = vmatmul.mubr.bf16.gmra.mrb[0].mxu0 %v1112
        %v1959 = vpop.f32.mrb[0].mxu0
        %v1960 = vadd.f32 %v1687, %v1959
        %v1961 = vpop.f32.mrb[0].mxu0
        %v1962 = vadd.f32 %v1689, %v1961
        %v1963 = vpop.f32.mrb[0].mxu0
        %v1964 = vadd.f32 %v1691, %v1963
        %v1965 = vpop.f32.mrb[0].mxu0
        %v1966 = vadd.f32 %v1693, %v1965
        %1967 = vmatprep.mubr.bf16.mxu0 %v1117
        %1968 = vmatmul.mubr.bf16.gmra.mrb[0].mxu0 %v1116
        %v1969 = vpop.f32.mrb[0].mxu0
        %v1970 = vadd.f32 %v1697, %v1969
        %v1971 = vpop.f32.mrb[0].mxu0
        %v1972 = vadd.f32 %v1699, %v1971
        %v1973 = vpop.f32.mrb[0].mxu0
        %v1974 = vadd.f32 %v1701, %v1973
        %v1975 = vpop.f32.mrb[0].mxu0
        %v1976 = vadd.f32 %v1703, %v1975
        %1977 = vmatprep.mubr.bf16.mxu0 %v1121
        %1978 = vmatmul.mubr.bf16.gmra.mrb[0].mxu0 %v1120
        %v1979 = vpop.f32.mrb[0].mxu0
        %v1980 = vadd.f32 %v1707, %v1979
        %v1981 = vpop.f32.mrb[0].mxu0
        %v1982 = vadd.f32 %v1709, %v1981
        %v1983 = vpop.f32.mrb[0].mxu0
        %v1984 = vadd.f32 %v1711, %v1983
        %v1985 = vpop.f32.mrb[0].mxu0
        %v1986 = vadd.f32 %v1713, %v1985
        %1987 = vmatprep.mubr.bf16.mxu0 %v1125
        %1988 = vmatmul.mubr.bf16.gmra.mrb[0].mxu0 %v1124
        %v1989 = vpop.f32.mrb[0].mxu0
        %v1990 = vadd.f32 %v1717, %v1989
        %v1991 = vpop.f32.mrb[0].mxu0
        %v1992 = vadd.f32 %v1719, %v1991
        %v1993 = vpop.f32.mrb[0].mxu0
        %v1994 = vadd.f32 %v1721, %v1993
        %v1995 = vpop.f32.mrb[0].mxu0
        %v1996 = vadd.f32 %v1723, %v1995
        %1997 = vmatprep.mubr.bf16.mxu0 %v1129
        %1998 = vmatmul.mubr.bf16.gmra.mrb[0].mxu0 %v1128
        %v1999 = vpop.f32.mrb[0].mxu0
        %v2000 = vadd.f32 %v1727, %v1999
        %v2001 = vpop.f32.mrb[0].mxu0
        %v2002 = vadd.f32 %v1729, %v2001
        %v2003 = vpop.f32.mrb[0].mxu0
        %v2004 = vadd.f32 %v1731, %v2003
        %v2005 = vpop.f32.mrb[0].mxu0
        %v2006 = vadd.f32 %v1733, %v2005
        %2007 = vmatprep.mubr.bf16.mxu0 %v1133
        %2008 = vmatmul.mubr.bf16.gmra.mrb[0].mxu0 %v1132
        %v2009 = vpop.f32.mrb[0].mxu0
        %v2010 = vadd.f32 %v1737, %v2009
        %v2011 = vpop.f32.mrb[0].mxu0
        %v2012 = vadd.f32 %v1739, %v2011
        %v2013 = vpop.f32.mrb[0].mxu0
        %v2014 = vadd.f32 %v1741, %v2013
        %v2015 = vpop.f32.mrb[0].mxu0
        %v2016 = vadd.f32 %v1743, %v2015
        %2017 = vmatprep.mubr.bf16.mxu0 %v1137
        %2018 = vmatmul.mubr.bf16.gmra.mrb[0].mxu0 %v1136
        %v2019 = vpop.f32.mrb[0].mxu0
        %v2020 = vadd.f32 %v1747, %v2019
        %v2021 = vpop.f32.mrb[0].mxu0
        %v2022 = vadd.f32 %v1749, %v2021
        %v2023 = vpop.f32.mrb[0].mxu0
        %v2024 = vadd.f32 %v1751, %v2023
        %v2025 = vpop.f32.mrb[0].mxu0
        %v2026 = vadd.f32 %v1753, %v2025
        %2027 = vmatprep.mubr.bf16.mxu0 %v1141
        %2028 = vmatmul.mubr.bf16.gmra.mrb[0].mxu0 %v1140
        %v2029 = vpop.f32.mrb[0].mxu0
        %v2030 = vadd.f32 %v1757, %v2029
        %v2031 = vpop.f32.mrb[0].mxu0
        %v2032 = vadd.f32 %v1759, %v2031
        %v2033 = vpop.f32.mrb[0].mxu0
        %v2034 = vadd.f32 %v1761, %v2033
        %v2035 = vpop.f32.mrb[0].mxu0
        %v2036 = vadd.f32 %v1763, %v2035
        %2037 = vmatprep.mubr.bf16.mxu0 %v1145
        %2038 = vmatmul.mubr.bf16.gmra.mrb[0].mxu0 %v1144
        %v2039 = vpop.f32.mrb[0].mxu0
        %v2040 = vadd.f32 %v1767, %v2039
        %v2041 = vpop.f32.mrb[0].mxu0
        %v2042 = vadd.f32 %v1769, %v2041
        %v2043 = vpop.f32.mrb[0].mxu0
        %v2044 = vadd.f32 %v1771, %v2043
        %v2045 = vpop.f32.mrb[0].mxu0
        %v2046 = vadd.f32 %v1773, %v2045
        %2047 = vmatprep.mubr.bf16.mxu0 %v1149
        %2048 = vmatmul.mubr.bf16.gmra.mrb[0].mxu0 %v1148
        %v2049 = vpop.f32.mrb[0].mxu0
        %v2050 = vadd.f32 %v1777, %v2049
        %v2051 = vpop.f32.mrb[0].mxu0
        %v2052 = vadd.f32 %v1779, %v2051
        %v2053 = vpop.f32.mrb[0].mxu0
        %v2054 = vadd.f32 %v1781, %v2053
        %v2055 = vpop.f32.mrb[0].mxu0
        %v2056 = vadd.f32 %v1783, %v2055
        %2057 = vmatprep.mubr.bf16.mxu0 %v1153
        %2058 = vmatmul.mubr.bf16.gmra.mrb[0].mxu0 %v1152
        %v2059 = vpop.f32.mrb[0].mxu0
        %v2060 = vadd.f32 %v1787, %v2059
        %v2061 = vpop.f32.mrb[0].mxu0
        %v2062 = vadd.f32 %v1789, %v2061
        %v2063 = vpop.f32.mrb[0].mxu0
        %v2064 = vadd.f32 %v1791, %v2063
        %v2065 = vpop.f32.mrb[0].mxu0
        %v2066 = vadd.f32 %v1793, %v2065
        %2067 = vmatprep.mubr.bf16.mxu0 %v1157
        %2068 = vmatmul.mubr.bf16.gmra.mrb[0].mxu0 %v1156
        %v2069 = vpop.f32.mrb[0].mxu0
        %v2070 = vadd.f32 %v1797, %v2069
        %v2071 = vpop.f32.mrb[0].mxu0
        %v2072 = vadd.f32 %v1799, %v2071
        %v2073 = vpop.f32.mrb[0].mxu0
        %v2074 = vadd.f32 %v1801, %v2073
        %v2075 = vpop.f32.mrb[0].mxu0
        %v2076 = vadd.f32 %v1803, %v2075
        %2077 = vmatprep.mubr.bf16.mxu0 %v1161
        %2078 = vmatmul.mubr.bf16.gmra.mrb[0].mxu0 %v1160
        %v2079 = vpop.f32.mrb[0].mxu0
        %v2080 = vadd.f32 %v1807, %v2079
        %v2081 = vpop.f32.mrb[0].mxu0
        %v2082 = vadd.f32 %v1809, %v2081
        %v2083 = vpop.f32.mrb[0].mxu0
        %v2084 = vadd.f32 %v1811, %v2083
        %v2085 = vpop.f32.mrb[0].mxu0
        %v2086 = vadd.f32 %v1813, %v2085
        %2087 = vmatprep.mubr.bf16.mxu0 %v1165
        %2088 = vmatmul.mubr.bf16.gmra.mrb[0].mxu0 %v1164
        %v2089 = vpop.f32.mrb[0].mxu0
        %v2090 = vadd.f32 %v1817, %v2089
        %v2091 = vpop.f32.mrb[0].mxu0
        %v2092 = vadd.f32 %v1819, %v2091
        %v2093 = vpop.f32.mrb[0].mxu0
        %v2094 = vadd.f32 %v1821, %v2093
        %v2095 = vpop.f32.mrb[0].mxu0
        %v2096 = vadd.f32 %v1823, %v2095
        %2097 = vmatprep.mubr.bf16.mxu0 %v1169
        %2098 = vmatmul.mubr.bf16.gmra.mrb[0].mxu0 %v1168
        %v2099 = vpop.f32.mrb[0].mxu0
        %v2100 = vadd.f32 %v1827, %v2099
        %v2101 = vpop.f32.mrb[0].mxu0
        %v2102 = vadd.f32 %v1829, %v2101
        %v2103 = vpop.f32.mrb[0].mxu0
        %v2104 = vadd.f32 %v1831, %v2103
        %v2105 = vpop.f32.mrb[0].mxu0
        %v2106 = vadd.f32 %v1833, %v2105
        %2107 = vmatprep.mubr.bf16.mxu0 %v1173
        %2108 = vmatmul.mubr.bf16.gmra.mrb[0].mxu0 %v1172
        %v2109 = vpop.f32.mrb[0].mxu0
        %v2110 = vadd.f32 %v1837, %v2109
        %v2111 = vpop.f32.mrb[0].mxu0
        %v2112 = vadd.f32 %v1839, %v2111
        %v2113 = vpop.f32.mrb[0].mxu0
        %v2114 = vadd.f32 %v1841, %v2113
        %v2115 = vpop.f32.mrb[0].mxu0
        %v2116 = vadd.f32 %v1843, %v2115
        %2117 = vmatprep.mubr.bf16.mxu0 %v1177
        %2118 = vmatmul.mubr.bf16.gmra.mrb[0].mxu0 %v1176
        %v2119 = vpop.f32.mrb[0].mxu0
        %v2120 = vadd.f32 %v1847, %v2119
        %v2121 = vpop.f32.mrb[0].mxu0
        %v2122 = vadd.f32 %v1849, %v2121
        %v2123 = vpop.f32.mrb[0].mxu0
        %v2124 = vadd.f32 %v1851, %v2123
        %v2125 = vpop.f32.mrb[0].mxu0
        %v2126 = vadd.f32 %v1853, %v2125
        %2127 = vmatprep.mubr.bf16.mxu0 %v1181
        %2128 = vmatmul.mubr.bf16.gmra.mrb[0].mxu0 %v1180
        %v2129 = vpop.f32.mrb[0].mxu0
        %v2130 = vadd.f32 %v1857, %v2129
        %v2131 = vpop.f32.mrb[0].mxu0
        %v2132 = vadd.f32 %v1859, %v2131
        %v2133 = vpop.f32.mrb[0].mxu0
        %v2134 = vadd.f32 %v1861, %v2133
        %v2135 = vpop.f32.mrb[0].mxu0
        %v2136 = vadd.f32 %v1863, %v2135
        %2137 = vmatprep.mubr.bf16.mxu0 %v1185
        %2138 = vmatmul.mubr.bf16.gmra.mrb[0].mxu0 %v1184
        %v2139 = vpop.f32.mrb[0].mxu0
        %v2140 = vadd.f32 %v1867, %v2139
        %v2141 = vpop.f32.mrb[0].mxu0
        %v2142 = vadd.f32 %v1869, %v2141
        %v2143 = vpop.f32.mrb[0].mxu0
        %v2144 = vadd.f32 %v1871, %v2143
        %v2145 = vpop.f32.mrb[0].mxu0
        %v2146 = vadd.f32 %v1873, %v2145
        %2147 = vdwg.mxu0
        %v2148 = vpack.c.bf16 %v1914, %v1910
        %v2149 = vpack.c.bf16 %v1916, %v1912
        %v2150 = vpack.c.bf16 %v1924, %v1920
        %v2151 = vpack.c.bf16 %v1926, %v1922
        %v2152 = vpack.c.bf16 %v1934, %v1930
        %v2153 = vpack.c.bf16 %v1936, %v1932
        %v2154 = vpack.c.bf16 %v1944, %v1940
        %v2155 = vpack.c.bf16 %v1946, %v1942
        %v2156 = vpack.c.bf16 %v1954, %v1950
        %v2157 = vpack.c.bf16 %v1956, %v1952
        %v2158 = vpack.c.bf16 %v1964, %v1960
        %v2159 = vpack.c.bf16 %v1966, %v1962
        %v2160 = vpack.c.bf16 %v1974, %v1970
        %v2161 = vpack.c.bf16 %v1976, %v1972
        %v2162 = vpack.c.bf16 %v1984, %v1980
        %v2163 = vpack.c.bf16 %v1986, %v1982
        %v2164 = vpack.c.bf16 %v1994, %v1990
        %v2165 = vpack.c.bf16 %v1996, %v1992
        %v2166 = vpack.c.bf16 %v2004, %v2000
        %v2167 = vpack.c.bf16 %v2006, %v2002
        %v2168 = vpack.c.bf16 %v2014, %v2010
        %v2169 = vpack.c.bf16 %v2016, %v2012
        %v2170 = vpack.c.bf16 %v2024, %v2020
        %v2171 = vpack.c.bf16 %v2026, %v2022
        %v2172 = vpack.c.bf16 %v2034, %v2030
        %v2173 = vpack.c.bf16 %v2036, %v2032
        %v2174 = vpack.c.bf16 %v2044, %v2040
        %v2175 = vpack.c.bf16 %v2046, %v2042
        %v2176 = vpack.c.bf16 %v2054, %v2050
        %v2177 = vpack.c.bf16 %v2056, %v2052
        %v2178 = vpack.c.bf16 %v2064, %v2060
        %v2179 = vpack.c.bf16 %v2066, %v2062
        %v2180 = vpack.c.bf16 %v2074, %v2070
        %v2181 = vpack.c.bf16 %v2076, %v2072
        %v2182 = vpack.c.bf16 %v2084, %v2080
        %v2183 = vpack.c.bf16 %v2086, %v2082
        %v2184 = vpack.c.bf16 %v2094, %v2090
        %v2185 = vpack.c.bf16 %v2096, %v2092
        %v2186 = vpack.c.bf16 %v2104, %v2100
        %v2187 = vpack.c.bf16 %v2106, %v2102
        %v2188 = vpack.c.bf16 %v2114, %v2110
        %v2189 = vpack.c.bf16 %v2116, %v2112
        %v2190 = vpack.c.bf16 %v2124, %v2120
        %v2191 = vpack.c.bf16 %v2126, %v2122
        %v2192 = vpack.c.bf16 %v2134, %v2130
        %v2193 = vpack.c.bf16 %v2136, %v2132
        %v2194 = vpack.c.bf16 %v2144, %v2140
        %v2195 = vpack.c.bf16 %v2146, %v2142
        %vm2196 = vcmask 523264
        %v2198 = vsel %vm2196, %v2148, 0
        %v2201 = vsel %vm2196, %v2150, 0
        %v2204 = vsel %vm2196, %v2152, 0
        %v2207 = vsel %vm2196, %v2154, 0
        %v2210 = vsel %vm2196, %v2156, 0
        %v2213 = vsel %vm2196, %v2158, 0
        %v2216 = vsel %vm2196, %v2160, 0
        %v2219 = vsel %vm2196, %v2162, 0
        %v2222 = vsel %vm2196, %v2164, 0
        %v2225 = vsel %vm2196, %v2166, 0
        %v2228 = vsel %vm2196, %v2168, 0
        %v2231 = vsel %vm2196, %v2170, 0
        %v2234 = vsel %vm2196, %v2172, 0
        %v2237 = vsel %vm2196, %v2174, 0
        %v2240 = vsel %vm2196, %v2176, 0
        %v2243 = vsel %vm2196, %v2178, 0
        %v2246 = vsel %vm2196, %v2180, 0
        %v2249 = vsel %vm2196, %v2182, 0
        %v2252 = vsel %vm2196, %v2184, 0
        %v2255 = vsel %vm2196, %v2186, 0
        %v2258 = vsel %vm2196, %v2188, 0
        %v2261 = vsel %vm2196, %v2190, 0
        %v2264 = vsel %vm2196, %v2192, 0
        %v2267 = vsel %vm2196, %v2194, 0
        %2269 = vmatprep.subr.bf16.mxu0 0
        %2270 = vmatpush1.bf16.xpose.msra.mxu0 %v2246
        %2271 = vmatprep.subr.bf16.mxu0 0
        %2272 = vmatpush1.bf16.xpose.msra.mxu0 %v2249
        %2273 = vmatprep.subr.bf16.mxu0 0
        %2274 = vmatpush1.bf16.xpose.msra.mxu0 %v2252
        %2275 = vmatprep.subr.bf16.mxu0 0
        %2276 = vmatpush1.bf16.xpose.msra.mxu0 %v2255
        %2277 = vmatprep.subr.bf16.mxu0 0
        %2278 = vmatpush1.bf16.xpose.msra.mxu0 %v2258
        %2279 = vmatprep.subr.bf16.mxu0 0
        %2280 = vmatpush1.bf16.xpose.msra.mxu0 %v2261
        %2281 = vmatprep.subr.bf16.mxu0 0
        %2282 = vmatpush1.bf16.xpose.msra.mxu0 %v2264
        %2283 = vmatprep.subr.bf16.mxu0 0
        %2284 = vmatpush1.bf16.xpose.msra.mxu0 %v2267
        %2285 = vmatprep.subr.bf16.mxu0 0
        %2286 = vmatpush1.bf16.xpose.msra.mxu0 0
        %2287 = vmatprep.subr.bf16.mxu0 0
        %2288 = vmatpush1.bf16.xpose.msra.mxu0 0
        %2289 = vmatprep.subr.bf16.mxu0 0
        %2290 = vmatpush1.bf16.xpose.msra.mxu0 0
        %2291 = vmatprep.subr.bf16.mxu0 0
        %2292 = vmatpush1.bf16.xpose.msra.mxu0 0
        %2293 = vmatprep.subr.bf16.mxu0 0
        %2294 = vmatpush1.bf16.xpose.msra.mxu0 0
        %2295 = vmatprep.subr.bf16.mxu0 0
        %2296 = vmatpush1.bf16.xpose.msra.mxu0 0
        %2297 = vmatprep.subr.bf16.mxu0 0
        %2298 = vmatpush1.bf16.xpose.msra.mxu0 0
        %2299 = vmatprep.subr.bf16.mxu0 0
        %2300 = vmatpush1.bf16.xpose.msra.mxu0 0
        %2301 = vmatprep.mubr.bf16.mxu0 0
        %2302 = vmatmul.mubr.bf16.gmra.mrb[0].mxu0 %v2198
        %v2303 = vpop.f32.mrb[0].mxu0
        %v2304 = vadd.f32 0.0, %v2303
        %v2305 = vpop.f32.mrb[0].mxu0
        %v2306 = vpop.f32.mrb[0].mxu0
        %v2307 = vadd.f32 0.0, %v2306
        %v2308 = vpop.f32.mrb[0].mxu0
        %2309 = vmatprep.mubr.bf16.mxu0 0
        %2310 = vmatmul.mubr.bf16.gmra.mrb[0].mxu0 %v2201
        %v2311 = vpop.f32.mrb[0].mxu0
        %v2312 = vadd.f32 0.0, %v2311
        %v2313 = vpop.f32.mrb[0].mxu0
        %v2314 = vpop.f32.mrb[0].mxu0
        %v2315 = vadd.f32 0.0, %v2314
        %v2316 = vpop.f32.mrb[0].mxu0
        %2317 = vmatprep.mubr.bf16.mxu0 0
        %2318 = vmatmul.mubr.bf16.gmra.mrb[0].mxu0 %v2204
        %v2319 = vpop.f32.mrb[0].mxu0
        %v2320 = vadd.f32 0.0, %v2319
        %v2321 = vpop.f32.mrb[0].mxu0
        %v2322 = vpop.f32.mrb[0].mxu0
        %v2323 = vadd.f32 0.0, %v2322
        %v2324 = vpop.f32.mrb[0].mxu0
        %2325 = vmatprep.mubr.bf16.mxu0 0
        %2326 = vmatmul.mubr.bf16.gmra.mrb[0].mxu0 %v2207
        %v2327 = vpop.f32.mrb[0].mxu0
        %v2328 = vadd.f32 0.0, %v2327
        %v2329 = vpop.f32.mrb[0].mxu0
        %v2330 = vpop.f32.mrb[0].mxu0
        %v2331 = vadd.f32 0.0, %v2330
        %v2332 = vpop.f32.mrb[0].mxu0
        %2333 = vmatprep.mubr.bf16.mxu0 0
        %2334 = vmatmul.mubr.bf16.gmra.mrb[0].mxu0 %v2210
        %v2335 = vpop.f32.mrb[0].mxu0
        %v2336 = vadd.f32 0.0, %v2335
        %v2337 = vpop.f32.mrb[0].mxu0
        %v2338 = vpop.f32.mrb[0].mxu0
        %v2339 = vadd.f32 0.0, %v2338
        %v2340 = vpop.f32.mrb[0].mxu0
        %2341 = vmatprep.mubr.bf16.mxu0 0
        %2342 = vmatmul.mubr.bf16.gmra.mrb[0].mxu0 %v2213
        %v2343 = vpop.f32.mrb[0].mxu0
        %v2344 = vadd.f32 0.0, %v2343
        %v2345 = vpop.f32.mrb[0].mxu0
        %v2346 = vpop.f32.mrb[0].mxu0
        %v2347 = vadd.f32 0.0, %v2346
        %v2348 = vpop.f32.mrb[0].mxu0
        %2349 = vmatprep.mubr.bf16.mxu0 0
        %2350 = vmatmul.mubr.bf16.gmra.mrb[0].mxu0 %v2216
        %v2351 = vpop.f32.mrb[0].mxu0
        %v2352 = vadd.f32 0.0, %v2351
        %v2353 = vpop.f32.mrb[0].mxu0
        %v2354 = vpop.f32.mrb[0].mxu0
        %v2355 = vadd.f32 0.0, %v2354
        %v2356 = vpop.f32.mrb[0].mxu0
        %2357 = vmatprep.mubr.bf16.mxu0 0
        %2358 = vmatmul.mubr.bf16.gmra.mrb[0].mxu0 %v2219
        %v2359 = vpop.f32.mrb[0].mxu0
        %v2360 = vadd.f32 0.0, %v2359
        %v2361 = vpop.f32.mrb[0].mxu0
        %v2362 = vpop.f32.mrb[0].mxu0
        %v2363 = vadd.f32 0.0, %v2362
        %v2364 = vpop.f32.mrb[0].mxu0
        %2365 = vmatprep.mubr.bf16.mxu0 0
        %2366 = vmatmul.mubr.bf16.gmra.mrb[0].mxu0 %v2222
        %v2367 = vpop.f32.mrb[0].mxu0
        %v2368 = vadd.f32 0.0, %v2367
        %v2369 = vpop.f32.mrb[0].mxu0
        %v2370 = vpop.f32.mrb[0].mxu0
        %v2371 = vadd.f32 0.0, %v2370
        %v2372 = vpop.f32.mrb[0].mxu0
        %2373 = vmatprep.mubr.bf16.mxu0 0
        %2374 = vmatmul.mubr.bf16.gmra.mrb[0].mxu0 %v2225
        %v2375 = vpop.f32.mrb[0].mxu0
        %v2376 = vadd.f32 0.0, %v2375
        %v2377 = vpop.f32.mrb[0].mxu0
        %v2378 = vpop.f32.mrb[0].mxu0
        %v2379 = vadd.f32 0.0, %v2378
        %v2380 = vpop.f32.mrb[0].mxu0
        %2381 = vmatprep.mubr.bf16.mxu0 0
        %2382 = vmatmul.mubr.bf16.gmra.mrb[0].mxu0 %v2228
        %v2383 = vpop.f32.mrb[0].mxu0
        %v2384 = vadd.f32 0.0, %v2383
        %v2385 = vpop.f32.mrb[0].mxu0
        %v2386 = vpop.f32.mrb[0].mxu0
        %v2387 = vadd.f32 0.0, %v2386
        %v2388 = vpop.f32.mrb[0].mxu0
        %2389 = vmatprep.mubr.bf16.mxu0 0
        %2390 = vmatmul.mubr.bf16.gmra.mrb[0].mxu0 %v2231
        %v2391 = vpop.f32.mrb[0].mxu0
        %v2392 = vadd.f32 0.0, %v2391
        %v2393 = vpop.f32.mrb[0].mxu0
        %v2394 = vpop.f32.mrb[0].mxu0
        %v2395 = vadd.f32 0.0, %v2394
        %v2396 = vpop.f32.mrb[0].mxu0
        %2397 = vmatprep.mubr.bf16.mxu0 0
        %2398 = vmatmul.mubr.bf16.gmra.mrb[0].mxu0 %v2234
        %v2399 = vpop.f32.mrb[0].mxu0
        %v2400 = vadd.f32 0.0, %v2399
        %v2401 = vpop.f32.mrb[0].mxu0
        %v2402 = vpop.f32.mrb[0].mxu0
        %v2403 = vadd.f32 0.0, %v2402
        %v2404 = vpop.f32.mrb[0].mxu0
        %2405 = vmatprep.mubr.bf16.mxu0 0
        %2406 = vmatmul.mubr.bf16.gmra.mrb[0].mxu0 %v2237
        %v2407 = vpop.f32.mrb[0].mxu0
        %v2408 = vadd.f32 0.0, %v2407
        %v2409 = vpop.f32.mrb[0].mxu0
        %v2410 = vpop.f32.mrb[0].mxu0
        %v2411 = vadd.f32 0.0, %v2410
        %v2412 = vpop.f32.mrb[0].mxu0
        %2413 = vmatprep.mubr.bf16.mxu0 0
        %2414 = vmatmul.mubr.bf16.gmra.mrb[0].mxu0 %v2240
        %v2415 = vpop.f32.mrb[0].mxu0
        %v2416 = vadd.f32 0.0, %v2415
        %v2417 = vpop.f32.mrb[0].mxu0
        %v2418 = vpop.f32.mrb[0].mxu0
        %v2419 = vadd.f32 0.0, %v2418
        %v2420 = vpop.f32.mrb[0].mxu0
        %2421 = vmatprep.mubr.bf16.mxu0 0
        %2422 = vmatmul.mubr.bf16.gmra.mrb[0].mxu0 %v2243
        %v2423 = vpop.f32.mrb[0].mxu0
        %v2424 = vadd.f32 0.0, %v2423
        %v2425 = vpop.f32.mrb[0].mxu0
        %v2426 = vpop.f32.mrb[0].mxu0
        %v2427 = vadd.f32 0.0, %v2426
        %v2428 = vpop.f32.mrb[0].mxu0
        %2429 = vdwg.mxu0
        %2446 = vrot.lane.b32.xlu0 %v2148, 64
        %v2447 = vpop.permute.xlu0 %2446
        %2448 = vrot.lane.b32.xlu0 %v2150, 64
        %v2449 = vpop.permute.xlu0 %2448
        %2450 = vrot.lane.b32.xlu0 %v2152, 64
        %v2451 = vpop.permute.xlu0 %2450
        %2452 = vrot.lane.b32.xlu0 %v2154, 64
        %v2453 = vpop.permute.xlu0 %2452
        %2454 = vrot.lane.b32.xlu0 %v2156, 64
        %v2455 = vpop.permute.xlu0 %2454
        %2456 = vrot.lane.b32.xlu0 %v2158, 64
        %v2457 = vpop.permute.xlu0 %2456
        %2458 = vrot.lane.b32.xlu0 %v2160, 64
        %v2459 = vpop.permute.xlu0 %2458
        %2460 = vrot.lane.b32.xlu0 %v2162, 64
        %v2461 = vpop.permute.xlu0 %2460
        %2462 = vrot.lane.b32.xlu0 %v2164, 64
        %v2463 = vpop.permute.xlu0 %2462
        %2464 = vrot.lane.b32.xlu0 %v2166, 64
        %v2465 = vpop.permute.xlu0 %2464
        %2466 = vrot.lane.b32.xlu0 %v2168, 64
        %v2467 = vpop.permute.xlu0 %2466
        %2468 = vrot.lane.b32.xlu0 %v2170, 64
        %v2469 = vpop.permute.xlu0 %2468
        %2470 = vrot.lane.b32.xlu0 %v2172, 64
        %v2471 = vpop.permute.xlu0 %2470
        %2472 = vrot.lane.b32.xlu0 %v2174, 64
        %v2473 = vpop.permute.xlu0 %2472
        %2474 = vrot.lane.b32.xlu0 %v2176, 64
        %v2475 = vpop.permute.xlu0 %2474
        %2476 = vrot.lane.b32.xlu0 %v2178, 64
        %v2477 = vpop.permute.xlu0 %2476
        %2486 = vrot.lane.b32.xlu0 %v2180, 64
        %v2487 = vpop.permute.xlu0 %2486
        %2488 = vrot.lane.b32.xlu0 %v2182, 64
        %v2489 = vpop.permute.xlu0 %2488
        %2490 = vrot.lane.b32.xlu0 %v2184, 64
        %v2491 = vpop.permute.xlu0 %2490
        %2492 = vrot.lane.b32.xlu0 %v2186, 64
        %v2493 = vpop.permute.xlu0 %2492
        %2494 = vrot.lane.b32.xlu0 %v2188, 64
        %v2495 = vpop.permute.xlu0 %2494
        %2496 = vrot.lane.b32.xlu0 %v2190, 64
        %v2497 = vpop.permute.xlu0 %2496
        %2498 = vrot.lane.b32.xlu0 %v2192, 64
        %v2499 = vpop.permute.xlu0 %2498
        %2500 = vrot.lane.b32.xlu0 %v2194, 64
        %v2501 = vpop.permute.xlu0 %2500
        %v2503 = vsel %vm2196, %v2447, 0
        %v2506 = vsel %vm2196, %v2449, 0
        %v2509 = vsel %vm2196, %v2451, 0
        %v2512 = vsel %vm2196, %v2453, 0
        %v2515 = vsel %vm2196, %v2455, 0
        %v2518 = vsel %vm2196, %v2457, 0
        %v2521 = vsel %vm2196, %v2459, 0
        %v2524 = vsel %vm2196, %v2461, 0
        %v2527 = vsel %vm2196, %v2463, 0
        %v2530 = vsel %vm2196, %v2465, 0
        %v2533 = vsel %vm2196, %v2467, 0
        %v2536 = vsel %vm2196, %v2469, 0
        %v2539 = vsel %vm2196, %v2471, 0
        %v2542 = vsel %vm2196, %v2473, 0
        %v2545 = vsel %vm2196, %v2475, 0
        %v2548 = vsel %vm2196, %v2477, 0
        %v2551 = vsel %vm2196, %v2487, 0
        %v2554 = vsel %vm2196, %v2489, 0
        %v2557 = vsel %vm2196, %v2491, 0
        %v2560 = vsel %vm2196, %v2493, 0
        %v2563 = vsel %vm2196, %v2495, 0
        %v2566 = vsel %vm2196, %v2497, 0
        %v2569 = vsel %vm2196, %v2499, 0
        %v2572 = vsel %vm2196, %v2501, 0
        %2574 = vmatprep.subr.bf16.mxu0 0
        %2575 = vmatpush1.bf16.xpose.msra.mxu0 %v2551
        %2576 = vmatprep.subr.bf16.mxu0 0
        %2577 = vmatpush1.bf16.xpose.msra.mxu0 %v2554
        %2578 = vmatprep.subr.bf16.mxu0 0
        %2579 = vmatpush1.bf16.xpose.msra.mxu0 %v2557
        %2580 = vmatprep.subr.bf16.mxu0 0
        %2581 = vmatpush1.bf16.xpose.msra.mxu0 %v2560
        %2582 = vmatprep.subr.bf16.mxu0 0
        %2583 = vmatpush1.bf16.xpose.msra.mxu0 %v2563
        %2584 = vmatprep.subr.bf16.mxu0 0
        %2585 = vmatpush1.bf16.xpose.msra.mxu0 %v2566
        %2586 = vmatprep.subr.bf16.mxu0 0
        %2587 = vmatpush1.bf16.xpose.msra.mxu0 %v2569
        %2588 = vmatprep.subr.bf16.mxu0 0
        %2589 = vmatpush1.bf16.xpose.msra.mxu0 %v2572
        %2590 = vmatprep.subr.bf16.mxu0 0
        %2591 = vmatpush1.bf16.xpose.msra.mxu0 0
        %2592 = vmatprep.subr.bf16.mxu0 0
        %2593 = vmatpush1.bf16.xpose.msra.mxu0 0
        %2594 = vmatprep.subr.bf16.mxu0 0
        %2595 = vmatpush1.bf16.xpose.msra.mxu0 0
        %2596 = vmatprep.subr.bf16.mxu0 0
        %2597 = vmatpush1.bf16.xpose.msra.mxu0 0
        %2598 = vmatprep.subr.bf16.mxu0 0
        %2599 = vmatpush1.bf16.xpose.msra.mxu0 0
        %2600 = vmatprep.subr.bf16.mxu0 0
        %2601 = vmatpush1.bf16.xpose.msra.mxu0 0
        %2602 = vmatprep.subr.bf16.mxu0 0
        %2603 = vmatpush1.bf16.xpose.msra.mxu0 0
        %2604 = vmatprep.subr.bf16.mxu0 0
        %2605 = vmatpush1.bf16.xpose.msra.mxu0 0
        %2606 = vmatprep.mubr.bf16.mxu0 0
        %2607 = vmatmul.mubr.bf16.gmra.mrb[0].mxu0 %v2503
        %v2608 = vpop.f32.mrb[0].mxu0
        %v2609 = vadd.f32 0.0, %v2608
        %v2610 = vpop.f32.mrb[0].mxu0
        %v2611 = vpop.f32.mrb[0].mxu0
        %v2612 = vadd.f32 0.0, %v2611
        %v2613 = vpop.f32.mrb[0].mxu0
        %2614 = vmatprep.mubr.bf16.mxu0 0
        %2615 = vmatmul.mubr.bf16.gmra.mrb[0].mxu0 %v2506
        %v2616 = vpop.f32.mrb[0].mxu0
        %v2617 = vadd.f32 0.0, %v2616
        %v2618 = vpop.f32.mrb[0].mxu0
        %v2619 = vpop.f32.mrb[0].mxu0
        %v2620 = vadd.f32 0.0, %v2619
        %v2621 = vpop.f32.mrb[0].mxu0
        %2622 = vmatprep.mubr.bf16.mxu0 0
        %2623 = vmatmul.mubr.bf16.gmra.mrb[0].mxu0 %v2509
        %v2624 = vpop.f32.mrb[0].mxu0
        %v2625 = vadd.f32 0.0, %v2624
        %v2626 = vpop.f32.mrb[0].mxu0
        %v2627 = vpop.f32.mrb[0].mxu0
        %v2628 = vadd.f32 0.0, %v2627
        %v2629 = vpop.f32.mrb[0].mxu0
        %2630 = vmatprep.mubr.bf16.mxu0 0
        %2631 = vmatmul.mubr.bf16.gmra.mrb[0].mxu0 %v2512
        %v2632 = vpop.f32.mrb[0].mxu0
        %v2633 = vadd.f32 0.0, %v2632
        %v2634 = vpop.f32.mrb[0].mxu0
        %v2635 = vpop.f32.mrb[0].mxu0
        %v2636 = vadd.f32 0.0, %v2635
        %v2637 = vpop.f32.mrb[0].mxu0
        %2638 = vmatprep.mubr.bf16.mxu0 0
        %2639 = vmatmul.mubr.bf16.gmra.mrb[0].mxu0 %v2515
        %v2640 = vpop.f32.mrb[0].mxu0
        %v2641 = vadd.f32 0.0, %v2640
        %v2642 = vpop.f32.mrb[0].mxu0
        %v2643 = vpop.f32.mrb[0].mxu0
        %v2644 = vadd.f32 0.0, %v2643
        %v2645 = vpop.f32.mrb[0].mxu0
        %2646 = vmatprep.mubr.bf16.mxu0 0
        %2647 = vmatmul.mubr.bf16.gmra.mrb[0].mxu0 %v2518
        %v2648 = vpop.f32.mrb[0].mxu0
        %v2649 = vadd.f32 0.0, %v2648
        %v2650 = vpop.f32.mrb[0].mxu0
        %v2651 = vpop.f32.mrb[0].mxu0
        %v2652 = vadd.f32 0.0, %v2651
        %v2653 = vpop.f32.mrb[0].mxu0
        %2654 = vmatprep.mubr.bf16.mxu0 0
        %2655 = vmatmul.mubr.bf16.gmra.mrb[0].mxu0 %v2521
        %v2656 = vpop.f32.mrb[0].mxu0
        %v2657 = vadd.f32 0.0, %v2656
        %v2658 = vpop.f32.mrb[0].mxu0
        %v2659 = vpop.f32.mrb[0].mxu0
        %v2660 = vadd.f32 0.0, %v2659
        %v2661 = vpop.f32.mrb[0].mxu0
        %2662 = vmatprep.mubr.bf16.mxu0 0
        %2663 = vmatmul.mubr.bf16.gmra.mrb[0].mxu0 %v2524
        %v2664 = vpop.f32.mrb[0].mxu0
        %v2665 = vadd.f32 0.0, %v2664
        %v2666 = vpop.f32.mrb[0].mxu0
        %v2667 = vpop.f32.mrb[0].mxu0
        %v2668 = vadd.f32 0.0, %v2667
        %v2669 = vpop.f32.mrb[0].mxu0
        %2670 = vmatprep.mubr.bf16.mxu0 0
        %2671 = vmatmul.mubr.bf16.gmra.mrb[0].mxu0 %v2527
        %v2672 = vpop.f32.mrb[0].mxu0
        %v2673 = vadd.f32 0.0, %v2672
        %v2674 = vpop.f32.mrb[0].mxu0
        %v2675 = vpop.f32.mrb[0].mxu0
        %v2676 = vadd.f32 0.0, %v2675
        %v2677 = vpop.f32.mrb[0].mxu0
        %2678 = vmatprep.mubr.bf16.mxu0 0
        %2679 = vmatmul.mubr.bf16.gmra.mrb[0].mxu0 %v2530
        %v2680 = vpop.f32.mrb[0].mxu0
        %v2681 = vadd.f32 0.0, %v2680
        %v2682 = vpop.f32.mrb[0].mxu0
        %v2683 = vpop.f32.mrb[0].mxu0
        %v2684 = vadd.f32 0.0, %v2683
        %v2685 = vpop.f32.mrb[0].mxu0
        %2686 = vmatprep.mubr.bf16.mxu0 0
        %2687 = vmatmul.mubr.bf16.gmra.mrb[0].mxu0 %v2533
        %v2688 = vpop.f32.mrb[0].mxu0
        %v2689 = vadd.f32 0.0, %v2688
        %v2690 = vpop.f32.mrb[0].mxu0
        %v2691 = vpop.f32.mrb[0].mxu0
        %v2692 = vadd.f32 0.0, %v2691
        %v2693 = vpop.f32.mrb[0].mxu0
        %2694 = vmatprep.mubr.bf16.mxu0 0
        %2695 = vmatmul.mubr.bf16.gmra.mrb[0].mxu0 %v2536
        %v2696 = vpop.f32.mrb[0].mxu0
        %v2697 = vadd.f32 0.0, %v2696
        %v2698 = vpop.f32.mrb[0].mxu0
        %v2699 = vpop.f32.mrb[0].mxu0
        %v2700 = vadd.f32 0.0, %v2699
        %v2701 = vpop.f32.mrb[0].mxu0
        %2702 = vmatprep.mubr.bf16.mxu0 0
        %2703 = vmatmul.mubr.bf16.gmra.mrb[0].mxu0 %v2539
        %v2704 = vpop.f32.mrb[0].mxu0
        %v2705 = vadd.f32 0.0, %v2704
        %v2706 = vpop.f32.mrb[0].mxu0
        %v2707 = vpop.f32.mrb[0].mxu0
        %v2708 = vadd.f32 0.0, %v2707
        %v2709 = vpop.f32.mrb[0].mxu0
        %2710 = vmatprep.mubr.bf16.mxu0 0
        %2711 = vmatmul.mubr.bf16.gmra.mrb[0].mxu0 %v2542
        %v2712 = vpop.f32.mrb[0].mxu0
        %v2713 = vadd.f32 0.0, %v2712
        %v2714 = vpop.f32.mrb[0].mxu0
        %v2715 = vpop.f32.mrb[0].mxu0
        %v2716 = vadd.f32 0.0, %v2715
        %v2717 = vpop.f32.mrb[0].mxu0
        %2718 = vmatprep.mubr.bf16.mxu0 0
        %2719 = vmatmul.mubr.bf16.gmra.mrb[0].mxu0 %v2545
        %v2720 = vpop.f32.mrb[0].mxu0
        %v2721 = vadd.f32 0.0, %v2720
        %v2722 = vpop.f32.mrb[0].mxu0
        %v2723 = vpop.f32.mrb[0].mxu0
        %v2724 = vadd.f32 0.0, %v2723
        %v2725 = vpop.f32.mrb[0].mxu0
        %2726 = vmatprep.mubr.bf16.mxu0 0
        %2727 = vmatmul.mubr.bf16.gmra.mrb[0].mxu0 %v2548
        %v2728 = vpop.f32.mrb[0].mxu0
        %v2729 = vadd.f32 0.0, %v2728
        %v2730 = vpop.f32.mrb[0].mxu0
        %v2731 = vpop.f32.mrb[0].mxu0
        %v2732 = vadd.f32 0.0, %v2731
        %v2733 = vpop.f32.mrb[0].mxu0
        %2734 = vdwg.mxu0
        %v2736 = vsel %vm2196, %v2149, 0
        %v2739 = vsel %vm2196, %v2151, 0
        %v2742 = vsel %vm2196, %v2153, 0
        %v2745 = vsel %vm2196, %v2155, 0
        %v2748 = vsel %vm2196, %v2157, 0
        %v2751 = vsel %vm2196, %v2159, 0
        %v2754 = vsel %vm2196, %v2161, 0
        %v2757 = vsel %vm2196, %v2163, 0
        %v2760 = vsel %vm2196, %v2165, 0
        %v2763 = vsel %vm2196, %v2167, 0
        %v2766 = vsel %vm2196, %v2169, 0
        %v2769 = vsel %vm2196, %v2171, 0
        %v2772 = vsel %vm2196, %v2173, 0
        %v2775 = vsel %vm2196, %v2175, 0
        %v2778 = vsel %vm2196, %v2177, 0
        %v2781 = vsel %vm2196, %v2179, 0
        %v2784 = vsel %vm2196, %v2181, 0
        %v2787 = vsel %vm2196, %v2183, 0
        %v2790 = vsel %vm2196, %v2185, 0
        %v2793 = vsel %vm2196, %v2187, 0
        %v2796 = vsel %vm2196, %v2189, 0
        %v2799 = vsel %vm2196, %v2191, 0
        %v2802 = vsel %vm2196, %v2193, 0
        %v2805 = vsel %vm2196, %v2195, 0
        %2807 = vmatprep.subr.bf16.mxu0 0
        %2808 = vmatpush1.bf16.xpose.msra.mxu0 %v2784
        %2809 = vmatprep.subr.bf16.mxu0 0
        %2810 = vmatpush1.bf16.xpose.msra.mxu0 %v2787
        %2811 = vmatprep.subr.bf16.mxu0 0
        %2812 = vmatpush1.bf16.xpose.msra.mxu0 %v2790
        %2813 = vmatprep.subr.bf16.mxu0 0
        %2814 = vmatpush1.bf16.xpose.msra.mxu0 %v2793
        %2815 = vmatprep.subr.bf16.mxu0 0
        %2816 = vmatpush1.bf16.xpose.msra.mxu0 %v2796
        %2817 = vmatprep.subr.bf16.mxu0 0
        %2818 = vmatpush1.bf16.xpose.msra.mxu0 %v2799
        %2819 = vmatprep.subr.bf16.mxu0 0
        %2820 = vmatpush1.bf16.xpose.msra.mxu0 %v2802
        %2821 = vmatprep.subr.bf16.mxu0 0
        %2822 = vmatpush1.bf16.xpose.msra.mxu0 %v2805
        %2823 = vmatprep.subr.bf16.mxu0 0
        %2824 = vmatpush1.bf16.xpose.msra.mxu0 0
        %2825 = vmatprep.subr.bf16.mxu0 0
        %2826 = vmatpush1.bf16.xpose.msra.mxu0 0
        %2827 = vmatprep.subr.bf16.mxu0 0
        %2828 = vmatpush1.bf16.xpose.msra.mxu0 0
        %2829 = vmatprep.subr.bf16.mxu0 0
        %2830 = vmatpush1.bf16.xpose.msra.mxu0 0
        %2831 = vmatprep.subr.bf16.mxu0 0
        %2832 = vmatpush1.bf16.xpose.msra.mxu0 0
        %2833 = vmatprep.subr.bf16.mxu0 0
        %2834 = vmatpush1.bf16.xpose.msra.mxu0 0
        %2835 = vmatprep.subr.bf16.mxu0 0
        %2836 = vmatpush1.bf16.xpose.msra.mxu0 0
        %2837 = vmatprep.subr.bf16.mxu0 0
        %2838 = vmatpush1.bf16.xpose.msra.mxu0 0
        %2839 = vmatprep.mubr.bf16.mxu0 0
        %2840 = vmatmul.mubr.bf16.gmra.mrb[0].mxu0 %v2736
        %v2841 = vpop.f32.mrb[0].mxu0
        %v2842 = vadd.f32 0.0, %v2841
        %v2843 = vpop.f32.mrb[0].mxu0
        %v2844 = vpop.f32.mrb[0].mxu0
        %v2845 = vadd.f32 0.0, %v2844
        %v2846 = vpop.f32.mrb[0].mxu0
        %2847 = vmatprep.mubr.bf16.mxu0 0
        %2848 = vmatmul.mubr.bf16.gmra.mrb[0].mxu0 %v2739
        %v2849 = vpop.f32.mrb[0].mxu0
        %v2850 = vadd.f32 0.0, %v2849
        %v2851 = vpop.f32.mrb[0].mxu0
        %v2852 = vpop.f32.mrb[0].mxu0
        %v2853 = vadd.f32 0.0, %v2852
        %v2854 = vpop.f32.mrb[0].mxu0
        %2855 = vmatprep.mubr.bf16.mxu0 0
        %2856 = vmatmul.mubr.bf16.gmra.mrb[0].mxu0 %v2742
        %v2857 = vpop.f32.mrb[0].mxu0
        %v2858 = vadd.f32 0.0, %v2857
        %v2859 = vpop.f32.mrb[0].mxu0
        %v2860 = vpop.f32.mrb[0].mxu0
        %v2861 = vadd.f32 0.0, %v2860
        %v2862 = vpop.f32.mrb[0].mxu0
        %2863 = vmatprep.mubr.bf16.mxu0 0
        %2864 = vmatmul.mubr.bf16.gmra.mrb[0].mxu0 %v2745
        %v2865 = vpop.f32.mrb[0].mxu0
        %v2866 = vadd.f32 0.0, %v2865
        %v2867 = vpop.f32.mrb[0].mxu0
        %v2868 = vpop.f32.mrb[0].mxu0
        %v2869 = vadd.f32 0.0, %v2868
        %v2870 = vpop.f32.mrb[0].mxu0
        %2871 = vmatprep.mubr.bf16.mxu0 0
        %2872 = vmatmul.mubr.bf16.gmra.mrb[0].mxu0 %v2748
        %v2873 = vpop.f32.mrb[0].mxu0
        %v2874 = vadd.f32 0.0, %v2873
        %v2875 = vpop.f32.mrb[0].mxu0
        %v2876 = vpop.f32.mrb[0].mxu0
        %v2877 = vadd.f32 0.0, %v2876
        %v2878 = vpop.f32.mrb[0].mxu0
        %2879 = vmatprep.mubr.bf16.mxu0 0
        %2880 = vmatmul.mubr.bf16.gmra.mrb[0].mxu0 %v2751
        %v2881 = vpop.f32.mrb[0].mxu0
        %v2882 = vadd.f32 0.0, %v2881
        %v2883 = vpop.f32.mrb[0].mxu0
        %v2884 = vpop.f32.mrb[0].mxu0
        %v2885 = vadd.f32 0.0, %v2884
        %v2886 = vpop.f32.mrb[0].mxu0
        %2887 = vmatprep.mubr.bf16.mxu0 0
        %2888 = vmatmul.mubr.bf16.gmra.mrb[0].mxu0 %v2754
        %v2889 = vpop.f32.mrb[0].mxu0
        %v2890 = vadd.f32 0.0, %v2889
        %v2891 = vpop.f32.mrb[0].mxu0
        %v2892 = vpop.f32.mrb[0].mxu0
        %v2893 = vadd.f32 0.0, %v2892
        %v2894 = vpop.f32.mrb[0].mxu0
        %2895 = vmatprep.mubr.bf16.mxu0 0
        %2896 = vmatmul.mubr.bf16.gmra.mrb[0].mxu0 %v2757
        %v2897 = vpop.f32.mrb[0].mxu0
        %v2898 = vadd.f32 0.0, %v2897
        %v2899 = vpop.f32.mrb[0].mxu0
        %v2900 = vpop.f32.mrb[0].mxu0
        %v2901 = vadd.f32 0.0, %v2900
        %v2902 = vpop.f32.mrb[0].mxu0
        %2903 = vmatprep.mubr.bf16.mxu0 0
        %2904 = vmatmul.mubr.bf16.gmra.mrb[0].mxu0 %v2760
        %v2905 = vpop.f32.mrb[0].mxu0
        %v2906 = vadd.f32 0.0, %v2905
        %v2907 = vpop.f32.mrb[0].mxu0
        %v2908 = vpop.f32.mrb[0].mxu0
        %v2909 = vadd.f32 0.0, %v2908
        %v2910 = vpop.f32.mrb[0].mxu0
        %2911 = vmatprep.mubr.bf16.mxu0 0
        %2912 = vmatmul.mubr.bf16.gmra.mrb[0].mxu0 %v2763
        %v2913 = vpop.f32.mrb[0].mxu0
        %v2914 = vadd.f32 0.0, %v2913
        %v2915 = vpop.f32.mrb[0].mxu0
        %v2916 = vpop.f32.mrb[0].mxu0
        %v2917 = vadd.f32 0.0, %v2916
        %v2918 = vpop.f32.mrb[0].mxu0
        %2919 = vmatprep.mubr.bf16.mxu0 0
        %2920 = vmatmul.mubr.bf16.gmra.mrb[0].mxu0 %v2766
        %v2921 = vpop.f32.mrb[0].mxu0
        %v2922 = vadd.f32 0.0, %v2921
        %v2923 = vpop.f32.mrb[0].mxu0
        %v2924 = vpop.f32.mrb[0].mxu0
        %v2925 = vadd.f32 0.0, %v2924
        %v2926 = vpop.f32.mrb[0].mxu0
        %2927 = vmatprep.mubr.bf16.mxu0 0
        %2928 = vmatmul.mubr.bf16.gmra.mrb[0].mxu0 %v2769
        %v2929 = vpop.f32.mrb[0].mxu0
        %v2930 = vadd.f32 0.0, %v2929
        %v2931 = vpop.f32.mrb[0].mxu0
        %v2932 = vpop.f32.mrb[0].mxu0
        %v2933 = vadd.f32 0.0, %v2932
        %v2934 = vpop.f32.mrb[0].mxu0
        %2935 = vmatprep.mubr.bf16.mxu0 0
        %2936 = vmatmul.mubr.bf16.gmra.mrb[0].mxu0 %v2772
        %v2937 = vpop.f32.mrb[0].mxu0
        %v2938 = vadd.f32 0.0, %v2937
        %v2939 = vpop.f32.mrb[0].mxu0
        %v2940 = vpop.f32.mrb[0].mxu0
        %v2941 = vadd.f32 0.0, %v2940
        %v2942 = vpop.f32.mrb[0].mxu0
        %2943 = vmatprep.mubr.bf16.mxu0 0
        %2944 = vmatmul.mubr.bf16.gmra.mrb[0].mxu0 %v2775
        %v2945 = vpop.f32.mrb[0].mxu0
        %v2946 = vadd.f32 0.0, %v2945
        %v2947 = vpop.f32.mrb[0].mxu0
        %v2948 = vpop.f32.mrb[0].mxu0
        %v2949 = vadd.f32 0.0, %v2948
        %v2950 = vpop.f32.mrb[0].mxu0
        %2951 = vmatprep.mubr.bf16.mxu0 0
        %2952 = vmatmul.mubr.bf16.gmra.mrb[0].mxu0 %v2778
        %v2953 = vpop.f32.mrb[0].mxu0
        %v2954 = vadd.f32 0.0, %v2953
        %v2955 = vpop.f32.mrb[0].mxu0
        %v2956 = vpop.f32.mrb[0].mxu0
        %v2957 = vadd.f32 0.0, %v2956
        %v2958 = vpop.f32.mrb[0].mxu0
        %2959 = vmatprep.mubr.bf16.mxu0 0
        %2960 = vmatmul.mubr.bf16.gmra.mrb[0].mxu0 %v2781
        %v2961 = vpop.f32.mrb[0].mxu0
        %v2962 = vadd.f32 0.0, %v2961
        %v2963 = vpop.f32.mrb[0].mxu0
        %v2964 = vpop.f32.mrb[0].mxu0
        %v2965 = vadd.f32 0.0, %v2964
        %v2966 = vpop.f32.mrb[0].mxu0
        %2967 = vdwg.mxu0
        %2984 = vrot.lane.b32.xlu0 %v2149, 64
        %v2985 = vpop.permute.xlu0 %2984
        %2986 = vrot.lane.b32.xlu0 %v2151, 64
        %v2987 = vpop.permute.xlu0 %2986
        %2988 = vrot.lane.b32.xlu0 %v2153, 64
        %v2989 = vpop.permute.xlu0 %2988
        %2990 = vrot.lane.b32.xlu0 %v2155, 64
        %v2991 = vpop.permute.xlu0 %2990
        %2992 = vrot.lane.b32.xlu0 %v2157, 64
        %v2993 = vpop.permute.xlu0 %2992
        %2994 = vrot.lane.b32.xlu0 %v2159, 64
        %v2995 = vpop.permute.xlu0 %2994
        %2996 = vrot.lane.b32.xlu0 %v2161, 64
        %v2997 = vpop.permute.xlu0 %2996
        %2998 = vrot.lane.b32.xlu0 %v2163, 64
        %v2999 = vpop.permute.xlu0 %2998
        %3000 = vrot.lane.b32.xlu0 %v2165, 64
        %v3001 = vpop.permute.xlu0 %3000
        %3002 = vrot.lane.b32.xlu0 %v2167, 64
        %v3003 = vpop.permute.xlu0 %3002
        %3004 = vrot.lane.b32.xlu0 %v2169, 64
        %v3005 = vpop.permute.xlu0 %3004
        %3006 = vrot.lane.b32.xlu0 %v2171, 64
        %v3007 = vpop.permute.xlu0 %3006
        %3008 = vrot.lane.b32.xlu0 %v2173, 64
        %v3009 = vpop.permute.xlu0 %3008
        %3010 = vrot.lane.b32.xlu0 %v2175, 64
        %v3011 = vpop.permute.xlu0 %3010
        %3012 = vrot.lane.b32.xlu0 %v2177, 64
        %v3013 = vpop.permute.xlu0 %3012
        %3014 = vrot.lane.b32.xlu0 %v2179, 64
        %v3015 = vpop.permute.xlu0 %3014
        %3024 = vrot.lane.b32.xlu0 %v2181, 64
        %v3025 = vpop.permute.xlu0 %3024
        %3026 = vrot.lane.b32.xlu0 %v2183, 64
        %v3027 = vpop.permute.xlu0 %3026
        %3028 = vrot.lane.b32.xlu0 %v2185, 64
        %v3029 = vpop.permute.xlu0 %3028
        %3030 = vrot.lane.b32.xlu0 %v2187, 64
        %v3031 = vpop.permute.xlu0 %3030
        %3032 = vrot.lane.b32.xlu0 %v2189, 64
        %v3033 = vpop.permute.xlu0 %3032
        %3034 = vrot.lane.b32.xlu0 %v2191, 64
        %v3035 = vpop.permute.xlu0 %3034
        %3036 = vrot.lane.b32.xlu0 %v2193, 64
        %v3037 = vpop.permute.xlu0 %3036
        %3038 = vrot.lane.b32.xlu0 %v2195, 64
        %v3039 = vpop.permute.xlu0 %3038
        %v3041 = vsel %vm2196, %v2985, 0
        %v3044 = vsel %vm2196, %v2987, 0
        %v3047 = vsel %vm2196, %v2989, 0
        %v3050 = vsel %vm2196, %v2991, 0
        %v3053 = vsel %vm2196, %v2993, 0
        %v3056 = vsel %vm2196, %v2995, 0
        %v3059 = vsel %vm2196, %v2997, 0
        %v3062 = vsel %vm2196, %v2999, 0
        %v3065 = vsel %vm2196, %v3001, 0
        %v3068 = vsel %vm2196, %v3003, 0
        %v3071 = vsel %vm2196, %v3005, 0
        %v3074 = vsel %vm2196, %v3007, 0
        %v3077 = vsel %vm2196, %v3009, 0
        %v3080 = vsel %vm2196, %v3011, 0
        %v3083 = vsel %vm2196, %v3013, 0
        %v3086 = vsel %vm2196, %v3015, 0
        %v3089 = vsel %vm2196, %v3025, 0
        %v3092 = vsel %vm2196, %v3027, 0
        %v3095 = vsel %vm2196, %v3029, 0
        %v3098 = vsel %vm2196, %v3031, 0
        %v3101 = vsel %vm2196, %v3033, 0
        %v3104 = vsel %vm2196, %v3035, 0
        %v3107 = vsel %vm2196, %v3037, 0
        %v3110 = vsel %vm2196, %v3039, 0
        %3112 = vmatprep.subr.bf16.mxu0 0
        %3113 = vmatpush1.bf16.xpose.msra.mxu0 %v3089
        %3114 = vmatprep.subr.bf16.mxu0 0
        %3115 = vmatpush1.bf16.xpose.msra.mxu0 %v3092
        %3116 = vmatprep.subr.bf16.mxu0 0
        %3117 = vmatpush1.bf16.xpose.msra.mxu0 %v3095
        %3118 = vmatprep.subr.bf16.mxu0 0
        %3119 = vmatpush1.bf16.xpose.msra.mxu0 %v3098
        %3120 = vmatprep.subr.bf16.mxu0 0
        %3121 = vmatpush1.bf16.xpose.msra.mxu0 %v3101
        %3122 = vmatprep.subr.bf16.mxu0 0
        %3123 = vmatpush1.bf16.xpose.msra.mxu0 %v3104
        %3124 = vmatprep.subr.bf16.mxu0 0
        %3125 = vmatpush1.bf16.xpose.msra.mxu0 %v3107
        %3126 = vmatprep.subr.bf16.mxu0 0
        %3127 = vmatpush1.bf16.xpose.msra.mxu0 %v3110
        %3128 = vmatprep.subr.bf16.mxu0 0
        %3129 = vmatpush1.bf16.xpose.msra.mxu0 0
        %3130 = vmatprep.subr.bf16.mxu0 0
        %3131 = vmatpush1.bf16.xpose.msra.mxu0 0
        %3132 = vmatprep.subr.bf16.mxu0 0
        %3133 = vmatpush1.bf16.xpose.msra.mxu0 0
        %3134 = vmatprep.subr.bf16.mxu0 0
        %3135 = vmatpush1.bf16.xpose.msra.mxu0 0
        %3136 = vmatprep.subr.bf16.mxu0 0
        %3137 = vmatpush1.bf16.xpose.msra.mxu0 0
        %3138 = vmatprep.subr.bf16.mxu0 0
        %3139 = vmatpush1.bf16.xpose.msra.mxu0 0
        %3140 = vmatprep.subr.bf16.mxu0 0
        %3141 = vmatpush1.bf16.xpose.msra.mxu0 0
        %3142 = vmatprep.subr.bf16.mxu0 0
        %3143 = vmatpush1.bf16.xpose.msra.mxu0 0
        %3144 = vmatprep.mubr.bf16.mxu0 0
        %3145 = vmatmul.mubr.bf16.gmra.mrb[0].mxu0 %v3041
        %v3146 = vpop.f32.mrb[0].mxu0
        %v3147 = vadd.f32 0.0, %v3146
        %v3148 = vpop.f32.mrb[0].mxu0
        %v3149 = vpop.f32.mrb[0].mxu0
        %v3150 = vadd.f32 0.0, %v3149
        %v3151 = vpop.f32.mrb[0].mxu0
        %3152 = vmatprep.mubr.bf16.mxu0 0
        %3153 = vmatmul.mubr.bf16.gmra.mrb[0].mxu0 %v3044
        %v3154 = vpop.f32.mrb[0].mxu0
        %v3155 = vadd.f32 0.0, %v3154
        %v3156 = vpop.f32.mrb[0].mxu0
        %v3157 = vpop.f32.mrb[0].mxu0
        %v3158 = vadd.f32 0.0, %v3157
        %v3159 = vpop.f32.mrb[0].mxu0
        %3160 = vmatprep.mubr.bf16.mxu0 0
        %3161 = vmatmul.mubr.bf16.gmra.mrb[0].mxu0 %v3047
        %v3162 = vpop.f32.mrb[0].mxu0
        %v3163 = vadd.f32 0.0, %v3162
        %v3164 = vpop.f32.mrb[0].mxu0
        %v3165 = vpop.f32.mrb[0].mxu0
        %v3166 = vadd.f32 0.0, %v3165
        %v3167 = vpop.f32.mrb[0].mxu0
        %3168 = vmatprep.mubr.bf16.mxu0 0
        %3169 = vmatmul.mubr.bf16.gmra.mrb[0].mxu0 %v3050
        %v3170 = vpop.f32.mrb[0].mxu0
        %v3171 = vadd.f32 0.0, %v3170
        %v3172 = vpop.f32.mrb[0].mxu0
        %v3173 = vpop.f32.mrb[0].mxu0
        %v3174 = vadd.f32 0.0, %v3173
        %v3175 = vpop.f32.mrb[0].mxu0
        %3176 = vmatprep.mubr.bf16.mxu0 0
        %3177 = vmatmul.mubr.bf16.gmra.mrb[0].mxu0 %v3053
        %v3178 = vpop.f32.mrb[0].mxu0
        %v3179 = vadd.f32 0.0, %v3178
        %v3180 = vpop.f32.mrb[0].mxu0
        %v3181 = vpop.f32.mrb[0].mxu0
        %v3182 = vadd.f32 0.0, %v3181
        %v3183 = vpop.f32.mrb[0].mxu0
        %3184 = vmatprep.mubr.bf16.mxu0 0
        %3185 = vmatmul.mubr.bf16.gmra.mrb[0].mxu0 %v3056
        %v3186 = vpop.f32.mrb[0].mxu0
        %v3187 = vadd.f32 0.0, %v3186
        %v3188 = vpop.f32.mrb[0].mxu0
        %v3189 = vpop.f32.mrb[0].mxu0
        %v3190 = vadd.f32 0.0, %v3189
        %v3191 = vpop.f32.mrb[0].mxu0
        %3192 = vmatprep.mubr.bf16.mxu0 0
        %3193 = vmatmul.mubr.bf16.gmra.mrb[0].mxu0 %v3059
        %v3194 = vpop.f32.mrb[0].mxu0
        %v3195 = vadd.f32 0.0, %v3194
        %v3196 = vpop.f32.mrb[0].mxu0
        %v3197 = vpop.f32.mrb[0].mxu0
        %v3198 = vadd.f32 0.0, %v3197
        %v3199 = vpop.f32.mrb[0].mxu0
        %3200 = vmatprep.mubr.bf16.mxu0 0
        %3201 = vmatmul.mubr.bf16.gmra.mrb[0].mxu0 %v3062
        %v3202 = vpop.f32.mrb[0].mxu0
        %v3203 = vadd.f32 0.0, %v3202
        %v3204 = vpop.f32.mrb[0].mxu0
        %v3205 = vpop.f32.mrb[0].mxu0
        %v3206 = vadd.f32 0.0, %v3205
        %v3207 = vpop.f32.mrb[0].mxu0
        %3208 = vmatprep.mubr.bf16.mxu0 0
        %3209 = vmatmul.mubr.bf16.gmra.mrb[0].mxu0 %v3065
        %v3210 = vpop.f32.mrb[0].mxu0
        %v3211 = vadd.f32 0.0, %v3210
        %v3212 = vpop.f32.mrb[0].mxu0
        %v3213 = vpop.f32.mrb[0].mxu0
        %v3214 = vadd.f32 0.0, %v3213
        %v3215 = vpop.f32.mrb[0].mxu0
        %3216 = vmatprep.mubr.bf16.mxu0 0
        %3217 = vmatmul.mubr.bf16.gmra.mrb[0].mxu0 %v3068
        %v3218 = vpop.f32.mrb[0].mxu0
        %v3219 = vadd.f32 0.0, %v3218
        %v3220 = vpop.f32.mrb[0].mxu0
        %v3221 = vpop.f32.mrb[0].mxu0
        %v3222 = vadd.f32 0.0, %v3221
        %v3223 = vpop.f32.mrb[0].mxu0
        %3224 = vmatprep.mubr.bf16.mxu0 0
        %3225 = vmatmul.mubr.bf16.gmra.mrb[0].mxu0 %v3071
        %v3226 = vpop.f32.mrb[0].mxu0
        %v3227 = vadd.f32 0.0, %v3226
        %v3228 = vpop.f32.mrb[0].mxu0
        %v3229 = vpop.f32.mrb[0].mxu0
        %v3230 = vadd.f32 0.0, %v3229
        %v3231 = vpop.f32.mrb[0].mxu0
        %3232 = vmatprep.mubr.bf16.mxu0 0
        %3233 = vmatmul.mubr.bf16.gmra.mrb[0].mxu0 %v3074
        %v3234 = vpop.f32.mrb[0].mxu0
        %v3235 = vadd.f32 0.0, %v3234
        %v3236 = vpop.f32.mrb[0].mxu0
        %v3237 = vpop.f32.mrb[0].mxu0
        %v3238 = vadd.f32 0.0, %v3237
        %v3239 = vpop.f32.mrb[0].mxu0
        %3240 = vmatprep.mubr.bf16.mxu0 0
        %3241 = vmatmul.mubr.bf16.gmra.mrb[0].mxu0 %v3077
        %v3242 = vpop.f32.mrb[0].mxu0
        %v3243 = vadd.f32 0.0, %v3242
        %v3244 = vpop.f32.mrb[0].mxu0
        %v3245 = vpop.f32.mrb[0].mxu0
        %v3246 = vadd.f32 0.0, %v3245
        %v3247 = vpop.f32.mrb[0].mxu0
        %3248 = vmatprep.mubr.bf16.mxu0 0
        %3249 = vmatmul.mubr.bf16.gmra.mrb[0].mxu0 %v3080
        %v3250 = vpop.f32.mrb[0].mxu0
        %v3251 = vadd.f32 0.0, %v3250
        %v3252 = vpop.f32.mrb[0].mxu0
        %v3253 = vpop.f32.mrb[0].mxu0
        %v3254 = vadd.f32 0.0, %v3253
        %v3255 = vpop.f32.mrb[0].mxu0
        %3256 = vmatprep.mubr.bf16.mxu0 0
        %3257 = vmatmul.mubr.bf16.gmra.mrb[0].mxu0 %v3083
        %v3258 = vpop.f32.mrb[0].mxu0
        %v3259 = vadd.f32 0.0, %v3258
        %v3260 = vpop.f32.mrb[0].mxu0
        %v3261 = vpop.f32.mrb[0].mxu0
        %v3262 = vadd.f32 0.0, %v3261
        %v3263 = vpop.f32.mrb[0].mxu0
        %3264 = vmatprep.mubr.bf16.mxu0 0
        %3265 = vmatmul.mubr.bf16.gmra.mrb[0].mxu0 %v3086
        %v3266 = vpop.f32.mrb[0].mxu0
        %v3267 = vadd.f32 0.0, %v3266
        %v3268 = vpop.f32.mrb[0].mxu0
        %v3269 = vpop.f32.mrb[0].mxu0
        %v3270 = vadd.f32 0.0, %v3269
        %v3271 = vpop.f32.mrb[0].mxu0
        %3272 = vdwg.mxu0
        %v3273 = vpack.c.bf16 %v2307, %v2304
        %v3274 = vpack.c.bf16 %v2315, %v2312
        %v3275 = vpack.c.bf16 %v2323, %v2320
        %v3276 = vpack.c.bf16 %v2331, %v2328
        %v3277 = vpack.c.bf16 %v2339, %v2336
        %v3278 = vpack.c.bf16 %v2347, %v2344
        %v3279 = vpack.c.bf16 %v2355, %v2352
        %v3280 = vpack.c.bf16 %v2363, %v2360
        %v3281 = vpack.c.bf16 %v2371, %v2368
        %v3282 = vpack.c.bf16 %v2379, %v2376
        %v3283 = vpack.c.bf16 %v2387, %v2384
        %v3284 = vpack.c.bf16 %v2395, %v2392
        %v3285 = vpack.c.bf16 %v2403, %v2400
        %v3286 = vpack.c.bf16 %v2411, %v2408
        %v3287 = vpack.c.bf16 %v2419, %v2416
        %v3288 = vpack.c.bf16 %v2427, %v2424
        %v3289 = vpack.c.bf16 %v2612, %v2609
        %v3290 = vpack.c.bf16 %v2620, %v2617
        %v3291 = vpack.c.bf16 %v2628, %v2625
        %v3292 = vpack.c.bf16 %v2636, %v2633
        %v3293 = vpack.c.bf16 %v2644, %v2641
        %v3294 = vpack.c.bf16 %v2652, %v2649
        %v3295 = vpack.c.bf16 %v2660, %v2657
        %v3296 = vpack.c.bf16 %v2668, %v2665
        %v3297 = vpack.c.bf16 %v2676, %v2673
        %v3298 = vpack.c.bf16 %v2684, %v2681
        %v3299 = vpack.c.bf16 %v2692, %v2689
        %v3300 = vpack.c.bf16 %v2700, %v2697
        %v3301 = vpack.c.bf16 %v2708, %v2705
        %v3302 = vpack.c.bf16 %v2716, %v2713
        %v3303 = vpack.c.bf16 %v2724, %v2721
        %v3304 = vpack.c.bf16 %v2732, %v2729
        %v3305 = vpack.c.bf16 %v2845, %v2842
        %v3306 = vpack.c.bf16 %v2853, %v2850
        %v3307 = vpack.c.bf16 %v2861, %v2858
        %v3308 = vpack.c.bf16 %v2869, %v2866
        %v3309 = vpack.c.bf16 %v2877, %v2874
        %v3310 = vpack.c.bf16 %v2885, %v2882
        %v3311 = vpack.c.bf16 %v2893, %v2890
        %v3312 = vpack.c.bf16 %v2901, %v2898
        %v3313 = vpack.c.bf16 %v2909, %v2906
        %v3314 = vpack.c.bf16 %v2917, %v2914
        %v3315 = vpack.c.bf16 %v2925, %v2922
        %v3316 = vpack.c.bf16 %v2933, %v2930
        %v3317 = vpack.c.bf16 %v2941, %v2938
        %v3318 = vpack.c.bf16 %v2949, %v2946
        %v3319 = vpack.c.bf16 %v2957, %v2954
        %v3320 = vpack.c.bf16 %v2965, %v2962
        %v3321 = vpack.c.bf16 %v3150, %v3147
        %v3322 = vpack.c.bf16 %v3158, %v3155
        %v3323 = vpack.c.bf16 %v3166, %v3163
        %v3324 = vpack.c.bf16 %v3174, %v3171
        %v3325 = vpack.c.bf16 %v3182, %v3179
        %v3326 = vpack.c.bf16 %v3190, %v3187
        %v3327 = vpack.c.bf16 %v3198, %v3195
        %v3328 = vpack.c.bf16 %v3206, %v3203
        %v3329 = vpack.c.bf16 %v3214, %v3211
        %v3330 = vpack.c.bf16 %v3222, %v3219
        %v3331 = vpack.c.bf16 %v3230, %v3227
        %v3332 = vpack.c.bf16 %v3238, %v3235
        %v3333 = vpack.c.bf16 %v3246, %v3243
        %v3334 = vpack.c.bf16 %v3254, %v3251
        %v3335 = vpack.c.bf16 %v3262, %v3259
        %v3336 = vpack.c.bf16 %v3270, %v3267
        %v3337 = vld [vmem:[#allocation5] sm:$0xff]
        %v3338 = vld [vmem:[#allocation5 + $0x8] sm:$0xf]
        %v3339 = vld [vmem:[#allocation5 + $0xc] sm:$0xff]
        %v3340 = vld [vmem:[#allocation5 + $0x14] sm:$0xf]
        %v3341 = vld [vmem:[#allocation5 + $0x18] sm:$0xff]
        %v3342 = vld [vmem:[#allocation5 + $0x20] sm:$0xf]
        %v3343 = vld [vmem:[#allocation5 + $0x24] sm:$0xff]
        %v3344 = vld [vmem:[#allocation5 + $0x2c] sm:$0xf]
        %v3345 = vld [vmem:[#allocation5 + $0x30] sm:$0xff]
        %v3346 = vld [vmem:[#allocation5 + $0x38] sm:$0xf]
        %v3347 = vld [vmem:[#allocation5 + $0x3c] sm:$0xff]
        %v3348 = vld [vmem:[#allocation5 + $0x44] sm:$0xf]
        %v3349 = vld [vmem:[#allocation5 + $0x48] sm:$0xff]
        %v3350 = vld [vmem:[#allocation5 + $0x50] sm:$0xf]
        %v3351 = vld [vmem:[#allocation5 + $0x54] sm:$0xff]
        %v3352 = vld [vmem:[#allocation5 + $0x5c] sm:$0xf]
        %v3353 = vld [vmem:[#allocation5 + $0x60] sm:$0xff]
        %v3354 = vld [vmem:[#allocation5 + $0x68] sm:$0xf]
        %v3355 = vld [vmem:[#allocation5 + $0x6c] sm:$0xff]
        %v3356 = vld [vmem:[#allocation5 + $0x74] sm:$0xf]
        %v3357 = vld [vmem:[#allocation5 + $0x78] sm:$0xff]
        %v3358 = vld [vmem:[#allocation5 + $0x80] sm:$0xf]
        %v3359 = vld [vmem:[#allocation5 + $0x84] sm:$0xff]
        %v3360 = vld [vmem:[#allocation5 + $0x8c] sm:$0xf]
        %v3361 = vld [vmem:[#allocation5 + $0x90] sm:$0xff]
        %v3362 = vld [vmem:[#allocation5 + $0x98] sm:$0xf]
        %v3363 = vld [vmem:[#allocation5 + $0x9c] sm:$0xff]
        %v3364 = vld [vmem:[#allocation5 + $0xa4] sm:$0xf]
        %v3365 = vld [vmem:[#allocation5 + $0xa8] sm:$0xff]
        %v3366 = vld [vmem:[#allocation5 + $0xb0] sm:$0xf]
        %v3367 = vld [vmem:[#allocation5 + $0xb4] sm:$0xff]
        %v3368 = vld [vmem:[#allocation5 + $0xbc] sm:$0xf]
        %v3401 = vunpack.c.l.b16 %v3337
        %v3402 = vunpack.c.h.b16 %v3337
        %v3403 = vunpack.c.l.b16 %v3338
        %v3404 = vunpack.c.l.b16 %v3339
        %v3405 = vunpack.c.h.b16 %v3339
        %v3406 = vunpack.c.l.b16 %v3340
        %v3407 = vunpack.c.l.b16 %v3341
        %v3408 = vunpack.c.h.b16 %v3341
        %v3409 = vunpack.c.l.b16 %v3342
        %v3410 = vunpack.c.l.b16 %v3343
        %v3411 = vunpack.c.h.b16 %v3343
        %v3412 = vunpack.c.l.b16 %v3344
        %v3413 = vunpack.c.l.b16 %v3345
        %v3414 = vunpack.c.h.b16 %v3345
        %v3415 = vunpack.c.l.b16 %v3346
        %v3416 = vunpack.c.l.b16 %v3347
        %v3417 = vunpack.c.h.b16 %v3347
        %v3418 = vunpack.c.l.b16 %v3348
        %v3419 = vunpack.c.l.b16 %v3349
        %v3420 = vunpack.c.h.b16 %v3349
        %v3421 = vunpack.c.l.b16 %v3350
        %v3422 = vunpack.c.l.b16 %v3351
        %v3423 = vunpack.c.h.b16 %v3351
        %v3424 = vunpack.c.l.b16 %v3352
        %v3425 = vunpack.c.l.b16 %v3353
        %v3426 = vunpack.c.h.b16 %v3353
        %v3427 = vunpack.c.l.b16 %v3354
        %v3428 = vunpack.c.l.b16 %v3355
        %v3429 = vunpack.c.h.b16 %v3355
        %v3430 = vunpack.c.l.b16 %v3356
        %v3431 = vunpack.c.l.b16 %v3357
        %v3432 = vunpack.c.h.b16 %v3357
        %v3433 = vunpack.c.l.b16 %v3358
        %v3434 = vunpack.c.l.b16 %v3359
        %v3435 = vunpack.c.h.b16 %v3359
        %v3436 = vunpack.c.l.b16 %v3360
        %v3437 = vunpack.c.l.b16 %v3361
        %v3438 = vunpack.c.h.b16 %v3361
        %v3439 = vunpack.c.l.b16 %v3362
        %v3440 = vunpack.c.l.b16 %v3363
        %v3441 = vunpack.c.h.b16 %v3363
        %v3442 = vunpack.c.l.b16 %v3364
        %v3443 = vunpack.c.l.b16 %v3365
        %v3444 = vunpack.c.h.b16 %v3365
        %v3445 = vunpack.c.l.b16 %v3366
        %v3446 = vunpack.c.l.b16 %v3367
        %v3447 = vunpack.c.h.b16 %v3367
        %v3448 = vunpack.c.l.b16 %v3368
        %v3449 = vpack.c.b16 %v3404, %v3401
        %v3450 = vpack.c.b16 %v3405, %v3402
        %v3451 = vpack.c.b16 %v3406, %v3403
        %v3452 = vpack.c.b16 %v3410, %v3407
        %v3453 = vpack.c.b16 %v3411, %v3408
        %v3454 = vpack.c.b16 %v3412, %v3409
        %v3455 = vpack.c.b16 %v3416, %v3413
        %v3456 = vpack.c.b16 %v3417, %v3414
        %v3457 = vpack.c.b16 %v3418, %v3415
        %v3458 = vpack.c.b16 %v3422, %v3419
        %v3459 = vpack.c.b16 %v3423, %v3420
        %v3460 = vpack.c.b16 %v3424, %v3421
        %v3461 = vpack.c.b16 %v3428, %v3425
        %v3462 = vpack.c.b16 %v3429, %v3426
        %v3463 = vpack.c.b16 %v3430, %v3427
        %v3464 = vpack.c.b16 %v3434, %v3431
        %v3465 = vpack.c.b16 %v3435, %v3432
        %v3466 = vpack.c.b16 %v3436, %v3433
        %v3467 = vpack.c.b16 %v3440, %v3437
        %v3468 = vpack.c.b16 %v3441, %v3438
        %v3469 = vpack.c.b16 %v3442, %v3439
        %v3470 = vpack.c.b16 %v3446, %v3443
        %v3471 = vpack.c.b16 %v3447, %v3444
        %v3472 = vpack.c.b16 %v3448, %v3445
        %3497 = vmatprep.subr.bf16.mxu0 %v3450
        %3498 = vmatpush1.bf16.msra.mxu0 %v3449
        %3499 = vmatprep.subr.bf16.mxu0 %v3453
        %3500 = vmatpush1.bf16.msra.mxu0 %v3452
        %3501 = vmatprep.subr.bf16.mxu0 %v3456
        %3502 = vmatpush1.bf16.msra.mxu0 %v3455
        %3503 = vmatprep.subr.bf16.mxu0 %v3459
        %3504 = vmatpush1.bf16.msra.mxu0 %v3458
        %3505 = vmatprep.subr.bf16.mxu0 %v3462
        %3506 = vmatpush1.bf16.msra.mxu0 %v3461
        %3507 = vmatprep.subr.bf16.mxu0 %v3465
        %3508 = vmatpush1.bf16.msra.mxu0 %v3464
        %3509 = vmatprep.subr.bf16.mxu0 %v3468
        %3510 = vmatpush1.bf16.msra.mxu0 %v3467
        %3511 = vmatprep.subr.bf16.mxu0 %v3471
        %3512 = vmatpush1.bf16.msra.mxu0 %v3470
        %3513 = vmatprep.subr.bf16.mxu0 0
        %3514 = vmatpush1.bf16.msra.mxu0 0
        %3515 = vmatprep.subr.bf16.mxu0 0
        %3516 = vmatpush1.bf16.msra.mxu0 0
        %3517 = vmatprep.subr.bf16.mxu0 0
        %3518 = vmatpush1.bf16.msra.mxu0 0
        %3519 = vmatprep.subr.bf16.mxu0 0
        %3520 = vmatpush1.bf16.msra.mxu0 0
        %3521 = vmatprep.subr.bf16.mxu0 0
        %3522 = vmatpush1.bf16.msra.mxu0 0
        %3523 = vmatprep.subr.bf16.mxu0 0
        %3524 = vmatpush1.bf16.msra.mxu0 0
        %3525 = vmatprep.subr.bf16.mxu0 0
        %3526 = vmatpush1.bf16.msra.mxu0 0
        %3527 = vmatprep.subr.bf16.mxu0 0
        %3528 = vmatpush1.bf16.msra.mxu0 0
        %3529 = vmatprep.mubr.bf16.mxu0 0
        %3530 = vmatmul.mubr.bf16.gmra.mrb[0].mxu0 %v3273
        %v3531 = vpop.f32.mrb[0].mxu0
        %v3532 = vadd.f32 0.0, %v3531
        %v3533 = vpop.f32.mrb[0].mxu0
        %v3534 = vadd.f32 0.0, %v3533
        %v3535 = vpop.f32.mrb[0].mxu0
        %v3536 = vadd.f32 0.0, %v3535
        %v3537 = vpop.f32.mrb[0].mxu0
        %v3538 = vadd.f32 0.0, %v3537
        %3539 = vmatprep.mubr.bf16.mxu0 0
        %3540 = vmatmul.mubr.bf16.gmra.mrb[0].mxu0 %v3274
        %v3541 = vpop.f32.mrb[0].mxu0
        %v3542 = vadd.f32 0.0, %v3541
        %v3543 = vpop.f32.mrb[0].mxu0
        %v3544 = vadd.f32 0.0, %v3543
        %v3545 = vpop.f32.mrb[0].mxu0
        %v3546 = vadd.f32 0.0, %v3545
        %v3547 = vpop.f32.mrb[0].mxu0
        %v3548 = vadd.f32 0.0, %v3547
        %3549 = vmatprep.mubr.bf16.mxu0 0
        %3550 = vmatmul.mubr.bf16.gmra.mrb[0].mxu0 %v3275
        %v3551 = vpop.f32.mrb[0].mxu0
        %v3552 = vadd.f32 0.0, %v3551
        %v3553 = vpop.f32.mrb[0].mxu0
        %v3554 = vadd.f32 0.0, %v3553
        %v3555 = vpop.f32.mrb[0].mxu0
        %v3556 = vadd.f32 0.0, %v3555
        %v3557 = vpop.f32.mrb[0].mxu0
        %v3558 = vadd.f32 0.0, %v3557
        %3559 = vmatprep.mubr.bf16.mxu0 0
        %3560 = vmatmul.mubr.bf16.gmra.mrb[0].mxu0 %v3276
        %v3561 = vpop.f32.mrb[0].mxu0
        %v3562 = vadd.f32 0.0, %v3561
        %v3563 = vpop.f32.mrb[0].mxu0
        %v3564 = vadd.f32 0.0, %v3563
        %v3565 = vpop.f32.mrb[0].mxu0
        %v3566 = vadd.f32 0.0, %v3565
        %v3567 = vpop.f32.mrb[0].mxu0
        %v3568 = vadd.f32 0.0, %v3567
        %3569 = vmatprep.mubr.bf16.mxu0 0
        %3570 = vmatmul.mubr.bf16.gmra.mrb[0].mxu0 %v3277
        %v3571 = vpop.f32.mrb[0].mxu0
        %v3572 = vadd.f32 0.0, %v3571
        %v3573 = vpop.f32.mrb[0].mxu0
        %v3574 = vadd.f32 0.0, %v3573
        %v3575 = vpop.f32.mrb[0].mxu0
        %v3576 = vadd.f32 0.0, %v3575
        %v3577 = vpop.f32.mrb[0].mxu0
        %v3578 = vadd.f32 0.0, %v3577
        %3579 = vmatprep.mubr.bf16.mxu0 0
        %3580 = vmatmul.mubr.bf16.gmra.mrb[0].mxu0 %v3278
        %v3581 = vpop.f32.mrb[0].mxu0
        %v3582 = vadd.f32 0.0, %v3581
        %v3583 = vpop.f32.mrb[0].mxu0
        %v3584 = vadd.f32 0.0, %v3583
        %v3585 = vpop.f32.mrb[0].mxu0
        %v3586 = vadd.f32 0.0, %v3585
        %v3587 = vpop.f32.mrb[0].mxu0
        %v3588 = vadd.f32 0.0, %v3587
        %3589 = vmatprep.mubr.bf16.mxu0 0
        %3590 = vmatmul.mubr.bf16.gmra.mrb[0].mxu0 %v3279
        %v3591 = vpop.f32.mrb[0].mxu0
        %v3592 = vadd.f32 0.0, %v3591
        %v3593 = vpop.f32.mrb[0].mxu0
        %v3594 = vadd.f32 0.0, %v3593
        %v3595 = vpop.f32.mrb[0].mxu0
        %v3596 = vadd.f32 0.0, %v3595
        %v3597 = vpop.f32.mrb[0].mxu0
        %v3598 = vadd.f32 0.0, %v3597
        %3599 = vmatprep.mubr.bf16.mxu0 0
        %3600 = vmatmul.mubr.bf16.gmra.mrb[0].mxu0 %v3280
        %v3601 = vpop.f32.mrb[0].mxu0
        %v3602 = vadd.f32 0.0, %v3601
        %v3603 = vpop.f32.mrb[0].mxu0
        %v3604 = vadd.f32 0.0, %v3603
        %v3605 = vpop.f32.mrb[0].mxu0
        %v3606 = vadd.f32 0.0, %v3605
        %v3607 = vpop.f32.mrb[0].mxu0
        %v3608 = vadd.f32 0.0, %v3607
        %3609 = vmatprep.mubr.bf16.mxu0 0
        %3610 = vmatmul.mubr.bf16.gmra.mrb[0].mxu0 %v3281
        %v3611 = vpop.f32.mrb[0].mxu0
        %v3612 = vadd.f32 0.0, %v3611
        %v3613 = vpop.f32.mrb[0].mxu0
        %v3614 = vadd.f32 0.0, %v3613
        %v3615 = vpop.f32.mrb[0].mxu0
        %v3616 = vadd.f32 0.0, %v3615
        %v3617 = vpop.f32.mrb[0].mxu0
        %v3618 = vadd.f32 0.0, %v3617
        %3619 = vmatprep.mubr.bf16.mxu0 0
        %3620 = vmatmul.mubr.bf16.gmra.mrb[0].mxu0 %v3282
        %v3621 = vpop.f32.mrb[0].mxu0
        %v3622 = vadd.f32 0.0, %v3621
        %v3623 = vpop.f32.mrb[0].mxu0
        %v3624 = vadd.f32 0.0, %v3623
        %v3625 = vpop.f32.mrb[0].mxu0
        %v3626 = vadd.f32 0.0, %v3625
        %v3627 = vpop.f32.mrb[0].mxu0
        %v3628 = vadd.f32 0.0, %v3627
        %3629 = vmatprep.mubr.bf16.mxu0 0
        %3630 = vmatmul.mubr.bf16.gmra.mrb[0].mxu0 %v3283
        %v3631 = vpop.f32.mrb[0].mxu0
        %v3632 = vadd.f32 0.0, %v3631
        %v3633 = vpop.f32.mrb[0].mxu0
        %v3634 = vadd.f32 0.0, %v3633
        %v3635 = vpop.f32.mrb[0].mxu0
        %v3636 = vadd.f32 0.0, %v3635
        %v3637 = vpop.f32.mrb[0].mxu0
        %v3638 = vadd.f32 0.0, %v3637
        %3639 = vmatprep.mubr.bf16.mxu0 0
        %3640 = vmatmul.mubr.bf16.gmra.mrb[0].mxu0 %v3284
        %v3641 = vpop.f32.mrb[0].mxu0
        %v3642 = vadd.f32 0.0, %v3641
        %v3643 = vpop.f32.mrb[0].mxu0
        %v3644 = vadd.f32 0.0, %v3643
        %v3645 = vpop.f32.mrb[0].mxu0
        %v3646 = vadd.f32 0.0, %v3645
        %v3647 = vpop.f32.mrb[0].mxu0
        %v3648 = vadd.f32 0.0, %v3647
        %3649 = vmatprep.mubr.bf16.mxu0 0
        %3650 = vmatmul.mubr.bf16.gmra.mrb[0].mxu0 %v3285
        %v3651 = vpop.f32.mrb[0].mxu0
        %v3652 = vadd.f32 0.0, %v3651
        %v3653 = vpop.f32.mrb[0].mxu0
        %v3654 = vadd.f32 0.0, %v3653
        %v3655 = vpop.f32.mrb[0].mxu0
        %v3656 = vadd.f32 0.0, %v3655
        %v3657 = vpop.f32.mrb[0].mxu0
        %v3658 = vadd.f32 0.0, %v3657
        %3659 = vmatprep.mubr.bf16.mxu0 0
        %3660 = vmatmul.mubr.bf16.gmra.mrb[0].mxu0 %v3286
        %v3661 = vpop.f32.mrb[0].mxu0
        %v3662 = vadd.f32 0.0, %v3661
        %v3663 = vpop.f32.mrb[0].mxu0
        %v3664 = vadd.f32 0.0, %v3663
        %v3665 = vpop.f32.mrb[0].mxu0
        %v3666 = vadd.f32 0.0, %v3665
        %v3667 = vpop.f32.mrb[0].mxu0
        %v3668 = vadd.f32 0.0, %v3667
        %3669 = vmatprep.mubr.bf16.mxu0 0
        %3670 = vmatmul.mubr.bf16.gmra.mrb[0].mxu0 %v3287
        %v3671 = vpop.f32.mrb[0].mxu0
        %v3672 = vadd.f32 0.0, %v3671
        %v3673 = vpop.f32.mrb[0].mxu0
        %v3674 = vadd.f32 0.0, %v3673
        %v3675 = vpop.f32.mrb[0].mxu0
        %v3676 = vadd.f32 0.0, %v3675
        %v3677 = vpop.f32.mrb[0].mxu0
        %v3678 = vadd.f32 0.0, %v3677
        %3679 = vmatprep.mubr.bf16.mxu0 0
        %3680 = vmatmul.mubr.bf16.gmra.mrb[0].mxu0 %v3288
        %v3681 = vpop.f32.mrb[0].mxu0
        %v3682 = vadd.f32 0.0, %v3681
        %v3683 = vpop.f32.mrb[0].mxu0
        %v3684 = vadd.f32 0.0, %v3683
        %v3685 = vpop.f32.mrb[0].mxu0
        %v3686 = vadd.f32 0.0, %v3685
        %v3687 = vpop.f32.mrb[0].mxu0
        %v3688 = vadd.f32 0.0, %v3687
        %3689 = vmatprep.mubr.bf16.mxu0 0
        %3690 = vmatmul.mubr.bf16.gmra.mrb[0].mxu0 %v3289
        %v3691 = vpop.f32.mrb[0].mxu0
        %v3692 = vadd.f32 0.0, %v3691
        %v3693 = vpop.f32.mrb[0].mxu0
        %v3694 = vadd.f32 0.0, %v3693
        %v3695 = vpop.f32.mrb[0].mxu0
        %v3696 = vadd.f32 0.0, %v3695
        %v3697 = vpop.f32.mrb[0].mxu0
        %v3698 = vadd.f32 0.0, %v3697
        %3699 = vmatprep.mubr.bf16.mxu0 0
        %3700 = vmatmul.mubr.bf16.gmra.mrb[0].mxu0 %v3290
        %v3701 = vpop.f32.mrb[0].mxu0
        %v3702 = vadd.f32 0.0, %v3701
        %v3703 = vpop.f32.mrb[0].mxu0
        %v3704 = vadd.f32 0.0, %v3703
        %v3705 = vpop.f32.mrb[0].mxu0
        %v3706 = vadd.f32 0.0, %v3705
        %v3707 = vpop.f32.mrb[0].mxu0
        %v3708 = vadd.f32 0.0, %v3707
        %3709 = vmatprep.mubr.bf16.mxu0 0
        %3710 = vmatmul.mubr.bf16.gmra.mrb[0].mxu0 %v3291
        %v3711 = vpop.f32.mrb[0].mxu0
        %v3712 = vadd.f32 0.0, %v3711
        %v3713 = vpop.f32.mrb[0].mxu0
        %v3714 = vadd.f32 0.0, %v3713
        %v3715 = vpop.f32.mrb[0].mxu0
        %v3716 = vadd.f32 0.0, %v3715
        %v3717 = vpop.f32.mrb[0].mxu0
        %v3718 = vadd.f32 0.0, %v3717
        %3719 = vmatprep.mubr.bf16.mxu0 0
        %3720 = vmatmul.mubr.bf16.gmra.mrb[0].mxu0 %v3292
        %v3721 = vpop.f32.mrb[0].mxu0
        %v3722 = vadd.f32 0.0, %v3721
        %v3723 = vpop.f32.mrb[0].mxu0
        %v3724 = vadd.f32 0.0, %v3723
        %v3725 = vpop.f32.mrb[0].mxu0
        %v3726 = vadd.f32 0.0, %v3725
        %v3727 = vpop.f32.mrb[0].mxu0
        %v3728 = vadd.f32 0.0, %v3727
        %3729 = vmatprep.mubr.bf16.mxu0 0
        %3730 = vmatmul.mubr.bf16.gmra.mrb[0].mxu0 %v3293
        %v3731 = vpop.f32.mrb[0].mxu0
        %v3732 = vadd.f32 0.0, %v3731
        %v3733 = vpop.f32.mrb[0].mxu0
        %v3734 = vadd.f32 0.0, %v3733
        %v3735 = vpop.f32.mrb[0].mxu0
        %v3736 = vadd.f32 0.0, %v3735
        %v3737 = vpop.f32.mrb[0].mxu0
        %v3738 = vadd.f32 0.0, %v3737
        %3739 = vmatprep.mubr.bf16.mxu0 0
        %3740 = vmatmul.mubr.bf16.gmra.mrb[0].mxu0 %v3294
        %v3741 = vpop.f32.mrb[0].mxu0
        %v3742 = vadd.f32 0.0, %v3741
        %v3743 = vpop.f32.mrb[0].mxu0
        %v3744 = vadd.f32 0.0, %v3743
        %v3745 = vpop.f32.mrb[0].mxu0
        %v3746 = vadd.f32 0.0, %v3745
        %v3747 = vpop.f32.mrb[0].mxu0
        %v3748 = vadd.f32 0.0, %v3747
        %3749 = vmatprep.mubr.bf16.mxu0 0
        %3750 = vmatmul.mubr.bf16.gmra.mrb[0].mxu0 %v3295
        %v3751 = vpop.f32.mrb[0].mxu0
        %v3752 = vadd.f32 0.0, %v3751
        %v3753 = vpop.f32.mrb[0].mxu0
        %v3754 = vadd.f32 0.0, %v3753
        %v3755 = vpop.f32.mrb[0].mxu0
        %v3756 = vadd.f32 0.0, %v3755
        %v3757 = vpop.f32.mrb[0].mxu0
        %v3758 = vadd.f32 0.0, %v3757
        %3759 = vmatprep.mubr.bf16.mxu0 0
        %3760 = vmatmul.mubr.bf16.gmra.mrb[0].mxu0 %v3296
        %v3761 = vpop.f32.mrb[0].mxu0
        %v3762 = vadd.f32 0.0, %v3761
        %v3763 = vpop.f32.mrb[0].mxu0
        %v3764 = vadd.f32 0.0, %v3763
        %v3765 = vpop.f32.mrb[0].mxu0
        %v3766 = vadd.f32 0.0, %v3765
        %v3767 = vpop.f32.mrb[0].mxu0
        %v3768 = vadd.f32 0.0, %v3767
        %3769 = vmatprep.mubr.bf16.mxu0 0
        %3770 = vmatmul.mubr.bf16.gmra.mrb[0].mxu0 %v3297
        %v3771 = vpop.f32.mrb[0].mxu0
        %v3772 = vadd.f32 0.0, %v3771
        %v3773 = vpop.f32.mrb[0].mxu0
        %v3774 = vadd.f32 0.0, %v3773
        %v3775 = vpop.f32.mrb[0].mxu0
        %v3776 = vadd.f32 0.0, %v3775
        %v3777 = vpop.f32.mrb[0].mxu0
        %v3778 = vadd.f32 0.0, %v3777
        %3779 = vmatprep.mubr.bf16.mxu0 0
        %3780 = vmatmul.mubr.bf16.gmra.mrb[0].mxu0 %v3298
        %v3781 = vpop.f32.mrb[0].mxu0
        %v3782 = vadd.f32 0.0, %v3781
        %v3783 = vpop.f32.mrb[0].mxu0
        %v3784 = vadd.f32 0.0, %v3783
        %v3785 = vpop.f32.mrb[0].mxu0
        %v3786 = vadd.f32 0.0, %v3785
        %v3787 = vpop.f32.mrb[0].mxu0
        %v3788 = vadd.f32 0.0, %v3787
        %3789 = vmatprep.mubr.bf16.mxu0 0
        %3790 = vmatmul.mubr.bf16.gmra.mrb[0].mxu0 %v3299
        %v3791 = vpop.f32.mrb[0].mxu0
        %v3792 = vadd.f32 0.0, %v3791
        %v3793 = vpop.f32.mrb[0].mxu0
        %v3794 = vadd.f32 0.0, %v3793
        %v3795 = vpop.f32.mrb[0].mxu0
        %v3796 = vadd.f32 0.0, %v3795
        %v3797 = vpop.f32.mrb[0].mxu0
        %v3798 = vadd.f32 0.0, %v3797
        %3799 = vmatprep.mubr.bf16.mxu0 0
        %3800 = vmatmul.mubr.bf16.gmra.mrb[0].mxu0 %v3300
        %v3801 = vpop.f32.mrb[0].mxu0
        %v3802 = vadd.f32 0.0, %v3801
        %v3803 = vpop.f32.mrb[0].mxu0
        %v3804 = vadd.f32 0.0, %v3803
        %v3805 = vpop.f32.mrb[0].mxu0
        %v3806 = vadd.f32 0.0, %v3805
        %v3807 = vpop.f32.mrb[0].mxu0
        %v3808 = vadd.f32 0.0, %v3807
        %3809 = vmatprep.mubr.bf16.mxu0 0
        %3810 = vmatmul.mubr.bf16.gmra.mrb[0].mxu0 %v3301
        %v3811 = vpop.f32.mrb[0].mxu0
        %v3812 = vadd.f32 0.0, %v3811
        %v3813 = vpop.f32.mrb[0].mxu0
        %v3814 = vadd.f32 0.0, %v3813
        %v3815 = vpop.f32.mrb[0].mxu0
        %v3816 = vadd.f32 0.0, %v3815
        %v3817 = vpop.f32.mrb[0].mxu0
        %v3818 = vadd.f32 0.0, %v3817
        %3819 = vmatprep.mubr.bf16.mxu0 0
        %3820 = vmatmul.mubr.bf16.gmra.mrb[0].mxu0 %v3302
        %v3821 = vpop.f32.mrb[0].mxu0
        %v3822 = vadd.f32 0.0, %v3821
        %v3823 = vpop.f32.mrb[0].mxu0
        %v3824 = vadd.f32 0.0, %v3823
        %v3825 = vpop.f32.mrb[0].mxu0
        %v3826 = vadd.f32 0.0, %v3825
        %v3827 = vpop.f32.mrb[0].mxu0
        %v3828 = vadd.f32 0.0, %v3827
        %3829 = vmatprep.mubr.bf16.mxu0 0
        %3830 = vmatmul.mubr.bf16.gmra.mrb[0].mxu0 %v3303
        %v3831 = vpop.f32.mrb[0].mxu0
        %v3832 = vadd.f32 0.0, %v3831
        %v3833 = vpop.f32.mrb[0].mxu0
        %v3834 = vadd.f32 0.0, %v3833
        %v3835 = vpop.f32.mrb[0].mxu0
        %v3836 = vadd.f32 0.0, %v3835
        %v3837 = vpop.f32.mrb[0].mxu0
        %v3838 = vadd.f32 0.0, %v3837
        %3839 = vmatprep.mubr.bf16.mxu0 0
        %3840 = vmatmul.mubr.bf16.gmra.mrb[0].mxu0 %v3304
        %v3841 = vpop.f32.mrb[0].mxu0
        %v3842 = vadd.f32 0.0, %v3841
        %v3843 = vpop.f32.mrb[0].mxu0
        %v3844 = vadd.f32 0.0, %v3843
        %v3845 = vpop.f32.mrb[0].mxu0
        %v3846 = vadd.f32 0.0, %v3845
        %v3847 = vpop.f32.mrb[0].mxu0
        %v3848 = vadd.f32 0.0, %v3847
        %3849 = vmatprep.mubr.bf16.mxu0 0
        %3850 = vmatmul.mubr.bf16.gmra.mrb[0].mxu0 %v3305
        %v3851 = vpop.f32.mrb[0].mxu0
        %v3852 = vadd.f32 0.0, %v3851
        %v3853 = vpop.f32.mrb[0].mxu0
        %v3854 = vadd.f32 0.0, %v3853
        %v3855 = vpop.f32.mrb[0].mxu0
        %v3856 = vadd.f32 0.0, %v3855
        %v3857 = vpop.f32.mrb[0].mxu0
        %v3858 = vadd.f32 0.0, %v3857
        %3859 = vmatprep.mubr.bf16.mxu0 0
        %3860 = vmatmul.mubr.bf16.gmra.mrb[0].mxu0 %v3306
        %v3861 = vpop.f32.mrb[0].mxu0
        %v3862 = vadd.f32 0.0, %v3861
        %v3863 = vpop.f32.mrb[0].mxu0
        %v3864 = vadd.f32 0.0, %v3863
        %v3865 = vpop.f32.mrb[0].mxu0
        %v3866 = vadd.f32 0.0, %v3865
        %v3867 = vpop.f32.mrb[0].mxu0
        %v3868 = vadd.f32 0.0, %v3867
        %3869 = vmatprep.mubr.bf16.mxu0 0
        %3870 = vmatmul.mubr.bf16.gmra.mrb[0].mxu0 %v3307
        %v3871 = vpop.f32.mrb[0].mxu0
        %v3872 = vadd.f32 0.0, %v3871
        %v3873 = vpop.f32.mrb[0].mxu0
        %v3874 = vadd.f32 0.0, %v3873
        %v3875 = vpop.f32.mrb[0].mxu0
        %v3876 = vadd.f32 0.0, %v3875
        %v3877 = vpop.f32.mrb[0].mxu0
        %v3878 = vadd.f32 0.0, %v3877
        %3879 = vmatprep.mubr.bf16.mxu0 0
        %3880 = vmatmul.mubr.bf16.gmra.mrb[0].mxu0 %v3308
        %v3881 = vpop.f32.mrb[0].mxu0
        %v3882 = vadd.f32 0.0, %v3881
        %v3883 = vpop.f32.mrb[0].mxu0
        %v3884 = vadd.f32 0.0, %v3883
        %v3885 = vpop.f32.mrb[0].mxu0
        %v3886 = vadd.f32 0.0, %v3885
        %v3887 = vpop.f32.mrb[0].mxu0
        %v3888 = vadd.f32 0.0, %v3887
        %3889 = vmatprep.mubr.bf16.mxu0 0
        %3890 = vmatmul.mubr.bf16.gmra.mrb[0].mxu0 %v3309
        %v3891 = vpop.f32.mrb[0].mxu0
        %v3892 = vadd.f32 0.0, %v3891
        %v3893 = vpop.f32.mrb[0].mxu0
        %v3894 = vadd.f32 0.0, %v3893
        %v3895 = vpop.f32.mrb[0].mxu0
        %v3896 = vadd.f32 0.0, %v3895
        %v3897 = vpop.f32.mrb[0].mxu0
        %v3898 = vadd.f32 0.0, %v3897
        %3899 = vmatprep.mubr.bf16.mxu0 0
        %3900 = vmatmul.mubr.bf16.gmra.mrb[0].mxu0 %v3310
        %v3901 = vpop.f32.mrb[0].mxu0
        %v3902 = vadd.f32 0.0, %v3901
        %v3903 = vpop.f32.mrb[0].mxu0
        %v3904 = vadd.f32 0.0, %v3903
        %v3905 = vpop.f32.mrb[0].mxu0
        %v3906 = vadd.f32 0.0, %v3905
        %v3907 = vpop.f32.mrb[0].mxu0
        %v3908 = vadd.f32 0.0, %v3907
        %3909 = vmatprep.mubr.bf16.mxu0 0
        %3910 = vmatmul.mubr.bf16.gmra.mrb[0].mxu0 %v3311
        %v3911 = vpop.f32.mrb[0].mxu0
        %v3912 = vadd.f32 0.0, %v3911
        %v3913 = vpop.f32.mrb[0].mxu0
        %v3914 = vadd.f32 0.0, %v3913
        %v3915 = vpop.f32.mrb[0].mxu0
        %v3916 = vadd.f32 0.0, %v3915
        %v3917 = vpop.f32.mrb[0].mxu0
        %v3918 = vadd.f32 0.0, %v3917
        %3919 = vmatprep.mubr.bf16.mxu0 0
        %3920 = vmatmul.mubr.bf16.gmra.mrb[0].mxu0 %v3312
        %v3921 = vpop.f32.mrb[0].mxu0
        %v3922 = vadd.f32 0.0, %v3921
        %v3923 = vpop.f32.mrb[0].mxu0
        %v3924 = vadd.f32 0.0, %v3923
        %v3925 = vpop.f32.mrb[0].mxu0
        %v3926 = vadd.f32 0.0, %v3925
        %v3927 = vpop.f32.mrb[0].mxu0
        %v3928 = vadd.f32 0.0, %v3927
        %3929 = vmatprep.mubr.bf16.mxu0 0
        %3930 = vmatmul.mubr.bf16.gmra.mrb[0].mxu0 %v3313
        %v3931 = vpop.f32.mrb[0].mxu0
        %v3932 = vadd.f32 0.0, %v3931
        %v3933 = vpop.f32.mrb[0].mxu0
        %v3934 = vadd.f32 0.0, %v3933
        %v3935 = vpop.f32.mrb[0].mxu0
        %v3936 = vadd.f32 0.0, %v3935
        %v3937 = vpop.f32.mrb[0].mxu0
        %v3938 = vadd.f32 0.0, %v3937
        %3939 = vmatprep.mubr.bf16.mxu0 0
        %3940 = vmatmul.mubr.bf16.gmra.mrb[0].mxu0 %v3314
        %v3941 = vpop.f32.mrb[0].mxu0
        %v3942 = vadd.f32 0.0, %v3941
        %v3943 = vpop.f32.mrb[0].mxu0
        %v3944 = vadd.f32 0.0, %v3943
        %v3945 = vpop.f32.mrb[0].mxu0
        %v3946 = vadd.f32 0.0, %v3945
        %v3947 = vpop.f32.mrb[0].mxu0
        %v3948 = vadd.f32 0.0, %v3947
        %3949 = vmatprep.mubr.bf16.mxu0 0
        %3950 = vmatmul.mubr.bf16.gmra.mrb[0].mxu0 %v3315
        %v3951 = vpop.f32.mrb[0].mxu0
        %v3952 = vadd.f32 0.0, %v3951
        %v3953 = vpop.f32.mrb[0].mxu0
        %v3954 = vadd.f32 0.0, %v3953
        %v3955 = vpop.f32.mrb[0].mxu0
        %v3956 = vadd.f32 0.0, %v3955
        %v3957 = vpop.f32.mrb[0].mxu0
        %v3958 = vadd.f32 0.0, %v3957
        %3959 = vmatprep.mubr.bf16.mxu0 0
        %3960 = vmatmul.mubr.bf16.gmra.mrb[0].mxu0 %v3316
        %v3961 = vpop.f32.mrb[0].mxu0
        %v3962 = vadd.f32 0.0, %v3961
        %v3963 = vpop.f32.mrb[0].mxu0
        %v3964 = vadd.f32 0.0, %v3963
        %v3965 = vpop.f32.mrb[0].mxu0
        %v3966 = vadd.f32 0.0, %v3965
        %v3967 = vpop.f32.mrb[0].mxu0
        %v3968 = vadd.f32 0.0, %v3967
        %3969 = vmatprep.mubr.bf16.mxu0 0
        %3970 = vmatmul.mubr.bf16.gmra.mrb[0].mxu0 %v3317
        %v3971 = vpop.f32.mrb[0].mxu0
        %v3972 = vadd.f32 0.0, %v3971
        %v3973 = vpop.f32.mrb[0].mxu0
        %v3974 = vadd.f32 0.0, %v3973
        %v3975 = vpop.f32.mrb[0].mxu0
        %v3976 = vadd.f32 0.0, %v3975
        %v3977 = vpop.f32.mrb[0].mxu0
        %v3978 = vadd.f32 0.0, %v3977
        %3979 = vmatprep.mubr.bf16.mxu0 0
        %3980 = vmatmul.mubr.bf16.gmra.mrb[0].mxu0 %v3318
        %v3981 = vpop.f32.mrb[0].mxu0
        %v3982 = vadd.f32 0.0, %v3981
        %v3983 = vpop.f32.mrb[0].mxu0
        %v3984 = vadd.f32 0.0, %v3983
        %v3985 = vpop.f32.mrb[0].mxu0
        %v3986 = vadd.f32 0.0, %v3985
        %v3987 = vpop.f32.mrb[0].mxu0
        %v3988 = vadd.f32 0.0, %v3987
        %3989 = vmatprep.mubr.bf16.mxu0 0
        %3990 = vmatmul.mubr.bf16.gmra.mrb[0].mxu0 %v3319
        %v3991 = vpop.f32.mrb[0].mxu0
        %v3992 = vadd.f32 0.0, %v3991
        %v3993 = vpop.f32.mrb[0].mxu0
        %v3994 = vadd.f32 0.0, %v3993
        %v3995 = vpop.f32.mrb[0].mxu0
        %v3996 = vadd.f32 0.0, %v3995
        %v3997 = vpop.f32.mrb[0].mxu0
        %v3998 = vadd.f32 0.0, %v3997
        %3999 = vmatprep.mubr.bf16.mxu0 0
        %4000 = vmatmul.mubr.bf16.gmra.mrb[0].mxu0 %v3320
        %v4001 = vpop.f32.mrb[0].mxu0
        %v4002 = vadd.f32 0.0, %v4001
        %v4003 = vpop.f32.mrb[0].mxu0
        %v4004 = vadd.f32 0.0, %v4003
        %v4005 = vpop.f32.mrb[0].mxu0
        %v4006 = vadd.f32 0.0, %v4005
        %v4007 = vpop.f32.mrb[0].mxu0
        %v4008 = vadd.f32 0.0, %v4007
        %4009 = vmatprep.mubr.bf16.mxu0 0
        %4010 = vmatmul.mubr.bf16.gmra.mrb[0].mxu0 %v3321
        %v4011 = vpop.f32.mrb[0].mxu0
        %v4012 = vadd.f32 0.0, %v4011
        %v4013 = vpop.f32.mrb[0].mxu0
        %v4014 = vadd.f32 0.0, %v4013
        %v4015 = vpop.f32.mrb[0].mxu0
        %v4016 = vadd.f32 0.0, %v4015
        %v4017 = vpop.f32.mrb[0].mxu0
        %v4018 = vadd.f32 0.0, %v4017
        %4019 = vmatprep.mubr.bf16.mxu0 0
        %4020 = vmatmul.mubr.bf16.gmra.mrb[0].mxu0 %v3322
        %v4021 = vpop.f32.mrb[0].mxu0
        %v4022 = vadd.f32 0.0, %v4021
        %v4023 = vpop.f32.mrb[0].mxu0
        %v4024 = vadd.f32 0.0, %v4023
        %v4025 = vpop.f32.mrb[0].mxu0
        %v4026 = vadd.f32 0.0, %v4025
        %v4027 = vpop.f32.mrb[0].mxu0
        %v4028 = vadd.f32 0.0, %v4027
        %4029 = vmatprep.mubr.bf16.mxu0 0
        %4030 = vmatmul.mubr.bf16.gmra.mrb[0].mxu0 %v3323
        %v4031 = vpop.f32.mrb[0].mxu0
        %v4032 = vadd.f32 0.0, %v4031
        %v4033 = vpop.f32.mrb[0].mxu0
        %v4034 = vadd.f32 0.0, %v4033
        %v4035 = vpop.f32.mrb[0].mxu0
        %v4036 = vadd.f32 0.0, %v4035
        %v4037 = vpop.f32.mrb[0].mxu0
        %v4038 = vadd.f32 0.0, %v4037
        %4039 = vmatprep.mubr.bf16.mxu0 0
        %4040 = vmatmul.mubr.bf16.gmra.mrb[0].mxu0 %v3324
        %v4041 = vpop.f32.mrb[0].mxu0
        %v4042 = vadd.f32 0.0, %v4041
        %v4043 = vpop.f32.mrb[0].mxu0
        %v4044 = vadd.f32 0.0, %v4043
        %v4045 = vpop.f32.mrb[0].mxu0
        %v4046 = vadd.f32 0.0, %v4045
        %v4047 = vpop.f32.mrb[0].mxu0
        %v4048 = vadd.f32 0.0, %v4047
        %4049 = vmatprep.mubr.bf16.mxu0 0
        %4050 = vmatmul.mubr.bf16.gmra.mrb[0].mxu0 %v3325
        %v4051 = vpop.f32.mrb[0].mxu0
        %v4052 = vadd.f32 0.0, %v4051
        %v4053 = vpop.f32.mrb[0].mxu0
        %v4054 = vadd.f32 0.0, %v4053
        %v4055 = vpop.f32.mrb[0].mxu0
        %v4056 = vadd.f32 0.0, %v4055
        %v4057 = vpop.f32.mrb[0].mxu0
        %v4058 = vadd.f32 0.0, %v4057
        %4059 = vmatprep.mubr.bf16.mxu0 0
        %4060 = vmatmul.mubr.bf16.gmra.mrb[0].mxu0 %v3326
        %v4061 = vpop.f32.mrb[0].mxu0
        %v4062 = vadd.f32 0.0, %v4061
        %v4063 = vpop.f32.mrb[0].mxu0
        %v4064 = vadd.f32 0.0, %v4063
        %v4065 = vpop.f32.mrb[0].mxu0
        %v4066 = vadd.f32 0.0, %v4065
        %v4067 = vpop.f32.mrb[0].mxu0
        %v4068 = vadd.f32 0.0, %v4067
        %4069 = vmatprep.mubr.bf16.mxu0 0
        %4070 = vmatmul.mubr.bf16.gmra.mrb[0].mxu0 %v3327
        %v4071 = vpop.f32.mrb[0].mxu0
        %v4072 = vadd.f32 0.0, %v4071
        %v4073 = vpop.f32.mrb[0].mxu0
        %v4074 = vadd.f32 0.0, %v4073
        %v4075 = vpop.f32.mrb[0].mxu0
        %v4076 = vadd.f32 0.0, %v4075
        %v4077 = vpop.f32.mrb[0].mxu0
        %v4078 = vadd.f32 0.0, %v4077
        %4079 = vmatprep.mubr.bf16.mxu0 0
        %4080 = vmatmul.mubr.bf16.gmra.mrb[0].mxu0 %v3328
        %v4081 = vpop.f32.mrb[0].mxu0
        %v4082 = vadd.f32 0.0, %v4081
        %v4083 = vpop.f32.mrb[0].mxu0
        %v4084 = vadd.f32 0.0, %v4083
        %v4085 = vpop.f32.mrb[0].mxu0
        %v4086 = vadd.f32 0.0, %v4085
        %v4087 = vpop.f32.mrb[0].mxu0
        %v4088 = vadd.f32 0.0, %v4087
        %4089 = vmatprep.mubr.bf16.mxu0 0
        %4090 = vmatmul.mubr.bf16.gmra.mrb[0].mxu0 %v3329
        %v4091 = vpop.f32.mrb[0].mxu0
        %v4092 = vadd.f32 0.0, %v4091
        %v4093 = vpop.f32.mrb[0].mxu0
        %v4094 = vadd.f32 0.0, %v4093
        %v4095 = vpop.f32.mrb[0].mxu0
        %v4096 = vadd.f32 0.0, %v4095
        %v4097 = vpop.f32.mrb[0].mxu0
        %v4098 = vadd.f32 0.0, %v4097
        %4099 = vmatprep.mubr.bf16.mxu0 0
        %4100 = vmatmul.mubr.bf16.gmra.mrb[0].mxu0 %v3330
        %v4101 = vpop.f32.mrb[0].mxu0
        %v4102 = vadd.f32 0.0, %v4101
        %v4103 = vpop.f32.mrb[0].mxu0
        %v4104 = vadd.f32 0.0, %v4103
        %v4105 = vpop.f32.mrb[0].mxu0
        %v4106 = vadd.f32 0.0, %v4105
        %v4107 = vpop.f32.mrb[0].mxu0
        %v4108 = vadd.f32 0.0, %v4107
        %4109 = vmatprep.mubr.bf16.mxu0 0
        %4110 = vmatmul.mubr.bf16.gmra.mrb[0].mxu0 %v3331
        %v4111 = vpop.f32.mrb[0].mxu0
        %v4112 = vadd.f32 0.0, %v4111
        %v4113 = vpop.f32.mrb[0].mxu0
        %v4114 = vadd.f32 0.0, %v4113
        %v4115 = vpop.f32.mrb[0].mxu0
        %v4116 = vadd.f32 0.0, %v4115
        %v4117 = vpop.f32.mrb[0].mxu0
        %v4118 = vadd.f32 0.0, %v4117
        %4119 = vmatprep.mubr.bf16.mxu0 0
        %4120 = vmatmul.mubr.bf16.gmra.mrb[0].mxu0 %v3332
        %v4121 = vpop.f32.mrb[0].mxu0
        %v4122 = vadd.f32 0.0, %v4121
        %v4123 = vpop.f32.mrb[0].mxu0
        %v4124 = vadd.f32 0.0, %v4123
        %v4125 = vpop.f32.mrb[0].mxu0
        %v4126 = vadd.f32 0.0, %v4125
        %v4127 = vpop.f32.mrb[0].mxu0
        %v4128 = vadd.f32 0.0, %v4127
        %4129 = vmatprep.mubr.bf16.mxu0 0
        %4130 = vmatmul.mubr.bf16.gmra.mrb[0].mxu0 %v3333
        %v4131 = vpop.f32.mrb[0].mxu0
        %v4132 = vadd.f32 0.0, %v4131
        %v4133 = vpop.f32.mrb[0].mxu0
        %v4134 = vadd.f32 0.0, %v4133
        %v4135 = vpop.f32.mrb[0].mxu0
        %v4136 = vadd.f32 0.0, %v4135
        %v4137 = vpop.f32.mrb[0].mxu0
        %v4138 = vadd.f32 0.0, %v4137
        %4139 = vmatprep.mubr.bf16.mxu0 0
        %4140 = vmatmul.mubr.bf16.gmra.mrb[0].mxu0 %v3334
        %v4141 = vpop.f32.mrb[0].mxu0
        %v4142 = vadd.f32 0.0, %v4141
        %v4143 = vpop.f32.mrb[0].mxu0
        %v4144 = vadd.f32 0.0, %v4143
        %v4145 = vpop.f32.mrb[0].mxu0
        %v4146 = vadd.f32 0.0, %v4145
        %v4147 = vpop.f32.mrb[0].mxu0
        %v4148 = vadd.f32 0.0, %v4147
        %4149 = vmatprep.mubr.bf16.mxu0 0
        %4150 = vmatmul.mubr.bf16.gmra.mrb[0].mxu0 %v3335
        %v4151 = vpop.f32.mrb[0].mxu0
        %v4152 = vadd.f32 0.0, %v4151
        %v4153 = vpop.f32.mrb[0].mxu0
        %v4154 = vadd.f32 0.0, %v4153
        %v4155 = vpop.f32.mrb[0].mxu0
        %v4156 = vadd.f32 0.0, %v4155
        %v4157 = vpop.f32.mrb[0].mxu0
        %v4158 = vadd.f32 0.0, %v4157
        %4159 = vmatprep.mubr.bf16.mxu0 0
        %4160 = vmatmul.mubr.bf16.gmra.mrb[0].mxu0 %v3336
        %v4161 = vpop.f32.mrb[0].mxu0
        %v4162 = vadd.f32 0.0, %v4161
        %v4163 = vpop.f32.mrb[0].mxu0
        %v4164 = vadd.f32 0.0, %v4163
        %v4165 = vpop.f32.mrb[0].mxu0
        %v4166 = vadd.f32 0.0, %v4165
        %v4167 = vpop.f32.mrb[0].mxu0
        %v4168 = vadd.f32 0.0, %v4167
        %4169 = vdwg.mxu0
        %4170 = vmatprep.subr.bf16.mxu0 0
        %4171 = vmatpush1.bf16.msra.mxu0 %v3451
        %4172 = vmatprep.subr.bf16.mxu0 0
        %4173 = vmatpush1.bf16.msra.mxu0 %v3454
        %4174 = vmatprep.subr.bf16.mxu0 0
        %4175 = vmatpush1.bf16.msra.mxu0 %v3457
        %4176 = vmatprep.subr.bf16.mxu0 0
        %4177 = vmatpush1.bf16.msra.mxu0 %v3460
        %4178 = vmatprep.subr.bf16.mxu0 0
        %4179 = vmatpush1.bf16.msra.mxu0 %v3463
        %4180 = vmatprep.subr.bf16.mxu0 0
        %4181 = vmatpush1.bf16.msra.mxu0 %v3466
        %4182 = vmatprep.subr.bf16.mxu0 0
        %4183 = vmatpush1.bf16.msra.mxu0 %v3469
        %4184 = vmatprep.subr.bf16.mxu0 0
        %4185 = vmatpush1.bf16.msra.mxu0 %v3472
        %4186 = vmatprep.subr.bf16.mxu0 0
        %4187 = vmatpush1.bf16.msra.mxu0 0
        %4188 = vmatprep.subr.bf16.mxu0 0
        %4189 = vmatpush1.bf16.msra.mxu0 0
        %4190 = vmatprep.subr.bf16.mxu0 0
        %4191 = vmatpush1.bf16.msra.mxu0 0
        %4192 = vmatprep.subr.bf16.mxu0 0
        %4193 = vmatpush1.bf16.msra.mxu0 0
        %4194 = vmatprep.subr.bf16.mxu0 0
        %4195 = vmatpush1.bf16.msra.mxu0 0
        %4196 = vmatprep.subr.bf16.mxu0 0
        %4197 = vmatpush1.bf16.msra.mxu0 0
        %4198 = vmatprep.subr.bf16.mxu0 0
        %4199 = vmatpush1.bf16.msra.mxu0 0
        %4200 = vmatprep.subr.bf16.mxu0 0
        %4201 = vmatpush1.bf16.msra.mxu0 0
        %4202 = vmatprep.mubr.bf16.mxu0 0
        %4203 = vmatmul.mubr.bf16.gmra.mrb[0].mxu0 %v3273
        %v4204 = vpop.f32.mrb[0].mxu0
        %v4205 = vadd.f32 0.0, %v4204
        %v4206 = vpop.f32.mrb[0].mxu0
        %v4207 = vpop.f32.mrb[0].mxu0
        %v4208 = vadd.f32 0.0, %v4207
        %v4209 = vpop.f32.mrb[0].mxu0
        %4210 = vmatprep.mubr.bf16.mxu0 0
        %4211 = vmatmul.mubr.bf16.gmra.mrb[0].mxu0 %v3274
        %v4212 = vpop.f32.mrb[0].mxu0
        %v4213 = vadd.f32 0.0, %v4212
        %v4214 = vpop.f32.mrb[0].mxu0
        %v4215 = vpop.f32.mrb[0].mxu0
        %v4216 = vadd.f32 0.0, %v4215
        %v4217 = vpop.f32.mrb[0].mxu0
        %4218 = vmatprep.mubr.bf16.mxu0 0
        %4219 = vmatmul.mubr.bf16.gmra.mrb[0].mxu0 %v3275
        %v4220 = vpop.f32.mrb[0].mxu0
        %v4221 = vadd.f32 0.0, %v4220
        %v4222 = vpop.f32.mrb[0].mxu0
        %v4223 = vpop.f32.mrb[0].mxu0
        %v4224 = vadd.f32 0.0, %v4223
        %v4225 = vpop.f32.mrb[0].mxu0
        %4226 = vmatprep.mubr.bf16.mxu0 0
        %4227 = vmatmul.mubr.bf16.gmra.mrb[0].mxu0 %v3276
        %v4228 = vpop.f32.mrb[0].mxu0
        %v4229 = vadd.f32 0.0, %v4228
        %v4230 = vpop.f32.mrb[0].mxu0
        %v4231 = vpop.f32.mrb[0].mxu0
        %v4232 = vadd.f32 0.0, %v4231
        %v4233 = vpop.f32.mrb[0].mxu0
        %4234 = vmatprep.mubr.bf16.mxu0 0
        %4235 = vmatmul.mubr.bf16.gmra.mrb[0].mxu0 %v3277
        %v4236 = vpop.f32.mrb[0].mxu0
        %v4237 = vadd.f32 0.0, %v4236
        %v4238 = vpop.f32.mrb[0].mxu0
        %v4239 = vpop.f32.mrb[0].mxu0
        %v4240 = vadd.f32 0.0, %v4239
        %v4241 = vpop.f32.mrb[0].mxu0
        %4242 = vmatprep.mubr.bf16.mxu0 0
        %4243 = vmatmul.mubr.bf16.gmra.mrb[0].mxu0 %v3278
        %v4244 = vpop.f32.mrb[0].mxu0
        %v4245 = vadd.f32 0.0, %v4244
        %v4246 = vpop.f32.mrb[0].mxu0
        %v4247 = vpop.f32.mrb[0].mxu0
        %v4248 = vadd.f32 0.0, %v4247
        %v4249 = vpop.f32.mrb[0].mxu0
        %4250 = vmatprep.mubr.bf16.mxu0 0
        %4251 = vmatmul.mubr.bf16.gmra.mrb[0].mxu0 %v3279
        %v4252 = vpop.f32.mrb[0].mxu0
        %v4253 = vadd.f32 0.0, %v4252
        %v4254 = vpop.f32.mrb[0].mxu0
        %v4255 = vpop.f32.mrb[0].mxu0
        %v4256 = vadd.f32 0.0, %v4255
        %v4257 = vpop.f32.mrb[0].mxu0
        %4258 = vmatprep.mubr.bf16.mxu0 0
        %4259 = vmatmul.mubr.bf16.gmra.mrb[0].mxu0 %v3280
        %v4260 = vpop.f32.mrb[0].mxu0
        %v4261 = vadd.f32 0.0, %v4260
        %v4262 = vpop.f32.mrb[0].mxu0
        %v4263 = vpop.f32.mrb[0].mxu0
        %v4264 = vadd.f32 0.0, %v4263
        %v4265 = vpop.f32.mrb[0].mxu0
        %4266 = vmatprep.mubr.bf16.mxu0 0
        %4267 = vmatmul.mubr.bf16.gmra.mrb[0].mxu0 %v3281
        %v4268 = vpop.f32.mrb[0].mxu0
        %v4269 = vadd.f32 0.0, %v4268
        %v4270 = vpop.f32.mrb[0].mxu0
        %v4271 = vpop.f32.mrb[0].mxu0
        %v4272 = vadd.f32 0.0, %v4271
        %v4273 = vpop.f32.mrb[0].mxu0
        %4274 = vmatprep.mubr.bf16.mxu0 0
        %4275 = vmatmul.mubr.bf16.gmra.mrb[0].mxu0 %v3282
        %v4276 = vpop.f32.mrb[0].mxu0
        %v4277 = vadd.f32 0.0, %v4276
        %v4278 = vpop.f32.mrb[0].mxu0
        %v4279 = vpop.f32.mrb[0].mxu0
        %v4280 = vadd.f32 0.0, %v4279
        %v4281 = vpop.f32.mrb[0].mxu0
        %4282 = vmatprep.mubr.bf16.mxu0 0
        %4283 = vmatmul.mubr.bf16.gmra.mrb[0].mxu0 %v3283
        %v4284 = vpop.f32.mrb[0].mxu0
        %v4285 = vadd.f32 0.0, %v4284
        %v4286 = vpop.f32.mrb[0].mxu0
        %v4287 = vpop.f32.mrb[0].mxu0
        %v4288 = vadd.f32 0.0, %v4287
        %v4289 = vpop.f32.mrb[0].mxu0
        %4290 = vmatprep.mubr.bf16.mxu0 0
        %4291 = vmatmul.mubr.bf16.gmra.mrb[0].mxu0 %v3284
        %v4292 = vpop.f32.mrb[0].mxu0
        %v4293 = vadd.f32 0.0, %v4292
        %v4294 = vpop.f32.mrb[0].mxu0
        %v4295 = vpop.f32.mrb[0].mxu0
        %v4296 = vadd.f32 0.0, %v4295
        %v4297 = vpop.f32.mrb[0].mxu0
        %4298 = vmatprep.mubr.bf16.mxu0 0
        %4299 = vmatmul.mubr.bf16.gmra.mrb[0].mxu0 %v3285
        %v4300 = vpop.f32.mrb[0].mxu0
        %v4301 = vadd.f32 0.0, %v4300
        %v4302 = vpop.f32.mrb[0].mxu0
        %v4303 = vpop.f32.mrb[0].mxu0
        %v4304 = vadd.f32 0.0, %v4303
        %v4305 = vpop.f32.mrb[0].mxu0
        %4306 = vmatprep.mubr.bf16.mxu0 0
        %4307 = vmatmul.mubr.bf16.gmra.mrb[0].mxu0 %v3286
        %v4308 = vpop.f32.mrb[0].mxu0
        %v4309 = vadd.f32 0.0, %v4308
        %v4310 = vpop.f32.mrb[0].mxu0
        %v4311 = vpop.f32.mrb[0].mxu0
        %v4312 = vadd.f32 0.0, %v4311
        %v4313 = vpop.f32.mrb[0].mxu0
        %4314 = vmatprep.mubr.bf16.mxu0 0
        %4315 = vmatmul.mubr.bf16.gmra.mrb[0].mxu0 %v3287
        %v4316 = vpop.f32.mrb[0].mxu0
        %v4317 = vadd.f32 0.0, %v4316
        %v4318 = vpop.f32.mrb[0].mxu0
        %v4319 = vpop.f32.mrb[0].mxu0
        %v4320 = vadd.f32 0.0, %v4319
        %v4321 = vpop.f32.mrb[0].mxu0
        %4322 = vmatprep.mubr.bf16.mxu0 0
        %4323 = vmatmul.mubr.bf16.gmra.mrb[0].mxu0 %v3288
        %v4324 = vpop.f32.mrb[0].mxu0
        %v4325 = vadd.f32 0.0, %v4324
        %v4326 = vpop.f32.mrb[0].mxu0
        %v4327 = vpop.f32.mrb[0].mxu0
        %v4328 = vadd.f32 0.0, %v4327
        %v4329 = vpop.f32.mrb[0].mxu0
        %4330 = vmatprep.mubr.bf16.mxu0 0
        %4331 = vmatmul.mubr.bf16.gmra.mrb[0].mxu0 %v3289
        %v4332 = vpop.f32.mrb[0].mxu0
        %v4333 = vadd.f32 0.0, %v4332
        %v4334 = vpop.f32.mrb[0].mxu0
        %v4335 = vpop.f32.mrb[0].mxu0
        %v4336 = vadd.f32 0.0, %v4335
        %v4337 = vpop.f32.mrb[0].mxu0
        %4338 = vmatprep.mubr.bf16.mxu0 0
        %4339 = vmatmul.mubr.bf16.gmra.mrb[0].mxu0 %v3290
        %v4340 = vpop.f32.mrb[0].mxu0
        %v4341 = vadd.f32 0.0, %v4340
        %v4342 = vpop.f32.mrb[0].mxu0
        %v4343 = vpop.f32.mrb[0].mxu0
        %v4344 = vadd.f32 0.0, %v4343
        %v4345 = vpop.f32.mrb[0].mxu0
        %4346 = vmatprep.mubr.bf16.mxu0 0
        %4347 = vmatmul.mubr.bf16.gmra.mrb[0].mxu0 %v3291
        %v4348 = vpop.f32.mrb[0].mxu0
        %v4349 = vadd.f32 0.0, %v4348
        %v4350 = vpop.f32.mrb[0].mxu0
        %v4351 = vpop.f32.mrb[0].mxu0
        %v4352 = vadd.f32 0.0, %v4351
        %v4353 = vpop.f32.mrb[0].mxu0
        %4354 = vmatprep.mubr.bf16.mxu0 0
        %4355 = vmatmul.mubr.bf16.gmra.mrb[0].mxu0 %v3292
        %v4356 = vpop.f32.mrb[0].mxu0
        %v4357 = vadd.f32 0.0, %v4356
        %v4358 = vpop.f32.mrb[0].mxu0
        %v4359 = vpop.f32.mrb[0].mxu0
        %v4360 = vadd.f32 0.0, %v4359
        %v4361 = vpop.f32.mrb[0].mxu0
        %4362 = vmatprep.mubr.bf16.mxu0 0
        %4363 = vmatmul.mubr.bf16.gmra.mrb[0].mxu0 %v3293
        %v4364 = vpop.f32.mrb[0].mxu0
        %v4365 = vadd.f32 0.0, %v4364
        %v4366 = vpop.f32.mrb[0].mxu0
        %v4367 = vpop.f32.mrb[0].mxu0
        %v4368 = vadd.f32 0.0, %v4367
        %v4369 = vpop.f32.mrb[0].mxu0
        %4370 = vmatprep.mubr.bf16.mxu0 0
        %4371 = vmatmul.mubr.bf16.gmra.mrb[0].mxu0 %v3294
        %v4372 = vpop.f32.mrb[0].mxu0
        %v4373 = vadd.f32 0.0, %v4372
        %v4374 = vpop.f32.mrb[0].mxu0
        %v4375 = vpop.f32.mrb[0].mxu0
        %v4376 = vadd.f32 0.0, %v4375
        %v4377 = vpop.f32.mrb[0].mxu0
        %4378 = vmatprep.mubr.bf16.mxu0 0
        %4379 = vmatmul.mubr.bf16.gmra.mrb[0].mxu0 %v3295
        %v4380 = vpop.f32.mrb[0].mxu0
        %v4381 = vadd.f32 0.0, %v4380
        %v4382 = vpop.f32.mrb[0].mxu0
        %v4383 = vpop.f32.mrb[0].mxu0
        %v4384 = vadd.f32 0.0, %v4383
        %v4385 = vpop.f32.mrb[0].mxu0
        %4386 = vmatprep.mubr.bf16.mxu0 0
        %4387 = vmatmul.mubr.bf16.gmra.mrb[0].mxu0 %v3296
        %v4388 = vpop.f32.mrb[0].mxu0
        %v4389 = vadd.f32 0.0, %v4388
        %v4390 = vpop.f32.mrb[0].mxu0
        %v4391 = vpop.f32.mrb[0].mxu0
        %v4392 = vadd.f32 0.0, %v4391
        %v4393 = vpop.f32.mrb[0].mxu0
        %4394 = vmatprep.mubr.bf16.mxu0 0
        %4395 = vmatmul.mubr.bf16.gmra.mrb[0].mxu0 %v3297
        %v4396 = vpop.f32.mrb[0].mxu0
        %v4397 = vadd.f32 0.0, %v4396
        %v4398 = vpop.f32.mrb[0].mxu0
        %v4399 = vpop.f32.mrb[0].mxu0
        %v4400 = vadd.f32 0.0, %v4399
        %v4401 = vpop.f32.mrb[0].mxu0
        %4402 = vmatprep.mubr.bf16.mxu0 0
        %4403 = vmatmul.mubr.bf16.gmra.mrb[0].mxu0 %v3298
        %v4404 = vpop.f32.mrb[0].mxu0
        %v4405 = vadd.f32 0.0, %v4404
        %v4406 = vpop.f32.mrb[0].mxu0
        %v4407 = vpop.f32.mrb[0].mxu0
        %v4408 = vadd.f32 0.0, %v4407
        %v4409 = vpop.f32.mrb[0].mxu0
        %4410 = vmatprep.mubr.bf16.mxu0 0
        %4411 = vmatmul.mubr.bf16.gmra.mrb[0].mxu0 %v3299
        %v4412 = vpop.f32.mrb[0].mxu0
        %v4413 = vadd.f32 0.0, %v4412
        %v4414 = vpop.f32.mrb[0].mxu0
        %v4415 = vpop.f32.mrb[0].mxu0
        %v4416 = vadd.f32 0.0, %v4415
        %v4417 = vpop.f32.mrb[0].mxu0
        %4418 = vmatprep.mubr.bf16.mxu0 0
        %4419 = vmatmul.mubr.bf16.gmra.mrb[0].mxu0 %v3300
        %v4420 = vpop.f32.mrb[0].mxu0
        %v4421 = vadd.f32 0.0, %v4420
        %v4422 = vpop.f32.mrb[0].mxu0
        %v4423 = vpop.f32.mrb[0].mxu0
        %v4424 = vadd.f32 0.0, %v4423
        %v4425 = vpop.f32.mrb[0].mxu0
        %4426 = vmatprep.mubr.bf16.mxu0 0
        %4427 = vmatmul.mubr.bf16.gmra.mrb[0].mxu0 %v3301
        %v4428 = vpop.f32.mrb[0].mxu0
        %v4429 = vadd.f32 0.0, %v4428
        %v4430 = vpop.f32.mrb[0].mxu0
        %v4431 = vpop.f32.mrb[0].mxu0
        %v4432 = vadd.f32 0.0, %v4431
        %v4433 = vpop.f32.mrb[0].mxu0
        %4434 = vmatprep.mubr.bf16.mxu0 0
        %4435 = vmatmul.mubr.bf16.gmra.mrb[0].mxu0 %v3302
        %v4436 = vpop.f32.mrb[0].mxu0
        %v4437 = vadd.f32 0.0, %v4436
        %v4438 = vpop.f32.mrb[0].mxu0
        %v4439 = vpop.f32.mrb[0].mxu0
        %v4440 = vadd.f32 0.0, %v4439
        %v4441 = vpop.f32.mrb[0].mxu0
        %4442 = vmatprep.mubr.bf16.mxu0 0
        %4443 = vmatmul.mubr.bf16.gmra.mrb[0].mxu0 %v3303
        %v4444 = vpop.f32.mrb[0].mxu0
        %v4445 = vadd.f32 0.0, %v4444
        %v4446 = vpop.f32.mrb[0].mxu0
        %v4447 = vpop.f32.mrb[0].mxu0
        %v4448 = vadd.f32 0.0, %v4447
        %v4449 = vpop.f32.mrb[0].mxu0
        %4450 = vmatprep.mubr.bf16.mxu0 0
        %4451 = vmatmul.mubr.bf16.gmra.mrb[0].mxu0 %v3304
        %v4452 = vpop.f32.mrb[0].mxu0
        %v4453 = vadd.f32 0.0, %v4452
        %v4454 = vpop.f32.mrb[0].mxu0
        %v4455 = vpop.f32.mrb[0].mxu0
        %v4456 = vadd.f32 0.0, %v4455
        %v4457 = vpop.f32.mrb[0].mxu0
        %4458 = vmatprep.mubr.bf16.mxu0 0
        %4459 = vmatmul.mubr.bf16.gmra.mrb[0].mxu0 %v3305
        %v4460 = vpop.f32.mrb[0].mxu0
        %v4461 = vadd.f32 0.0, %v4460
        %v4462 = vpop.f32.mrb[0].mxu0
        %v4463 = vpop.f32.mrb[0].mxu0
        %v4464 = vadd.f32 0.0, %v4463
        %v4465 = vpop.f32.mrb[0].mxu0
        %4466 = vmatprep.mubr.bf16.mxu0 0
        %4467 = vmatmul.mubr.bf16.gmra.mrb[0].mxu0 %v3306
        %v4468 = vpop.f32.mrb[0].mxu0
        %v4469 = vadd.f32 0.0, %v4468
        %v4470 = vpop.f32.mrb[0].mxu0
        %v4471 = vpop.f32.mrb[0].mxu0
        %v4472 = vadd.f32 0.0, %v4471
        %v4473 = vpop.f32.mrb[0].mxu0
        %4474 = vmatprep.mubr.bf16.mxu0 0
        %4475 = vmatmul.mubr.bf16.gmra.mrb[0].mxu0 %v3307
        %v4476 = vpop.f32.mrb[0].mxu0
        %v4477 = vadd.f32 0.0, %v4476
        %v4478 = vpop.f32.mrb[0].mxu0
        %v4479 = vpop.f32.mrb[0].mxu0
        %v4480 = vadd.f32 0.0, %v4479
        %v4481 = vpop.f32.mrb[0].mxu0
        %4482 = vmatprep.mubr.bf16.mxu0 0
        %4483 = vmatmul.mubr.bf16.gmra.mrb[0].mxu0 %v3308
        %v4484 = vpop.f32.mrb[0].mxu0
        %v4485 = vadd.f32 0.0, %v4484
        %v4486 = vpop.f32.mrb[0].mxu0
        %v4487 = vpop.f32.mrb[0].mxu0
        %v4488 = vadd.f32 0.0, %v4487
        %v4489 = vpop.f32.mrb[0].mxu0
        %4490 = vmatprep.mubr.bf16.mxu0 0
        %4491 = vmatmul.mubr.bf16.gmra.mrb[0].mxu0 %v3309
        %v4492 = vpop.f32.mrb[0].mxu0
        %v4493 = vadd.f32 0.0, %v4492
        %v4494 = vpop.f32.mrb[0].mxu0
        %v4495 = vpop.f32.mrb[0].mxu0
        %v4496 = vadd.f32 0.0, %v4495
        %v4497 = vpop.f32.mrb[0].mxu0
        %4498 = vmatprep.mubr.bf16.mxu0 0
        %4499 = vmatmul.mubr.bf16.gmra.mrb[0].mxu0 %v3310
        %v4500 = vpop.f32.mrb[0].mxu0
        %v4501 = vadd.f32 0.0, %v4500
        %v4502 = vpop.f32.mrb[0].mxu0
        %v4503 = vpop.f32.mrb[0].mxu0
        %v4504 = vadd.f32 0.0, %v4503
        %v4505 = vpop.f32.mrb[0].mxu0
        %4506 = vmatprep.mubr.bf16.mxu0 0
        %4507 = vmatmul.mubr.bf16.gmra.mrb[0].mxu0 %v3311
        %v4508 = vpop.f32.mrb[0].mxu0
        %v4509 = vadd.f32 0.0, %v4508
        %v4510 = vpop.f32.mrb[0].mxu0
        %v4511 = vpop.f32.mrb[0].mxu0
        %v4512 = vadd.f32 0.0, %v4511
        %v4513 = vpop.f32.mrb[0].mxu0
        %4514 = vmatprep.mubr.bf16.mxu0 0
        %4515 = vmatmul.mubr.bf16.gmra.mrb[0].mxu0 %v3312
        %v4516 = vpop.f32.mrb[0].mxu0
        %v4517 = vadd.f32 0.0, %v4516
        %v4518 = vpop.f32.mrb[0].mxu0
        %v4519 = vpop.f32.mrb[0].mxu0
        %v4520 = vadd.f32 0.0, %v4519
        %v4521 = vpop.f32.mrb[0].mxu0
        %4522 = vmatprep.mubr.bf16.mxu0 0
        %4523 = vmatmul.mubr.bf16.gmra.mrb[0].mxu0 %v3313
        %v4524 = vpop.f32.mrb[0].mxu0
        %v4525 = vadd.f32 0.0, %v4524
        %v4526 = vpop.f32.mrb[0].mxu0
        %v4527 = vpop.f32.mrb[0].mxu0
        %v4528 = vadd.f32 0.0, %v4527
        %v4529 = vpop.f32.mrb[0].mxu0
        %4530 = vmatprep.mubr.bf16.mxu0 0
        %4531 = vmatmul.mubr.bf16.gmra.mrb[0].mxu0 %v3314
        %v4532 = vpop.f32.mrb[0].mxu0
        %v4533 = vadd.f32 0.0, %v4532
        %v4534 = vpop.f32.mrb[0].mxu0
        %v4535 = vpop.f32.mrb[0].mxu0
        %v4536 = vadd.f32 0.0, %v4535
        %v4537 = vpop.f32.mrb[0].mxu0
        %4538 = vmatprep.mubr.bf16.mxu0 0
        %4539 = vmatmul.mubr.bf16.gmra.mrb[0].mxu0 %v3315
        %v4540 = vpop.f32.mrb[0].mxu0
        %v4541 = vadd.f32 0.0, %v4540
        %v4542 = vpop.f32.mrb[0].mxu0
        %v4543 = vpop.f32.mrb[0].mxu0
        %v4544 = vadd.f32 0.0, %v4543
        %v4545 = vpop.f32.mrb[0].mxu0
        %4546 = vmatprep.mubr.bf16.mxu0 0
        %4547 = vmatmul.mubr.bf16.gmra.mrb[0].mxu0 %v3316
        %v4548 = vpop.f32.mrb[0].mxu0
        %v4549 = vadd.f32 0.0, %v4548
        %v4550 = vpop.f32.mrb[0].mxu0
        %v4551 = vpop.f32.mrb[0].mxu0
        %v4552 = vadd.f32 0.0, %v4551
        %v4553 = vpop.f32.mrb[0].mxu0
        %4554 = vmatprep.mubr.bf16.mxu0 0
        %4555 = vmatmul.mubr.bf16.gmra.mrb[0].mxu0 %v3317
        %v4556 = vpop.f32.mrb[0].mxu0
        %v4557 = vadd.f32 0.0, %v4556
        %v4558 = vpop.f32.mrb[0].mxu0
        %v4559 = vpop.f32.mrb[0].mxu0
        %v4560 = vadd.f32 0.0, %v4559
        %v4561 = vpop.f32.mrb[0].mxu0
        %4562 = vmatprep.mubr.bf16.mxu0 0
        %4563 = vmatmul.mubr.bf16.gmra.mrb[0].mxu0 %v3318
        %v4564 = vpop.f32.mrb[0].mxu0
        %v4565 = vadd.f32 0.0, %v4564
        %v4566 = vpop.f32.mrb[0].mxu0
        %v4567 = vpop.f32.mrb[0].mxu0
        %v4568 = vadd.f32 0.0, %v4567
        %v4569 = vpop.f32.mrb[0].mxu0
        %4570 = vmatprep.mubr.bf16.mxu0 0
        %4571 = vmatmul.mubr.bf16.gmra.mrb[0].mxu0 %v3319
        %v4572 = vpop.f32.mrb[0].mxu0
        %v4573 = vadd.f32 0.0, %v4572
        %v4574 = vpop.f32.mrb[0].mxu0
        %v4575 = vpop.f32.mrb[0].mxu0
        %v4576 = vadd.f32 0.0, %v4575
        %v4577 = vpop.f32.mrb[0].mxu0
        %4578 = vmatprep.mubr.bf16.mxu0 0
        %4579 = vmatmul.mubr.bf16.gmra.mrb[0].mxu0 %v3320
        %v4580 = vpop.f32.mrb[0].mxu0
        %v4581 = vadd.f32 0.0, %v4580
        %v4582 = vpop.f32.mrb[0].mxu0
        %v4583 = vpop.f32.mrb[0].mxu0
        %v4584 = vadd.f32 0.0, %v4583
        %v4585 = vpop.f32.mrb[0].mxu0
        %4586 = vmatprep.mubr.bf16.mxu0 0
        %4587 = vmatmul.mubr.bf16.gmra.mrb[0].mxu0 %v3321
        %v4588 = vpop.f32.mrb[0].mxu0
        %v4589 = vadd.f32 0.0, %v4588
        %v4590 = vpop.f32.mrb[0].mxu0
        %v4591 = vpop.f32.mrb[0].mxu0
        %v4592 = vadd.f32 0.0, %v4591
        %v4593 = vpop.f32.mrb[0].mxu0
        %4594 = vmatprep.mubr.bf16.mxu0 0
        %4595 = vmatmul.mubr.bf16.gmra.mrb[0].mxu0 %v3322
        %v4596 = vpop.f32.mrb[0].mxu0
        %v4597 = vadd.f32 0.0, %v4596
        %v4598 = vpop.f32.mrb[0].mxu0
        %v4599 = vpop.f32.mrb[0].mxu0
        %v4600 = vadd.f32 0.0, %v4599
        %v4601 = vpop.f32.mrb[0].mxu0
        %4602 = vmatprep.mubr.bf16.mxu0 0
        %4603 = vmatmul.mubr.bf16.gmra.mrb[0].mxu0 %v3323
        %v4604 = vpop.f32.mrb[0].mxu0
        %v4605 = vadd.f32 0.0, %v4604
        %v4606 = vpop.f32.mrb[0].mxu0
        %v4607 = vpop.f32.mrb[0].mxu0
        %v4608 = vadd.f32 0.0, %v4607
        %v4609 = vpop.f32.mrb[0].mxu0
        %4610 = vmatprep.mubr.bf16.mxu0 0
        %4611 = vmatmul.mubr.bf16.gmra.mrb[0].mxu0 %v3324
        %v4612 = vpop.f32.mrb[0].mxu0
        %v4613 = vadd.f32 0.0, %v4612
        %v4614 = vpop.f32.mrb[0].mxu0
        %v4615 = vpop.f32.mrb[0].mxu0
        %v4616 = vadd.f32 0.0, %v4615
        %v4617 = vpop.f32.mrb[0].mxu0
        %4618 = vmatprep.mubr.bf16.mxu0 0
        %4619 = vmatmul.mubr.bf16.gmra.mrb[0].mxu0 %v3325
        %v4620 = vpop.f32.mrb[0].mxu0
        %v4621 = vadd.f32 0.0, %v4620
        %v4622 = vpop.f32.mrb[0].mxu0
        %v4623 = vpop.f32.mrb[0].mxu0
        %v4624 = vadd.f32 0.0, %v4623
        %v4625 = vpop.f32.mrb[0].mxu0
        %4626 = vmatprep.mubr.bf16.mxu0 0
        %4627 = vmatmul.mubr.bf16.gmra.mrb[0].mxu0 %v3326
        %v4628 = vpop.f32.mrb[0].mxu0
        %v4629 = vadd.f32 0.0, %v4628
        %v4630 = vpop.f32.mrb[0].mxu0
        %v4631 = vpop.f32.mrb[0].mxu0
        %v4632 = vadd.f32 0.0, %v4631
        %v4633 = vpop.f32.mrb[0].mxu0
        %4634 = vmatprep.mubr.bf16.mxu0 0
        %4635 = vmatmul.mubr.bf16.gmra.mrb[0].mxu0 %v3327
        %v4636 = vpop.f32.mrb[0].mxu0
        %v4637 = vadd.f32 0.0, %v4636
        %v4638 = vpop.f32.mrb[0].mxu0
        %v4639 = vpop.f32.mrb[0].mxu0
        %v4640 = vadd.f32 0.0, %v4639
        %v4641 = vpop.f32.mrb[0].mxu0
        %4642 = vmatprep.mubr.bf16.mxu0 0
        %4643 = vmatmul.mubr.bf16.gmra.mrb[0].mxu0 %v3328
        %v4644 = vpop.f32.mrb[0].mxu0
        %v4645 = vadd.f32 0.0, %v4644
        %v4646 = vpop.f32.mrb[0].mxu0
        %v4647 = vpop.f32.mrb[0].mxu0
        %v4648 = vadd.f32 0.0, %v4647
        %v4649 = vpop.f32.mrb[0].mxu0
        %4650 = vmatprep.mubr.bf16.mxu0 0
        %4651 = vmatmul.mubr.bf16.gmra.mrb[0].mxu0 %v3329
        %v4652 = vpop.f32.mrb[0].mxu0
        %v4653 = vadd.f32 0.0, %v4652
        %v4654 = vpop.f32.mrb[0].mxu0
        %v4655 = vpop.f32.mrb[0].mxu0
        %v4656 = vadd.f32 0.0, %v4655
        %v4657 = vpop.f32.mrb[0].mxu0
        %4658 = vmatprep.mubr.bf16.mxu0 0
        %4659 = vmatmul.mubr.bf16.gmra.mrb[0].mxu0 %v3330
        %v4660 = vpop.f32.mrb[0].mxu0
        %v4661 = vadd.f32 0.0, %v4660
        %v4662 = vpop.f32.mrb[0].mxu0
        %v4663 = vpop.f32.mrb[0].mxu0
        %v4664 = vadd.f32 0.0, %v4663
        %v4665 = vpop.f32.mrb[0].mxu0
        %4666 = vmatprep.mubr.bf16.mxu0 0
        %4667 = vmatmul.mubr.bf16.gmra.mrb[0].mxu0 %v3331
        %v4668 = vpop.f32.mrb[0].mxu0
        %v4669 = vadd.f32 0.0, %v4668
        %v4670 = vpop.f32.mrb[0].mxu0
        %v4671 = vpop.f32.mrb[0].mxu0
        %v4672 = vadd.f32 0.0, %v4671
        %v4673 = vpop.f32.mrb[0].mxu0
        %4674 = vmatprep.mubr.bf16.mxu0 0
        %4675 = vmatmul.mubr.bf16.gmra.mrb[0].mxu0 %v3332
        %v4676 = vpop.f32.mrb[0].mxu0
        %v4677 = vadd.f32 0.0, %v4676
        %v4678 = vpop.f32.mrb[0].mxu0
        %v4679 = vpop.f32.mrb[0].mxu0
        %v4680 = vadd.f32 0.0, %v4679
        %v4681 = vpop.f32.mrb[0].mxu0
        %4682 = vmatprep.mubr.bf16.mxu0 0
        %4683 = vmatmul.mubr.bf16.gmra.mrb[0].mxu0 %v3333
        %v4684 = vpop.f32.mrb[0].mxu0
        %v4685 = vadd.f32 0.0, %v4684
        %v4686 = vpop.f32.mrb[0].mxu0
        %v4687 = vpop.f32.mrb[0].mxu0
        %v4688 = vadd.f32 0.0, %v4687
        %v4689 = vpop.f32.mrb[0].mxu0
        %4690 = vmatprep.mubr.bf16.mxu0 0
        %4691 = vmatmul.mubr.bf16.gmra.mrb[0].mxu0 %v3334
        %v4692 = vpop.f32.mrb[0].mxu0
        %v4693 = vadd.f32 0.0, %v4692
        %v4694 = vpop.f32.mrb[0].mxu0
        %v4695 = vpop.f32.mrb[0].mxu0
        %v4696 = vadd.f32 0.0, %v4695
        %v4697 = vpop.f32.mrb[0].mxu0
        %4698 = vmatprep.mubr.bf16.mxu0 0
        %4699 = vmatmul.mubr.bf16.gmra.mrb[0].mxu0 %v3335
        %v4700 = vpop.f32.mrb[0].mxu0
        %v4701 = vadd.f32 0.0, %v4700
        %v4702 = vpop.f32.mrb[0].mxu0
        %v4703 = vpop.f32.mrb[0].mxu0
        %v4704 = vadd.f32 0.0, %v4703
        %v4705 = vpop.f32.mrb[0].mxu0
        %4706 = vmatprep.mubr.bf16.mxu0 0
        %4707 = vmatmul.mubr.bf16.gmra.mrb[0].mxu0 %v3336
        %v4708 = vpop.f32.mrb[0].mxu0
        %v4709 = vadd.f32 0.0, %v4708
        %v4710 = vpop.f32.mrb[0].mxu0
        %v4711 = vpop.f32.mrb[0].mxu0
        %v4712 = vadd.f32 0.0, %v4711
        %v4713 = vpop.f32.mrb[0].mxu0
        %4714 = vdwg.mxu0
        %v4715 = vld [vmem:[%s4] sm:$0x1]
        %v4717 = vlaneseq
        %v4718 = vshrl.u32 %v4717, 7
        %v4719 = vsub.s32 0, %v4718
        %v4720 = vrot.slane %v4715, %v4719
        %v4722 = vadd.f32 %v3532, %v4720
        %v4723 = vadd.f32 %v3536, %v4720
        %v4724 = vadd.f32 %v3542, %v4720
        %v4725 = vadd.f32 %v3546, %v4720
        %v4726 = vadd.f32 %v3552, %v4720
        %v4727 = vadd.f32 %v3556, %v4720
        %v4728 = vadd.f32 %v3562, %v4720
        %v4729 = vadd.f32 %v3566, %v4720
        %v4730 = vadd.f32 %v3572, %v4720
        %v4731 = vadd.f32 %v3576, %v4720
        %v4732 = vadd.f32 %v3582, %v4720
        %v4733 = vadd.f32 %v3586, %v4720
        %v4734 = vadd.f32 %v3592, %v4720
        %v4735 = vadd.f32 %v3596, %v4720
        %v4736 = vadd.f32 %v3602, %v4720
        %v4737 = vadd.f32 %v3606, %v4720
        %v4738 = vadd.f32 %v3612, %v4720
        %v4739 = vadd.f32 %v3616, %v4720
        %v4740 = vadd.f32 %v3622, %v4720
        %v4741 = vadd.f32 %v3626, %v4720
        %v4742 = vadd.f32 %v3632, %v4720
        %v4743 = vadd.f32 %v3636, %v4720
        %v4744 = vadd.f32 %v3642, %v4720
        %v4745 = vadd.f32 %v3646, %v4720
        %v4746 = vadd.f32 %v3652, %v4720
        %v4747 = vadd.f32 %v3656, %v4720
        %v4748 = vadd.f32 %v3662, %v4720
        %v4749 = vadd.f32 %v3666, %v4720
        %v4750 = vadd.f32 %v3672, %v4720
        %v4751 = vadd.f32 %v3676, %v4720
        %v4752 = vadd.f32 %v3682, %v4720
        %v4753 = vadd.f32 %v3686, %v4720
        %v4754 = vadd.f32 %v3692, %v4720
        %v4755 = vadd.f32 %v3696, %v4720
        %v4756 = vadd.f32 %v3702, %v4720
        %v4757 = vadd.f32 %v3706, %v4720
        %v4758 = vadd.f32 %v3712, %v4720
        %v4759 = vadd.f32 %v3716, %v4720
        %v4760 = vadd.f32 %v3722, %v4720
        %v4761 = vadd.f32 %v3726, %v4720
        %v4762 = vadd.f32 %v3732, %v4720
        %v4763 = vadd.f32 %v3736, %v4720
        %v4764 = vadd.f32 %v3742, %v4720
        %v4765 = vadd.f32 %v3746, %v4720
        %v4766 = vadd.f32 %v3752, %v4720
        %v4767 = vadd.f32 %v3756, %v4720
        %v4768 = vadd.f32 %v3762, %v4720
        %v4769 = vadd.f32 %v3766, %v4720
        %v4770 = vadd.f32 %v3772, %v4720
        %v4771 = vadd.f32 %v3776, %v4720
        %v4772 = vadd.f32 %v3782, %v4720
        %v4773 = vadd.f32 %v3786, %v4720
        %v4774 = vadd.f32 %v3792, %v4720
        %v4775 = vadd.f32 %v3796, %v4720
        %v4776 = vadd.f32 %v3802, %v4720
        %v4777 = vadd.f32 %v3806, %v4720
        %v4778 = vadd.f32 %v3812, %v4720
        %v4779 = vadd.f32 %v3816, %v4720
        %v4780 = vadd.f32 %v3822, %v4720
        %v4781 = vadd.f32 %v3826, %v4720
        %v4782 = vadd.f32 %v3832, %v4720
        %v4783 = vadd.f32 %v3836, %v4720
        %v4784 = vadd.f32 %v3842, %v4720
        %v4785 = vadd.f32 %v3846, %v4720
        %v4786 = vadd.f32 %v3852, %v4720
        %v4787 = vadd.f32 %v3856, %v4720
        %v4788 = vadd.f32 %v3862, %v4720
        %v4789 = vadd.f32 %v3866, %v4720
        %v4790 = vadd.f32 %v3872, %v4720
        %v4791 = vadd.f32 %v3876, %v4720
        %v4792 = vadd.f32 %v3882, %v4720
        %v4793 = vadd.f32 %v3886, %v4720
        %v4794 = vadd.f32 %v3892, %v4720
        %v4795 = vadd.f32 %v3896, %v4720
        %v4796 = vadd.f32 %v3902, %v4720
        %v4797 = vadd.f32 %v3906, %v4720
        %v4798 = vadd.f32 %v3912, %v4720
        %v4799 = vadd.f32 %v3916, %v4720
        %v4800 = vadd.f32 %v3922, %v4720
        %v4801 = vadd.f32 %v3926, %v4720
        %v4802 = vadd.f32 %v3932, %v4720
        %v4803 = vadd.f32 %v3936, %v4720
        %v4804 = vadd.f32 %v3942, %v4720
        %v4805 = vadd.f32 %v3946, %v4720
        %v4806 = vadd.f32 %v3952, %v4720
        %v4807 = vadd.f32 %v3956, %v4720
        %v4808 = vadd.f32 %v3962, %v4720
        %v4809 = vadd.f32 %v3966, %v4720
        %v4810 = vadd.f32 %v3972, %v4720
        %v4811 = vadd.f32 %v3976, %v4720
        %v4812 = vadd.f32 %v3982, %v4720
        %v4813 = vadd.f32 %v3986, %v4720
        %v4814 = vadd.f32 %v3992, %v4720
        %v4815 = vadd.f32 %v3996, %v4720
        %v4816 = vadd.f32 %v4002, %v4720
        %v4817 = vadd.f32 %v4006, %v4720
        %v4818 = vadd.f32 %v4012, %v4720
        %v4819 = vadd.f32 %v4016, %v4720
        %v4820 = vadd.f32 %v4022, %v4720
        %v4821 = vadd.f32 %v4026, %v4720
        %v4822 = vadd.f32 %v4032, %v4720
        %v4823 = vadd.f32 %v4036, %v4720
        %v4824 = vadd.f32 %v4042, %v4720
        %v4825 = vadd.f32 %v4046, %v4720
        %v4826 = vadd.f32 %v4052, %v4720
        %v4827 = vadd.f32 %v4056, %v4720
        %v4828 = vadd.f32 %v4062, %v4720
        %v4829 = vadd.f32 %v4066, %v4720
        %v4830 = vadd.f32 %v4072, %v4720
        %v4831 = vadd.f32 %v4076, %v4720
        %v4832 = vadd.f32 %v4082, %v4720
        %v4833 = vadd.f32 %v4086, %v4720
        %v4834 = vadd.f32 %v4092, %v4720
        %v4835 = vadd.f32 %v4096, %v4720
        %v4836 = vadd.f32 %v4102, %v4720
        %v4837 = vadd.f32 %v4106, %v4720
        %v4838 = vadd.f32 %v4112, %v4720
        %v4839 = vadd.f32 %v4116, %v4720
        %v4840 = vadd.f32 %v4122, %v4720
        %v4841 = vadd.f32 %v4126, %v4720
        %v4842 = vadd.f32 %v4132, %v4720
        %v4843 = vadd.f32 %v4136, %v4720
        %v4844 = vadd.f32 %v4142, %v4720
        %v4845 = vadd.f32 %v4146, %v4720
        %v4846 = vadd.f32 %v4152, %v4720
        %v4847 = vadd.f32 %v4156, %v4720
        %v4848 = vadd.f32 %v4162, %v4720
        %v4849 = vadd.f32 %v4166, %v4720
        %v4850 = vmax.f32 %v4205, 0.0
        %v4851 = vmax.f32 %v4208, 0.0
        %v4852 = vmax.f32 %v4213, 0.0
        %v4853 = vmax.f32 %v4216, 0.0
        %v4854 = vmax.f32 %v4221, 0.0
        %v4855 = vmax.f32 %v4224, 0.0
        %v4856 = vmax.f32 %v4229, 0.0
        %v4857 = vmax.f32 %v4232, 0.0
        %v4858 = vmax.f32 %v4237, 0.0
        %v4859 = vmax.f32 %v4240, 0.0
        %v4860 = vmax.f32 %v4245, 0.0
        %v4861 = vmax.f32 %v4248, 0.0
        %v4862 = vmax.f32 %v4253, 0.0
        %v4863 = vmax.f32 %v4256, 0.0
        %v4864 = vmax.f32 %v4261, 0.0
        %v4865 = vmax.f32 %v4264, 0.0
        %v4866 = vmax.f32 %v4269, 0.0
        %v4867 = vmax.f32 %v4272, 0.0
        %v4868 = vmax.f32 %v4277, 0.0
        %v4869 = vmax.f32 %v4280, 0.0
        %v4870 = vmax.f32 %v4285, 0.0
        %v4871 = vmax.f32 %v4288, 0.0
        %v4872 = vmax.f32 %v4293, 0.0
        %v4873 = vmax.f32 %v4296, 0.0
        %v4874 = vmax.f32 %v4301, 0.0
        %v4875 = vmax.f32 %v4304, 0.0
        %v4876 = vmax.f32 %v4309, 0.0
        %v4877 = vmax.f32 %v4312, 0.0
        %v4878 = vmax.f32 %v4317, 0.0
        %v4879 = vmax.f32 %v4320, 0.0
        %v4880 = vmax.f32 %v4325, 0.0
        %v4881 = vmax.f32 %v4328, 0.0
        %v4882 = vmax.f32 %v4333, 0.0
        %v4883 = vmax.f32 %v4336, 0.0
        %v4884 = vmax.f32 %v4341, 0.0
        %v4885 = vmax.f32 %v4344, 0.0
        %v4886 = vmax.f32 %v4349, 0.0
        %v4887 = vmax.f32 %v4352, 0.0
        %v4888 = vmax.f32 %v4357, 0.0
        %v4889 = vmax.f32 %v4360, 0.0
        %v4890 = vmax.f32 %v4365, 0.0
        %v4891 = vmax.f32 %v4368, 0.0
        %v4892 = vmax.f32 %v4373, 0.0
        %v4893 = vmax.f32 %v4376, 0.0
        %v4894 = vmax.f32 %v4381, 0.0
        %v4895 = vmax.f32 %v4384, 0.0
        %v4896 = vmax.f32 %v4389, 0.0
        %v4897 = vmax.f32 %v4392, 0.0
        %v4898 = vmax.f32 %v4397, 0.0
        %v4899 = vmax.f32 %v4400, 0.0
        %v4900 = vmax.f32 %v4405, 0.0
        %v4901 = vmax.f32 %v4408, 0.0
        %v4902 = vmax.f32 %v4413, 0.0
        %v4903 = vmax.f32 %v4416, 0.0
        %v4904 = vmax.f32 %v4421, 0.0
        %v4905 = vmax.f32 %v4424, 0.0
        %v4906 = vmax.f32 %v4429, 0.0
        %v4907 = vmax.f32 %v4432, 0.0
        %v4908 = vmax.f32 %v4437, 0.0
        %v4909 = vmax.f32 %v4440, 0.0
        %v4910 = vmax.f32 %v4445, 0.0
        %v4911 = vmax.f32 %v4448, 0.0
        %v4912 = vmax.f32 %v4453, 0.0
        %v4913 = vmax.f32 %v4456, 0.0
        %v4914 = vmax.f32 %v4461, 0.0
        %v4915 = vmax.f32 %v4464, 0.0
        %v4916 = vmax.f32 %v4469, 0.0
        %v4917 = vmax.f32 %v4472, 0.0
        %v4918 = vmax.f32 %v4477, 0.0
        %v4919 = vmax.f32 %v4480, 0.0
        %v4920 = vmax.f32 %v4485, 0.0
        %v4921 = vmax.f32 %v4488, 0.0
        %v4922 = vmax.f32 %v4493, 0.0
        %v4923 = vmax.f32 %v4496, 0.0
        %v4924 = vmax.f32 %v4501, 0.0
        %v4925 = vmax.f32 %v4504, 0.0
        %v4926 = vmax.f32 %v4509, 0.0
        %v4927 = vmax.f32 %v4512, 0.0
        %v4928 = vmax.f32 %v4517, 0.0
        %v4929 = vmax.f32 %v4520, 0.0
        %v4930 = vmax.f32 %v4525, 0.0
        %v4931 = vmax.f32 %v4528, 0.0
        %v4932 = vmax.f32 %v4533, 0.0
        %v4933 = vmax.f32 %v4536, 0.0
        %v4934 = vmax.f32 %v4541, 0.0
        %v4935 = vmax.f32 %v4544, 0.0
        %v4936 = vmax.f32 %v4549, 0.0
        %v4937 = vmax.f32 %v4552, 0.0
        %v4938 = vmax.f32 %v4557, 0.0
        %v4939 = vmax.f32 %v4560, 0.0
        %v4940 = vmax.f32 %v4565, 0.0
        %v4941 = vmax.f32 %v4568, 0.0
        %v4942 = vmax.f32 %v4573, 0.0
        %v4943 = vmax.f32 %v4576, 0.0
        %v4944 = vmax.f32 %v4581, 0.0
        %v4945 = vmax.f32 %v4584, 0.0
        %v4946 = vmax.f32 %v4589, 0.0
        %v4947 = vmax.f32 %v4592, 0.0
        %v4948 = vmax.f32 %v4597, 0.0
        %v4949 = vmax.f32 %v4600, 0.0
        %v4950 = vmax.f32 %v4605, 0.0
        %v4951 = vmax.f32 %v4608, 0.0
        %v4952 = vmax.f32 %v4613, 0.0
        %v4953 = vmax.f32 %v4616, 0.0
        %v4954 = vmax.f32 %v4621, 0.0
        %v4955 = vmax.f32 %v4624, 0.0
        %v4956 = vmax.f32 %v4629, 0.0
        %v4957 = vmax.f32 %v4632, 0.0
        %v4958 = vmax.f32 %v4637, 0.0
        %v4959 = vmax.f32 %v4640, 0.0
        %v4960 = vmax.f32 %v4645, 0.0
        %v4961 = vmax.f32 %v4648, 0.0
        %v4962 = vmax.f32 %v4653, 0.0
        %v4963 = vmax.f32 %v4656, 0.0
        %v4964 = vmax.f32 %v4661, 0.0
        %v4965 = vmax.f32 %v4664, 0.0
        %v4966 = vmax.f32 %v4669, 0.0
        %v4967 = vmax.f32 %v4672, 0.0
        %v4968 = vmax.f32 %v4677, 0.0
        %v4969 = vmax.f32 %v4680, 0.0
        %v4970 = vmax.f32 %v4685, 0.0
        %v4971 = vmax.f32 %v4688, 0.0
        %v4972 = vmax.f32 %v4693, 0.0
        %v4973 = vmax.f32 %v4696, 0.0
        %v4974 = vmax.f32 %v4701, 0.0
        %v4975 = vmax.f32 %v4704, 0.0
        %v4976 = vmax.f32 %v4709, 0.0
        %v4977 = vmax.f32 %v4712, 0.0
        %v4978 = vxor.u32 %v4722, 2147483648
        %v4979 = vxor.u32 %v4723, 2147483648
        %v4980 = vxor.u32 %v4724, 2147483648
        %v4981 = vxor.u32 %v4725, 2147483648
        %v4982 = vxor.u32 %v4726, 2147483648
        %v4983 = vxor.u32 %v4727, 2147483648
        %v4984 = vxor.u32 %v4728, 2147483648
        %v4985 = vxor.u32 %v4729, 2147483648
        %v4986 = vxor.u32 %v4730, 2147483648
        %v4987 = vxor.u32 %v4731, 2147483648
        %v4988 = vxor.u32 %v4732, 2147483648
        %v4989 = vxor.u32 %v4733, 2147483648
        %v4990 = vxor.u32 %v4734, 2147483648
        %v4991 = vxor.u32 %v4735, 2147483648
        %v4992 = vxor.u32 %v4736, 2147483648
        %v4993 = vxor.u32 %v4737, 2147483648
        %v4994 = vxor.u32 %v4738, 2147483648
        %v4995 = vxor.u32 %v4739, 2147483648
        %v4996 = vxor.u32 %v4740, 2147483648
        %v4997 = vxor.u32 %v4741, 2147483648
        %v4998 = vxor.u32 %v4742, 2147483648
        %v4999 = vxor.u32 %v4743, 2147483648
        %v5000 = vxor.u32 %v4744, 2147483648
        %v5001 = vxor.u32 %v4745, 2147483648
        %v5002 = vxor.u32 %v4746, 2147483648
        %v5003 = vxor.u32 %v4747, 2147483648
        %v5004 = vxor.u32 %v4748, 2147483648
        %v5005 = vxor.u32 %v4749, 2147483648
        %v5006 = vxor.u32 %v4750, 2147483648
        %v5007 = vxor.u32 %v4751, 2147483648
        %v5008 = vxor.u32 %v4752, 2147483648
        %v5009 = vxor.u32 %v4753, 2147483648
        %v5010 = vxor.u32 %v4754, 2147483648
        %v5011 = vxor.u32 %v4755, 2147483648
        %v5012 = vxor.u32 %v4756, 2147483648
        %v5013 = vxor.u32 %v4757, 2147483648
        %v5014 = vxor.u32 %v4758, 2147483648
        %v5015 = vxor.u32 %v4759, 2147483648
        %v5016 = vxor.u32 %v4760, 2147483648
        %v5017 = vxor.u32 %v4761, 2147483648
        %v5018 = vxor.u32 %v4762, 2147483648
        %v5019 = vxor.u32 %v4763, 2147483648
        %v5020 = vxor.u32 %v4764, 2147483648
        %v5021 = vxor.u32 %v4765, 2147483648
        %v5022 = vxor.u32 %v4766, 2147483648
        %v5023 = vxor.u32 %v4767, 2147483648
        %v5024 = vxor.u32 %v4768, 2147483648
        %v5025 = vxor.u32 %v4769, 2147483648
        %v5026 = vxor.u32 %v4770, 2147483648
        %v5027 = vxor.u32 %v4771, 2147483648
        %v5028 = vxor.u32 %v4772, 2147483648
        %v5029 = vxor.u32 %v4773, 2147483648
        %v5030 = vxor.u32 %v4774, 2147483648
        %v5031 = vxor.u32 %v4775, 2147483648
        %v5032 = vxor.u32 %v4776, 2147483648
        %v5033 = vxor.u32 %v4777, 2147483648
        %v5034 = vxor.u32 %v4778, 2147483648
        %v5035 = vxor.u32 %v4779, 2147483648
        %v5036 = vxor.u32 %v4780, 2147483648
        %v5037 = vxor.u32 %v4781, 2147483648
        %v5038 = vxor.u32 %v4782, 2147483648
        %v5039 = vxor.u32 %v4783, 2147483648
        %v5040 = vxor.u32 %v4784, 2147483648
        %v5041 = vxor.u32 %v4785, 2147483648
        %v5042 = vxor.u32 %v4786, 2147483648
        %v5043 = vxor.u32 %v4787, 2147483648
        %v5044 = vxor.u32 %v4788, 2147483648
        %v5045 = vxor.u32 %v4789, 2147483648
        %v5046 = vxor.u32 %v4790, 2147483648
        %v5047 = vxor.u32 %v4791, 2147483648
        %v5048 = vxor.u32 %v4792, 2147483648
        %v5049 = vxor.u32 %v4793, 2147483648
        %v5050 = vxor.u32 %v4794, 2147483648
        %v5051 = vxor.u32 %v4795, 2147483648
        %v5052 = vxor.u32 %v4796, 2147483648
        %v5053 = vxor.u32 %v4797, 2147483648
        %v5054 = vxor.u32 %v4798, 2147483648
        %v5055 = vxor.u32 %v4799, 2147483648
        %v5056 = vxor.u32 %v4800, 2147483648
        %v5057 = vxor.u32 %v4801, 2147483648
        %v5058 = vxor.u32 %v4802, 2147483648
        %v5059 = vxor.u32 %v4803, 2147483648
        %v5060 = vxor.u32 %v4804, 2147483648
        %v5061 = vxor.u32 %v4805, 2147483648
        %v5062 = vxor.u32 %v4806, 2147483648
        %v5063 = vxor.u32 %v4807, 2147483648
        %v5064 = vxor.u32 %v4808, 2147483648
        %v5065 = vxor.u32 %v4809, 2147483648
        %v5066 = vxor.u32 %v4810, 2147483648
        %v5067 = vxor.u32 %v4811, 2147483648
        %v5068 = vxor.u32 %v4812, 2147483648
        %v5069 = vxor.u32 %v4813, 2147483648
        %v5070 = vxor.u32 %v4814, 2147483648
        %v5071 = vxor.u32 %v4815, 2147483648
        %v5072 = vxor.u32 %v4816, 2147483648
        %v5073 = vxor.u32 %v4817, 2147483648
        %v5074 = vxor.u32 %v4818, 2147483648
        %v5075 = vxor.u32 %v4819, 2147483648
        %v5076 = vxor.u32 %v4820, 2147483648
        %v5077 = vxor.u32 %v4821, 2147483648
        %v5078 = vxor.u32 %v4822, 2147483648
        %v5079 = vxor.u32 %v4823, 2147483648
        %v5080 = vxor.u32 %v4824, 2147483648
        %v5081 = vxor.u32 %v4825, 2147483648
        %v5082 = vxor.u32 %v4826, 2147483648
        %v5083 = vxor.u32 %v4827, 2147483648
        %v5084 = vxor.u32 %v4828, 2147483648
        %v5085 = vxor.u32 %v4829, 2147483648
        %v5086 = vxor.u32 %v4830, 2147483648
        %v5087 = vxor.u32 %v4831, 2147483648
        %v5088 = vxor.u32 %v4832, 2147483648
        %v5089 = vxor.u32 %v4833, 2147483648
        %v5090 = vxor.u32 %v4834, 2147483648
        %v5091 = vxor.u32 %v4835, 2147483648
        %v5092 = vxor.u32 %v4836, 2147483648
        %v5093 = vxor.u32 %v4837, 2147483648
        %v5094 = vxor.u32 %v4838, 2147483648
        %v5095 = vxor.u32 %v4839, 2147483648
        %v5096 = vxor.u32 %v4840, 2147483648
        %v5097 = vxor.u32 %v4841, 2147483648
        %v5098 = vxor.u32 %v4842, 2147483648
        %v5099 = vxor.u32 %v4843, 2147483648
        %v5100 = vxor.u32 %v4844, 2147483648
        %v5101 = vxor.u32 %v4845, 2147483648
        %v5102 = vxor.u32 %v4846, 2147483648
        %v5103 = vxor.u32 %v4847, 2147483648
        %v5104 = vxor.u32 %v4848, 2147483648
        %v5105 = vxor.u32 %v4849, 2147483648
        %v5106 = vmul.f32 %v4978, 1.442695
        %v5107 = vpow.pop %v5106
        %v5108 = vmul.f32 %v4979, 1.442695
        %v5109 = vpow.pop %v5108
        %v5110 = vmul.f32 %v4980, 1.442695
        %v5111 = vpow.pop %v5110
        %v5112 = vmul.f32 %v4981, 1.442695
        %v5113 = vpow.pop %v5112
        %v5114 = vmul.f32 %v4982, 1.442695
        %v5115 = vpow.pop %v5114
        %v5116 = vmul.f32 %v4983, 1.442695
        %v5117 = vpow.pop %v5116
        %v5118 = vmul.f32 %v4984, 1.442695
        %v5119 = vpow.pop %v5118
        %v5120 = vmul.f32 %v4985, 1.442695
        %v5121 = vpow.pop %v5120
        %v5122 = vmul.f32 %v4986, 1.442695
        %v5123 = vpow.pop %v5122
        %v5124 = vmul.f32 %v4987, 1.442695
        %v5125 = vpow.pop %v5124
        %v5126 = vmul.f32 %v4988, 1.442695
        %v5127 = vpow.pop %v5126
        %v5128 = vmul.f32 %v4989, 1.442695
        %v5129 = vpow.pop %v5128
        %v5130 = vmul.f32 %v4990, 1.442695
        %v5131 = vpow.pop %v5130
        %v5132 = vmul.f32 %v4991, 1.442695
        %v5133 = vpow.pop %v5132
        %v5134 = vmul.f32 %v4992, 1.442695
        %v5135 = vpow.pop %v5134
        %v5136 = vmul.f32 %v4993, 1.442695
        %v5137 = vpow.pop %v5136
        %v5138 = vmul.f32 %v4994, 1.442695
        %v5139 = vpow.pop %v5138
        %v5140 = vmul.f32 %v4995, 1.442695
        %v5141 = vpow.pop %v5140
        %v5142 = vmul.f32 %v4996, 1.442695
        %v5143 = vpow.pop %v5142
        %v5144 = vmul.f32 %v4997, 1.442695
        %v5145 = vpow.pop %v5144
        %v5146 = vmul.f32 %v4998, 1.442695
        %v5147 = vpow.pop %v5146
        %v5148 = vmul.f32 %v4999, 1.442695
        %v5149 = vpow.pop %v5148
        %v5150 = vmul.f32 %v5000, 1.442695
        %v5151 = vpow.pop %v5150
        %v5152 = vmul.f32 %v5001, 1.442695
        %v5153 = vpow.pop %v5152
        %v5154 = vmul.f32 %v5002, 1.442695
        %v5155 = vpow.pop %v5154
        %v5156 = vmul.f32 %v5003, 1.442695
        %v5157 = vpow.pop %v5156
        %v5158 = vmul.f32 %v5004, 1.442695
        %v5159 = vpow.pop %v5158
        %v5160 = vmul.f32 %v5005, 1.442695
        %v5161 = vpow.pop %v5160
        %v5162 = vmul.f32 %v5006, 1.442695
        %v5163 = vpow.pop %v5162
        %v5164 = vmul.f32 %v5007, 1.442695
        %v5165 = vpow.pop %v5164
        %v5166 = vmul.f32 %v5008, 1.442695
        %v5167 = vpow.pop %v5166
        %v5168 = vmul.f32 %v5009, 1.442695
        %v5169 = vpow.pop %v5168
        %v5170 = vmul.f32 %v5010, 1.442695
        %v5171 = vpow.pop %v5170
        %v5172 = vmul.f32 %v5011, 1.442695
        %v5173 = vpow.pop %v5172
        %v5174 = vmul.f32 %v5012, 1.442695
        %v5175 = vpow.pop %v5174
        %v5176 = vmul.f32 %v5013, 1.442695
        %v5177 = vpow.pop %v5176
        %v5178 = vmul.f32 %v5014, 1.442695
        %v5179 = vpow.pop %v5178
        %v5180 = vmul.f32 %v5015, 1.442695
        %v5181 = vpow.pop %v5180
        %v5182 = vmul.f32 %v5016, 1.442695
        %v5183 = vpow.pop %v5182
        %v5184 = vmul.f32 %v5017, 1.442695
        %v5185 = vpow.pop %v5184
        %v5186 = vmul.f32 %v5018, 1.442695
        %v5187 = vpow.pop %v5186
        %v5188 = vmul.f32 %v5019, 1.442695
        %v5189 = vpow.pop %v5188
        %v5190 = vmul.f32 %v5020, 1.442695
        %v5191 = vpow.pop %v5190
        %v5192 = vmul.f32 %v5021, 1.442695
        %v5193 = vpow.pop %v5192
        %v5194 = vmul.f32 %v5022, 1.442695
        %v5195 = vpow.pop %v5194
        %v5196 = vmul.f32 %v5023, 1.442695
        %v5197 = vpow.pop %v5196
        %v5198 = vmul.f32 %v5024, 1.442695
        %v5199 = vpow.pop %v5198
        %v5200 = vmul.f32 %v5025, 1.442695
        %v5201 = vpow.pop %v5200
        %v5202 = vmul.f32 %v5026, 1.442695
        %v5203 = vpow.pop %v5202
        %v5204 = vmul.f32 %v5027, 1.442695
        %v5205 = vpow.pop %v5204
        %v5206 = vmul.f32 %v5028, 1.442695
        %v5207 = vpow.pop %v5206
        %v5208 = vmul.f32 %v5029, 1.442695
        %v5209 = vpow.pop %v5208
        %v5210 = vmul.f32 %v5030, 1.442695
        %v5211 = vpow.pop %v5210
        %v5212 = vmul.f32 %v5031, 1.442695
        %v5213 = vpow.pop %v5212
        %v5214 = vmul.f32 %v5032, 1.442695
        %v5215 = vpow.pop %v5214
        %v5216 = vmul.f32 %v5033, 1.442695
        %v5217 = vpow.pop %v5216
        %v5218 = vmul.f32 %v5034, 1.442695
        %v5219 = vpow.pop %v5218
        %v5220 = vmul.f32 %v5035, 1.442695
        %v5221 = vpow.pop %v5220
        %v5222 = vmul.f32 %v5036, 1.442695
        %v5223 = vpow.pop %v5222
        %v5224 = vmul.f32 %v5037, 1.442695
        %v5225 = vpow.pop %v5224
        %v5226 = vmul.f32 %v5038, 1.442695
        %v5227 = vpow.pop %v5226
        %v5228 = vmul.f32 %v5039, 1.442695
        %v5229 = vpow.pop %v5228
        %v5230 = vmul.f32 %v5040, 1.442695
        %v5231 = vpow.pop %v5230
        %v5232 = vmul.f32 %v5041, 1.442695
        %v5233 = vpow.pop %v5232
        %v5234 = vmul.f32 %v5042, 1.442695
        %v5235 = vpow.pop %v5234
        %v5236 = vmul.f32 %v5043, 1.442695
        %v5237 = vpow.pop %v5236
        %v5238 = vmul.f32 %v5044, 1.442695
        %v5239 = vpow.pop %v5238
        %v5240 = vmul.f32 %v5045, 1.442695
        %v5241 = vpow.pop %v5240
        %v5242 = vmul.f32 %v5046, 1.442695
        %v5243 = vpow.pop %v5242
        %v5244 = vmul.f32 %v5047, 1.442695
        %v5245 = vpow.pop %v5244
        %v5246 = vmul.f32 %v5048, 1.442695
        %v5247 = vpow.pop %v5246
        %v5248 = vmul.f32 %v5049, 1.442695
        %v5249 = vpow.pop %v5248
        %v5250 = vmul.f32 %v5050, 1.442695
        %v5251 = vpow.pop %v5250
        %v5252 = vmul.f32 %v5051, 1.442695
        %v5253 = vpow.pop %v5252
        %v5254 = vmul.f32 %v5052, 1.442695
        %v5255 = vpow.pop %v5254
        %v5256 = vmul.f32 %v5053, 1.442695
        %v5257 = vpow.pop %v5256
        %v5258 = vmul.f32 %v5054, 1.442695
        %v5259 = vpow.pop %v5258
        %v5260 = vmul.f32 %v5055, 1.442695
        %v5261 = vpow.pop %v5260
        %v5262 = vmul.f32 %v5056, 1.442695
        %v5263 = vpow.pop %v5262
        %v5264 = vmul.f32 %v5057, 1.442695
        %v5265 = vpow.pop %v5264
        %v5266 = vmul.f32 %v5058, 1.442695
        %v5267 = vpow.pop %v5266
        %v5268 = vmul.f32 %v5059, 1.442695
        %v5269 = vpow.pop %v5268
        %v5270 = vmul.f32 %v5060, 1.442695
        %v5271 = vpow.pop %v5270
        %v5272 = vmul.f32 %v5061, 1.442695
        %v5273 = vpow.pop %v5272
        %v5274 = vmul.f32 %v5062, 1.442695
        %v5275 = vpow.pop %v5274
        %v5276 = vmul.f32 %v5063, 1.442695
        %v5277 = vpow.pop %v5276
        %v5278 = vmul.f32 %v5064, 1.442695
        %v5279 = vpow.pop %v5278
        %v5280 = vmul.f32 %v5065, 1.442695
        %v5281 = vpow.pop %v5280
        %v5282 = vmul.f32 %v5066, 1.442695
        %v5283 = vpow.pop %v5282
        %v5284 = vmul.f32 %v5067, 1.442695
        %v5285 = vpow.pop %v5284
        %v5286 = vmul.f32 %v5068, 1.442695
        %v5287 = vpow.pop %v5286
        %v5288 = vmul.f32 %v5069, 1.442695
        %v5289 = vpow.pop %v5288
        %v5290 = vmul.f32 %v5070, 1.442695
        %v5291 = vpow.pop %v5290
        %v5292 = vmul.f32 %v5071, 1.442695
        %v5293 = vpow.pop %v5292
        %v5294 = vmul.f32 %v5072, 1.442695
        %v5295 = vpow.pop %v5294
        %v5296 = vmul.f32 %v5073, 1.442695
        %v5297 = vpow.pop %v5296
        %v5298 = vmul.f32 %v5074, 1.442695
        %v5299 = vpow.pop %v5298
        %v5300 = vmul.f32 %v5075, 1.442695
        %v5301 = vpow.pop %v5300
        %v5302 = vmul.f32 %v5076, 1.442695
        %v5303 = vpow.pop %v5302
        %v5304 = vmul.f32 %v5077, 1.442695
        %v5305 = vpow.pop %v5304
        %v5306 = vmul.f32 %v5078, 1.442695
        %v5307 = vpow.pop %v5306
        %v5308 = vmul.f32 %v5079, 1.442695
        %v5309 = vpow.pop %v5308
        %v5310 = vmul.f32 %v5080, 1.442695
        %v5311 = vpow.pop %v5310
        %v5312 = vmul.f32 %v5081, 1.442695
        %v5313 = vpow.pop %v5312
        %v5314 = vmul.f32 %v5082, 1.442695
        %v5315 = vpow.pop %v5314
        %v5316 = vmul.f32 %v5083, 1.442695
        %v5317 = vpow.pop %v5316
        %v5318 = vmul.f32 %v5084, 1.442695
        %v5319 = vpow.pop %v5318
        %v5320 = vmul.f32 %v5085, 1.442695
        %v5321 = vpow.pop %v5320
        %v5322 = vmul.f32 %v5086, 1.442695
        %v5323 = vpow.pop %v5322
        %v5324 = vmul.f32 %v5087, 1.442695
        %v5325 = vpow.pop %v5324
        %v5326 = vmul.f32 %v5088, 1.442695
        %v5327 = vpow.pop %v5326
        %v5328 = vmul.f32 %v5089, 1.442695
        %v5329 = vpow.pop %v5328
        %v5330 = vmul.f32 %v5090, 1.442695
        %v5331 = vpow.pop %v5330
        %v5332 = vmul.f32 %v5091, 1.442695
        %v5333 = vpow.pop %v5332
        %v5334 = vmul.f32 %v5092, 1.442695
        %v5335 = vpow.pop %v5334
        %v5336 = vmul.f32 %v5093, 1.442695
        %v5337 = vpow.pop %v5336
        %v5338 = vmul.f32 %v5094, 1.442695
        %v5339 = vpow.pop %v5338
        %v5340 = vmul.f32 %v5095, 1.442695
        %v5341 = vpow.pop %v5340
        %v5342 = vmul.f32 %v5096, 1.442695
        %v5343 = vpow.pop %v5342
        %v5344 = vmul.f32 %v5097, 1.442695
        %v5345 = vpow.pop %v5344
        %v5346 = vmul.f32 %v5098, 1.442695
        %v5347 = vpow.pop %v5346
        %v5348 = vmul.f32 %v5099, 1.442695
        %v5349 = vpow.pop %v5348
        %v5350 = vmul.f32 %v5100, 1.442695
        %v5351 = vpow.pop %v5350
        %v5352 = vmul.f32 %v5101, 1.442695
        %v5353 = vpow.pop %v5352
        %v5354 = vmul.f32 %v5102, 1.442695
        %v5355 = vpow.pop %v5354
        %v5356 = vmul.f32 %v5103, 1.442695
        %v5357 = vpow.pop %v5356
        %v5358 = vmul.f32 %v5104, 1.442695
        %v5359 = vpow.pop %v5358
        %v5360 = vmul.f32 %v5105, 1.442695
        %v5361 = vpow.pop %v5360
        %v5362 = vadd.f32 %v5107, 1.0
        %v5363 = vadd.f32 %v5109, 1.0
        %v5364 = vadd.f32 %v5111, 1.0
        %v5365 = vadd.f32 %v5113, 1.0
        %v5366 = vadd.f32 %v5115, 1.0
        %v5367 = vadd.f32 %v5117, 1.0
        %v5368 = vadd.f32 %v5119, 1.0
        %v5369 = vadd.f32 %v5121, 1.0
        %v5370 = vadd.f32 %v5123, 1.0
        %v5371 = vadd.f32 %v5125, 1.0
        %v5372 = vadd.f32 %v5127, 1.0
        %v5373 = vadd.f32 %v5129, 1.0
        %v5374 = vadd.f32 %v5131, 1.0
        %v5375 = vadd.f32 %v5133, 1.0
        %v5376 = vadd.f32 %v5135, 1.0
        %v5377 = vadd.f32 %v5137, 1.0
        %v5378 = vadd.f32 %v5139, 1.0
        %v5379 = vadd.f32 %v5141, 1.0
        %v5380 = vadd.f32 %v5143, 1.0
        %v5381 = vadd.f32 %v5145, 1.0
        %v5382 = vadd.f32 %v5147, 1.0
        %v5383 = vadd.f32 %v5149, 1.0
        %v5384 = vadd.f32 %v5151, 1.0
        %v5385 = vadd.f32 %v5153, 1.0
        %v5386 = vadd.f32 %v5155, 1.0
        %v5387 = vadd.f32 %v5157, 1.0
        %v5388 = vadd.f32 %v5159, 1.0
        %v5389 = vadd.f32 %v5161, 1.0
        %v5390 = vadd.f32 %v5163, 1.0
        %v5391 = vadd.f32 %v5165, 1.0
        %v5392 = vadd.f32 %v5167, 1.0
        %v5393 = vadd.f32 %v5169, 1.0
        %v5394 = vadd.f32 %v5171, 1.0
        %v5395 = vadd.f32 %v5173, 1.0
        %v5396 = vadd.f32 %v5175, 1.0
        %v5397 = vadd.f32 %v5177, 1.0
        %v5398 = vadd.f32 %v5179, 1.0
        %v5399 = vadd.f32 %v5181, 1.0
        %v5400 = vadd.f32 %v5183, 1.0
        %v5401 = vadd.f32 %v5185, 1.0
        %v5402 = vadd.f32 %v5187, 1.0
        %v5403 = vadd.f32 %v5189, 1.0
        %v5404 = vadd.f32 %v5191, 1.0
        %v5405 = vadd.f32 %v5193, 1.0
        %v5406 = vadd.f32 %v5195, 1.0
        %v5407 = vadd.f32 %v5197, 1.0
        %v5408 = vadd.f32 %v5199, 1.0
        %v5409 = vadd.f32 %v5201, 1.0
        %v5410 = vadd.f32 %v5203, 1.0
        %v5411 = vadd.f32 %v5205, 1.0
        %v5412 = vadd.f32 %v5207, 1.0
        %v5413 = vadd.f32 %v5209, 1.0
        %v5414 = vadd.f32 %v5211, 1.0
        %v5415 = vadd.f32 %v5213, 1.0
        %v5416 = vadd.f32 %v5215, 1.0
        %v5417 = vadd.f32 %v5217, 1.0
        %v5418 = vadd.f32 %v5219, 1.0
        %v5419 = vadd.f32 %v5221, 1.0
        %v5420 = vadd.f32 %v5223, 1.0
        %v5421 = vadd.f32 %v5225, 1.0
        %v5422 = vadd.f32 %v5227, 1.0
        %v5423 = vadd.f32 %v5229, 1.0
        %v5424 = vadd.f32 %v5231, 1.0
        %v5425 = vadd.f32 %v5233, 1.0
        %v5426 = vadd.f32 %v5235, 1.0
        %v5427 = vadd.f32 %v5237, 1.0
        %v5428 = vadd.f32 %v5239, 1.0
        %v5429 = vadd.f32 %v5241, 1.0
        %v5430 = vadd.f32 %v5243, 1.0
        %v5431 = vadd.f32 %v5245, 1.0
        %v5432 = vadd.f32 %v5247, 1.0
        %v5433 = vadd.f32 %v5249, 1.0
        %v5434 = vadd.f32 %v5251, 1.0
        %v5435 = vadd.f32 %v5253, 1.0
        %v5436 = vadd.f32 %v5255, 1.0
        %v5437 = vadd.f32 %v5257, 1.0
        %v5438 = vadd.f32 %v5259, 1.0
        %v5439 = vadd.f32 %v5261, 1.0
        %v5440 = vadd.f32 %v5263, 1.0
        %v5441 = vadd.f32 %v5265, 1.0
        %v5442 = vadd.f32 %v5267, 1.0
        %v5443 = vadd.f32 %v5269, 1.0
        %v5444 = vadd.f32 %v5271, 1.0
        %v5445 = vadd.f32 %v5273, 1.0
        %v5446 = vadd.f32 %v5275, 1.0
        %v5447 = vadd.f32 %v5277, 1.0
        %v5448 = vadd.f32 %v5279, 1.0
        %v5449 = vadd.f32 %v5281, 1.0
        %v5450 = vadd.f32 %v5283, 1.0
        %v5451 = vadd.f32 %v5285, 1.0
        %v5452 = vadd.f32 %v5287, 1.0
        %v5453 = vadd.f32 %v5289, 1.0
        %v5454 = vadd.f32 %v5291, 1.0
        %v5455 = vadd.f32 %v5293, 1.0
        %v5456 = vadd.f32 %v5295, 1.0
        %v5457 = vadd.f32 %v5297, 1.0
        %v5458 = vadd.f32 %v5299, 1.0
        %v5459 = vadd.f32 %v5301, 1.0
        %v5460 = vadd.f32 %v5303, 1.0
        %v5461 = vadd.f32 %v5305, 1.0
        %v5462 = vadd.f32 %v5307, 1.0
        %v5463 = vadd.f32 %v5309, 1.0
        %v5464 = vadd.f32 %v5311, 1.0
        %v5465 = vadd.f32 %v5313, 1.0
        %v5466 = vadd.f32 %v5315, 1.0
        %v5467 = vadd.f32 %v5317, 1.0
        %v5468 = vadd.f32 %v5319, 1.0
        %v5469 = vadd.f32 %v5321, 1.0
        %v5470 = vadd.f32 %v5323, 1.0
        %v5471 = vadd.f32 %v5325, 1.0
        %v5472 = vadd.f32 %v5327, 1.0
        %v5473 = vadd.f32 %v5329, 1.0
        %v5474 = vadd.f32 %v5331, 1.0
        %v5475 = vadd.f32 %v5333, 1.0
        %v5476 = vadd.f32 %v5335, 1.0
        %v5477 = vadd.f32 %v5337, 1.0
        %v5478 = vadd.f32 %v5339, 1.0
        %v5479 = vadd.f32 %v5341, 1.0
        %v5480 = vadd.f32 %v5343, 1.0
        %v5481 = vadd.f32 %v5345, 1.0
        %v5482 = vadd.f32 %v5347, 1.0
        %v5483 = vadd.f32 %v5349, 1.0
        %v5484 = vadd.f32 %v5351, 1.0
        %v5485 = vadd.f32 %v5353, 1.0
        %v5486 = vadd.f32 %v5355, 1.0
        %v5487 = vadd.f32 %v5357, 1.0
        %v5488 = vadd.f32 %v5359, 1.0
        %v5489 = vadd.f32 %v5361, 1.0
        %v5490 = vrcp.pop %v5362
        %v5491 = vmul.f32 1.0, %v5490
        %v5492 = vrcp.pop %v5363
        %v5493 = vmul.f32 1.0, %v5492
        %v5494 = vrcp.pop %v5364
        %v5495 = vmul.f32 1.0, %v5494
        %v5496 = vrcp.pop %v5365
        %v5497 = vmul.f32 1.0, %v5496
        %v5498 = vrcp.pop %v5366
        %v5499 = vmul.f32 1.0, %v5498
        %v5500 = vrcp.pop %v5367
        %v5501 = vmul.f32 1.0, %v5500
        %v5502 = vrcp.pop %v5368
        %v5503 = vmul.f32 1.0, %v5502
        %v5504 = vrcp.pop %v5369
        %v5505 = vmul.f32 1.0, %v5504
        %v5506 = vrcp.pop %v5370
        %v5507 = vmul.f32 1.0, %v5506
        %v5508 = vrcp.pop %v5371
        %v5509 = vmul.f32 1.0, %v5508
        %v5510 = vrcp.pop %v5372
        %v5511 = vmul.f32 1.0, %v5510
        %v5512 = vrcp.pop %v5373
        %v5513 = vmul.f32 1.0, %v5512
        %v5514 = vrcp.pop %v5374
        %v5515 = vmul.f32 1.0, %v5514
        %v5516 = vrcp.pop %v5375
        %v5517 = vmul.f32 1.0, %v5516
        %v5518 = vrcp.pop %v5376
        %v5519 = vmul.f32 1.0, %v5518
        %v5520 = vrcp.pop %v5377
        %v5521 = vmul.f32 1.0, %v5520
        %v5522 = vrcp.pop %v5378
        %v5523 = vmul.f32 1.0, %v5522
        %v5524 = vrcp.pop %v5379
        %v5525 = vmul.f32 1.0, %v5524
        %v5526 = vrcp.pop %v5380
        %v5527 = vmul.f32 1.0, %v5526
        %v5528 = vrcp.pop %v5381
        %v5529 = vmul.f32 1.0, %v5528
        %v5530 = vrcp.pop %v5382
        %v5531 = vmul.f32 1.0, %v5530
        %v5532 = vrcp.pop %v5383
        %v5533 = vmul.f32 1.0, %v5532
        %v5534 = vrcp.pop %v5384
        %v5535 = vmul.f32 1.0, %v5534
        %v5536 = vrcp.pop %v5385
        %v5537 = vmul.f32 1.0, %v5536
        %v5538 = vrcp.pop %v5386
        %v5539 = vmul.f32 1.0, %v5538
        %v5540 = vrcp.pop %v5387
        %v5541 = vmul.f32 1.0, %v5540
        %v5542 = vrcp.pop %v5388
        %v5543 = vmul.f32 1.0, %v5542
        %v5544 = vrcp.pop %v5389
        %v5545 = vmul.f32 1.0, %v5544
        %v5546 = vrcp.pop %v5390
        %v5547 = vmul.f32 1.0, %v5546
        %v5548 = vrcp.pop %v5391
        %v5549 = vmul.f32 1.0, %v5548
        %v5550 = vrcp.pop %v5392
        %v5551 = vmul.f32 1.0, %v5550
        %v5552 = vrcp.pop %v5393
        %v5553 = vmul.f32 1.0, %v5552
        %v5554 = vrcp.pop %v5394
        %v5555 = vmul.f32 1.0, %v5554
        %v5556 = vrcp.pop %v5395
        %v5557 = vmul.f32 1.0, %v5556
        %v5558 = vrcp.pop %v5396
        %v5559 = vmul.f32 1.0, %v5558
        %v5560 = vrcp.pop %v5397
        %v5561 = vmul.f32 1.0, %v5560
        %v5562 = vrcp.pop %v5398
        %v5563 = vmul.f32 1.0, %v5562
        %v5564 = vrcp.pop %v5399
        %v5565 = vmul.f32 1.0, %v5564
        %v5566 = vrcp.pop %v5400
        %v5567 = vmul.f32 1.0, %v5566
        %v5568 = vrcp.pop %v5401
        %v5569 = vmul.f32 1.0, %v5568
        %v5570 = vrcp.pop %v5402
        %v5571 = vmul.f32 1.0, %v5570
        %v5572 = vrcp.pop %v5403
        %v5573 = vmul.f32 1.0, %v5572
        %v5574 = vrcp.pop %v5404
        %v5575 = vmul.f32 1.0, %v5574
        %v5576 = vrcp.pop %v5405
        %v5577 = vmul.f32 1.0, %v5576
        %v5578 = vrcp.pop %v5406
        %v5579 = vmul.f32 1.0, %v5578
        %v5580 = vrcp.pop %v5407
        %v5581 = vmul.f32 1.0, %v5580
        %v5582 = vrcp.pop %v5408
        %v5583 = vmul.f32 1.0, %v5582
        %v5584 = vrcp.pop %v5409
        %v5585 = vmul.f32 1.0, %v5584
        %v5586 = vrcp.pop %v5410
        %v5587 = vmul.f32 1.0, %v5586
        %v5588 = vrcp.pop %v5411
        %v5589 = vmul.f32 1.0, %v5588
        %v5590 = vrcp.pop %v5412
        %v5591 = vmul.f32 1.0, %v5590
        %v5592 = vrcp.pop %v5413
        %v5593 = vmul.f32 1.0, %v5592
        %v5594 = vrcp.pop %v5414
        %v5595 = vmul.f32 1.0, %v5594
        %v5596 = vrcp.pop %v5415
        %v5597 = vmul.f32 1.0, %v5596
        %v5598 = vrcp.pop %v5416
        %v5599 = vmul.f32 1.0, %v5598
        %v5600 = vrcp.pop %v5417
        %v5601 = vmul.f32 1.0, %v5600
        %v5602 = vrcp.pop %v5418
        %v5603 = vmul.f32 1.0, %v5602
        %v5604 = vrcp.pop %v5419
        %v5605 = vmul.f32 1.0, %v5604
        %v5606 = vrcp.pop %v5420
        %v5607 = vmul.f32 1.0, %v5606
        %v5608 = vrcp.pop %v5421
        %v5609 = vmul.f32 1.0, %v5608
        %v5610 = vrcp.pop %v5422
        %v5611 = vmul.f32 1.0, %v5610
        %v5612 = vrcp.pop %v5423
        %v5613 = vmul.f32 1.0, %v5612
        %v5614 = vrcp.pop %v5424
        %v5615 = vmul.f32 1.0, %v5614
        %v5616 = vrcp.pop %v5425
        %v5617 = vmul.f32 1.0, %v5616
        %v5618 = vrcp.pop %v5426
        %v5619 = vmul.f32 1.0, %v5618
        %v5620 = vrcp.pop %v5427
        %v5621 = vmul.f32 1.0, %v5620
        %v5622 = vrcp.pop %v5428
        %v5623 = vmul.f32 1.0, %v5622
        %v5624 = vrcp.pop %v5429
        %v5625 = vmul.f32 1.0, %v5624
        %v5626 = vrcp.pop %v5430
        %v5627 = vmul.f32 1.0, %v5626
        %v5628 = vrcp.pop %v5431
        %v5629 = vmul.f32 1.0, %v5628
        %v5630 = vrcp.pop %v5432
        %v5631 = vmul.f32 1.0, %v5630
        %v5632 = vrcp.pop %v5433
        %v5633 = vmul.f32 1.0, %v5632
        %v5634 = vrcp.pop %v5434
        %v5635 = vmul.f32 1.0, %v5634
        %v5636 = vrcp.pop %v5435
        %v5637 = vmul.f32 1.0, %v5636
        %v5638 = vrcp.pop %v5436
        %v5639 = vmul.f32 1.0, %v5638
        %v5640 = vrcp.pop %v5437
        %v5641 = vmul.f32 1.0, %v5640
        %v5642 = vrcp.pop %v5438
        %v5643 = vmul.f32 1.0, %v5642
        %v5644 = vrcp.pop %v5439
        %v5645 = vmul.f32 1.0, %v5644
        %v5646 = vrcp.pop %v5440
        %v5647 = vmul.f32 1.0, %v5646
        %v5648 = vrcp.pop %v5441
        %v5649 = vmul.f32 1.0, %v5648
        %v5650 = vrcp.pop %v5442
        %v5651 = vmul.f32 1.0, %v5650
        %v5652 = vrcp.pop %v5443
        %v5653 = vmul.f32 1.0, %v5652
        %v5654 = vrcp.pop %v5444
        %v5655 = vmul.f32 1.0, %v5654
        %v5656 = vrcp.pop %v5445
        %v5657 = vmul.f32 1.0, %v5656
        %v5658 = vrcp.pop %v5446
        %v5659 = vmul.f32 1.0, %v5658
        %v5660 = vrcp.pop %v5447
        %v5661 = vmul.f32 1.0, %v5660
        %v5662 = vrcp.pop %v5448
        %v5663 = vmul.f32 1.0, %v5662
        %v5664 = vrcp.pop %v5449
        %v5665 = vmul.f32 1.0, %v5664
        %v5666 = vrcp.pop %v5450
        %v5667 = vmul.f32 1.0, %v5666
        %v5668 = vrcp.pop %v5451
        %v5669 = vmul.f32 1.0, %v5668
        %v5670 = vrcp.pop %v5452
        %v5671 = vmul.f32 1.0, %v5670
        %v5672 = vrcp.pop %v5453
        %v5673 = vmul.f32 1.0, %v5672
        %v5674 = vrcp.pop %v5454
        %v5675 = vmul.f32 1.0, %v5674
        %v5676 = vrcp.pop %v5455
        %v5677 = vmul.f32 1.0, %v5676
        %v5678 = vrcp.pop %v5456
        %v5679 = vmul.f32 1.0, %v5678
        %v5680 = vrcp.pop %v5457
        %v5681 = vmul.f32 1.0, %v5680
        %v5682 = vrcp.pop %v5458
        %v5683 = vmul.f32 1.0, %v5682
        %v5684 = vrcp.pop %v5459
        %v5685 = vmul.f32 1.0, %v5684
        %v5686 = vrcp.pop %v5460
        %v5687 = vmul.f32 1.0, %v5686
        %v5688 = vrcp.pop %v5461
        %v5689 = vmul.f32 1.0, %v5688
        %v5690 = vrcp.pop %v5462
        %v5691 = vmul.f32 1.0, %v5690
        %v5692 = vrcp.pop %v5463
        %v5693 = vmul.f32 1.0, %v5692
        %v5694 = vrcp.pop %v5464
        %v5695 = vmul.f32 1.0, %v5694
        %v5696 = vrcp.pop %v5465
        %v5697 = vmul.f32 1.0, %v5696
        %v5698 = vrcp.pop %v5466
        %v5699 = vmul.f32 1.0, %v5698
        %v5700 = vrcp.pop %v5467
        %v5701 = vmul.f32 1.0, %v5700
        %v5702 = vrcp.pop %v5468
        %v5703 = vmul.f32 1.0, %v5702
        %v5704 = vrcp.pop %v5469
        %v5705 = vmul.f32 1.0, %v5704
        %v5706 = vrcp.pop %v5470
        %v5707 = vmul.f32 1.0, %v5706
        %v5708 = vrcp.pop %v5471
        %v5709 = vmul.f32 1.0, %v5708
        %v5710 = vrcp.pop %v5472
        %v5711 = vmul.f32 1.0, %v5710
        %v5712 = vrcp.pop %v5473
        %v5713 = vmul.f32 1.0, %v5712
        %v5714 = vrcp.pop %v5474
        %v5715 = vmul.f32 1.0, %v5714
        %v5716 = vrcp.pop %v5475
        %v5717 = vmul.f32 1.0, %v5716
        %v5718 = vrcp.pop %v5476
        %v5719 = vmul.f32 1.0, %v5718
        %v5720 = vrcp.pop %v5477
        %v5721 = vmul.f32 1.0, %v5720
        %v5722 = vrcp.pop %v5478
        %v5723 = vmul.f32 1.0, %v5722
        %v5724 = vrcp.pop %v5479
        %v5725 = vmul.f32 1.0, %v5724
        %v5726 = vrcp.pop %v5480
        %v5727 = vmul.f32 1.0, %v5726
        %v5728 = vrcp.pop %v5481
        %v5729 = vmul.f32 1.0, %v5728
        %v5730 = vrcp.pop %v5482
        %v5731 = vmul.f32 1.0, %v5730
        %v5732 = vrcp.pop %v5483
        %v5733 = vmul.f32 1.0, %v5732
        %v5734 = vrcp.pop %v5484
        %v5735 = vmul.f32 1.0, %v5734
        %v5736 = vrcp.pop %v5485
        %v5737 = vmul.f32 1.0, %v5736
        %v5738 = vrcp.pop %v5486
        %v5739 = vmul.f32 1.0, %v5738
        %v5740 = vrcp.pop %v5487
        %v5741 = vmul.f32 1.0, %v5740
        %v5742 = vrcp.pop %v5488
        %v5743 = vmul.f32 1.0, %v5742
        %v5744 = vrcp.pop %v5489
        %v5745 = vmul.f32 1.0, %v5744
        %5746 = vadd.xlane.f32.xlu0 %v5491
        %v5747 = vpop.xlane.xlu0 %5746
        %5748 = vadd.xlane.f32.xlu0 %v5493
        %v5749 = vpop.xlane.xlu0 %5748
        %5750 = vadd.xlane.f32.xlu0 %v5495
        %v5751 = vpop.xlane.xlu0 %5750
        %5752 = vadd.xlane.f32.xlu0 %v5497
        %v5753 = vpop.xlane.xlu0 %5752
        %5754 = vadd.xlane.f32.xlu0 %v5499
        %v5755 = vpop.xlane.xlu0 %5754
        %5756 = vadd.xlane.f32.xlu0 %v5501
        %v5757 = vpop.xlane.xlu0 %5756
        %5758 = vadd.xlane.f32.xlu0 %v5503
        %v5759 = vpop.xlane.xlu0 %5758
        %5760 = vadd.xlane.f32.xlu0 %v5505
        %v5761 = vpop.xlane.xlu0 %5760
        %5762 = vadd.xlane.f32.xlu0 %v5507
        %v5763 = vpop.xlane.xlu0 %5762
        %5764 = vadd.xlane.f32.xlu0 %v5509
        %v5765 = vpop.xlane.xlu0 %5764
        %5766 = vadd.xlane.f32.xlu0 %v5511
        %v5767 = vpop.xlane.xlu0 %5766
        %5768 = vadd.xlane.f32.xlu0 %v5513
        %v5769 = vpop.xlane.xlu0 %5768
        %5770 = vadd.xlane.f32.xlu0 %v5515
        %v5771 = vpop.xlane.xlu0 %5770
        %5772 = vadd.xlane.f32.xlu0 %v5517
        %v5773 = vpop.xlane.xlu0 %5772
        %5774 = vadd.xlane.f32.xlu0 %v5519
        %v5775 = vpop.xlane.xlu0 %5774
        %5776 = vadd.xlane.f32.xlu0 %v5521
        %v5777 = vpop.xlane.xlu0 %5776
        %5778 = vadd.xlane.f32.xlu0 %v5523
        %v5779 = vpop.xlane.xlu0 %5778
        %5780 = vadd.xlane.f32.xlu0 %v5525
        %v5781 = vpop.xlane.xlu0 %5780
        %5782 = vadd.xlane.f32.xlu0 %v5527
        %v5783 = vpop.xlane.xlu0 %5782
        %5784 = vadd.xlane.f32.xlu0 %v5529
        %v5785 = vpop.xlane.xlu0 %5784
        %5786 = vadd.xlane.f32.xlu0 %v5531
        %v5787 = vpop.xlane.xlu0 %5786
        %5788 = vadd.xlane.f32.xlu0 %v5533
        %v5789 = vpop.xlane.xlu0 %5788
        %5790 = vadd.xlane.f32.xlu0 %v5535
        %v5791 = vpop.xlane.xlu0 %5790
        %5792 = vadd.xlane.f32.xlu0 %v5537
        %v5793 = vpop.xlane.xlu0 %5792
        %5794 = vadd.xlane.f32.xlu0 %v5539
        %v5795 = vpop.xlane.xlu0 %5794
        %5796 = vadd.xlane.f32.xlu0 %v5541
        %v5797 = vpop.xlane.xlu0 %5796
        %5798 = vadd.xlane.f32.xlu0 %v5543
        %v5799 = vpop.xlane.xlu0 %5798
        %5800 = vadd.xlane.f32.xlu0 %v5545
        %v5801 = vpop.xlane.xlu0 %5800
        %5802 = vadd.xlane.f32.xlu0 %v5547
        %v5803 = vpop.xlane.xlu0 %5802
        %5804 = vadd.xlane.f32.xlu0 %v5549
        %v5805 = vpop.xlane.xlu0 %5804
        %5806 = vadd.xlane.f32.xlu0 %v5551
        %v5807 = vpop.xlane.xlu0 %5806
        %5808 = vadd.xlane.f32.xlu0 %v5553
        %v5809 = vpop.xlane.xlu0 %5808
        %5810 = vadd.xlane.f32.xlu0 %v5555
        %v5811 = vpop.xlane.xlu0 %5810
        %5812 = vadd.xlane.f32.xlu0 %v5557
        %v5813 = vpop.xlane.xlu0 %5812
        %5814 = vadd.xlane.f32.xlu0 %v5559
        %v5815 = vpop.xlane.xlu0 %5814
        %5816 = vadd.xlane.f32.xlu0 %v5561
        %v5817 = vpop.xlane.xlu0 %5816
        %5818 = vadd.xlane.f32.xlu0 %v5563
        %v5819 = vpop.xlane.xlu0 %5818
        %5820 = vadd.xlane.f32.xlu0 %v5565
        %v5821 = vpop.xlane.xlu0 %5820
        %5822 = vadd.xlane.f32.xlu0 %v5567
        %v5823 = vpop.xlane.xlu0 %5822
        %5824 = vadd.xlane.f32.xlu0 %v5569
        %v5825 = vpop.xlane.xlu0 %5824
        %5826 = vadd.xlane.f32.xlu0 %v5571
        %v5827 = vpop.xlane.xlu0 %5826
        %5828 = vadd.xlane.f32.xlu0 %v5573
        %v5829 = vpop.xlane.xlu0 %5828
        %5830 = vadd.xlane.f32.xlu0 %v5575
        %v5831 = vpop.xlane.xlu0 %5830
        %5832 = vadd.xlane.f32.xlu0 %v5577
        %v5833 = vpop.xlane.xlu0 %5832
        %5834 = vadd.xlane.f32.xlu0 %v5579
        %v5835 = vpop.xlane.xlu0 %5834
        %5836 = vadd.xlane.f32.xlu0 %v5581
        %v5837 = vpop.xlane.xlu0 %5836
        %5838 = vadd.xlane.f32.xlu0 %v5583
        %v5839 = vpop.xlane.xlu0 %5838
        %5840 = vadd.xlane.f32.xlu0 %v5585
        %v5841 = vpop.xlane.xlu0 %5840
        %5842 = vadd.xlane.f32.xlu0 %v5587
        %v5843 = vpop.xlane.xlu0 %5842
        %5844 = vadd.xlane.f32.xlu0 %v5589
        %v5845 = vpop.xlane.xlu0 %5844
        %5846 = vadd.xlane.f32.xlu0 %v5591
        %v5847 = vpop.xlane.xlu0 %5846
        %5848 = vadd.xlane.f32.xlu0 %v5593
        %v5849 = vpop.xlane.xlu0 %5848
        %5850 = vadd.xlane.f32.xlu0 %v5595
        %v5851 = vpop.xlane.xlu0 %5850
        %5852 = vadd.xlane.f32.xlu0 %v5597
        %v5853 = vpop.xlane.xlu0 %5852
        %5854 = vadd.xlane.f32.xlu0 %v5599
        %v5855 = vpop.xlane.xlu0 %5854
        %5856 = vadd.xlane.f32.xlu0 %v5601
        %v5857 = vpop.xlane.xlu0 %5856
        %5858 = vadd.xlane.f32.xlu0 %v5603
        %v5859 = vpop.xlane.xlu0 %5858
        %5860 = vadd.xlane.f32.xlu0 %v5605
        %v5861 = vpop.xlane.xlu0 %5860
        %5862 = vadd.xlane.f32.xlu0 %v5607
        %v5863 = vpop.xlane.xlu0 %5862
        %5864 = vadd.xlane.f32.xlu0 %v5609
        %v5865 = vpop.xlane.xlu0 %5864
        %5866 = vadd.xlane.f32.xlu0 %v5611
        %v5867 = vpop.xlane.xlu0 %5866
        %5868 = vadd.xlane.f32.xlu0 %v5613
        %v5869 = vpop.xlane.xlu0 %5868
        %5870 = vadd.xlane.f32.xlu0 %v5615
        %v5871 = vpop.xlane.xlu0 %5870
        %5872 = vadd.xlane.f32.xlu0 %v5617
        %v5873 = vpop.xlane.xlu0 %5872
        %5874 = vadd.xlane.f32.xlu0 %v5619
        %v5875 = vpop.xlane.xlu0 %5874
        %5876 = vadd.xlane.f32.xlu0 %v5621
        %v5877 = vpop.xlane.xlu0 %5876
        %5878 = vadd.xlane.f32.xlu0 %v5623
        %v5879 = vpop.xlane.xlu0 %5878
        %5880 = vadd.xlane.f32.xlu0 %v5625
        %v5881 = vpop.xlane.xlu0 %5880
        %5882 = vadd.xlane.f32.xlu0 %v5627
        %v5883 = vpop.xlane.xlu0 %5882
        %5884 = vadd.xlane.f32.xlu0 %v5629
        %v5885 = vpop.xlane.xlu0 %5884
        %5886 = vadd.xlane.f32.xlu0 %v5631
        %v5887 = vpop.xlane.xlu0 %5886
        %5888 = vadd.xlane.f32.xlu0 %v5633
        %v5889 = vpop.xlane.xlu0 %5888
        %5890 = vadd.xlane.f32.xlu0 %v5635
        %v5891 = vpop.xlane.xlu0 %5890
        %5892 = vadd.xlane.f32.xlu0 %v5637
        %v5893 = vpop.xlane.xlu0 %5892
        %5894 = vadd.xlane.f32.xlu0 %v5639
        %v5895 = vpop.xlane.xlu0 %5894
        %5896 = vadd.xlane.f32.xlu0 %v5641
        %v5897 = vpop.xlane.xlu0 %5896
        %5898 = vadd.xlane.f32.xlu0 %v5643
        %v5899 = vpop.xlane.xlu0 %5898
        %5900 = vadd.xlane.f32.xlu0 %v5645
        %v5901 = vpop.xlane.xlu0 %5900
        %5902 = vadd.xlane.f32.xlu0 %v5647
        %v5903 = vpop.xlane.xlu0 %5902
        %5904 = vadd.xlane.f32.xlu0 %v5649
        %v5905 = vpop.xlane.xlu0 %5904
        %5906 = vadd.xlane.f32.xlu0 %v5651
        %v5907 = vpop.xlane.xlu0 %5906
        %5908 = vadd.xlane.f32.xlu0 %v5653
        %v5909 = vpop.xlane.xlu0 %5908
        %5910 = vadd.xlane.f32.xlu0 %v5655
        %v5911 = vpop.xlane.xlu0 %5910
        %5912 = vadd.xlane.f32.xlu0 %v5657
        %v5913 = vpop.xlane.xlu0 %5912
        %5914 = vadd.xlane.f32.xlu0 %v5659
        %v5915 = vpop.xlane.xlu0 %5914
        %5916 = vadd.xlane.f32.xlu0 %v5661
        %v5917 = vpop.xlane.xlu0 %5916
        %5918 = vadd.xlane.f32.xlu0 %v5663
        %v5919 = vpop.xlane.xlu0 %5918
        %5920 = vadd.xlane.f32.xlu0 %v5665
        %v5921 = vpop.xlane.xlu0 %5920
        %5922 = vadd.xlane.f32.xlu0 %v5667
        %v5923 = vpop.xlane.xlu0 %5922
        %5924 = vadd.xlane.f32.xlu0 %v5669
        %v5925 = vpop.xlane.xlu0 %5924
        %5926 = vadd.xlane.f32.xlu0 %v5671
        %v5927 = vpop.xlane.xlu0 %5926
        %5928 = vadd.xlane.f32.xlu0 %v5673
        %v5929 = vpop.xlane.xlu0 %5928
        %5930 = vadd.xlane.f32.xlu0 %v5675
        %v5931 = vpop.xlane.xlu0 %5930
        %5932 = vadd.xlane.f32.xlu0 %v5677
        %v5933 = vpop.xlane.xlu0 %5932
        %5934 = vadd.xlane.f32.xlu0 %v5679
        %v5935 = vpop.xlane.xlu0 %5934
        %5936 = vadd.xlane.f32.xlu0 %v5681
        %v5937 = vpop.xlane.xlu0 %5936
        %5938 = vadd.xlane.f32.xlu0 %v5683
        %v5939 = vpop.xlane.xlu0 %5938
        %5940 = vadd.xlane.f32.xlu0 %v5685
        %v5941 = vpop.xlane.xlu0 %5940
        %5942 = vadd.xlane.f32.xlu0 %v5687
        %v5943 = vpop.xlane.xlu0 %5942
        %5944 = vadd.xlane.f32.xlu0 %v5689
        %v5945 = vpop.xlane.xlu0 %5944
        %5946 = vadd.xlane.f32.xlu0 %v5691
        %v5947 = vpop.xlane.xlu0 %5946
        %5948 = vadd.xlane.f32.xlu0 %v5693
        %v5949 = vpop.xlane.xlu0 %5948
        %5950 = vadd.xlane.f32.xlu0 %v5695
        %v5951 = vpop.xlane.xlu0 %5950
        %5952 = vadd.xlane.f32.xlu0 %v5697
        %v5953 = vpop.xlane.xlu0 %5952
        %5954 = vadd.xlane.f32.xlu0 %v5699
        %v5955 = vpop.xlane.xlu0 %5954
        %5956 = vadd.xlane.f32.xlu0 %v5701
        %v5957 = vpop.xlane.xlu0 %5956
        %5958 = vadd.xlane.f32.xlu0 %v5703
        %v5959 = vpop.xlane.xlu0 %5958
        %5960 = vadd.xlane.f32.xlu0 %v5705
        %v5961 = vpop.xlane.xlu0 %5960
        %5962 = vadd.xlane.f32.xlu0 %v5707
        %v5963 = vpop.xlane.xlu0 %5962
        %5964 = vadd.xlane.f32.xlu0 %v5709
        %v5965 = vpop.xlane.xlu0 %5964
        %5966 = vadd.xlane.f32.xlu0 %v5711
        %v5967 = vpop.xlane.xlu0 %5966
        %5968 = vadd.xlane.f32.xlu0 %v5713
        %v5969 = vpop.xlane.xlu0 %5968
        %5970 = vadd.xlane.f32.xlu0 %v5715
        %v5971 = vpop.xlane.xlu0 %5970
        %5972 = vadd.xlane.f32.xlu0 %v5717
        %v5973 = vpop.xlane.xlu0 %5972
        %5974 = vadd.xlane.f32.xlu0 %v5719
        %v5975 = vpop.xlane.xlu0 %5974
        %5976 = vadd.xlane.f32.xlu0 %v5721
        %v5977 = vpop.xlane.xlu0 %5976
        %5978 = vadd.xlane.f32.xlu0 %v5723
        %v5979 = vpop.xlane.xlu0 %5978
        %5980 = vadd.xlane.f32.xlu0 %v5725
        %v5981 = vpop.xlane.xlu0 %5980
        %5982 = vadd.xlane.f32.xlu0 %v5727
        %v5983 = vpop.xlane.xlu0 %5982
        %5984 = vadd.xlane.f32.xlu0 %v5729
        %v5985 = vpop.xlane.xlu0 %5984
        %5986 = vadd.xlane.f32.xlu0 %v5731
        %v5987 = vpop.xlane.xlu0 %5986
        %5988 = vadd.xlane.f32.xlu0 %v5733
        %v5989 = vpop.xlane.xlu0 %5988
        %5990 = vadd.xlane.f32.xlu0 %v5735
        %v5991 = vpop.xlane.xlu0 %5990
        %5992 = vadd.xlane.f32.xlu0 %v5737
        %v5993 = vpop.xlane.xlu0 %5992
        %5994 = vadd.xlane.f32.xlu0 %v5739
        %v5995 = vpop.xlane.xlu0 %5994
        %5996 = vadd.xlane.f32.xlu0 %v5741
        %v5997 = vpop.xlane.xlu0 %5996
        %5998 = vadd.xlane.f32.xlu0 %v5743
        %v5999 = vpop.xlane.xlu0 %5998
        %6000 = vadd.xlane.f32.xlu0 %v5745
        %v6001 = vpop.xlane.xlu0 %6000
        %v6002 = vadd.f32 %v5747, 1e-09
        %v6003 = vadd.f32 %v5749, 1e-09
        %v6004 = vadd.f32 %v5751, 1e-09
        %v6005 = vadd.f32 %v5753, 1e-09
        %v6006 = vadd.f32 %v5755, 1e-09
        %v6007 = vadd.f32 %v5757, 1e-09
        %v6008 = vadd.f32 %v5759, 1e-09
        %v6009 = vadd.f32 %v5761, 1e-09
        %v6010 = vadd.f32 %v5763, 1e-09
        %v6011 = vadd.f32 %v5765, 1e-09
        %v6012 = vadd.f32 %v5767, 1e-09
        %v6013 = vadd.f32 %v5769, 1e-09
        %v6014 = vadd.f32 %v5771, 1e-09
        %v6015 = vadd.f32 %v5773, 1e-09
        %v6016 = vadd.f32 %v5775, 1e-09
        %v6017 = vadd.f32 %v5777, 1e-09
        %v6018 = vadd.f32 %v5779, 1e-09
        %v6019 = vadd.f32 %v5781, 1e-09
        %v6020 = vadd.f32 %v5783, 1e-09
        %v6021 = vadd.f32 %v5785, 1e-09
        %v6022 = vadd.f32 %v5787, 1e-09
        %v6023 = vadd.f32 %v5789, 1e-09
        %v6024 = vadd.f32 %v5791, 1e-09
        %v6025 = vadd.f32 %v5793, 1e-09
        %v6026 = vadd.f32 %v5795, 1e-09
        %v6027 = vadd.f32 %v5797, 1e-09
        %v6028 = vadd.f32 %v5799, 1e-09
        %v6029 = vadd.f32 %v5801, 1e-09
        %v6030 = vadd.f32 %v5803, 1e-09
        %v6031 = vadd.f32 %v5805, 1e-09
        %v6032 = vadd.f32 %v5807, 1e-09
        %v6033 = vadd.f32 %v5809, 1e-09
        %v6034 = vadd.f32 %v5811, 1e-09
        %v6035 = vadd.f32 %v5813, 1e-09
        %v6036 = vadd.f32 %v5815, 1e-09
        %v6037 = vadd.f32 %v5817, 1e-09
        %v6038 = vadd.f32 %v5819, 1e-09
        %v6039 = vadd.f32 %v5821, 1e-09
        %v6040 = vadd.f32 %v5823, 1e-09
        %v6041 = vadd.f32 %v5825, 1e-09
        %v6042 = vadd.f32 %v5827, 1e-09
        %v6043 = vadd.f32 %v5829, 1e-09
        %v6044 = vadd.f32 %v5831, 1e-09
        %v6045 = vadd.f32 %v5833, 1e-09
        %v6046 = vadd.f32 %v5835, 1e-09
        %v6047 = vadd.f32 %v5837, 1e-09
        %v6048 = vadd.f32 %v5839, 1e-09
        %v6049 = vadd.f32 %v5841, 1e-09
        %v6050 = vadd.f32 %v5843, 1e-09
        %v6051 = vadd.f32 %v5845, 1e-09
        %v6052 = vadd.f32 %v5847, 1e-09
        %v6053 = vadd.f32 %v5849, 1e-09
        %v6054 = vadd.f32 %v5851, 1e-09
        %v6055 = vadd.f32 %v5853, 1e-09
        %v6056 = vadd.f32 %v5855, 1e-09
        %v6057 = vadd.f32 %v5857, 1e-09
        %v6058 = vadd.f32 %v5859, 1e-09
        %v6059 = vadd.f32 %v5861, 1e-09
        %v6060 = vadd.f32 %v5863, 1e-09
        %v6061 = vadd.f32 %v5865, 1e-09
        %v6062 = vadd.f32 %v5867, 1e-09
        %v6063 = vadd.f32 %v5869, 1e-09
        %v6064 = vadd.f32 %v5871, 1e-09
        %v6065 = vadd.f32 %v5873, 1e-09
        %v6066 = vadd.f32 %v5875, 1e-09
        %v6067 = vadd.f32 %v5877, 1e-09
        %v6068 = vadd.f32 %v5879, 1e-09
        %v6069 = vadd.f32 %v5881, 1e-09
        %v6070 = vadd.f32 %v5883, 1e-09
        %v6071 = vadd.f32 %v5885, 1e-09
        %v6072 = vadd.f32 %v5887, 1e-09
        %v6073 = vadd.f32 %v5889, 1e-09
        %v6074 = vadd.f32 %v5891, 1e-09
        %v6075 = vadd.f32 %v5893, 1e-09
        %v6076 = vadd.f32 %v5895, 1e-09
        %v6077 = vadd.f32 %v5897, 1e-09
        %v6078 = vadd.f32 %v5899, 1e-09
        %v6079 = vadd.f32 %v5901, 1e-09
        %v6080 = vadd.f32 %v5903, 1e-09
        %v6081 = vadd.f32 %v5905, 1e-09
        %v6082 = vadd.f32 %v5907, 1e-09
        %v6083 = vadd.f32 %v5909, 1e-09
        %v6084 = vadd.f32 %v5911, 1e-09
        %v6085 = vadd.f32 %v5913, 1e-09
        %v6086 = vadd.f32 %v5915, 1e-09
        %v6087 = vadd.f32 %v5917, 1e-09
        %v6088 = vadd.f32 %v5919, 1e-09
        %v6089 = vadd.f32 %v5921, 1e-09
        %v6090 = vadd.f32 %v5923, 1e-09
        %v6091 = vadd.f32 %v5925, 1e-09
        %v6092 = vadd.f32 %v5927, 1e-09
        %v6093 = vadd.f32 %v5929, 1e-09
        %v6094 = vadd.f32 %v5931, 1e-09
        %v6095 = vadd.f32 %v5933, 1e-09
        %v6096 = vadd.f32 %v5935, 1e-09
        %v6097 = vadd.f32 %v5937, 1e-09
        %v6098 = vadd.f32 %v5939, 1e-09
        %v6099 = vadd.f32 %v5941, 1e-09
        %v6100 = vadd.f32 %v5943, 1e-09
        %v6101 = vadd.f32 %v5945, 1e-09
        %v6102 = vadd.f32 %v5947, 1e-09
        %v6103 = vadd.f32 %v5949, 1e-09
        %v6104 = vadd.f32 %v5951, 1e-09
        %v6105 = vadd.f32 %v5953, 1e-09
        %v6106 = vadd.f32 %v5955, 1e-09
        %v6107 = vadd.f32 %v5957, 1e-09
        %v6108 = vadd.f32 %v5959, 1e-09
        %v6109 = vadd.f32 %v5961, 1e-09
        %v6110 = vadd.f32 %v5963, 1e-09
        %v6111 = vadd.f32 %v5965, 1e-09
        %v6112 = vadd.f32 %v5967, 1e-09
        %v6113 = vadd.f32 %v5969, 1e-09
        %v6114 = vadd.f32 %v5971, 1e-09
        %v6115 = vadd.f32 %v5973, 1e-09
        %v6116 = vadd.f32 %v5975, 1e-09
        %v6117 = vadd.f32 %v5977, 1e-09
        %v6118 = vadd.f32 %v5979, 1e-09
        %v6119 = vadd.f32 %v5981, 1e-09
        %v6120 = vadd.f32 %v5983, 1e-09
        %v6121 = vadd.f32 %v5985, 1e-09
        %v6122 = vadd.f32 %v5987, 1e-09
        %v6123 = vadd.f32 %v5989, 1e-09
        %v6124 = vadd.f32 %v5991, 1e-09
        %v6125 = vadd.f32 %v5993, 1e-09
        %v6126 = vadd.f32 %v5995, 1e-09
        %v6127 = vadd.f32 %v5997, 1e-09
        %v6128 = vadd.f32 %v5999, 1e-09
        %v6129 = vadd.f32 %v6001, 1e-09
        %v6130 = vrcp.pop %v6002
        %v6131 = vrcp.pop %v6003
        %v6132 = vrcp.pop %v6004
        %v6133 = vrcp.pop %v6005
        %v6134 = vrcp.pop %v6006
        %v6135 = vrcp.pop %v6007
        %v6136 = vrcp.pop %v6008
        %v6137 = vrcp.pop %v6009
        %v6138 = vrcp.pop %v6010
        %v6139 = vrcp.pop %v6011
        %v6140 = vrcp.pop %v6012
        %v6141 = vrcp.pop %v6013
        %v6142 = vrcp.pop %v6014
        %v6143 = vrcp.pop %v6015
        %v6144 = vrcp.pop %v6016
        %v6145 = vrcp.pop %v6017
        %v6146 = vrcp.pop %v6018
        %v6147 = vrcp.pop %v6019
        %v6148 = vrcp.pop %v6020
        %v6149 = vrcp.pop %v6021
        %v6150 = vrcp.pop %v6022
        %v6151 = vrcp.pop %v6023
        %v6152 = vrcp.pop %v6024
        %v6153 = vrcp.pop %v6025
        %v6154 = vrcp.pop %v6026
        %v6155 = vrcp.pop %v6027
        %v6156 = vrcp.pop %v6028
        %v6157 = vrcp.pop %v6029
        %v6158 = vrcp.pop %v6030
        %v6159 = vrcp.pop %v6031
        %v6160 = vrcp.pop %v6032
        %v6161 = vrcp.pop %v6033
        %v6162 = vrcp.pop %v6034
        %v6163 = vrcp.pop %v6035
        %v6164 = vrcp.pop %v6036
        %v6165 = vrcp.pop %v6037
        %v6166 = vrcp.pop %v6038
        %v6167 = vrcp.pop %v6039
        %v6168 = vrcp.pop %v6040
        %v6169 = vrcp.pop %v6041
        %v6170 = vrcp.pop %v6042
        %v6171 = vrcp.pop %v6043
        %v6172 = vrcp.pop %v6044
        %v6173 = vrcp.pop %v6045
        %v6174 = vrcp.pop %v6046
        %v6175 = vrcp.pop %v6047
        %v6176 = vrcp.pop %v6048
        %v6177 = vrcp.pop %v6049
        %v6178 = vrcp.pop %v6050
        %v6179 = vrcp.pop %v6051
        %v6180 = vrcp.pop %v6052
        %v6181 = vrcp.pop %v6053
        %v6182 = vrcp.pop %v6054
        %v6183 = vrcp.pop %v6055
        %v6184 = vrcp.pop %v6056
        %v6185 = vrcp.pop %v6057
        %v6186 = vrcp.pop %v6058
        %v6187 = vrcp.pop %v6059
        %v6188 = vrcp.pop %v6060
        %v6189 = vrcp.pop %v6061
        %v6190 = vrcp.pop %v6062
        %v6191 = vrcp.pop %v6063
        %v6192 = vrcp.pop %v6064
        %v6193 = vrcp.pop %v6065
        %v6194 = vrcp.pop %v6066
        %v6195 = vrcp.pop %v6067
        %v6196 = vrcp.pop %v6068
        %v6197 = vrcp.pop %v6069
        %v6198 = vrcp.pop %v6070
        %v6199 = vrcp.pop %v6071
        %v6200 = vrcp.pop %v6072
        %v6201 = vrcp.pop %v6073
        %v6202 = vrcp.pop %v6074
        %v6203 = vrcp.pop %v6075
        %v6204 = vrcp.pop %v6076
        %v6205 = vrcp.pop %v6077
        %v6206 = vrcp.pop %v6078
        %v6207 = vrcp.pop %v6079
        %v6208 = vrcp.pop %v6080
        %v6209 = vrcp.pop %v6081
        %v6210 = vrcp.pop %v6082
        %v6211 = vrcp.pop %v6083
        %v6212 = vrcp.pop %v6084
        %v6213 = vrcp.pop %v6085
        %v6214 = vrcp.pop %v6086
        %v6215 = vrcp.pop %v6087
        %v6216 = vrcp.pop %v6088
        %v6217 = vrcp.pop %v6089
        %v6218 = vrcp.pop %v6090
        %v6219 = vrcp.pop %v6091
        %v6220 = vrcp.pop %v6092
        %v6221 = vrcp.pop %v6093
        %v6222 = vrcp.pop %v6094
        %v6223 = vrcp.pop %v6095
        %v6224 = vrcp.pop %v6096
        %v6225 = vrcp.pop %v6097
        %v6226 = vrcp.pop %v6098
        %v6227 = vrcp.pop %v6099
        %v6228 = vrcp.pop %v6100
        %v6229 = vrcp.pop %v6101
        %v6230 = vrcp.pop %v6102
        %v6231 = vrcp.pop %v6103
        %v6232 = vrcp.pop %v6104
        %v6233 = vrcp.pop %v6105
        %v6234 = vrcp.pop %v6106
        %v6235 = vrcp.pop %v6107
        %v6236 = vrcp.pop %v6108
        %v6237 = vrcp.pop %v6109
        %v6238 = vrcp.pop %v6110
        %v6239 = vrcp.pop %v6111
        %v6240 = vrcp.pop %v6112
        %v6241 = vrcp.pop %v6113
        %v6242 = vrcp.pop %v6114
        %v6243 = vrcp.pop %v6115
        %v6244 = vrcp.pop %v6116
        %v6245 = vrcp.pop %v6117
        %v6246 = vrcp.pop %v6118
        %v6247 = vrcp.pop %v6119
        %v6248 = vrcp.pop %v6120
        %v6249 = vrcp.pop %v6121
        %v6250 = vrcp.pop %v6122
        %v6251 = vrcp.pop %v6123
        %v6252 = vrcp.pop %v6124
        %v6253 = vrcp.pop %v6125
        %v6254 = vrcp.pop %v6126
        %v6255 = vrcp.pop %v6127
        %v6256 = vrcp.pop %v6128
        %v6257 = vrcp.pop %v6129
        %v6258 = vmul.f32 %v5491, %v6130
        %v6259 = vmul.f32 %v5493, %v6131
        %v6260 = vmul.f32 %v5495, %v6132
        %v6261 = vmul.f32 %v5497, %v6133
        %v6262 = vmul.f32 %v5499, %v6134
        %v6263 = vmul.f32 %v5501, %v6135
        %v6264 = vmul.f32 %v5503, %v6136
        %v6265 = vmul.f32 %v5505, %v6137
        %v6266 = vmul.f32 %v5507, %v6138
        %v6267 = vmul.f32 %v5509, %v6139
        %v6268 = vmul.f32 %v5511, %v6140
        %v6269 = vmul.f32 %v5513, %v6141
        %v6270 = vmul.f32 %v5515, %v6142
        %v6271 = vmul.f32 %v5517, %v6143
        %v6272 = vmul.f32 %v5519, %v6144
        %v6273 = vmul.f32 %v5521, %v6145
        %v6274 = vmul.f32 %v5523, %v6146
        %v6275 = vmul.f32 %v5525, %v6147
        %v6276 = vmul.f32 %v5527, %v6148
        %v6277 = vmul.f32 %v5529, %v6149
        %v6278 = vmul.f32 %v5531, %v6150
        %v6279 = vmul.f32 %v5533, %v6151
        %v6280 = vmul.f32 %v5535, %v6152
        %v6281 = vmul.f32 %v5537, %v6153
        %v6282 = vmul.f32 %v5539, %v6154
        %v6283 = vmul.f32 %v5541, %v6155
        %v6284 = vmul.f32 %v5543, %v6156
        %v6285 = vmul.f32 %v5545, %v6157
        %v6286 = vmul.f32 %v5547, %v6158
        %v6287 = vmul.f32 %v5549, %v6159
        %v6288 = vmul.f32 %v5551, %v6160
        %v6289 = vmul.f32 %v5553, %v6161
        %v6290 = vmul.f32 %v5555, %v6162
        %v6291 = vmul.f32 %v5557, %v6163
        %v6292 = vmul.f32 %v5559, %v6164
        %v6293 = vmul.f32 %v5561, %v6165
        %v6294 = vmul.f32 %v5563, %v6166
        %v6295 = vmul.f32 %v5565, %v6167
        %v6296 = vmul.f32 %v5567, %v6168
        %v6297 = vmul.f32 %v5569, %v6169
        %v6298 = vmul.f32 %v5571, %v6170
        %v6299 = vmul.f32 %v5573, %v6171
        %v6300 = vmul.f32 %v5575, %v6172
        %v6301 = vmul.f32 %v5577, %v6173
        %v6302 = vmul.f32 %v5579, %v6174
        %v6303 = vmul.f32 %v5581, %v6175
        %v6304 = vmul.f32 %v5583, %v6176
        %v6305 = vmul.f32 %v5585, %v6177
        %v6306 = vmul.f32 %v5587, %v6178
        %v6307 = vmul.f32 %v5589, %v6179
        %v6308 = vmul.f32 %v5591, %v6180
        %v6309 = vmul.f32 %v5593, %v6181
        %v6310 = vmul.f32 %v5595, %v6182
        %v6311 = vmul.f32 %v5597, %v6183
        %v6312 = vmul.f32 %v5599, %v6184
        %v6313 = vmul.f32 %v5601, %v6185
        %v6314 = vmul.f32 %v5603, %v6186
        %v6315 = vmul.f32 %v5605, %v6187
        %v6316 = vmul.f32 %v5607, %v6188
        %v6317 = vmul.f32 %v5609, %v6189
        %v6318 = vmul.f32 %v5611, %v6190
        %v6319 = vmul.f32 %v5613, %v6191
        %v6320 = vmul.f32 %v5615, %v6192
        %v6321 = vmul.f32 %v5617, %v6193
        %v6322 = vmul.f32 %v5619, %v6194
        %v6323 = vmul.f32 %v5621, %v6195
        %v6324 = vmul.f32 %v5623, %v6196
        %v6325 = vmul.f32 %v5625, %v6197
        %v6326 = vmul.f32 %v5627, %v6198
        %v6327 = vmul.f32 %v5629, %v6199
        %v6328 = vmul.f32 %v5631, %v6200
        %v6329 = vmul.f32 %v5633, %v6201
        %v6330 = vmul.f32 %v5635, %v6202
        %v6331 = vmul.f32 %v5637, %v6203
        %v6332 = vmul.f32 %v5639, %v6204
        %v6333 = vmul.f32 %v5641, %v6205
        %v6334 = vmul.f32 %v5643, %v6206
        %v6335 = vmul.f32 %v5645, %v6207
        %v6336 = vmul.f32 %v5647, %v6208
        %v6337 = vmul.f32 %v5649, %v6209
        %v6338 = vmul.f32 %v5651, %v6210
        %v6339 = vmul.f32 %v5653, %v6211
        %v6340 = vmul.f32 %v5655, %v6212
        %v6341 = vmul.f32 %v5657, %v6213
        %v6342 = vmul.f32 %v5659, %v6214
        %v6343 = vmul.f32 %v5661, %v6215
        %v6344 = vmul.f32 %v5663, %v6216
        %v6345 = vmul.f32 %v5665, %v6217
        %v6346 = vmul.f32 %v5667, %v6218
        %v6347 = vmul.f32 %v5669, %v6219
        %v6348 = vmul.f32 %v5671, %v6220
        %v6349 = vmul.f32 %v5673, %v6221
        %v6350 = vmul.f32 %v5675, %v6222
        %v6351 = vmul.f32 %v5677, %v6223
        %v6352 = vmul.f32 %v5679, %v6224
        %v6353 = vmul.f32 %v5681, %v6225
        %v6354 = vmul.f32 %v5683, %v6226
        %v6355 = vmul.f32 %v5685, %v6227
        %v6356 = vmul.f32 %v5687, %v6228
        %v6357 = vmul.f32 %v5689, %v6229
        %v6358 = vmul.f32 %v5691, %v6230
        %v6359 = vmul.f32 %v5693, %v6231
        %v6360 = vmul.f32 %v5695, %v6232
        %v6361 = vmul.f32 %v5697, %v6233
        %v6362 = vmul.f32 %v5699, %v6234
        %v6363 = vmul.f32 %v5701, %v6235
        %v6364 = vmul.f32 %v5703, %v6236
        %v6365 = vmul.f32 %v5705, %v6237
        %v6366 = vmul.f32 %v5707, %v6238
        %v6367 = vmul.f32 %v5709, %v6239
        %v6368 = vmul.f32 %v5711, %v6240
        %v6369 = vmul.f32 %v5713, %v6241
        %v6370 = vmul.f32 %v5715, %v6242
        %v6371 = vmul.f32 %v5717, %v6243
        %v6372 = vmul.f32 %v5719, %v6244
        %v6373 = vmul.f32 %v5721, %v6245
        %v6374 = vmul.f32 %v5723, %v6246
        %v6375 = vmul.f32 %v5725, %v6247
        %v6376 = vmul.f32 %v5727, %v6248
        %v6377 = vmul.f32 %v5729, %v6249
        %v6378 = vmul.f32 %v5731, %v6250
        %v6379 = vmul.f32 %v5733, %v6251
        %v6380 = vmul.f32 %v5735, %v6252
        %v6381 = vmul.f32 %v5737, %v6253
        %v6382 = vmul.f32 %v5739, %v6254
        %v6383 = vmul.f32 %v5741, %v6255
        %v6384 = vmul.f32 %v5743, %v6256
        %v6385 = vmul.f32 %v5745, %v6257
        %v6386 = vpack.c.bf16 %v6259, %v6258
        %v6387 = vpack.c.bf16 %v6261, %v6260
        %v6388 = vpack.c.bf16 %v6263, %v6262
        %v6389 = vpack.c.bf16 %v6265, %v6264
        %v6390 = vpack.c.bf16 %v6267, %v6266
        %v6391 = vpack.c.bf16 %v6269, %v6268
        %v6392 = vpack.c.bf16 %v6271, %v6270
        %v6393 = vpack.c.bf16 %v6273, %v6272
        %v6394 = vpack.c.bf16 %v6275, %v6274
        %v6395 = vpack.c.bf16 %v6277, %v6276
        %v6396 = vpack.c.bf16 %v6279, %v6278
        %v6397 = vpack.c.bf16 %v6281, %v6280
        %v6398 = vpack.c.bf16 %v6283, %v6282
        %v6399 = vpack.c.bf16 %v6285, %v6284
        %v6400 = vpack.c.bf16 %v6287, %v6286
        %v6401 = vpack.c.bf16 %v6289, %v6288
        %v6402 = vpack.c.bf16 %v6291, %v6290
        %v6403 = vpack.c.bf16 %v6293, %v6292
        %v6404 = vpack.c.bf16 %v6295, %v6294
        %v6405 = vpack.c.bf16 %v6297, %v6296
        %v6406 = vpack.c.bf16 %v6299, %v6298
        %v6407 = vpack.c.bf16 %v6301, %v6300
        %v6408 = vpack.c.bf16 %v6303, %v6302
        %v6409 = vpack.c.bf16 %v6305, %v6304
        %v6410 = vpack.c.bf16 %v6307, %v6306
        %v6411 = vpack.c.bf16 %v6309, %v6308
        %v6412 = vpack.c.bf16 %v6311, %v6310
        %v6413 = vpack.c.bf16 %v6313, %v6312
        %v6414 = vpack.c.bf16 %v6315, %v6314
        %v6415 = vpack.c.bf16 %v6317, %v6316
        %v6416 = vpack.c.bf16 %v6319, %v6318
        %v6417 = vpack.c.bf16 %v6321, %v6320
        %v6418 = vpack.c.bf16 %v6323, %v6322
        %v6419 = vpack.c.bf16 %v6325, %v6324
        %v6420 = vpack.c.bf16 %v6327, %v6326
        %v6421 = vpack.c.bf16 %v6329, %v6328
        %v6422 = vpack.c.bf16 %v6331, %v6330
        %v6423 = vpack.c.bf16 %v6333, %v6332
        %v6424 = vpack.c.bf16 %v6335, %v6334
        %v6425 = vpack.c.bf16 %v6337, %v6336
        %v6426 = vpack.c.bf16 %v6339, %v6338
        %v6427 = vpack.c.bf16 %v6341, %v6340
        %v6428 = vpack.c.bf16 %v6343, %v6342
        %v6429 = vpack.c.bf16 %v6345, %v6344
        %v6430 = vpack.c.bf16 %v6347, %v6346
        %v6431 = vpack.c.bf16 %v6349, %v6348
        %v6432 = vpack.c.bf16 %v6351, %v6350
        %v6433 = vpack.c.bf16 %v6353, %v6352
        %v6434 = vpack.c.bf16 %v6355, %v6354
        %v6435 = vpack.c.bf16 %v6357, %v6356
        %v6436 = vpack.c.bf16 %v6359, %v6358
        %v6437 = vpack.c.bf16 %v6361, %v6360
        %v6438 = vpack.c.bf16 %v6363, %v6362
        %v6439 = vpack.c.bf16 %v6365, %v6364
        %v6440 = vpack.c.bf16 %v6367, %v6366
        %v6441 = vpack.c.bf16 %v6369, %v6368
        %v6442 = vpack.c.bf16 %v6371, %v6370
        %v6443 = vpack.c.bf16 %v6373, %v6372
        %v6444 = vpack.c.bf16 %v6375, %v6374
        %v6445 = vpack.c.bf16 %v6377, %v6376
        %v6446 = vpack.c.bf16 %v6379, %v6378
        %v6447 = vpack.c.bf16 %v6381, %v6380
        %v6448 = vpack.c.bf16 %v6383, %v6382
        %v6449 = vpack.c.bf16 %v6385, %v6384
        %v6450 = vld [vmem:[%s5] sm:$0xf]
        %v6451 = vld [vmem:[%s5 + $0x4] sm:$0xf]
        %v6452 = vld [vmem:[%s5 + $0x8] sm:$0xf]
        %v6453 = vld [vmem:[%s5 + $0xc] sm:$0xf]
        %v6454 = vld [vmem:[%s5 + $0x10] sm:$0xf]
        %v6455 = vld [vmem:[%s5 + $0x14] sm:$0xf]
        %v6456 = vld [vmem:[%s5 + $0x18] sm:$0xf]
        %v6457 = vld [vmem:[%s5 + $0x1c] sm:$0xf]
        %v6458 = vld [vmem:[%s5 + $0x20] sm:$0xf]
        %v6459 = vld [vmem:[%s5 + $0x24] sm:$0xf]
        %v6460 = vld [vmem:[%s5 + $0x28] sm:$0xf]
        %v6461 = vld [vmem:[%s5 + $0x2c] sm:$0xf]
        %v6462 = vld [vmem:[%s5 + $0x30] sm:$0xf]
        %v6463 = vld [vmem:[%s5 + $0x34] sm:$0xf]
        %v6464 = vld [vmem:[%s5 + $0x38] sm:$0xf]
        %v6465 = vld [vmem:[%s5 + $0x3c] sm:$0xf]
        %v6466 = vld [vmem:[%s4 + $0x1] sm:$0x1]
        %v6468 = vlaneseq
        %v6469 = vshrl.u32 %v6468, 7
        %v6470 = vsub.s32 0, %v6469
        %v6471 = vrot.slane %v6466, %v6470
        %v6489 = vunpack.c.l.b16 %v6450
        %v6490 = vunpack.c.l.b16 %v6451
        %v6491 = vunpack.c.l.b16 %v6452
        %v6492 = vunpack.c.l.b16 %v6453
        %v6493 = vunpack.c.l.b16 %v6454
        %v6494 = vunpack.c.l.b16 %v6455
        %v6495 = vunpack.c.l.b16 %v6456
        %v6496 = vunpack.c.l.b16 %v6457
        %v6497 = vunpack.c.l.b16 %v6458
        %v6498 = vunpack.c.l.b16 %v6459
        %v6499 = vunpack.c.l.b16 %v6460
        %v6500 = vunpack.c.l.b16 %v6461
        %v6501 = vunpack.c.l.b16 %v6462
        %v6502 = vunpack.c.l.b16 %v6463
        %v6503 = vunpack.c.l.b16 %v6464
        %v6504 = vunpack.c.l.b16 %v6465
        %v6505 = vpack.c.b16 %v6490, %v6489
        %v6506 = vpack.c.b16 %v6492, %v6491
        %v6507 = vpack.c.b16 %v6494, %v6493
        %v6508 = vpack.c.b16 %v6496, %v6495
        %v6509 = vpack.c.b16 %v6498, %v6497
        %v6510 = vpack.c.b16 %v6500, %v6499
        %v6511 = vpack.c.b16 %v6502, %v6501
        %v6512 = vpack.c.b16 %v6504, %v6503
        %6521 = vmatprep.subr.bf16.mxu0 0
        %6522 = vmatpush1.bf16.msra.mxu0 %v6505
        %6523 = vmatprep.subr.bf16.mxu0 0
        %6524 = vmatpush1.bf16.msra.mxu0 %v6506
        %6525 = vmatprep.subr.bf16.mxu0 0
        %6526 = vmatpush1.bf16.msra.mxu0 %v6507
        %6527 = vmatprep.subr.bf16.mxu0 0
        %6528 = vmatpush1.bf16.msra.mxu0 %v6508
        %6529 = vmatprep.subr.bf16.mxu0 0
        %6530 = vmatpush1.bf16.msra.mxu0 %v6509
        %6531 = vmatprep.subr.bf16.mxu0 0
        %6532 = vmatpush1.bf16.msra.mxu0 %v6510
        %6533 = vmatprep.subr.bf16.mxu0 0
        %6534 = vmatpush1.bf16.msra.mxu0 %v6511
        %6535 = vmatprep.subr.bf16.mxu0 0
        %6536 = vmatpush1.bf16.msra.mxu0 %v6512
        %6537 = vmatprep.subr.bf16.mxu0 0
        %6538 = vmatpush1.bf16.msra.mxu0 0
        %6539 = vmatprep.subr.bf16.mxu0 0
        %6540 = vmatpush1.bf16.msra.mxu0 0
        %6541 = vmatprep.subr.bf16.mxu0 0
        %6542 = vmatpush1.bf16.msra.mxu0 0
        %6543 = vmatprep.subr.bf16.mxu0 0
        %6544 = vmatpush1.bf16.msra.mxu0 0
        %6545 = vmatprep.subr.bf16.mxu0 0
        %6546 = vmatpush1.bf16.msra.mxu0 0
        %6547 = vmatprep.subr.bf16.mxu0 0
        %6548 = vmatpush1.bf16.msra.mxu0 0
        %6549 = vmatprep.subr.bf16.mxu0 0
        %6550 = vmatpush1.bf16.msra.mxu0 0
        %6551 = vmatprep.subr.bf16.mxu0 0
        %6552 = vmatpush1.bf16.msra.mxu0 0
        %6553 = vmatprep.mubr.bf16.mxu0 0
        %6554 = vmatmul.mubr.bf16.gmra.mrb[0].mxu0 %v6386
        %v6555 = vpop.f32.mrb[0].mxu0
        %v6556 = vadd.f32 %v6471, %v6555
        %v6557 = vpop.f32.mrb[0].mxu0
        %v6558 = vpop.f32.mrb[0].mxu0
        %v6559 = vadd.f32 %v6471, %v6558
        %v6560 = vpop.f32.mrb[0].mxu0
        %6561 = vmatprep.mubr.bf16.mxu0 0
        %6562 = vmatmul.mubr.bf16.gmra.mrb[0].mxu0 %v6387
        %v6563 = vpop.f32.mrb[0].mxu0
        %v6564 = vadd.f32 %v6471, %v6563
        %v6565 = vpop.f32.mrb[0].mxu0
        %v6566 = vpop.f32.mrb[0].mxu0
        %v6567 = vadd.f32 %v6471, %v6566
        %v6568 = vpop.f32.mrb[0].mxu0
        %6569 = vmatprep.mubr.bf16.mxu0 0
        %6570 = vmatmul.mubr.bf16.gmra.mrb[0].mxu0 %v6388
        %v6571 = vpop.f32.mrb[0].mxu0
        %v6572 = vadd.f32 %v6471, %v6571
        %v6573 = vpop.f32.mrb[0].mxu0
        %v6574 = vpop.f32.mrb[0].mxu0
        %v6575 = vadd.f32 %v6471, %v6574
        %v6576 = vpop.f32.mrb[0].mxu0
        %6577 = vmatprep.mubr.bf16.mxu0 0
        %6578 = vmatmul.mubr.bf16.gmra.mrb[0].mxu0 %v6389
        %v6579 = vpop.f32.mrb[0].mxu0
        %v6580 = vadd.f32 %v6471, %v6579
        %v6581 = vpop.f32.mrb[0].mxu0
        %v6582 = vpop.f32.mrb[0].mxu0
        %v6583 = vadd.f32 %v6471, %v6582
        %v6584 = vpop.f32.mrb[0].mxu0
        %6585 = vmatprep.mubr.bf16.mxu0 0
        %6586 = vmatmul.mubr.bf16.gmra.mrb[0].mxu0 %v6390
        %v6587 = vpop.f32.mrb[0].mxu0
        %v6588 = vadd.f32 %v6471, %v6587
        %v6589 = vpop.f32.mrb[0].mxu0
        %v6590 = vpop.f32.mrb[0].mxu0
        %v6591 = vadd.f32 %v6471, %v6590
        %v6592 = vpop.f32.mrb[0].mxu0
        %6593 = vmatprep.mubr.bf16.mxu0 0
        %6594 = vmatmul.mubr.bf16.gmra.mrb[0].mxu0 %v6391
        %v6595 = vpop.f32.mrb[0].mxu0
        %v6596 = vadd.f32 %v6471, %v6595
        %v6597 = vpop.f32.mrb[0].mxu0
        %v6598 = vpop.f32.mrb[0].mxu0
        %v6599 = vadd.f32 %v6471, %v6598
        %v6600 = vpop.f32.mrb[0].mxu0
        %6601 = vmatprep.mubr.bf16.mxu0 0
        %6602 = vmatmul.mubr.bf16.gmra.mrb[0].mxu0 %v6392
        %v6603 = vpop.f32.mrb[0].mxu0
        %v6604 = vadd.f32 %v6471, %v6603
        %v6605 = vpop.f32.mrb[0].mxu0
        %v6606 = vpop.f32.mrb[0].mxu0
        %v6607 = vadd.f32 %v6471, %v6606
        %v6608 = vpop.f32.mrb[0].mxu0
        %6609 = vmatprep.mubr.bf16.mxu0 0
        %6610 = vmatmul.mubr.bf16.gmra.mrb[0].mxu0 %v6393
        %v6611 = vpop.f32.mrb[0].mxu0
        %v6612 = vadd.f32 %v6471, %v6611
        %v6613 = vpop.f32.mrb[0].mxu0
        %v6614 = vpop.f32.mrb[0].mxu0
        %v6615 = vadd.f32 %v6471, %v6614
        %v6616 = vpop.f32.mrb[0].mxu0
        %6617 = vmatprep.mubr.bf16.mxu0 0
        %6618 = vmatmul.mubr.bf16.gmra.mrb[0].mxu0 %v6394
        %v6619 = vpop.f32.mrb[0].mxu0
        %v6620 = vadd.f32 %v6471, %v6619
        %v6621 = vpop.f32.mrb[0].mxu0
        %v6622 = vpop.f32.mrb[0].mxu0
        %v6623 = vadd.f32 %v6471, %v6622
        %v6624 = vpop.f32.mrb[0].mxu0
        %6625 = vmatprep.mubr.bf16.mxu0 0
        %6626 = vmatmul.mubr.bf16.gmra.mrb[0].mxu0 %v6395
        %v6627 = vpop.f32.mrb[0].mxu0
        %v6628 = vadd.f32 %v6471, %v6627
        %v6629 = vpop.f32.mrb[0].mxu0
        %v6630 = vpop.f32.mrb[0].mxu0
        %v6631 = vadd.f32 %v6471, %v6630
        %v6632 = vpop.f32.mrb[0].mxu0
        %6633 = vmatprep.mubr.bf16.mxu0 0
        %6634 = vmatmul.mubr.bf16.gmra.mrb[0].mxu0 %v6396
        %v6635 = vpop.f32.mrb[0].mxu0
        %v6636 = vadd.f32 %v6471, %v6635
        %v6637 = vpop.f32.mrb[0].mxu0
        %v6638 = vpop.f32.mrb[0].mxu0
        %v6639 = vadd.f32 %v6471, %v6638
        %v6640 = vpop.f32.mrb[0].mxu0
        %6641 = vmatprep.mubr.bf16.mxu0 0
        %6642 = vmatmul.mubr.bf16.gmra.mrb[0].mxu0 %v6397
        %v6643 = vpop.f32.mrb[0].mxu0
        %v6644 = vadd.f32 %v6471, %v6643
        %v6645 = vpop.f32.mrb[0].mxu0
        %v6646 = vpop.f32.mrb[0].mxu0
        %v6647 = vadd.f32 %v6471, %v6646
        %v6648 = vpop.f32.mrb[0].mxu0
        %6649 = vmatprep.mubr.bf16.mxu0 0
        %6650 = vmatmul.mubr.bf16.gmra.mrb[0].mxu0 %v6398
        %v6651 = vpop.f32.mrb[0].mxu0
        %v6652 = vadd.f32 %v6471, %v6651
        %v6653 = vpop.f32.mrb[0].mxu0
        %v6654 = vpop.f32.mrb[0].mxu0
        %v6655 = vadd.f32 %v6471, %v6654
        %v6656 = vpop.f32.mrb[0].mxu0
        %6657 = vmatprep.mubr.bf16.mxu0 0
        %6658 = vmatmul.mubr.bf16.gmra.mrb[0].mxu0 %v6399
        %v6659 = vpop.f32.mrb[0].mxu0
        %v6660 = vadd.f32 %v6471, %v6659
        %v6661 = vpop.f32.mrb[0].mxu0
        %v6662 = vpop.f32.mrb[0].mxu0
        %v6663 = vadd.f32 %v6471, %v6662
        %v6664 = vpop.f32.mrb[0].mxu0
        %6665 = vmatprep.mubr.bf16.mxu0 0
        %6666 = vmatmul.mubr.bf16.gmra.mrb[0].mxu0 %v6400
        %v6667 = vpop.f32.mrb[0].mxu0
        %v6668 = vadd.f32 %v6471, %v6667
        %v6669 = vpop.f32.mrb[0].mxu0
        %v6670 = vpop.f32.mrb[0].mxu0
        %v6671 = vadd.f32 %v6471, %v6670
        %v6672 = vpop.f32.mrb[0].mxu0
        %6673 = vmatprep.mubr.bf16.mxu0 0
        %6674 = vmatmul.mubr.bf16.gmra.mrb[0].mxu0 %v6401
        %v6675 = vpop.f32.mrb[0].mxu0
        %v6676 = vadd.f32 %v6471, %v6675
        %v6677 = vpop.f32.mrb[0].mxu0
        %v6678 = vpop.f32.mrb[0].mxu0
        %v6679 = vadd.f32 %v6471, %v6678
        %v6680 = vpop.f32.mrb[0].mxu0
        %6681 = vmatprep.mubr.bf16.mxu0 0
        %6682 = vmatmul.mubr.bf16.gmra.mrb[0].mxu0 %v6402
        %v6683 = vpop.f32.mrb[0].mxu0
        %v6684 = vadd.f32 %v6471, %v6683
        %v6685 = vpop.f32.mrb[0].mxu0
        %v6686 = vpop.f32.mrb[0].mxu0
        %v6687 = vadd.f32 %v6471, %v6686
        %v6688 = vpop.f32.mrb[0].mxu0
        %6689 = vmatprep.mubr.bf16.mxu0 0
        %6690 = vmatmul.mubr.bf16.gmra.mrb[0].mxu0 %v6403
        %v6691 = vpop.f32.mrb[0].mxu0
        %v6692 = vadd.f32 %v6471, %v6691
        %v6693 = vpop.f32.mrb[0].mxu0
        %v6694 = vpop.f32.mrb[0].mxu0
        %v6695 = vadd.f32 %v6471, %v6694
        %v6696 = vpop.f32.mrb[0].mxu0
        %6697 = vmatprep.mubr.bf16.mxu0 0
        %6698 = vmatmul.mubr.bf16.gmra.mrb[0].mxu0 %v6404
        %v6699 = vpop.f32.mrb[0].mxu0
        %v6700 = vadd.f32 %v6471, %v6699
        %v6701 = vpop.f32.mrb[0].mxu0
        %v6702 = vpop.f32.mrb[0].mxu0
        %v6703 = vadd.f32 %v6471, %v6702
        %v6704 = vpop.f32.mrb[0].mxu0
        %6705 = vmatprep.mubr.bf16.mxu0 0
        %6706 = vmatmul.mubr.bf16.gmra.mrb[0].mxu0 %v6405
        %v6707 = vpop.f32.mrb[0].mxu0
        %v6708 = vadd.f32 %v6471, %v6707
        %v6709 = vpop.f32.mrb[0].mxu0
        %v6710 = vpop.f32.mrb[0].mxu0
        %v6711 = vadd.f32 %v6471, %v6710
        %v6712 = vpop.f32.mrb[0].mxu0
        %6713 = vmatprep.mubr.bf16.mxu0 0
        %6714 = vmatmul.mubr.bf16.gmra.mrb[0].mxu0 %v6406
        %v6715 = vpop.f32.mrb[0].mxu0
        %v6716 = vadd.f32 %v6471, %v6715
        %v6717 = vpop.f32.mrb[0].mxu0
        %v6718 = vpop.f32.mrb[0].mxu0
        %v6719 = vadd.f32 %v6471, %v6718
        %v6720 = vpop.f32.mrb[0].mxu0
        %6721 = vmatprep.mubr.bf16.mxu0 0
        %6722 = vmatmul.mubr.bf16.gmra.mrb[0].mxu0 %v6407
        %v6723 = vpop.f32.mrb[0].mxu0
        %v6724 = vadd.f32 %v6471, %v6723
        %v6725 = vpop.f32.mrb[0].mxu0
        %v6726 = vpop.f32.mrb[0].mxu0
        %v6727 = vadd.f32 %v6471, %v6726
        %v6728 = vpop.f32.mrb[0].mxu0
        %6729 = vmatprep.mubr.bf16.mxu0 0
        %6730 = vmatmul.mubr.bf16.gmra.mrb[0].mxu0 %v6408
        %v6731 = vpop.f32.mrb[0].mxu0
        %v6732 = vadd.f32 %v6471, %v6731
        %v6733 = vpop.f32.mrb[0].mxu0
        %v6734 = vpop.f32.mrb[0].mxu0
        %v6735 = vadd.f32 %v6471, %v6734
        %v6736 = vpop.f32.mrb[0].mxu0
        %6737 = vmatprep.mubr.bf16.mxu0 0
        %6738 = vmatmul.mubr.bf16.gmra.mrb[0].mxu0 %v6409
        %v6739 = vpop.f32.mrb[0].mxu0
        %v6740 = vadd.f32 %v6471, %v6739
        %v6741 = vpop.f32.mrb[0].mxu0
        %v6742 = vpop.f32.mrb[0].mxu0
        %v6743 = vadd.f32 %v6471, %v6742
        %v6744 = vpop.f32.mrb[0].mxu0
        %6745 = vmatprep.mubr.bf16.mxu0 0
        %6746 = vmatmul.mubr.bf16.gmra.mrb[0].mxu0 %v6410
        %v6747 = vpop.f32.mrb[0].mxu0
        %v6748 = vadd.f32 %v6471, %v6747
        %v6749 = vpop.f32.mrb[0].mxu0
        %v6750 = vpop.f32.mrb[0].mxu0
        %v6751 = vadd.f32 %v6471, %v6750
        %v6752 = vpop.f32.mrb[0].mxu0
        %6753 = vmatprep.mubr.bf16.mxu0 0
        %6754 = vmatmul.mubr.bf16.gmra.mrb[0].mxu0 %v6411
        %v6755 = vpop.f32.mrb[0].mxu0
        %v6756 = vadd.f32 %v6471, %v6755
        %v6757 = vpop.f32.mrb[0].mxu0
        %v6758 = vpop.f32.mrb[0].mxu0
        %v6759 = vadd.f32 %v6471, %v6758
        %v6760 = vpop.f32.mrb[0].mxu0
        %6761 = vmatprep.mubr.bf16.mxu0 0
        %6762 = vmatmul.mubr.bf16.gmra.mrb[0].mxu0 %v6412
        %v6763 = vpop.f32.mrb[0].mxu0
        %v6764 = vadd.f32 %v6471, %v6763
        %v6765 = vpop.f32.mrb[0].mxu0
        %v6766 = vpop.f32.mrb[0].mxu0
        %v6767 = vadd.f32 %v6471, %v6766
        %v6768 = vpop.f32.mrb[0].mxu0
        %6769 = vmatprep.mubr.bf16.mxu0 0
        %6770 = vmatmul.mubr.bf16.gmra.mrb[0].mxu0 %v6413
        %v6771 = vpop.f32.mrb[0].mxu0
        %v6772 = vadd.f32 %v6471, %v6771
        %v6773 = vpop.f32.mrb[0].mxu0
        %v6774 = vpop.f32.mrb[0].mxu0
        %v6775 = vadd.f32 %v6471, %v6774
        %v6776 = vpop.f32.mrb[0].mxu0
        %6777 = vmatprep.mubr.bf16.mxu0 0
        %6778 = vmatmul.mubr.bf16.gmra.mrb[0].mxu0 %v6414
        %v6779 = vpop.f32.mrb[0].mxu0
        %v6780 = vadd.f32 %v6471, %v6779
        %v6781 = vpop.f32.mrb[0].mxu0
        %v6782 = vpop.f32.mrb[0].mxu0
        %v6783 = vadd.f32 %v6471, %v6782
        %v6784 = vpop.f32.mrb[0].mxu0
        %6785 = vmatprep.mubr.bf16.mxu0 0
        %6786 = vmatmul.mubr.bf16.gmra.mrb[0].mxu0 %v6415
        %v6787 = vpop.f32.mrb[0].mxu0
        %v6788 = vadd.f32 %v6471, %v6787
        %v6789 = vpop.f32.mrb[0].mxu0
        %v6790 = vpop.f32.mrb[0].mxu0
        %v6791 = vadd.f32 %v6471, %v6790
        %v6792 = vpop.f32.mrb[0].mxu0
        %6793 = vmatprep.mubr.bf16.mxu0 0
        %6794 = vmatmul.mubr.bf16.gmra.mrb[0].mxu0 %v6416
        %v6795 = vpop.f32.mrb[0].mxu0
        %v6796 = vadd.f32 %v6471, %v6795
        %v6797 = vpop.f32.mrb[0].mxu0
        %v6798 = vpop.f32.mrb[0].mxu0
        %v6799 = vadd.f32 %v6471, %v6798
        %v6800 = vpop.f32.mrb[0].mxu0
        %6801 = vmatprep.mubr.bf16.mxu0 0
        %6802 = vmatmul.mubr.bf16.gmra.mrb[0].mxu0 %v6417
        %v6803 = vpop.f32.mrb[0].mxu0
        %v6804 = vadd.f32 %v6471, %v6803
        %v6805 = vpop.f32.mrb[0].mxu0
        %v6806 = vpop.f32.mrb[0].mxu0
        %v6807 = vadd.f32 %v6471, %v6806
        %v6808 = vpop.f32.mrb[0].mxu0
        %6809 = vmatprep.mubr.bf16.mxu0 0
        %6810 = vmatmul.mubr.bf16.gmra.mrb[0].mxu0 %v6418
        %v6811 = vpop.f32.mrb[0].mxu0
        %v6812 = vadd.f32 %v6471, %v6811
        %v6813 = vpop.f32.mrb[0].mxu0
        %v6814 = vpop.f32.mrb[0].mxu0
        %v6815 = vadd.f32 %v6471, %v6814
        %v6816 = vpop.f32.mrb[0].mxu0
        %6817 = vmatprep.mubr.bf16.mxu0 0
        %6818 = vmatmul.mubr.bf16.gmra.mrb[0].mxu0 %v6419
        %v6819 = vpop.f32.mrb[0].mxu0
        %v6820 = vadd.f32 %v6471, %v6819
        %v6821 = vpop.f32.mrb[0].mxu0
        %v6822 = vpop.f32.mrb[0].mxu0
        %v6823 = vadd.f32 %v6471, %v6822
        %v6824 = vpop.f32.mrb[0].mxu0
        %6825 = vmatprep.mubr.bf16.mxu0 0
        %6826 = vmatmul.mubr.bf16.gmra.mrb[0].mxu0 %v6420
        %v6827 = vpop.f32.mrb[0].mxu0
        %v6828 = vadd.f32 %v6471, %v6827
        %v6829 = vpop.f32.mrb[0].mxu0
        %v6830 = vpop.f32.mrb[0].mxu0
        %v6831 = vadd.f32 %v6471, %v6830
        %v6832 = vpop.f32.mrb[0].mxu0
        %6833 = vmatprep.mubr.bf16.mxu0 0
        %6834 = vmatmul.mubr.bf16.gmra.mrb[0].mxu0 %v6421
        %v6835 = vpop.f32.mrb[0].mxu0
        %v6836 = vadd.f32 %v6471, %v6835
        %v6837 = vpop.f32.mrb[0].mxu0
        %v6838 = vpop.f32.mrb[0].mxu0
        %v6839 = vadd.f32 %v6471, %v6838
        %v6840 = vpop.f32.mrb[0].mxu0
        %6841 = vmatprep.mubr.bf16.mxu0 0
        %6842 = vmatmul.mubr.bf16.gmra.mrb[0].mxu0 %v6422
        %v6843 = vpop.f32.mrb[0].mxu0
        %v6844 = vadd.f32 %v6471, %v6843
        %v6845 = vpop.f32.mrb[0].mxu0
        %v6846 = vpop.f32.mrb[0].mxu0
        %v6847 = vadd.f32 %v6471, %v6846
        %v6848 = vpop.f32.mrb[0].mxu0
        %6849 = vmatprep.mubr.bf16.mxu0 0
        %6850 = vmatmul.mubr.bf16.gmra.mrb[0].mxu0 %v6423
        %v6851 = vpop.f32.mrb[0].mxu0
        %v6852 = vadd.f32 %v6471, %v6851
        %v6853 = vpop.f32.mrb[0].mxu0
        %v6854 = vpop.f32.mrb[0].mxu0
        %v6855 = vadd.f32 %v6471, %v6854
        %v6856 = vpop.f32.mrb[0].mxu0
        %6857 = vmatprep.mubr.bf16.mxu0 0
        %6858 = vmatmul.mubr.bf16.gmra.mrb[0].mxu0 %v6424
        %v6859 = vpop.f32.mrb[0].mxu0
        %v6860 = vadd.f32 %v6471, %v6859
        %v6861 = vpop.f32.mrb[0].mxu0
        %v6862 = vpop.f32.mrb[0].mxu0
        %v6863 = vadd.f32 %v6471, %v6862
        %v6864 = vpop.f32.mrb[0].mxu0
        %6865 = vmatprep.mubr.bf16.mxu0 0
        %6866 = vmatmul.mubr.bf16.gmra.mrb[0].mxu0 %v6425
        %v6867 = vpop.f32.mrb[0].mxu0
        %v6868 = vadd.f32 %v6471, %v6867
        %v6869 = vpop.f32.mrb[0].mxu0
        %v6870 = vpop.f32.mrb[0].mxu0
        %v6871 = vadd.f32 %v6471, %v6870
        %v6872 = vpop.f32.mrb[0].mxu0
        %6873 = vmatprep.mubr.bf16.mxu0 0
        %6874 = vmatmul.mubr.bf16.gmra.mrb[0].mxu0 %v6426
        %v6875 = vpop.f32.mrb[0].mxu0
        %v6876 = vadd.f32 %v6471, %v6875
        %v6877 = vpop.f32.mrb[0].mxu0
        %v6878 = vpop.f32.mrb[0].mxu0
        %v6879 = vadd.f32 %v6471, %v6878
        %v6880 = vpop.f32.mrb[0].mxu0
        %6881 = vmatprep.mubr.bf16.mxu0 0
        %6882 = vmatmul.mubr.bf16.gmra.mrb[0].mxu0 %v6427
        %v6883 = vpop.f32.mrb[0].mxu0
        %v6884 = vadd.f32 %v6471, %v6883
        %v6885 = vpop.f32.mrb[0].mxu0
        %v6886 = vpop.f32.mrb[0].mxu0
        %v6887 = vadd.f32 %v6471, %v6886
        %v6888 = vpop.f32.mrb[0].mxu0
        %6889 = vmatprep.mubr.bf16.mxu0 0
        %6890 = vmatmul.mubr.bf16.gmra.mrb[0].mxu0 %v6428
        %v6891 = vpop.f32.mrb[0].mxu0
        %v6892 = vadd.f32 %v6471, %v6891
        %v6893 = vpop.f32.mrb[0].mxu0
        %v6894 = vpop.f32.mrb[0].mxu0
        %v6895 = vadd.f32 %v6471, %v6894
        %v6896 = vpop.f32.mrb[0].mxu0
        %6897 = vmatprep.mubr.bf16.mxu0 0
        %6898 = vmatmul.mubr.bf16.gmra.mrb[0].mxu0 %v6429
        %v6899 = vpop.f32.mrb[0].mxu0
        %v6900 = vadd.f32 %v6471, %v6899
        %v6901 = vpop.f32.mrb[0].mxu0
        %v6902 = vpop.f32.mrb[0].mxu0
        %v6903 = vadd.f32 %v6471, %v6902
        %v6904 = vpop.f32.mrb[0].mxu0
        %6905 = vmatprep.mubr.bf16.mxu0 0
        %6906 = vmatmul.mubr.bf16.gmra.mrb[0].mxu0 %v6430
        %v6907 = vpop.f32.mrb[0].mxu0
        %v6908 = vadd.f32 %v6471, %v6907
        %v6909 = vpop.f32.mrb[0].mxu0
        %v6910 = vpop.f32.mrb[0].mxu0
        %v6911 = vadd.f32 %v6471, %v6910
        %v6912 = vpop.f32.mrb[0].mxu0
        %6913 = vmatprep.mubr.bf16.mxu0 0
        %6914 = vmatmul.mubr.bf16.gmra.mrb[0].mxu0 %v6431
        %v6915 = vpop.f32.mrb[0].mxu0
        %v6916 = vadd.f32 %v6471, %v6915
        %v6917 = vpop.f32.mrb[0].mxu0
        %v6918 = vpop.f32.mrb[0].mxu0
        %v6919 = vadd.f32 %v6471, %v6918
        %v6920 = vpop.f32.mrb[0].mxu0
        %6921 = vmatprep.mubr.bf16.mxu0 0
        %6922 = vmatmul.mubr.bf16.gmra.mrb[0].mxu0 %v6432
        %v6923 = vpop.f32.mrb[0].mxu0
        %v6924 = vadd.f32 %v6471, %v6923
        %v6925 = vpop.f32.mrb[0].mxu0
        %v6926 = vpop.f32.mrb[0].mxu0
        %v6927 = vadd.f32 %v6471, %v6926
        %v6928 = vpop.f32.mrb[0].mxu0
        %6929 = vmatprep.mubr.bf16.mxu0 0
        %6930 = vmatmul.mubr.bf16.gmra.mrb[0].mxu0 %v6433
        %v6931 = vpop.f32.mrb[0].mxu0
        %v6932 = vadd.f32 %v6471, %v6931
        %v6933 = vpop.f32.mrb[0].mxu0
        %v6934 = vpop.f32.mrb[0].mxu0
        %v6935 = vadd.f32 %v6471, %v6934
        %v6936 = vpop.f32.mrb[0].mxu0
        %6937 = vmatprep.mubr.bf16.mxu0 0
        %6938 = vmatmul.mubr.bf16.gmra.mrb[0].mxu0 %v6434
        %v6939 = vpop.f32.mrb[0].mxu0
        %v6940 = vadd.f32 %v6471, %v6939
        %v6941 = vpop.f32.mrb[0].mxu0
        %v6942 = vpop.f32.mrb[0].mxu0
        %v6943 = vadd.f32 %v6471, %v6942
        %v6944 = vpop.f32.mrb[0].mxu0
        %6945 = vmatprep.mubr.bf16.mxu0 0
        %6946 = vmatmul.mubr.bf16.gmra.mrb[0].mxu0 %v6435
        %v6947 = vpop.f32.mrb[0].mxu0
        %v6948 = vadd.f32 %v6471, %v6947
        %v6949 = vpop.f32.mrb[0].mxu0
        %v6950 = vpop.f32.mrb[0].mxu0
        %v6951 = vadd.f32 %v6471, %v6950
        %v6952 = vpop.f32.mrb[0].mxu0
        %6953 = vmatprep.mubr.bf16.mxu0 0
        %6954 = vmatmul.mubr.bf16.gmra.mrb[0].mxu0 %v6436
        %v6955 = vpop.f32.mrb[0].mxu0
        %v6956 = vadd.f32 %v6471, %v6955
        %v6957 = vpop.f32.mrb[0].mxu0
        %v6958 = vpop.f32.mrb[0].mxu0
        %v6959 = vadd.f32 %v6471, %v6958
        %v6960 = vpop.f32.mrb[0].mxu0
        %6961 = vmatprep.mubr.bf16.mxu0 0
        %6962 = vmatmul.mubr.bf16.gmra.mrb[0].mxu0 %v6437
        %v6963 = vpop.f32.mrb[0].mxu0
        %v6964 = vadd.f32 %v6471, %v6963
        %v6965 = vpop.f32.mrb[0].mxu0
        %v6966 = vpop.f32.mrb[0].mxu0
        %v6967 = vadd.f32 %v6471, %v6966
        %v6968 = vpop.f32.mrb[0].mxu0
        %6969 = vmatprep.mubr.bf16.mxu0 0
        %6970 = vmatmul.mubr.bf16.gmra.mrb[0].mxu0 %v6438
        %v6971 = vpop.f32.mrb[0].mxu0
        %v6972 = vadd.f32 %v6471, %v6971
        %v6973 = vpop.f32.mrb[0].mxu0
        %v6974 = vpop.f32.mrb[0].mxu0
        %v6975 = vadd.f32 %v6471, %v6974
        %v6976 = vpop.f32.mrb[0].mxu0
        %6977 = vmatprep.mubr.bf16.mxu0 0
        %6978 = vmatmul.mubr.bf16.gmra.mrb[0].mxu0 %v6439
        %v6979 = vpop.f32.mrb[0].mxu0
        %v6980 = vadd.f32 %v6471, %v6979
        %v6981 = vpop.f32.mrb[0].mxu0
        %v6982 = vpop.f32.mrb[0].mxu0
        %v6983 = vadd.f32 %v6471, %v6982
        %v6984 = vpop.f32.mrb[0].mxu0
        %6985 = vmatprep.mubr.bf16.mxu0 0
        %6986 = vmatmul.mubr.bf16.gmra.mrb[0].mxu0 %v6440
        %v6987 = vpop.f32.mrb[0].mxu0
        %v6988 = vadd.f32 %v6471, %v6987
        %v6989 = vpop.f32.mrb[0].mxu0
        %v6990 = vpop.f32.mrb[0].mxu0
        %v6991 = vadd.f32 %v6471, %v6990
        %v6992 = vpop.f32.mrb[0].mxu0
        %6993 = vmatprep.mubr.bf16.mxu0 0
        %6994 = vmatmul.mubr.bf16.gmra.mrb[0].mxu0 %v6441
        %v6995 = vpop.f32.mrb[0].mxu0
        %v6996 = vadd.f32 %v6471, %v6995
        %v6997 = vpop.f32.mrb[0].mxu0
        %v6998 = vpop.f32.mrb[0].mxu0
        %v6999 = vadd.f32 %v6471, %v6998
        %v7000 = vpop.f32.mrb[0].mxu0
        %7001 = vmatprep.mubr.bf16.mxu0 0
        %7002 = vmatmul.mubr.bf16.gmra.mrb[0].mxu0 %v6442
        %v7003 = vpop.f32.mrb[0].mxu0
        %v7004 = vadd.f32 %v6471, %v7003
        %v7005 = vpop.f32.mrb[0].mxu0
        %v7006 = vpop.f32.mrb[0].mxu0
        %v7007 = vadd.f32 %v6471, %v7006
        %v7008 = vpop.f32.mrb[0].mxu0
        %7009 = vmatprep.mubr.bf16.mxu0 0
        %7010 = vmatmul.mubr.bf16.gmra.mrb[0].mxu0 %v6443
        %v7011 = vpop.f32.mrb[0].mxu0
        %v7012 = vadd.f32 %v6471, %v7011
        %v7013 = vpop.f32.mrb[0].mxu0
        %v7014 = vpop.f32.mrb[0].mxu0
        %v7015 = vadd.f32 %v6471, %v7014
        %v7016 = vpop.f32.mrb[0].mxu0
        %7017 = vmatprep.mubr.bf16.mxu0 0
        %7018 = vmatmul.mubr.bf16.gmra.mrb[0].mxu0 %v6444
        %v7019 = vpop.f32.mrb[0].mxu0
        %v7020 = vadd.f32 %v6471, %v7019
        %v7021 = vpop.f32.mrb[0].mxu0
        %v7022 = vpop.f32.mrb[0].mxu0
        %v7023 = vadd.f32 %v6471, %v7022
        %v7024 = vpop.f32.mrb[0].mxu0
        %7025 = vmatprep.mubr.bf16.mxu0 0
        %7026 = vmatmul.mubr.bf16.gmra.mrb[0].mxu0 %v6445
        %v7027 = vpop.f32.mrb[0].mxu0
        %v7028 = vadd.f32 %v6471, %v7027
        %v7029 = vpop.f32.mrb[0].mxu0
        %v7030 = vpop.f32.mrb[0].mxu0
        %v7031 = vadd.f32 %v6471, %v7030
        %v7032 = vpop.f32.mrb[0].mxu0
        %7033 = vmatprep.mubr.bf16.mxu0 0
        %7034 = vmatmul.mubr.bf16.gmra.mrb[0].mxu0 %v6446
        %v7035 = vpop.f32.mrb[0].mxu0
        %v7036 = vadd.f32 %v6471, %v7035
        %v7037 = vpop.f32.mrb[0].mxu0
        %v7038 = vpop.f32.mrb[0].mxu0
        %v7039 = vadd.f32 %v6471, %v7038
        %v7040 = vpop.f32.mrb[0].mxu0
        %7041 = vmatprep.mubr.bf16.mxu0 0
        %7042 = vmatmul.mubr.bf16.gmra.mrb[0].mxu0 %v6447
        %v7043 = vpop.f32.mrb[0].mxu0
        %v7044 = vadd.f32 %v6471, %v7043
        %v7045 = vpop.f32.mrb[0].mxu0
        %v7046 = vpop.f32.mrb[0].mxu0
        %v7047 = vadd.f32 %v6471, %v7046
        %v7048 = vpop.f32.mrb[0].mxu0
        %7049 = vmatprep.mubr.bf16.mxu0 0
        %7050 = vmatmul.mubr.bf16.gmra.mrb[0].mxu0 %v6448
        %v7051 = vpop.f32.mrb[0].mxu0
        %v7052 = vadd.f32 %v6471, %v7051
        %v7053 = vpop.f32.mrb[0].mxu0
        %v7054 = vpop.f32.mrb[0].mxu0
        %v7055 = vadd.f32 %v6471, %v7054
        %v7056 = vpop.f32.mrb[0].mxu0
        %7057 = vmatprep.mubr.bf16.mxu0 0
        %7058 = vmatmul.mubr.bf16.gmra.mrb[0].mxu0 %v6449
        %v7059 = vpop.f32.mrb[0].mxu0
        %v7060 = vadd.f32 %v6471, %v7059
        %v7061 = vpop.f32.mrb[0].mxu0
        %v7062 = vpop.f32.mrb[0].mxu0
        %v7063 = vadd.f32 %v6471, %v7062
        %v7064 = vpop.f32.mrb[0].mxu0
        %7065 = vdwg.mxu0
        %v7066 = vadd.f32 %v6556, %v2304
        %v7067 = vadd.f32 %v6559, %v2307
        %v7068 = vadd.f32 %v6564, %v2312
        %v7069 = vadd.f32 %v6567, %v2315
        %v7070 = vadd.f32 %v6572, %v2320
        %v7071 = vadd.f32 %v6575, %v2323
        %v7072 = vadd.f32 %v6580, %v2328
        %v7073 = vadd.f32 %v6583, %v2331
        %v7074 = vadd.f32 %v6588, %v2336
        %v7075 = vadd.f32 %v6591, %v2339
        %v7076 = vadd.f32 %v6596, %v2344
        %v7077 = vadd.f32 %v6599, %v2347
        %v7078 = vadd.f32 %v6604, %v2352
        %v7079 = vadd.f32 %v6607, %v2355
        %v7080 = vadd.f32 %v6612, %v2360
        %v7081 = vadd.f32 %v6615, %v2363
        %v7082 = vadd.f32 %v6620, %v2368
        %v7083 = vadd.f32 %v6623, %v2371
        %v7084 = vadd.f32 %v6628, %v2376
        %v7085 = vadd.f32 %v6631, %v2379
        %v7086 = vadd.f32 %v6636, %v2384
        %v7087 = vadd.f32 %v6639, %v2387
        %v7088 = vadd.f32 %v6644, %v2392
        %v7089 = vadd.f32 %v6647, %v2395
        %v7090 = vadd.f32 %v6652, %v2400
        %v7091 = vadd.f32 %v6655, %v2403
        %v7092 = vadd.f32 %v6660, %v2408
        %v7093 = vadd.f32 %v6663, %v2411
        %v7094 = vadd.f32 %v6668, %v2416
        %v7095 = vadd.f32 %v6671, %v2419
        %v7096 = vadd.f32 %v6676, %v2424
        %v7097 = vadd.f32 %v6679, %v2427
        %v7098 = vadd.f32 %v6684, %v2609
        %v7099 = vadd.f32 %v6687, %v2612
        %v7100 = vadd.f32 %v6692, %v2617
        %v7101 = vadd.f32 %v6695, %v2620
        %v7102 = vadd.f32 %v6700, %v2625
        %v7103 = vadd.f32 %v6703, %v2628
        %v7104 = vadd.f32 %v6708, %v2633
        %v7105 = vadd.f32 %v6711, %v2636
        %v7106 = vadd.f32 %v6716, %v2641
        %v7107 = vadd.f32 %v6719, %v2644
        %v7108 = vadd.f32 %v6724, %v2649
        %v7109 = vadd.f32 %v6727, %v2652
        %v7110 = vadd.f32 %v6732, %v2657
        %v7111 = vadd.f32 %v6735, %v2660
        %v7112 = vadd.f32 %v6740, %v2665
        %v7113 = vadd.f32 %v6743, %v2668
        %v7114 = vadd.f32 %v6748, %v2673
        %v7115 = vadd.f32 %v6751, %v2676
        %v7116 = vadd.f32 %v6756, %v2681
        %v7117 = vadd.f32 %v6759, %v2684
        %v7118 = vadd.f32 %v6764, %v2689
        %v7119 = vadd.f32 %v6767, %v2692
        %v7120 = vadd.f32 %v6772, %v2697
        %v7121 = vadd.f32 %v6775, %v2700
        %v7122 = vadd.f32 %v6780, %v2705
        %v7123 = vadd.f32 %v6783, %v2708
        %v7124 = vadd.f32 %v6788, %v2713
        %v7125 = vadd.f32 %v6791, %v2716
        %v7126 = vadd.f32 %v6796, %v2721
        %v7127 = vadd.f32 %v6799, %v2724
        %v7128 = vadd.f32 %v6804, %v2729
        %v7129 = vadd.f32 %v6807, %v2732
        %v7130 = vadd.f32 %v6812, %v2842
        %v7131 = vadd.f32 %v6815, %v2845
        %v7132 = vadd.f32 %v6820, %v2850
        %v7133 = vadd.f32 %v6823, %v2853
        %v7134 = vadd.f32 %v6828, %v2858
        %v7135 = vadd.f32 %v6831, %v2861
        %v7136 = vadd.f32 %v6836, %v2866
        %v7137 = vadd.f32 %v6839, %v2869
        %v7138 = vadd.f32 %v6844, %v2874
        %v7139 = vadd.f32 %v6847, %v2877
        %v7140 = vadd.f32 %v6852, %v2882
        %v7141 = vadd.f32 %v6855, %v2885
        %v7142 = vadd.f32 %v6860, %v2890
        %v7143 = vadd.f32 %v6863, %v2893
        %v7144 = vadd.f32 %v6868, %v2898
        %v7145 = vadd.f32 %v6871, %v2901
        %v7146 = vadd.f32 %v6876, %v2906
        %v7147 = vadd.f32 %v6879, %v2909
        %v7148 = vadd.f32 %v6884, %v2914
        %v7149 = vadd.f32 %v6887, %v2917
        %v7150 = vadd.f32 %v6892, %v2922
        %v7151 = vadd.f32 %v6895, %v2925
        %v7152 = vadd.f32 %v6900, %v2930
        %v7153 = vadd.f32 %v6903, %v2933
        %v7154 = vadd.f32 %v6908, %v2938
        %v7155 = vadd.f32 %v6911, %v2941
        %v7156 = vadd.f32 %v6916, %v2946
        %v7157 = vadd.f32 %v6919, %v2949
        %v7158 = vadd.f32 %v6924, %v2954
        %v7159 = vadd.f32 %v6927, %v2957
        %v7160 = vadd.f32 %v6932, %v2962
        %v7161 = vadd.f32 %v6935, %v2965
        %v7162 = vadd.f32 %v6940, %v3147
        %v7163 = vadd.f32 %v6943, %v3150
        %v7164 = vadd.f32 %v6948, %v3155
        %v7165 = vadd.f32 %v6951, %v3158
        %v7166 = vadd.f32 %v6956, %v3163
        %v7167 = vadd.f32 %v6959, %v3166
        %v7168 = vadd.f32 %v6964, %v3171
        %v7169 = vadd.f32 %v6967, %v3174
        %v7170 = vadd.f32 %v6972, %v3179
        %v7171 = vadd.f32 %v6975, %v3182
        %v7172 = vadd.f32 %v6980, %v3187
        %v7173 = vadd.f32 %v6983, %v3190
        %v7174 = vadd.f32 %v6988, %v3195
        %v7175 = vadd.f32 %v6991, %v3198
        %v7176 = vadd.f32 %v6996, %v3203
        %v7177 = vadd.f32 %v6999, %v3206
        %v7178 = vadd.f32 %v7004, %v3211
        %v7179 = vadd.f32 %v7007, %v3214
        %v7180 = vadd.f32 %v7012, %v3219
        %v7181 = vadd.f32 %v7015, %v3222
        %v7182 = vadd.f32 %v7020, %v3227
        %v7183 = vadd.f32 %v7023, %v3230
        %v7184 = vadd.f32 %v7028, %v3235
        %v7185 = vadd.f32 %v7031, %v3238
        %v7186 = vadd.f32 %v7036, %v3243
        %v7187 = vadd.f32 %v7039, %v3246
        %v7188 = vadd.f32 %v7044, %v3251
        %v7189 = vadd.f32 %v7047, %v3254
        %v7190 = vadd.f32 %v7052, %v3259
        %v7191 = vadd.f32 %v7055, %v3262
        %v7192 = vadd.f32 %v7060, %v3267
        %v7193 = vadd.f32 %v7063, %v3270
        %v7194 = vmax.f32 %v7066, 0.0
        %v7195 = vmax.f32 %v7067, 0.0
        %v7196 = vmax.f32 %v7068, 0.0
        %v7197 = vmax.f32 %v7069, 0.0
        %v7198 = vmax.f32 %v7070, 0.0
        %v7199 = vmax.f32 %v7071, 0.0
        %v7200 = vmax.f32 %v7072, 0.0
        %v7201 = vmax.f32 %v7073, 0.0
        %v7202 = vmax.f32 %v7074, 0.0
        %v7203 = vmax.f32 %v7075, 0.0
        %v7204 = vmax.f32 %v7076, 0.0
        %v7205 = vmax.f32 %v7077, 0.0
        %v7206 = vmax.f32 %v7078, 0.0
        %v7207 = vmax.f32 %v7079, 0.0
        %v7208 = vmax.f32 %v7080, 0.0
        %v7209 = vmax.f32 %v7081, 0.0
        %v7210 = vmax.f32 %v7082, 0.0
        %v7211 = vmax.f32 %v7083, 0.0
        %v7212 = vmax.f32 %v7084, 0.0
        %v7213 = vmax.f32 %v7085, 0.0
        %v7214 = vmax.f32 %v7086, 0.0
        %v7215 = vmax.f32 %v7087, 0.0
        %v7216 = vmax.f32 %v7088, 0.0
        %v7217 = vmax.f32 %v7089, 0.0
        %v7218 = vmax.f32 %v7090, 0.0
        %v7219 = vmax.f32 %v7091, 0.0
        %v7220 = vmax.f32 %v7092, 0.0
        %v7221 = vmax.f32 %v7093, 0.0
        %v7222 = vmax.f32 %v7094, 0.0
        %v7223 = vmax.f32 %v7095, 0.0
        %v7224 = vmax.f32 %v7096, 0.0
        %v7225 = vmax.f32 %v7097, 0.0
        %v7226 = vmax.f32 %v7098, 0.0
        %v7227 = vmax.f32 %v7099, 0.0
        %v7228 = vmax.f32 %v7100, 0.0
        %v7229 = vmax.f32 %v7101, 0.0
        %v7230 = vmax.f32 %v7102, 0.0
        %v7231 = vmax.f32 %v7103, 0.0
        %v7232 = vmax.f32 %v7104, 0.0
        %v7233 = vmax.f32 %v7105, 0.0
        %v7234 = vmax.f32 %v7106, 0.0
        %v7235 = vmax.f32 %v7107, 0.0
        %v7236 = vmax.f32 %v7108, 0.0
        %v7237 = vmax.f32 %v7109, 0.0
        %v7238 = vmax.f32 %v7110, 0.0
        %v7239 = vmax.f32 %v7111, 0.0
        %v7240 = vmax.f32 %v7112, 0.0
        %v7241 = vmax.f32 %v7113, 0.0
        %v7242 = vmax.f32 %v7114, 0.0
        %v7243 = vmax.f32 %v7115, 0.0
        %v7244 = vmax.f32 %v7116, 0.0
        %v7245 = vmax.f32 %v7117, 0.0
        %v7246 = vmax.f32 %v7118, 0.0
        %v7247 = vmax.f32 %v7119, 0.0
        %v7248 = vmax.f32 %v7120, 0.0
        %v7249 = vmax.f32 %v7121, 0.0
        %v7250 = vmax.f32 %v7122, 0.0
        %v7251 = vmax.f32 %v7123, 0.0
        %v7252 = vmax.f32 %v7124, 0.0
        %v7253 = vmax.f32 %v7125, 0.0
        %v7254 = vmax.f32 %v7126, 0.0
        %v7255 = vmax.f32 %v7127, 0.0
        %v7256 = vmax.f32 %v7128, 0.0
        %v7257 = vmax.f32 %v7129, 0.0
        %v7258 = vmax.f32 %v7130, 0.0
        %v7259 = vmax.f32 %v7131, 0.0
        %v7260 = vmax.f32 %v7132, 0.0
        %v7261 = vmax.f32 %v7133, 0.0
        %v7262 = vmax.f32 %v7134, 0.0
        %v7263 = vmax.f32 %v7135, 0.0
        %v7264 = vmax.f32 %v7136, 0.0
        %v7265 = vmax.f32 %v7137, 0.0
        %v7266 = vmax.f32 %v7138, 0.0
        %v7267 = vmax.f32 %v7139, 0.0
        %v7268 = vmax.f32 %v7140, 0.0
        %v7269 = vmax.f32 %v7141, 0.0
        %v7270 = vmax.f32 %v7142, 0.0
        %v7271 = vmax.f32 %v7143, 0.0
        %v7272 = vmax.f32 %v7144, 0.0
        %v7273 = vmax.f32 %v7145, 0.0
        %v7274 = vmax.f32 %v7146, 0.0
        %v7275 = vmax.f32 %v7147, 0.0
        %v7276 = vmax.f32 %v7148, 0.0
        %v7277 = vmax.f32 %v7149, 0.0
        %v7278 = vmax.f32 %v7150, 0.0
        %v7279 = vmax.f32 %v7151, 0.0
        %v7280 = vmax.f32 %v7152, 0.0
        %v7281 = vmax.f32 %v7153, 0.0
        %v7282 = vmax.f32 %v7154, 0.0
        %v7283 = vmax.f32 %v7155, 0.0
        %v7284 = vmax.f32 %v7156, 0.0
        %v7285 = vmax.f32 %v7157, 0.0
        %v7286 = vmax.f32 %v7158, 0.0
        %v7287 = vmax.f32 %v7159, 0.0
        %v7288 = vmax.f32 %v7160, 0.0
        %v7289 = vmax.f32 %v7161, 0.0
        %v7290 = vmax.f32 %v7162, 0.0
        %v7291 = vmax.f32 %v7163, 0.0
        %v7292 = vmax.f32 %v7164, 0.0
        %v7293 = vmax.f32 %v7165, 0.0
        %v7294 = vmax.f32 %v7166, 0.0
        %v7295 = vmax.f32 %v7167, 0.0
        %v7296 = vmax.f32 %v7168, 0.0
        %v7297 = vmax.f32 %v7169, 0.0
        %v7298 = vmax.f32 %v7170, 0.0
        %v7299 = vmax.f32 %v7171, 0.0
        %v7300 = vmax.f32 %v7172, 0.0
        %v7301 = vmax.f32 %v7173, 0.0
        %v7302 = vmax.f32 %v7174, 0.0
        %v7303 = vmax.f32 %v7175, 0.0
        %v7304 = vmax.f32 %v7176, 0.0
        %v7305 = vmax.f32 %v7177, 0.0
        %v7306 = vmax.f32 %v7178, 0.0
        %v7307 = vmax.f32 %v7179, 0.0
        %v7308 = vmax.f32 %v7180, 0.0
        %v7309 = vmax.f32 %v7181, 0.0
        %v7310 = vmax.f32 %v7182, 0.0
        %v7311 = vmax.f32 %v7183, 0.0
        %v7312 = vmax.f32 %v7184, 0.0
        %v7313 = vmax.f32 %v7185, 0.0
        %v7314 = vmax.f32 %v7186, 0.0
        %v7315 = vmax.f32 %v7187, 0.0
        %v7316 = vmax.f32 %v7188, 0.0
        %v7317 = vmax.f32 %v7189, 0.0
        %v7318 = vmax.f32 %v7190, 0.0
        %v7319 = vmax.f32 %v7191, 0.0
        %v7320 = vmax.f32 %v7192, 0.0
        %v7321 = vmax.f32 %v7193, 0.0
        %v7322 = vmul.f32 %v3534, %v4850
        %v7323 = vmul.f32 %v3538, %v4851
        %v7324 = vmul.f32 %v3544, %v4852
        %v7325 = vmul.f32 %v3548, %v4853
        %v7326 = vmul.f32 %v3554, %v4854
        %v7327 = vmul.f32 %v3558, %v4855
        %v7328 = vmul.f32 %v3564, %v4856
        %v7329 = vmul.f32 %v3568, %v4857
        %v7330 = vmul.f32 %v3574, %v4858
        %v7331 = vmul.f32 %v3578, %v4859
        %v7332 = vmul.f32 %v3584, %v4860
        %v7333 = vmul.f32 %v3588, %v4861
        %v7334 = vmul.f32 %v3594, %v4862
        %v7335 = vmul.f32 %v3598, %v4863
        %v7336 = vmul.f32 %v3604, %v4864
        %v7337 = vmul.f32 %v3608, %v4865
        %v7338 = vmul.f32 %v3614, %v4866
        %v7339 = vmul.f32 %v3618, %v4867
        %v7340 = vmul.f32 %v3624, %v4868
        %v7341 = vmul.f32 %v3628, %v4869
        %v7342 = vmul.f32 %v3634, %v4870
        %v7343 = vmul.f32 %v3638, %v4871
        %v7344 = vmul.f32 %v3644, %v4872
        %v7345 = vmul.f32 %v3648, %v4873
        %v7346 = vmul.f32 %v3654, %v4874
        %v7347 = vmul.f32 %v3658, %v4875
        %v7348 = vmul.f32 %v3664, %v4876
        %v7349 = vmul.f32 %v3668, %v4877
        %v7350 = vmul.f32 %v3674, %v4878
        %v7351 = vmul.f32 %v3678, %v4879
        %v7352 = vmul.f32 %v3684, %v4880
        %v7353 = vmul.f32 %v3688, %v4881
        %v7354 = vmul.f32 %v3694, %v4882
        %v7355 = vmul.f32 %v3698, %v4883
        %v7356 = vmul.f32 %v3704, %v4884
        %v7357 = vmul.f32 %v3708, %v4885
        %v7358 = vmul.f32 %v3714, %v4886
        %v7359 = vmul.f32 %v3718, %v4887
        %v7360 = vmul.f32 %v3724, %v4888
        %v7361 = vmul.f32 %v3728, %v4889
        %v7362 = vmul.f32 %v3734, %v4890
        %v7363 = vmul.f32 %v3738, %v4891
        %v7364 = vmul.f32 %v3744, %v4892
        %v7365 = vmul.f32 %v3748, %v4893
        %v7366 = vmul.f32 %v3754, %v4894
        %v7367 = vmul.f32 %v3758, %v4895
        %v7368 = vmul.f32 %v3764, %v4896
        %v7369 = vmul.f32 %v3768, %v4897
        %v7370 = vmul.f32 %v3774, %v4898
        %v7371 = vmul.f32 %v3778, %v4899
        %v7372 = vmul.f32 %v3784, %v4900
        %v7373 = vmul.f32 %v3788, %v4901
        %v7374 = vmul.f32 %v3794, %v4902
        %v7375 = vmul.f32 %v3798, %v4903
        %v7376 = vmul.f32 %v3804, %v4904
        %v7377 = vmul.f32 %v3808, %v4905
        %v7378 = vmul.f32 %v3814, %v4906
        %v7379 = vmul.f32 %v3818, %v4907
        %v7380 = vmul.f32 %v3824, %v4908
        %v7381 = vmul.f32 %v3828, %v4909
        %v7382 = vmul.f32 %v3834, %v4910
        %v7383 = vmul.f32 %v3838, %v4911
        %v7384 = vmul.f32 %v3844, %v4912
        %v7385 = vmul.f32 %v3848, %v4913
        %v7386 = vmul.f32 %v3854, %v4914
        %v7387 = vmul.f32 %v3858, %v4915
        %v7388 = vmul.f32 %v3864, %v4916
        %v7389 = vmul.f32 %v3868, %v4917
        %v7390 = vmul.f32 %v3874, %v4918
        %v7391 = vmul.f32 %v3878, %v4919
        %v7392 = vmul.f32 %v3884, %v4920
        %v7393 = vmul.f32 %v3888, %v4921
        %v7394 = vmul.f32 %v3894, %v4922
        %v7395 = vmul.f32 %v3898, %v4923
        %v7396 = vmul.f32 %v3904, %v4924
        %v7397 = vmul.f32 %v3908, %v4925
        %v7398 = vmul.f32 %v3914, %v4926
        %v7399 = vmul.f32 %v3918, %v4927
        %v7400 = vmul.f32 %v3924, %v4928
        %v7401 = vmul.f32 %v3928, %v4929
        %v7402 = vmul.f32 %v3934, %v4930
        %v7403 = vmul.f32 %v3938, %v4931
        %v7404 = vmul.f32 %v3944, %v4932
        %v7405 = vmul.f32 %v3948, %v4933
        %v7406 = vmul.f32 %v3954, %v4934
        %v7407 = vmul.f32 %v3958, %v4935
        %v7408 = vmul.f32 %v3964, %v4936
        %v7409 = vmul.f32 %v3968, %v4937
        %v7410 = vmul.f32 %v3974, %v4938
        %v7411 = vmul.f32 %v3978, %v4939
        %v7412 = vmul.f32 %v3984, %v4940
        %v7413 = vmul.f32 %v3988, %v4941
        %v7414 = vmul.f32 %v3994, %v4942
        %v7415 = vmul.f32 %v3998, %v4943
        %v7416 = vmul.f32 %v4004, %v4944
        %v7417 = vmul.f32 %v4008, %v4945
        %v7418 = vmul.f32 %v4014, %v4946
        %v7419 = vmul.f32 %v4018, %v4947
        %v7420 = vmul.f32 %v4024, %v4948
        %v7421 = vmul.f32 %v4028, %v4949
        %v7422 = vmul.f32 %v4034, %v4950
        %v7423 = vmul.f32 %v4038, %v4951
        %v7424 = vmul.f32 %v4044, %v4952
        %v7425 = vmul.f32 %v4048, %v4953
        %v7426 = vmul.f32 %v4054, %v4954
        %v7427 = vmul.f32 %v4058, %v4955
        %v7428 = vmul.f32 %v4064, %v4956
        %v7429 = vmul.f32 %v4068, %v4957
        %v7430 = vmul.f32 %v4074, %v4958
        %v7431 = vmul.f32 %v4078, %v4959
        %v7432 = vmul.f32 %v4084, %v4960
        %v7433 = vmul.f32 %v4088, %v4961
        %v7434 = vmul.f32 %v4094, %v4962
        %v7435 = vmul.f32 %v4098, %v4963
        %v7436 = vmul.f32 %v4104, %v4964
        %v7437 = vmul.f32 %v4108, %v4965
        %v7438 = vmul.f32 %v4114, %v4966
        %v7439 = vmul.f32 %v4118, %v4967
        %v7440 = vmul.f32 %v4124, %v4968
        %v7441 = vmul.f32 %v4128, %v4969
        %v7442 = vmul.f32 %v4134, %v4970
        %v7443 = vmul.f32 %v4138, %v4971
        %v7444 = vmul.f32 %v4144, %v4972
        %v7445 = vmul.f32 %v4148, %v4973
        %v7446 = vmul.f32 %v4154, %v4974
        %v7447 = vmul.f32 %v4158, %v4975
        %v7448 = vmul.f32 %v4164, %v4976
        %v7449 = vmul.f32 %v4168, %v4977
        %v7450 = vadd.f32 %v7322, %v7194
        %v7451 = vadd.f32 %v7323, %v7195
        %v7452 = vadd.f32 %v7324, %v7196
        %v7453 = vadd.f32 %v7325, %v7197
        %v7454 = vadd.f32 %v7326, %v7198
        %v7455 = vadd.f32 %v7327, %v7199
        %v7456 = vadd.f32 %v7328, %v7200
        %v7457 = vadd.f32 %v7329, %v7201
        %v7458 = vadd.f32 %v7330, %v7202
        %v7459 = vadd.f32 %v7331, %v7203
        %v7460 = vadd.f32 %v7332, %v7204
        %v7461 = vadd.f32 %v7333, %v7205
        %v7462 = vadd.f32 %v7334, %v7206
        %v7463 = vadd.f32 %v7335, %v7207
        %v7464 = vadd.f32 %v7336, %v7208
        %v7465 = vadd.f32 %v7337, %v7209
        %v7466 = vadd.f32 %v7338, %v7210
        %v7467 = vadd.f32 %v7339, %v7211
        %v7468 = vadd.f32 %v7340, %v7212
        %v7469 = vadd.f32 %v7341, %v7213
        %v7470 = vadd.f32 %v7342, %v7214
        %v7471 = vadd.f32 %v7343, %v7215
        %v7472 = vadd.f32 %v7344, %v7216
        %v7473 = vadd.f32 %v7345, %v7217
        %v7474 = vadd.f32 %v7346, %v7218
        %v7475 = vadd.f32 %v7347, %v7219
        %v7476 = vadd.f32 %v7348, %v7220
        %v7477 = vadd.f32 %v7349, %v7221
        %v7478 = vadd.f32 %v7350, %v7222
        %v7479 = vadd.f32 %v7351, %v7223
        %v7480 = vadd.f32 %v7352, %v7224
        %v7481 = vadd.f32 %v7353, %v7225
        %v7482 = vadd.f32 %v7354, %v7226
        %v7483 = vadd.f32 %v7355, %v7227
        %v7484 = vadd.f32 %v7356, %v7228
        %v7485 = vadd.f32 %v7357, %v7229
        %v7486 = vadd.f32 %v7358, %v7230
        %v7487 = vadd.f32 %v7359, %v7231
        %v7488 = vadd.f32 %v7360, %v7232
        %v7489 = vadd.f32 %v7361, %v7233
        %v7490 = vadd.f32 %v7362, %v7234
        %v7491 = vadd.f32 %v7363, %v7235
        %v7492 = vadd.f32 %v7364, %v7236
        %v7493 = vadd.f32 %v7365, %v7237
        %v7494 = vadd.f32 %v7366, %v7238
        %v7495 = vadd.f32 %v7367, %v7239
        %v7496 = vadd.f32 %v7368, %v7240
        %v7497 = vadd.f32 %v7369, %v7241
        %v7498 = vadd.f32 %v7370, %v7242
        %v7499 = vadd.f32 %v7371, %v7243
        %v7500 = vadd.f32 %v7372, %v7244
        %v7501 = vadd.f32 %v7373, %v7245
        %v7502 = vadd.f32 %v7374, %v7246
        %v7503 = vadd.f32 %v7375, %v7247
        %v7504 = vadd.f32 %v7376, %v7248
        %v7505 = vadd.f32 %v7377, %v7249
        %v7506 = vadd.f32 %v7378, %v7250
        %v7507 = vadd.f32 %v7379, %v7251
        %v7508 = vadd.f32 %v7380, %v7252
        %v7509 = vadd.f32 %v7381, %v7253
        %v7510 = vadd.f32 %v7382, %v7254
        %v7511 = vadd.f32 %v7383, %v7255
        %v7512 = vadd.f32 %v7384, %v7256
        %v7513 = vadd.f32 %v7385, %v7257
        %v7514 = vadd.f32 %v7386, %v7258
        %v7515 = vadd.f32 %v7387, %v7259
        %v7516 = vadd.f32 %v7388, %v7260
        %v7517 = vadd.f32 %v7389, %v7261
        %v7518 = vadd.f32 %v7390, %v7262
        %v7519 = vadd.f32 %v7391, %v7263
        %v7520 = vadd.f32 %v7392, %v7264
        %v7521 = vadd.f32 %v7393, %v7265
        %v7522 = vadd.f32 %v7394, %v7266
        %v7523 = vadd.f32 %v7395, %v7267
        %v7524 = vadd.f32 %v7396, %v7268
        %v7525 = vadd.f32 %v7397, %v7269
        %v7526 = vadd.f32 %v7398, %v7270
        %v7527 = vadd.f32 %v7399, %v7271
        %v7528 = vadd.f32 %v7400, %v7272
        %v7529 = vadd.f32 %v7401, %v7273
        %v7530 = vadd.f32 %v7402, %v7274
        %v7531 = vadd.f32 %v7403, %v7275
        %v7532 = vadd.f32 %v7404, %v7276
        %v7533 = vadd.f32 %v7405, %v7277
        %v7534 = vadd.f32 %v7406, %v7278
        %v7535 = vadd.f32 %v7407, %v7279
        %v7536 = vadd.f32 %v7408, %v7280
        %v7537 = vadd.f32 %v7409, %v7281
        %v7538 = vadd.f32 %v7410, %v7282
        %v7539 = vadd.f32 %v7411, %v7283
        %v7540 = vadd.f32 %v7412, %v7284
        %v7541 = vadd.f32 %v7413, %v7285
        %v7542 = vadd.f32 %v7414, %v7286
        %v7543 = vadd.f32 %v7415, %v7287
        %v7544 = vadd.f32 %v7416, %v7288
        %v7545 = vadd.f32 %v7417, %v7289
        %v7546 = vadd.f32 %v7418, %v7290
        %v7547 = vadd.f32 %v7419, %v7291
        %v7548 = vadd.f32 %v7420, %v7292
        %v7549 = vadd.f32 %v7421, %v7293
        %v7550 = vadd.f32 %v7422, %v7294
        %v7551 = vadd.f32 %v7423, %v7295
        %v7552 = vadd.f32 %v7424, %v7296
        %v7553 = vadd.f32 %v7425, %v7297
        %v7554 = vadd.f32 %v7426, %v7298
        %v7555 = vadd.f32 %v7427, %v7299
        %v7556 = vadd.f32 %v7428, %v7300
        %v7557 = vadd.f32 %v7429, %v7301
        %v7558 = vadd.f32 %v7430, %v7302
        %v7559 = vadd.f32 %v7431, %v7303
        %v7560 = vadd.f32 %v7432, %v7304
        %v7561 = vadd.f32 %v7433, %v7305
        %v7562 = vadd.f32 %v7434, %v7306
        %v7563 = vadd.f32 %v7435, %v7307
        %v7564 = vadd.f32 %v7436, %v7308
        %v7565 = vadd.f32 %v7437, %v7309
        %v7566 = vadd.f32 %v7438, %v7310
        %v7567 = vadd.f32 %v7439, %v7311
        %v7568 = vadd.f32 %v7440, %v7312
        %v7569 = vadd.f32 %v7441, %v7313
        %v7570 = vadd.f32 %v7442, %v7314
        %v7571 = vadd.f32 %v7443, %v7315
        %v7572 = vadd.f32 %v7444, %v7316
        %v7573 = vadd.f32 %v7445, %v7317
        %v7574 = vadd.f32 %v7446, %v7318
        %v7575 = vadd.f32 %v7447, %v7319
        %v7576 = vadd.f32 %v7448, %v7320
        %v7577 = vadd.f32 %v7449, %v7321
        %v7578 = vadd.f32 %v7450, %v2304
        %v7579 = vadd.f32 %v7451, %v2307
        %v7580 = vadd.f32 %v7452, %v2312
        %v7581 = vadd.f32 %v7453, %v2315
        %v7582 = vadd.f32 %v7454, %v2320
        %v7583 = vadd.f32 %v7455, %v2323
        %v7584 = vadd.f32 %v7456, %v2328
        %v7585 = vadd.f32 %v7457, %v2331
        %v7586 = vadd.f32 %v7458, %v2336
        %v7587 = vadd.f32 %v7459, %v2339
        %v7588 = vadd.f32 %v7460, %v2344
        %v7589 = vadd.f32 %v7461, %v2347
        %v7590 = vadd.f32 %v7462, %v2352
        %v7591 = vadd.f32 %v7463, %v2355
        %v7592 = vadd.f32 %v7464, %v2360
        %v7593 = vadd.f32 %v7465, %v2363
        %v7594 = vadd.f32 %v7466, %v2368
        %v7595 = vadd.f32 %v7467, %v2371
        %v7596 = vadd.f32 %v7468, %v2376
        %v7597 = vadd.f32 %v7469, %v2379
        %v7598 = vadd.f32 %v7470, %v2384
        %v7599 = vadd.f32 %v7471, %v2387
        %v7600 = vadd.f32 %v7472, %v2392
        %v7601 = vadd.f32 %v7473, %v2395
        %v7602 = vadd.f32 %v7474, %v2400
        %v7603 = vadd.f32 %v7475, %v2403
        %v7604 = vadd.f32 %v7476, %v2408
        %v7605 = vadd.f32 %v7477, %v2411
        %v7606 = vadd.f32 %v7478, %v2416
        %v7607 = vadd.f32 %v7479, %v2419
        %v7608 = vadd.f32 %v7480, %v2424
        %v7609 = vadd.f32 %v7481, %v2427
        %v7610 = vadd.f32 %v7482, %v2609
        %v7611 = vadd.f32 %v7483, %v2612
        %v7612 = vadd.f32 %v7484, %v2617
        %v7613 = vadd.f32 %v7485, %v2620
        %v7614 = vadd.f32 %v7486, %v2625
        %v7615 = vadd.f32 %v7487, %v2628
        %v7616 = vadd.f32 %v7488, %v2633
        %v7617 = vadd.f32 %v7489, %v2636
        %v7618 = vadd.f32 %v7490, %v2641
        %v7619 = vadd.f32 %v7491, %v2644
        %v7620 = vadd.f32 %v7492, %v2649
        %v7621 = vadd.f32 %v7493, %v2652
        %v7622 = vadd.f32 %v7494, %v2657
        %v7623 = vadd.f32 %v7495, %v2660
        %v7624 = vadd.f32 %v7496, %v2665
        %v7625 = vadd.f32 %v7497, %v2668
        %v7626 = vadd.f32 %v7498, %v2673
        %v7627 = vadd.f32 %v7499, %v2676
        %v7628 = vadd.f32 %v7500, %v2681
        %v7629 = vadd.f32 %v7501, %v2684
        %v7630 = vadd.f32 %v7502, %v2689
        %v7631 = vadd.f32 %v7503, %v2692
        %v7632 = vadd.f32 %v7504, %v2697
        %v7633 = vadd.f32 %v7505, %v2700
        %v7634 = vadd.f32 %v7506, %v2705
        %v7635 = vadd.f32 %v7507, %v2708
        %v7636 = vadd.f32 %v7508, %v2713
        %v7637 = vadd.f32 %v7509, %v2716
        %v7638 = vadd.f32 %v7510, %v2721
        %v7639 = vadd.f32 %v7511, %v2724
        %v7640 = vadd.f32 %v7512, %v2729
        %v7641 = vadd.f32 %v7513, %v2732
        %v7642 = vadd.f32 %v7514, %v2842
        %v7643 = vadd.f32 %v7515, %v2845
        %v7644 = vadd.f32 %v7516, %v2850
        %v7645 = vadd.f32 %v7517, %v2853
        %v7646 = vadd.f32 %v7518, %v2858
        %v7647 = vadd.f32 %v7519, %v2861
        %v7648 = vadd.f32 %v7520, %v2866
        %v7649 = vadd.f32 %v7521, %v2869
        %v7650 = vadd.f32 %v7522, %v2874
        %v7651 = vadd.f32 %v7523, %v2877
        %v7652 = vadd.f32 %v7524, %v2882
        %v7653 = vadd.f32 %v7525, %v2885
        %v7654 = vadd.f32 %v7526, %v2890
        %v7655 = vadd.f32 %v7527, %v2893
        %v7656 = vadd.f32 %v7528, %v2898
        %v7657 = vadd.f32 %v7529, %v2901
        %v7658 = vadd.f32 %v7530, %v2906
        %v7659 = vadd.f32 %v7531, %v2909
        %v7660 = vadd.f32 %v7532, %v2914
        %v7661 = vadd.f32 %v7533, %v2917
        %v7662 = vadd.f32 %v7534, %v2922
        %v7663 = vadd.f32 %v7535, %v2925
        %v7664 = vadd.f32 %v7536, %v2930
        %v7665 = vadd.f32 %v7537, %v2933
        %v7666 = vadd.f32 %v7538, %v2938
        %v7667 = vadd.f32 %v7539, %v2941
        %v7668 = vadd.f32 %v7540, %v2946
        %v7669 = vadd.f32 %v7541, %v2949
        %v7670 = vadd.f32 %v7542, %v2954
        %v7671 = vadd.f32 %v7543, %v2957
        %v7672 = vadd.f32 %v7544, %v2962
        %v7673 = vadd.f32 %v7545, %v2965
        %v7674 = vadd.f32 %v7546, %v3147
        %v7675 = vadd.f32 %v7547, %v3150
        %v7676 = vadd.f32 %v7548, %v3155
        %v7677 = vadd.f32 %v7549, %v3158
        %v7678 = vadd.f32 %v7550, %v3163
        %v7679 = vadd.f32 %v7551, %v3166
        %v7680 = vadd.f32 %v7552, %v3171
        %v7681 = vadd.f32 %v7553, %v3174
        %v7682 = vadd.f32 %v7554, %v3179
        %v7683 = vadd.f32 %v7555, %v3182
        %v7684 = vadd.f32 %v7556, %v3187
        %v7685 = vadd.f32 %v7557, %v3190
        %v7686 = vadd.f32 %v7558, %v3195
        %v7687 = vadd.f32 %v7559, %v3198
        %v7688 = vadd.f32 %v7560, %v3203
        %v7689 = vadd.f32 %v7561, %v3206
        %v7690 = vadd.f32 %v7562, %v3211
        %v7691 = vadd.f32 %v7563, %v3214
        %v7692 = vadd.f32 %v7564, %v3219
        %v7693 = vadd.f32 %v7565, %v3222
        %v7694 = vadd.f32 %v7566, %v3227
        %v7695 = vadd.f32 %v7567, %v3230
        %v7696 = vadd.f32 %v7568, %v3235
        %v7697 = vadd.f32 %v7569, %v3238
        %v7698 = vadd.f32 %v7570, %v3243
        %v7699 = vadd.f32 %v7571, %v3246
        %v7700 = vadd.f32 %v7572, %v3251
        %v7701 = vadd.f32 %v7573, %v3254
        %v7702 = vadd.f32 %v7574, %v3259
        %v7703 = vadd.f32 %v7575, %v3262
        %v7704 = vadd.f32 %v7576, %v3267
        %v7705 = vadd.f32 %v7577, %v3270
        %v7706 = vpack.c.bf16 %v7579, %v7578
        %v7707 = vpack.c.bf16 %v7581, %v7580
        %v7708 = vpack.c.bf16 %v7583, %v7582
        %v7709 = vpack.c.bf16 %v7585, %v7584
        %v7710 = vpack.c.bf16 %v7587, %v7586
        %v7711 = vpack.c.bf16 %v7589, %v7588
        %v7712 = vpack.c.bf16 %v7591, %v7590
        %v7713 = vpack.c.bf16 %v7593, %v7592
        %v7714 = vpack.c.bf16 %v7595, %v7594
        %v7715 = vpack.c.bf16 %v7597, %v7596
        %v7716 = vpack.c.bf16 %v7599, %v7598
        %v7717 = vpack.c.bf16 %v7601, %v7600
        %v7718 = vpack.c.bf16 %v7603, %v7602
        %v7719 = vpack.c.bf16 %v7605, %v7604
        %v7720 = vpack.c.bf16 %v7607, %v7606
        %v7721 = vpack.c.bf16 %v7609, %v7608
        %v7722 = vpack.c.bf16 %v7611, %v7610
        %v7723 = vpack.c.bf16 %v7613, %v7612
        %v7724 = vpack.c.bf16 %v7615, %v7614
        %v7725 = vpack.c.bf16 %v7617, %v7616
        %v7726 = vpack.c.bf16 %v7619, %v7618
        %v7727 = vpack.c.bf16 %v7621, %v7620
        %v7728 = vpack.c.bf16 %v7623, %v7622
        %v7729 = vpack.c.bf16 %v7625, %v7624
        %v7730 = vpack.c.bf16 %v7627, %v7626
        %v7731 = vpack.c.bf16 %v7629, %v7628
        %v7732 = vpack.c.bf16 %v7631, %v7630
        %v7733 = vpack.c.bf16 %v7633, %v7632
        %v7734 = vpack.c.bf16 %v7635, %v7634
        %v7735 = vpack.c.bf16 %v7637, %v7636
        %v7736 = vpack.c.bf16 %v7639, %v7638
        %v7737 = vpack.c.bf16 %v7641, %v7640
        %v7738 = vpack.c.bf16 %v7643, %v7642
        %v7739 = vpack.c.bf16 %v7645, %v7644
        %v7740 = vpack.c.bf16 %v7647, %v7646
        %v7741 = vpack.c.bf16 %v7649, %v7648
        %v7742 = vpack.c.bf16 %v7651, %v7650
        %v7743 = vpack.c.bf16 %v7653, %v7652
        %v7744 = vpack.c.bf16 %v7655, %v7654
        %v7745 = vpack.c.bf16 %v7657, %v7656
        %v7746 = vpack.c.bf16 %v7659, %v7658
        %v7747 = vpack.c.bf16 %v7661, %v7660
        %v7748 = vpack.c.bf16 %v7663, %v7662
        %v7749 = vpack.c.bf16 %v7665, %v7664
        %v7750 = vpack.c.bf16 %v7667, %v7666
        %v7751 = vpack.c.bf16 %v7669, %v7668
        %v7752 = vpack.c.bf16 %v7671, %v7670
        %v7753 = vpack.c.bf16 %v7673, %v7672
        %v7754 = vpack.c.bf16 %v7675, %v7674
        %v7755 = vpack.c.bf16 %v7677, %v7676
        %v7756 = vpack.c.bf16 %v7679, %v7678
        %v7757 = vpack.c.bf16 %v7681, %v7680
        %v7758 = vpack.c.bf16 %v7683, %v7682
        %v7759 = vpack.c.bf16 %v7685, %v7684
        %v7760 = vpack.c.bf16 %v7687, %v7686
        %v7761 = vpack.c.bf16 %v7689, %v7688
        %v7762 = vpack.c.bf16 %v7691, %v7690
        %v7763 = vpack.c.bf16 %v7693, %v7692
        %v7764 = vpack.c.bf16 %v7695, %v7694
        %v7765 = vpack.c.bf16 %v7697, %v7696
        %v7766 = vpack.c.bf16 %v7699, %v7698
        %v7767 = vpack.c.bf16 %v7701, %v7700
        %v7768 = vpack.c.bf16 %v7703, %v7702
        %v7769 = vpack.c.bf16 %v7705, %v7704
        %7770 = vmatprep.subr.bf16.mxu0 0
        %7771 = vmatpush1.bf16.msra.mxu0 %v2180
        %7772 = vmatprep.subr.bf16.mxu0 0
        %7773 = vmatpush1.bf16.msra.mxu0 %v2182
        %7774 = vmatprep.subr.bf16.mxu0 0
        %7775 = vmatpush1.bf16.msra.mxu0 %v2184
        %7776 = vmatprep.subr.bf16.mxu0 0
        %7777 = vmatpush1.bf16.msra.mxu0 %v2186
        %7778 = vmatprep.subr.bf16.mxu0 0
        %7779 = vmatpush1.bf16.msra.mxu0 %v2188
        %7780 = vmatprep.subr.bf16.mxu0 0
        %7781 = vmatpush1.bf16.msra.mxu0 %v2190
        %7782 = vmatprep.subr.bf16.mxu0 0
        %7783 = vmatpush1.bf16.msra.mxu0 %v2192
        %7784 = vmatprep.subr.bf16.mxu0 0
        %7785 = vmatpush1.bf16.msra.mxu0 %v2194
        %7786 = vmatprep.subr.bf16.mxu0 0
        %7787 = vmatpush1.bf16.msra.mxu0 0
        %7788 = vmatprep.subr.bf16.mxu0 0
        %7789 = vmatpush1.bf16.msra.mxu0 0
        %7790 = vmatprep.subr.bf16.mxu0 0
        %7791 = vmatpush1.bf16.msra.mxu0 0
        %7792 = vmatprep.subr.bf16.mxu0 0
        %7793 = vmatpush1.bf16.msra.mxu0 0
        %7794 = vmatprep.subr.bf16.mxu0 0
        %7795 = vmatpush1.bf16.msra.mxu0 0
        %7796 = vmatprep.subr.bf16.mxu0 0
        %7797 = vmatpush1.bf16.msra.mxu0 0
        %7798 = vmatprep.subr.bf16.mxu0 0
        %7799 = vmatpush1.bf16.msra.mxu0 0
        %7800 = vmatprep.subr.bf16.mxu0 0
        %7801 = vmatpush1.bf16.msra.mxu0 0
        %7802 = vmatprep.mubr.bf16.mxu0 0
        %7803 = vmatmul.mubr.bf16.gmra.mrb[0].mxu0 %v7706
        %v7804 = vpop.f32.mrb[0].mxu0
        %v7805 = vadd.f32 0.0, %v7804
        %v7806 = vpop.f32.mrb[0].mxu0
        %v7807 = vpop.f32.mrb[0].mxu0
        %v7808 = vadd.f32 0.0, %v7807
        %v7809 = vpop.f32.mrb[0].mxu0
        %7810 = vmatprep.mubr.bf16.mxu0 0
        %7811 = vmatmul.mubr.bf16.gmra.mrb[0].mxu0 %v7707
        %v7812 = vpop.f32.mrb[0].mxu0
        %v7813 = vadd.f32 0.0, %v7812
        %v7814 = vpop.f32.mrb[0].mxu0
        %v7815 = vpop.f32.mrb[0].mxu0
        %v7816 = vadd.f32 0.0, %v7815
        %v7817 = vpop.f32.mrb[0].mxu0
        %7818 = vmatprep.mubr.bf16.mxu0 0
        %7819 = vmatmul.mubr.bf16.gmra.mrb[0].mxu0 %v7708
        %v7820 = vpop.f32.mrb[0].mxu0
        %v7821 = vadd.f32 0.0, %v7820
        %v7822 = vpop.f32.mrb[0].mxu0
        %v7823 = vpop.f32.mrb[0].mxu0
        %v7824 = vadd.f32 0.0, %v7823
        %v7825 = vpop.f32.mrb[0].mxu0
        %7826 = vmatprep.mubr.bf16.mxu0 0
        %7827 = vmatmul.mubr.bf16.gmra.mrb[0].mxu0 %v7709
        %v7828 = vpop.f32.mrb[0].mxu0
        %v7829 = vadd.f32 0.0, %v7828
        %v7830 = vpop.f32.mrb[0].mxu0
        %v7831 = vpop.f32.mrb[0].mxu0
        %v7832 = vadd.f32 0.0, %v7831
        %v7833 = vpop.f32.mrb[0].mxu0
        %7834 = vmatprep.mubr.bf16.mxu0 0
        %7835 = vmatmul.mubr.bf16.gmra.mrb[0].mxu0 %v7710
        %v7836 = vpop.f32.mrb[0].mxu0
        %v7837 = vadd.f32 0.0, %v7836
        %v7838 = vpop.f32.mrb[0].mxu0
        %v7839 = vpop.f32.mrb[0].mxu0
        %v7840 = vadd.f32 0.0, %v7839
        %v7841 = vpop.f32.mrb[0].mxu0
        %7842 = vmatprep.mubr.bf16.mxu0 0
        %7843 = vmatmul.mubr.bf16.gmra.mrb[0].mxu0 %v7711
        %v7844 = vpop.f32.mrb[0].mxu0
        %v7845 = vadd.f32 0.0, %v7844
        %v7846 = vpop.f32.mrb[0].mxu0
        %v7847 = vpop.f32.mrb[0].mxu0
        %v7848 = vadd.f32 0.0, %v7847
        %v7849 = vpop.f32.mrb[0].mxu0
        %7850 = vmatprep.mubr.bf16.mxu0 0
        %7851 = vmatmul.mubr.bf16.gmra.mrb[0].mxu0 %v7712
        %v7852 = vpop.f32.mrb[0].mxu0
        %v7853 = vadd.f32 0.0, %v7852
        %v7854 = vpop.f32.mrb[0].mxu0
        %v7855 = vpop.f32.mrb[0].mxu0
        %v7856 = vadd.f32 0.0, %v7855
        %v7857 = vpop.f32.mrb[0].mxu0
        %7858 = vmatprep.mubr.bf16.mxu0 0
        %7859 = vmatmul.mubr.bf16.gmra.mrb[0].mxu0 %v7713
        %v7860 = vpop.f32.mrb[0].mxu0
        %v7861 = vadd.f32 0.0, %v7860
        %v7862 = vpop.f32.mrb[0].mxu0
        %v7863 = vpop.f32.mrb[0].mxu0
        %v7864 = vadd.f32 0.0, %v7863
        %v7865 = vpop.f32.mrb[0].mxu0
        %7866 = vmatprep.mubr.bf16.mxu0 0
        %7867 = vmatmul.mubr.bf16.gmra.mrb[0].mxu0 %v7714
        %v7868 = vpop.f32.mrb[0].mxu0
        %v7869 = vadd.f32 0.0, %v7868
        %v7870 = vpop.f32.mrb[0].mxu0
        %v7871 = vpop.f32.mrb[0].mxu0
        %v7872 = vadd.f32 0.0, %v7871
        %v7873 = vpop.f32.mrb[0].mxu0
        %7874 = vmatprep.mubr.bf16.mxu0 0
        %7875 = vmatmul.mubr.bf16.gmra.mrb[0].mxu0 %v7715
        %v7876 = vpop.f32.mrb[0].mxu0
        %v7877 = vadd.f32 0.0, %v7876
        %v7878 = vpop.f32.mrb[0].mxu0
        %v7879 = vpop.f32.mrb[0].mxu0
        %v7880 = vadd.f32 0.0, %v7879
        %v7881 = vpop.f32.mrb[0].mxu0
        %7882 = vmatprep.mubr.bf16.mxu0 0
        %7883 = vmatmul.mubr.bf16.gmra.mrb[0].mxu0 %v7716
        %v7884 = vpop.f32.mrb[0].mxu0
        %v7885 = vadd.f32 0.0, %v7884
        %v7886 = vpop.f32.mrb[0].mxu0
        %v7887 = vpop.f32.mrb[0].mxu0
        %v7888 = vadd.f32 0.0, %v7887
        %v7889 = vpop.f32.mrb[0].mxu0
        %7890 = vmatprep.mubr.bf16.mxu0 0
        %7891 = vmatmul.mubr.bf16.gmra.mrb[0].mxu0 %v7717
        %v7892 = vpop.f32.mrb[0].mxu0
        %v7893 = vadd.f32 0.0, %v7892
        %v7894 = vpop.f32.mrb[0].mxu0
        %v7895 = vpop.f32.mrb[0].mxu0
        %v7896 = vadd.f32 0.0, %v7895
        %v7897 = vpop.f32.mrb[0].mxu0
        %7898 = vmatprep.mubr.bf16.mxu0 0
        %7899 = vmatmul.mubr.bf16.gmra.mrb[0].mxu0 %v7718
        %v7900 = vpop.f32.mrb[0].mxu0
        %v7901 = vadd.f32 0.0, %v7900
        %v7902 = vpop.f32.mrb[0].mxu0
        %v7903 = vpop.f32.mrb[0].mxu0
        %v7904 = vadd.f32 0.0, %v7903
        %v7905 = vpop.f32.mrb[0].mxu0
        %7906 = vmatprep.mubr.bf16.mxu0 0
        %7907 = vmatmul.mubr.bf16.gmra.mrb[0].mxu0 %v7719
        %v7908 = vpop.f32.mrb[0].mxu0
        %v7909 = vadd.f32 0.0, %v7908
        %v7910 = vpop.f32.mrb[0].mxu0
        %v7911 = vpop.f32.mrb[0].mxu0
        %v7912 = vadd.f32 0.0, %v7911
        %v7913 = vpop.f32.mrb[0].mxu0
        %7914 = vmatprep.mubr.bf16.mxu0 0
        %7915 = vmatmul.mubr.bf16.gmra.mrb[0].mxu0 %v7720
        %v7916 = vpop.f32.mrb[0].mxu0
        %v7917 = vadd.f32 0.0, %v7916
        %v7918 = vpop.f32.mrb[0].mxu0
        %v7919 = vpop.f32.mrb[0].mxu0
        %v7920 = vadd.f32 0.0, %v7919
        %v7921 = vpop.f32.mrb[0].mxu0
        %7922 = vmatprep.mubr.bf16.mxu0 0
        %7923 = vmatmul.mubr.bf16.gmra.mrb[0].mxu0 %v7721
        %v7924 = vpop.f32.mrb[0].mxu0
        %v7925 = vadd.f32 0.0, %v7924
        %v7926 = vpop.f32.mrb[0].mxu0
        %v7927 = vpop.f32.mrb[0].mxu0
        %v7928 = vadd.f32 0.0, %v7927
        %v7929 = vpop.f32.mrb[0].mxu0
        %7930 = vdwg.mxu0
        %7939 = vmatprep.subr.bf16.mxu0 0
        %7940 = vmatpush1.bf16.msra.mxu0 %v2487
        %7941 = vmatprep.subr.bf16.mxu0 0
        %7942 = vmatpush1.bf16.msra.mxu0 %v2489
        %7943 = vmatprep.subr.bf16.mxu0 0
        %7944 = vmatpush1.bf16.msra.mxu0 %v2491
        %7945 = vmatprep.subr.bf16.mxu0 0
        %7946 = vmatpush1.bf16.msra.mxu0 %v2493
        %7947 = vmatprep.subr.bf16.mxu0 0
        %7948 = vmatpush1.bf16.msra.mxu0 %v2495
        %7949 = vmatprep.subr.bf16.mxu0 0
        %7950 = vmatpush1.bf16.msra.mxu0 %v2497
        %7951 = vmatprep.subr.bf16.mxu0 0
        %7952 = vmatpush1.bf16.msra.mxu0 %v2499
        %7953 = vmatprep.subr.bf16.mxu0 0
        %7954 = vmatpush1.bf16.msra.mxu0 %v2501
        %7955 = vmatprep.subr.bf16.mxu0 0
        %7956 = vmatpush1.bf16.msra.mxu0 0
        %7957 = vmatprep.subr.bf16.mxu0 0
        %7958 = vmatpush1.bf16.msra.mxu0 0
        %7959 = vmatprep.subr.bf16.mxu0 0
        %7960 = vmatpush1.bf16.msra.mxu0 0
        %7961 = vmatprep.subr.bf16.mxu0 0
        %7962 = vmatpush1.bf16.msra.mxu0 0
        %7963 = vmatprep.subr.bf16.mxu0 0
        %7964 = vmatpush1.bf16.msra.mxu0 0
        %7965 = vmatprep.subr.bf16.mxu0 0
        %7966 = vmatpush1.bf16.msra.mxu0 0
        %7967 = vmatprep.subr.bf16.mxu0 0
        %7968 = vmatpush1.bf16.msra.mxu0 0
        %7969 = vmatprep.subr.bf16.mxu0 0
        %7970 = vmatpush1.bf16.msra.mxu0 0
        %7971 = vmatprep.mubr.bf16.mxu0 0
        %7972 = vmatmul.mubr.bf16.gmra.mrb[0].mxu0 %v7722
        %v7973 = vpop.f32.mrb[0].mxu0
        %v7974 = vadd.f32 0.0, %v7973
        %v7975 = vpop.f32.mrb[0].mxu0
        %v7976 = vpop.f32.mrb[0].mxu0
        %v7977 = vadd.f32 0.0, %v7976
        %v7978 = vpop.f32.mrb[0].mxu0
        %7979 = vmatprep.mubr.bf16.mxu0 0
        %7980 = vmatmul.mubr.bf16.gmra.mrb[0].mxu0 %v7723
        %v7981 = vpop.f32.mrb[0].mxu0
        %v7982 = vadd.f32 0.0, %v7981
        %v7983 = vpop.f32.mrb[0].mxu0
        %v7984 = vpop.f32.mrb[0].mxu0
        %v7985 = vadd.f32 0.0, %v7984
        %v7986 = vpop.f32.mrb[0].mxu0
        %7987 = vmatprep.mubr.bf16.mxu0 0
        %7988 = vmatmul.mubr.bf16.gmra.mrb[0].mxu0 %v7724
        %v7989 = vpop.f32.mrb[0].mxu0
        %v7990 = vadd.f32 0.0, %v7989
        %v7991 = vpop.f32.mrb[0].mxu0
        %v7992 = vpop.f32.mrb[0].mxu0
        %v7993 = vadd.f32 0.0, %v7992
        %v7994 = vpop.f32.mrb[0].mxu0
        %7995 = vmatprep.mubr.bf16.mxu0 0
        %7996 = vmatmul.mubr.bf16.gmra.mrb[0].mxu0 %v7725
        %v7997 = vpop.f32.mrb[0].mxu0
        %v7998 = vadd.f32 0.0, %v7997
        %v7999 = vpop.f32.mrb[0].mxu0
        %v8000 = vpop.f32.mrb[0].mxu0
        %v8001 = vadd.f32 0.0, %v8000
        %v8002 = vpop.f32.mrb[0].mxu0
        %8003 = vmatprep.mubr.bf16.mxu0 0
        %8004 = vmatmul.mubr.bf16.gmra.mrb[0].mxu0 %v7726
        %v8005 = vpop.f32.mrb[0].mxu0
        %v8006 = vadd.f32 0.0, %v8005
        %v8007 = vpop.f32.mrb[0].mxu0
        %v8008 = vpop.f32.mrb[0].mxu0
        %v8009 = vadd.f32 0.0, %v8008
        %v8010 = vpop.f32.mrb[0].mxu0
        %8011 = vmatprep.mubr.bf16.mxu0 0
        %8012 = vmatmul.mubr.bf16.gmra.mrb[0].mxu0 %v7727
        %v8013 = vpop.f32.mrb[0].mxu0
        %v8014 = vadd.f32 0.0, %v8013
        %v8015 = vpop.f32.mrb[0].mxu0
        %v8016 = vpop.f32.mrb[0].mxu0
        %v8017 = vadd.f32 0.0, %v8016
        %v8018 = vpop.f32.mrb[0].mxu0
        %8019 = vmatprep.mubr.bf16.mxu0 0
        %8020 = vmatmul.mubr.bf16.gmra.mrb[0].mxu0 %v7728
        %v8021 = vpop.f32.mrb[0].mxu0
        %v8022 = vadd.f32 0.0, %v8021
        %v8023 = vpop.f32.mrb[0].mxu0
        %v8024 = vpop.f32.mrb[0].mxu0
        %v8025 = vadd.f32 0.0, %v8024
        %v8026 = vpop.f32.mrb[0].mxu0
        %8027 = vmatprep.mubr.bf16.mxu0 0
        %8028 = vmatmul.mubr.bf16.gmra.mrb[0].mxu0 %v7729
        %v8029 = vpop.f32.mrb[0].mxu0
        %v8030 = vadd.f32 0.0, %v8029
        %v8031 = vpop.f32.mrb[0].mxu0
        %v8032 = vpop.f32.mrb[0].mxu0
        %v8033 = vadd.f32 0.0, %v8032
        %v8034 = vpop.f32.mrb[0].mxu0
        %8035 = vmatprep.mubr.bf16.mxu0 0
        %8036 = vmatmul.mubr.bf16.gmra.mrb[0].mxu0 %v7730
        %v8037 = vpop.f32.mrb[0].mxu0
        %v8038 = vadd.f32 0.0, %v8037
        %v8039 = vpop.f32.mrb[0].mxu0
        %v8040 = vpop.f32.mrb[0].mxu0
        %v8041 = vadd.f32 0.0, %v8040
        %v8042 = vpop.f32.mrb[0].mxu0
        %8043 = vmatprep.mubr.bf16.mxu0 0
        %8044 = vmatmul.mubr.bf16.gmra.mrb[0].mxu0 %v7731
        %v8045 = vpop.f32.mrb[0].mxu0
        %v8046 = vadd.f32 0.0, %v8045
        %v8047 = vpop.f32.mrb[0].mxu0
        %v8048 = vpop.f32.mrb[0].mxu0
        %v8049 = vadd.f32 0.0, %v8048
        %v8050 = vpop.f32.mrb[0].mxu0
        %8051 = vmatprep.mubr.bf16.mxu0 0
        %8052 = vmatmul.mubr.bf16.gmra.mrb[0].mxu0 %v7732
        %v8053 = vpop.f32.mrb[0].mxu0
        %v8054 = vadd.f32 0.0, %v8053
        %v8055 = vpop.f32.mrb[0].mxu0
        %v8056 = vpop.f32.mrb[0].mxu0
        %v8057 = vadd.f32 0.0, %v8056
        %v8058 = vpop.f32.mrb[0].mxu0
        %8059 = vmatprep.mubr.bf16.mxu0 0
        %8060 = vmatmul.mubr.bf16.gmra.mrb[0].mxu0 %v7733
        %v8061 = vpop.f32.mrb[0].mxu0
        %v8062 = vadd.f32 0.0, %v8061
        %v8063 = vpop.f32.mrb[0].mxu0
        %v8064 = vpop.f32.mrb[0].mxu0
        %v8065 = vadd.f32 0.0, %v8064
        %v8066 = vpop.f32.mrb[0].mxu0
        %8067 = vmatprep.mubr.bf16.mxu0 0
        %8068 = vmatmul.mubr.bf16.gmra.mrb[0].mxu0 %v7734
        %v8069 = vpop.f32.mrb[0].mxu0
        %v8070 = vadd.f32 0.0, %v8069
        %v8071 = vpop.f32.mrb[0].mxu0
        %v8072 = vpop.f32.mrb[0].mxu0
        %v8073 = vadd.f32 0.0, %v8072
        %v8074 = vpop.f32.mrb[0].mxu0
        %8075 = vmatprep.mubr.bf16.mxu0 0
        %8076 = vmatmul.mubr.bf16.gmra.mrb[0].mxu0 %v7735
        %v8077 = vpop.f32.mrb[0].mxu0
        %v8078 = vadd.f32 0.0, %v8077
        %v8079 = vpop.f32.mrb[0].mxu0
        %v8080 = vpop.f32.mrb[0].mxu0
        %v8081 = vadd.f32 0.0, %v8080
        %v8082 = vpop.f32.mrb[0].mxu0
        %8083 = vmatprep.mubr.bf16.mxu0 0
        %8084 = vmatmul.mubr.bf16.gmra.mrb[0].mxu0 %v7736
        %v8085 = vpop.f32.mrb[0].mxu0
        %v8086 = vadd.f32 0.0, %v8085
        %v8087 = vpop.f32.mrb[0].mxu0
        %v8088 = vpop.f32.mrb[0].mxu0
        %v8089 = vadd.f32 0.0, %v8088
        %v8090 = vpop.f32.mrb[0].mxu0
        %8091 = vmatprep.mubr.bf16.mxu0 0
        %8092 = vmatmul.mubr.bf16.gmra.mrb[0].mxu0 %v7737
        %v8093 = vpop.f32.mrb[0].mxu0
        %v8094 = vadd.f32 0.0, %v8093
        %v8095 = vpop.f32.mrb[0].mxu0
        %v8096 = vpop.f32.mrb[0].mxu0
        %v8097 = vadd.f32 0.0, %v8096
        %v8098 = vpop.f32.mrb[0].mxu0
        %8099 = vdwg.mxu0
        %8100 = vmatprep.subr.bf16.mxu0 0
        %8101 = vmatpush1.bf16.msra.mxu0 %v2181
        %8102 = vmatprep.subr.bf16.mxu0 0
        %8103 = vmatpush1.bf16.msra.mxu0 %v2183
        %8104 = vmatprep.subr.bf16.mxu0 0
        %8105 = vmatpush1.bf16.msra.mxu0 %v2185
        %8106 = vmatprep.subr.bf16.mxu0 0
        %8107 = vmatpush1.bf16.msra.mxu0 %v2187
        %8108 = vmatprep.subr.bf16.mxu0 0
        %8109 = vmatpush1.bf16.msra.mxu0 %v2189
        %8110 = vmatprep.subr.bf16.mxu0 0
        %8111 = vmatpush1.bf16.msra.mxu0 %v2191
        %8112 = vmatprep.subr.bf16.mxu0 0
        %8113 = vmatpush1.bf16.msra.mxu0 %v2193
        %8114 = vmatprep.subr.bf16.mxu0 0
        %8115 = vmatpush1.bf16.msra.mxu0 %v2195
        %8116 = vmatprep.subr.bf16.mxu0 0
        %8117 = vmatpush1.bf16.msra.mxu0 0
        %8118 = vmatprep.subr.bf16.mxu0 0
        %8119 = vmatpush1.bf16.msra.mxu0 0
        %8120 = vmatprep.subr.bf16.mxu0 0
        %8121 = vmatpush1.bf16.msra.mxu0 0
        %8122 = vmatprep.subr.bf16.mxu0 0
        %8123 = vmatpush1.bf16.msra.mxu0 0
        %8124 = vmatprep.subr.bf16.mxu0 0
        %8125 = vmatpush1.bf16.msra.mxu0 0
        %8126 = vmatprep.subr.bf16.mxu0 0
        %8127 = vmatpush1.bf16.msra.mxu0 0
        %8128 = vmatprep.subr.bf16.mxu0 0
        %8129 = vmatpush1.bf16.msra.mxu0 0
        %8130 = vmatprep.subr.bf16.mxu0 0
        %8131 = vmatpush1.bf16.msra.mxu0 0
        %8132 = vmatprep.mubr.bf16.mxu0 0
        %8133 = vmatmul.mubr.bf16.gmra.mrb[0].mxu0 %v7738
        %v8134 = vpop.f32.mrb[0].mxu0
        %v8135 = vadd.f32 0.0, %v8134
        %v8136 = vpop.f32.mrb[0].mxu0
        %v8137 = vpop.f32.mrb[0].mxu0
        %v8138 = vadd.f32 0.0, %v8137
        %v8139 = vpop.f32.mrb[0].mxu0
        %8140 = vmatprep.mubr.bf16.mxu0 0
        %8141 = vmatmul.mubr.bf16.gmra.mrb[0].mxu0 %v7739
        %v8142 = vpop.f32.mrb[0].mxu0
        %v8143 = vadd.f32 0.0, %v8142
        %v8144 = vpop.f32.mrb[0].mxu0
        %v8145 = vpop.f32.mrb[0].mxu0
        %v8146 = vadd.f32 0.0, %v8145
        %v8147 = vpop.f32.mrb[0].mxu0
        %8148 = vmatprep.mubr.bf16.mxu0 0
        %8149 = vmatmul.mubr.bf16.gmra.mrb[0].mxu0 %v7740
        %v8150 = vpop.f32.mrb[0].mxu0
        %v8151 = vadd.f32 0.0, %v8150
        %v8152 = vpop.f32.mrb[0].mxu0
        %v8153 = vpop.f32.mrb[0].mxu0
        %v8154 = vadd.f32 0.0, %v8153
        %v8155 = vpop.f32.mrb[0].mxu0
        %8156 = vmatprep.mubr.bf16.mxu0 0
        %8157 = vmatmul.mubr.bf16.gmra.mrb[0].mxu0 %v7741
        %v8158 = vpop.f32.mrb[0].mxu0
        %v8159 = vadd.f32 0.0, %v8158
        %v8160 = vpop.f32.mrb[0].mxu0
        %v8161 = vpop.f32.mrb[0].mxu0
        %v8162 = vadd.f32 0.0, %v8161
        %v8163 = vpop.f32.mrb[0].mxu0
        %8164 = vmatprep.mubr.bf16.mxu0 0
        %8165 = vmatmul.mubr.bf16.gmra.mrb[0].mxu0 %v7742
        %v8166 = vpop.f32.mrb[0].mxu0
        %v8167 = vadd.f32 0.0, %v8166
        %v8168 = vpop.f32.mrb[0].mxu0
        %v8169 = vpop.f32.mrb[0].mxu0
        %v8170 = vadd.f32 0.0, %v8169
        %v8171 = vpop.f32.mrb[0].mxu0
        %8172 = vmatprep.mubr.bf16.mxu0 0
        %8173 = vmatmul.mubr.bf16.gmra.mrb[0].mxu0 %v7743
        %v8174 = vpop.f32.mrb[0].mxu0
        %v8175 = vadd.f32 0.0, %v8174
        %v8176 = vpop.f32.mrb[0].mxu0
        %v8177 = vpop.f32.mrb[0].mxu0
        %v8178 = vadd.f32 0.0, %v8177
        %v8179 = vpop.f32.mrb[0].mxu0
        %8180 = vmatprep.mubr.bf16.mxu0 0
        %8181 = vmatmul.mubr.bf16.gmra.mrb[0].mxu0 %v7744
        %v8182 = vpop.f32.mrb[0].mxu0
        %v8183 = vadd.f32 0.0, %v8182
        %v8184 = vpop.f32.mrb[0].mxu0
        %v8185 = vpop.f32.mrb[0].mxu0
        %v8186 = vadd.f32 0.0, %v8185
        %v8187 = vpop.f32.mrb[0].mxu0
        %8188 = vmatprep.mubr.bf16.mxu0 0
        %8189 = vmatmul.mubr.bf16.gmra.mrb[0].mxu0 %v7745
        %v8190 = vpop.f32.mrb[0].mxu0
        %v8191 = vadd.f32 0.0, %v8190
        %v8192 = vpop.f32.mrb[0].mxu0
        %v8193 = vpop.f32.mrb[0].mxu0
        %v8194 = vadd.f32 0.0, %v8193
        %v8195 = vpop.f32.mrb[0].mxu0
        %8196 = vmatprep.mubr.bf16.mxu0 0
        %8197 = vmatmul.mubr.bf16.gmra.mrb[0].mxu0 %v7746
        %v8198 = vpop.f32.mrb[0].mxu0
        %v8199 = vadd.f32 0.0, %v8198
        %v8200 = vpop.f32.mrb[0].mxu0
        %v8201 = vpop.f32.mrb[0].mxu0
        %v8202 = vadd.f32 0.0, %v8201
        %v8203 = vpop.f32.mrb[0].mxu0
        %8204 = vmatprep.mubr.bf16.mxu0 0
        %8205 = vmatmul.mubr.bf16.gmra.mrb[0].mxu0 %v7747
        %v8206 = vpop.f32.mrb[0].mxu0
        %v8207 = vadd.f32 0.0, %v8206
        %v8208 = vpop.f32.mrb[0].mxu0
        %v8209 = vpop.f32.mrb[0].mxu0
        %v8210 = vadd.f32 0.0, %v8209
        %v8211 = vpop.f32.mrb[0].mxu0
        %8212 = vmatprep.mubr.bf16.mxu0 0
        %8213 = vmatmul.mubr.bf16.gmra.mrb[0].mxu0 %v7748
        %v8214 = vpop.f32.mrb[0].mxu0
        %v8215 = vadd.f32 0.0, %v8214
        %v8216 = vpop.f32.mrb[0].mxu0
        %v8217 = vpop.f32.mrb[0].mxu0
        %v8218 = vadd.f32 0.0, %v8217
        %v8219 = vpop.f32.mrb[0].mxu0
        %8220 = vmatprep.mubr.bf16.mxu0 0
        %8221 = vmatmul.mubr.bf16.gmra.mrb[0].mxu0 %v7749
        %v8222 = vpop.f32.mrb[0].mxu0
        %v8223 = vadd.f32 0.0, %v8222
        %v8224 = vpop.f32.mrb[0].mxu0
        %v8225 = vpop.f32.mrb[0].mxu0
        %v8226 = vadd.f32 0.0, %v8225
        %v8227 = vpop.f32.mrb[0].mxu0
        %8228 = vmatprep.mubr.bf16.mxu0 0
        %8229 = vmatmul.mubr.bf16.gmra.mrb[0].mxu0 %v7750
        %v8230 = vpop.f32.mrb[0].mxu0
        %v8231 = vadd.f32 0.0, %v8230
        %v8232 = vpop.f32.mrb[0].mxu0
        %v8233 = vpop.f32.mrb[0].mxu0
        %v8234 = vadd.f32 0.0, %v8233
        %v8235 = vpop.f32.mrb[0].mxu0
        %8236 = vmatprep.mubr.bf16.mxu0 0
        %8237 = vmatmul.mubr.bf16.gmra.mrb[0].mxu0 %v7751
        %v8238 = vpop.f32.mrb[0].mxu0
        %v8239 = vadd.f32 0.0, %v8238
        %v8240 = vpop.f32.mrb[0].mxu0
        %v8241 = vpop.f32.mrb[0].mxu0
        %v8242 = vadd.f32 0.0, %v8241
        %v8243 = vpop.f32.mrb[0].mxu0
        %8244 = vmatprep.mubr.bf16.mxu0 0
        %8245 = vmatmul.mubr.bf16.gmra.mrb[0].mxu0 %v7752
        %v8246 = vpop.f32.mrb[0].mxu0
        %v8247 = vadd.f32 0.0, %v8246
        %v8248 = vpop.f32.mrb[0].mxu0
        %v8249 = vpop.f32.mrb[0].mxu0
        %v8250 = vadd.f32 0.0, %v8249
        %v8251 = vpop.f32.mrb[0].mxu0
        %8252 = vmatprep.mubr.bf16.mxu0 0
        %8253 = vmatmul.mubr.bf16.gmra.mrb[0].mxu0 %v7753
        %v8254 = vpop.f32.mrb[0].mxu0
        %v8255 = vadd.f32 0.0, %v8254
        %v8256 = vpop.f32.mrb[0].mxu0
        %v8257 = vpop.f32.mrb[0].mxu0
        %v8258 = vadd.f32 0.0, %v8257
        %v8259 = vpop.f32.mrb[0].mxu0
        %8260 = vdwg.mxu0
        %8269 = vmatprep.subr.bf16.mxu0 0
        %8270 = vmatpush1.bf16.msra.mxu0 %v3025
        %8271 = vmatprep.subr.bf16.mxu0 0
        %8272 = vmatpush1.bf16.msra.mxu0 %v3027
        %8273 = vmatprep.subr.bf16.mxu0 0
        %8274 = vmatpush1.bf16.msra.mxu0 %v3029
        %8275 = vmatprep.subr.bf16.mxu0 0
        %8276 = vmatpush1.bf16.msra.mxu0 %v3031
        %8277 = vmatprep.subr.bf16.mxu0 0
        %8278 = vmatpush1.bf16.msra.mxu0 %v3033
        %8279 = vmatprep.subr.bf16.mxu0 0
        %8280 = vmatpush1.bf16.msra.mxu0 %v3035
        %8281 = vmatprep.subr.bf16.mxu0 0
        %8282 = vmatpush1.bf16.msra.mxu0 %v3037
        %8283 = vmatprep.subr.bf16.mxu0 0
        %8284 = vmatpush1.bf16.msra.mxu0 %v3039
        %8285 = vmatprep.subr.bf16.mxu0 0
        %8286 = vmatpush1.bf16.msra.mxu0 0
        %8287 = vmatprep.subr.bf16.mxu0 0
        %8288 = vmatpush1.bf16.msra.mxu0 0
        %8289 = vmatprep.subr.bf16.mxu0 0
        %8290 = vmatpush1.bf16.msra.mxu0 0
        %8291 = vmatprep.subr.bf16.mxu0 0
        %8292 = vmatpush1.bf16.msra.mxu0 0
        %8293 = vmatprep.subr.bf16.mxu0 0
        %8294 = vmatpush1.bf16.msra.mxu0 0
        %8295 = vmatprep.subr.bf16.mxu0 0
        %8296 = vmatpush1.bf16.msra.mxu0 0
        %8297 = vmatprep.subr.bf16.mxu0 0
        %8298 = vmatpush1.bf16.msra.mxu0 0
        %8299 = vmatprep.subr.bf16.mxu0 0
        %8300 = vmatpush1.bf16.msra.mxu0 0
        %8301 = vmatprep.mubr.bf16.mxu0 0
        %8302 = vmatmul.mubr.bf16.gmra.mrb[0].mxu0 %v7754
        %v8303 = vpop.f32.mrb[0].mxu0
        %v8304 = vadd.f32 0.0, %v8303
        %v8305 = vpop.f32.mrb[0].mxu0
        %v8306 = vpop.f32.mrb[0].mxu0
        %v8307 = vadd.f32 0.0, %v8306
        %v8308 = vpop.f32.mrb[0].mxu0
        %8309 = vmatprep.mubr.bf16.mxu0 0
        %8310 = vmatmul.mubr.bf16.gmra.mrb[0].mxu0 %v7755
        %v8311 = vpop.f32.mrb[0].mxu0
        %v8312 = vadd.f32 0.0, %v8311
        %v8313 = vpop.f32.mrb[0].mxu0
        %v8314 = vpop.f32.mrb[0].mxu0
        %v8315 = vadd.f32 0.0, %v8314
        %v8316 = vpop.f32.mrb[0].mxu0
        %8317 = vmatprep.mubr.bf16.mxu0 0
        %8318 = vmatmul.mubr.bf16.gmra.mrb[0].mxu0 %v7756
        %v8319 = vpop.f32.mrb[0].mxu0
        %v8320 = vadd.f32 0.0, %v8319
        %v8321 = vpop.f32.mrb[0].mxu0
        %v8322 = vpop.f32.mrb[0].mxu0
        %v8323 = vadd.f32 0.0, %v8322
        %v8324 = vpop.f32.mrb[0].mxu0
        %8325 = vmatprep.mubr.bf16.mxu0 0
        %8326 = vmatmul.mubr.bf16.gmra.mrb[0].mxu0 %v7757
        %v8327 = vpop.f32.mrb[0].mxu0
        %v8328 = vadd.f32 0.0, %v8327
        %v8329 = vpop.f32.mrb[0].mxu0
        %v8330 = vpop.f32.mrb[0].mxu0
        %v8331 = vadd.f32 0.0, %v8330
        %v8332 = vpop.f32.mrb[0].mxu0
        %8333 = vmatprep.mubr.bf16.mxu0 0
        %8334 = vmatmul.mubr.bf16.gmra.mrb[0].mxu0 %v7758
        %v8335 = vpop.f32.mrb[0].mxu0
        %v8336 = vadd.f32 0.0, %v8335
        %v8337 = vpop.f32.mrb[0].mxu0
        %v8338 = vpop.f32.mrb[0].mxu0
        %v8339 = vadd.f32 0.0, %v8338
        %v8340 = vpop.f32.mrb[0].mxu0
        %8341 = vmatprep.mubr.bf16.mxu0 0
        %8342 = vmatmul.mubr.bf16.gmra.mrb[0].mxu0 %v7759
        %v8343 = vpop.f32.mrb[0].mxu0
        %v8344 = vadd.f32 0.0, %v8343
        %v8345 = vpop.f32.mrb[0].mxu0
        %v8346 = vpop.f32.mrb[0].mxu0
        %v8347 = vadd.f32 0.0, %v8346
        %v8348 = vpop.f32.mrb[0].mxu0
        %8349 = vmatprep.mubr.bf16.mxu0 0
        %8350 = vmatmul.mubr.bf16.gmra.mrb[0].mxu0 %v7760
        %v8351 = vpop.f32.mrb[0].mxu0
        %v8352 = vadd.f32 0.0, %v8351
        %v8353 = vpop.f32.mrb[0].mxu0
        %v8354 = vpop.f32.mrb[0].mxu0
        %v8355 = vadd.f32 0.0, %v8354
        %v8356 = vpop.f32.mrb[0].mxu0
        %8357 = vmatprep.mubr.bf16.mxu0 0
        %8358 = vmatmul.mubr.bf16.gmra.mrb[0].mxu0 %v7761
        %v8359 = vpop.f32.mrb[0].mxu0
        %v8360 = vadd.f32 0.0, %v8359
        %v8361 = vpop.f32.mrb[0].mxu0
        %v8362 = vpop.f32.mrb[0].mxu0
        %v8363 = vadd.f32 0.0, %v8362
        %v8364 = vpop.f32.mrb[0].mxu0
        %8365 = vmatprep.mubr.bf16.mxu0 0
        %8366 = vmatmul.mubr.bf16.gmra.mrb[0].mxu0 %v7762
        %v8367 = vpop.f32.mrb[0].mxu0
        %v8368 = vadd.f32 0.0, %v8367
        %v8369 = vpop.f32.mrb[0].mxu0
        %v8370 = vpop.f32.mrb[0].mxu0
        %v8371 = vadd.f32 0.0, %v8370
        %v8372 = vpop.f32.mrb[0].mxu0
        %8373 = vmatprep.mubr.bf16.mxu0 0
        %8374 = vmatmul.mubr.bf16.gmra.mrb[0].mxu0 %v7763
        %v8375 = vpop.f32.mrb[0].mxu0
        %v8376 = vadd.f32 0.0, %v8375
        %v8377 = vpop.f32.mrb[0].mxu0
        %v8378 = vpop.f32.mrb[0].mxu0
        %v8379 = vadd.f32 0.0, %v8378
        %v8380 = vpop.f32.mrb[0].mxu0
        %8381 = vmatprep.mubr.bf16.mxu0 0
        %8382 = vmatmul.mubr.bf16.gmra.mrb[0].mxu0 %v7764
        %v8383 = vpop.f32.mrb[0].mxu0
        %v8384 = vadd.f32 0.0, %v8383
        %v8385 = vpop.f32.mrb[0].mxu0
        %v8386 = vpop.f32.mrb[0].mxu0
        %v8387 = vadd.f32 0.0, %v8386
        %v8388 = vpop.f32.mrb[0].mxu0
        %8389 = vmatprep.mubr.bf16.mxu0 0
        %8390 = vmatmul.mubr.bf16.gmra.mrb[0].mxu0 %v7765
        %v8391 = vpop.f32.mrb[0].mxu0
        %v8392 = vadd.f32 0.0, %v8391
        %v8393 = vpop.f32.mrb[0].mxu0
        %v8394 = vpop.f32.mrb[0].mxu0
        %v8395 = vadd.f32 0.0, %v8394
        %v8396 = vpop.f32.mrb[0].mxu0
        %8397 = vmatprep.mubr.bf16.mxu0 0
        %8398 = vmatmul.mubr.bf16.gmra.mrb[0].mxu0 %v7766
        %v8399 = vpop.f32.mrb[0].mxu0
        %v8400 = vadd.f32 0.0, %v8399
        %v8401 = vpop.f32.mrb[0].mxu0
        %v8402 = vpop.f32.mrb[0].mxu0
        %v8403 = vadd.f32 0.0, %v8402
        %v8404 = vpop.f32.mrb[0].mxu0
        %8405 = vmatprep.mubr.bf16.mxu0 0
        %8406 = vmatmul.mubr.bf16.gmra.mrb[0].mxu0 %v7767
        %v8407 = vpop.f32.mrb[0].mxu0
        %v8408 = vadd.f32 0.0, %v8407
        %v8409 = vpop.f32.mrb[0].mxu0
        %v8410 = vpop.f32.mrb[0].mxu0
        %v8411 = vadd.f32 0.0, %v8410
        %v8412 = vpop.f32.mrb[0].mxu0
        %8413 = vmatprep.mubr.bf16.mxu0 0
        %8414 = vmatmul.mubr.bf16.gmra.mrb[0].mxu0 %v7768
        %v8415 = vpop.f32.mrb[0].mxu0
        %v8416 = vadd.f32 0.0, %v8415
        %v8417 = vpop.f32.mrb[0].mxu0
        %v8418 = vpop.f32.mrb[0].mxu0
        %v8419 = vadd.f32 0.0, %v8418
        %v8420 = vpop.f32.mrb[0].mxu0
        %8421 = vmatprep.mubr.bf16.mxu0 0
        %8422 = vmatmul.mubr.bf16.gmra.mrb[0].mxu0 %v7769
        %v8423 = vpop.f32.mrb[0].mxu0
        %v8424 = vadd.f32 0.0, %v8423
        %v8425 = vpop.f32.mrb[0].mxu0
        %v8426 = vpop.f32.mrb[0].mxu0
        %v8427 = vadd.f32 0.0, %v8426
        %v8428 = vpop.f32.mrb[0].mxu0
        %8429 = vdwg.mxu0
        %8462 = vrot.lane.b32.xlu0 %v7974, 64
        %v8463 = vpop.permute.xlu0 %8462
        %8464 = vrot.lane.b32.xlu0 %v7977, 64
        %v8465 = vpop.permute.xlu0 %8464
        %8466 = vrot.lane.b32.xlu0 %v7982, 64
        %v8467 = vpop.permute.xlu0 %8466
        %8468 = vrot.lane.b32.xlu0 %v7985, 64
        %v8469 = vpop.permute.xlu0 %8468
        %8470 = vrot.lane.b32.xlu0 %v7990, 64
        %v8471 = vpop.permute.xlu0 %8470
        %8472 = vrot.lane.b32.xlu0 %v7993, 64
        %v8473 = vpop.permute.xlu0 %8472
        %8474 = vrot.lane.b32.xlu0 %v7998, 64
        %v8475 = vpop.permute.xlu0 %8474
        %8476 = vrot.lane.b32.xlu0 %v8001, 64
        %v8477 = vpop.permute.xlu0 %8476
        %8478 = vrot.lane.b32.xlu0 %v8006, 64
        %v8479 = vpop.permute.xlu0 %8478
        %8480 = vrot.lane.b32.xlu0 %v8009, 64
        %v8481 = vpop.permute.xlu0 %8480
        %8482 = vrot.lane.b32.xlu0 %v8014, 64
        %v8483 = vpop.permute.xlu0 %8482
        %8484 = vrot.lane.b32.xlu0 %v8017, 64
        %v8485 = vpop.permute.xlu0 %8484
        %8486 = vrot.lane.b32.xlu0 %v8022, 64
        %v8487 = vpop.permute.xlu0 %8486
        %8488 = vrot.lane.b32.xlu0 %v8025, 64
        %v8489 = vpop.permute.xlu0 %8488
        %8490 = vrot.lane.b32.xlu0 %v8030, 64
        %v8491 = vpop.permute.xlu0 %8490
        %8492 = vrot.lane.b32.xlu0 %v8033, 64
        %v8493 = vpop.permute.xlu0 %8492
        %8494 = vrot.lane.b32.xlu0 %v8038, 64
        %v8495 = vpop.permute.xlu0 %8494
        %8496 = vrot.lane.b32.xlu0 %v8041, 64
        %v8497 = vpop.permute.xlu0 %8496
        %8498 = vrot.lane.b32.xlu0 %v8046, 64
        %v8499 = vpop.permute.xlu0 %8498
        %8500 = vrot.lane.b32.xlu0 %v8049, 64
        %v8501 = vpop.permute.xlu0 %8500
        %8502 = vrot.lane.b32.xlu0 %v8054, 64
        %v8503 = vpop.permute.xlu0 %8502
        %8504 = vrot.lane.b32.xlu0 %v8057, 64
        %v8505 = vpop.permute.xlu0 %8504
        %8506 = vrot.lane.b32.xlu0 %v8062, 64
        %v8507 = vpop.permute.xlu0 %8506
        %8508 = vrot.lane.b32.xlu0 %v8065, 64
        %v8509 = vpop.permute.xlu0 %8508
        %8510 = vrot.lane.b32.xlu0 %v8070, 64
        %v8511 = vpop.permute.xlu0 %8510
        %8512 = vrot.lane.b32.xlu0 %v8073, 64
        %v8513 = vpop.permute.xlu0 %8512
        %8514 = vrot.lane.b32.xlu0 %v8078, 64
        %v8515 = vpop.permute.xlu0 %8514
        %8516 = vrot.lane.b32.xlu0 %v8081, 64
        %v8517 = vpop.permute.xlu0 %8516
        %8518 = vrot.lane.b32.xlu0 %v8086, 64
        %v8519 = vpop.permute.xlu0 %8518
        %8520 = vrot.lane.b32.xlu0 %v8089, 64
        %v8521 = vpop.permute.xlu0 %8520
        %8522 = vrot.lane.b32.xlu0 %v8094, 64
        %v8523 = vpop.permute.xlu0 %8522
        %8524 = vrot.lane.b32.xlu0 %v8097, 64
        %v8525 = vpop.permute.xlu0 %8524
        %8590 = vrot.lane.b32.xlu0 %v8304, 64
        %v8591 = vpop.permute.xlu0 %8590
        %8592 = vrot.lane.b32.xlu0 %v8307, 64
        %v8593 = vpop.permute.xlu0 %8592
        %8594 = vrot.lane.b32.xlu0 %v8312, 64
        %v8595 = vpop.permute.xlu0 %8594
        %8596 = vrot.lane.b32.xlu0 %v8315, 64
        %v8597 = vpop.permute.xlu0 %8596
        %8598 = vrot.lane.b32.xlu0 %v8320, 64
        %v8599 = vpop.permute.xlu0 %8598
        %8600 = vrot.lane.b32.xlu0 %v8323, 64
        %v8601 = vpop.permute.xlu0 %8600
        %8602 = vrot.lane.b32.xlu0 %v8328, 64
        %v8603 = vpop.permute.xlu0 %8602
        %8604 = vrot.lane.b32.xlu0 %v8331, 64
        %v8605 = vpop.permute.xlu0 %8604
        %8606 = vrot.lane.b32.xlu0 %v8336, 64
        %v8607 = vpop.permute.xlu0 %8606
        %8608 = vrot.lane.b32.xlu0 %v8339, 64
        %v8609 = vpop.permute.xlu0 %8608
        %8610 = vrot.lane.b32.xlu0 %v8344, 64
        %v8611 = vpop.permute.xlu0 %8610
        %8612 = vrot.lane.b32.xlu0 %v8347, 64
        %v8613 = vpop.permute.xlu0 %8612
        %8614 = vrot.lane.b32.xlu0 %v8352, 64
        %v8615 = vpop.permute.xlu0 %8614
        %8616 = vrot.lane.b32.xlu0 %v8355, 64
        %v8617 = vpop.permute.xlu0 %8616
        %8618 = vrot.lane.b32.xlu0 %v8360, 64
        %v8619 = vpop.permute.xlu0 %8618
        %8620 = vrot.lane.b32.xlu0 %v8363, 64
        %v8621 = vpop.permute.xlu0 %8620
        %8622 = vrot.lane.b32.xlu0 %v8368, 64
        %v8623 = vpop.permute.xlu0 %8622
        %8624 = vrot.lane.b32.xlu0 %v8371, 64
        %v8625 = vpop.permute.xlu0 %8624
        %8626 = vrot.lane.b32.xlu0 %v8376, 64
        %v8627 = vpop.permute.xlu0 %8626
        %8628 = vrot.lane.b32.xlu0 %v8379, 64
        %v8629 = vpop.permute.xlu0 %8628
        %8630 = vrot.lane.b32.xlu0 %v8384, 64
        %v8631 = vpop.permute.xlu0 %8630
        %8632 = vrot.lane.b32.xlu0 %v8387, 64
        %v8633 = vpop.permute.xlu0 %8632
        %8634 = vrot.lane.b32.xlu0 %v8392, 64
        %v8635 = vpop.permute.xlu0 %8634
        %8636 = vrot.lane.b32.xlu0 %v8395, 64
        %v8637 = vpop.permute.xlu0 %8636
        %8638 = vrot.lane.b32.xlu0 %v8400, 64
        %v8639 = vpop.permute.xlu0 %8638
        %8640 = vrot.lane.b32.xlu0 %v8403, 64
        %v8641 = vpop.permute.xlu0 %8640
        %8642 = vrot.lane.b32.xlu0 %v8408, 64
        %v8643 = vpop.permute.xlu0 %8642
        %8644 = vrot.lane.b32.xlu0 %v8411, 64
        %v8645 = vpop.permute.xlu0 %8644
        %8646 = vrot.lane.b32.xlu0 %v8416, 64
        %v8647 = vpop.permute.xlu0 %8646
        %8648 = vrot.lane.b32.xlu0 %v8419, 64
        %v8649 = vpop.permute.xlu0 %8648
        %8650 = vrot.lane.b32.xlu0 %v8424, 64
        %v8651 = vpop.permute.xlu0 %8650
        %8652 = vrot.lane.b32.xlu0 %v8427, 64
        %v8653 = vpop.permute.xlu0 %8652
        %v8686 = vsel %vm2196, %v7805, %v8463
        %v8687 = vsel %vm2196, %v7808, %v8465
        %v8688 = vsel %vm2196, %v7813, %v8467
        %v8689 = vsel %vm2196, %v7816, %v8469
        %v8690 = vsel %vm2196, %v7821, %v8471
        %v8691 = vsel %vm2196, %v7824, %v8473
        %v8692 = vsel %vm2196, %v7829, %v8475
        %v8693 = vsel %vm2196, %v7832, %v8477
        %v8694 = vsel %vm2196, %v7837, %v8479
        %v8695 = vsel %vm2196, %v7840, %v8481
        %v8696 = vsel %vm2196, %v7845, %v8483
        %v8697 = vsel %vm2196, %v7848, %v8485
        %v8698 = vsel %vm2196, %v7853, %v8487
        %v8699 = vsel %vm2196, %v7856, %v8489
        %v8700 = vsel %vm2196, %v7861, %v8491
        %v8701 = vsel %vm2196, %v7864, %v8493
        %v8702 = vsel %vm2196, %v7869, %v8495
        %v8703 = vsel %vm2196, %v7872, %v8497
        %v8704 = vsel %vm2196, %v7877, %v8499
        %v8705 = vsel %vm2196, %v7880, %v8501
        %v8706 = vsel %vm2196, %v7885, %v8503
        %v8707 = vsel %vm2196, %v7888, %v8505
        %v8708 = vsel %vm2196, %v7893, %v8507
        %v8709 = vsel %vm2196, %v7896, %v8509
        %v8710 = vsel %vm2196, %v7901, %v8511
        %v8711 = vsel %vm2196, %v7904, %v8513
        %v8712 = vsel %vm2196, %v7909, %v8515
        %v8713 = vsel %vm2196, %v7912, %v8517
        %v8714 = vsel %vm2196, %v7917, %v8519
        %v8715 = vsel %vm2196, %v7920, %v8521
        %v8716 = vsel %vm2196, %v7925, %v8523
        %v8717 = vsel %vm2196, %v7928, %v8525
        %v8718 = vsel %vm2196, %v8135, %v8591
        %v8719 = vsel %vm2196, %v8138, %v8593
        %v8720 = vsel %vm2196, %v8143, %v8595
        %v8721 = vsel %vm2196, %v8146, %v8597
        %v8722 = vsel %vm2196, %v8151, %v8599
        %v8723 = vsel %vm2196, %v8154, %v8601
        %v8724 = vsel %vm2196, %v8159, %v8603
        %v8725 = vsel %vm2196, %v8162, %v8605
        %v8726 = vsel %vm2196, %v8167, %v8607
        %v8727 = vsel %vm2196, %v8170, %v8609
        %v8728 = vsel %vm2196, %v8175, %v8611
        %v8729 = vsel %vm2196, %v8178, %v8613
        %v8730 = vsel %vm2196, %v8183, %v8615
        %v8731 = vsel %vm2196, %v8186, %v8617
        %v8732 = vsel %vm2196, %v8191, %v8619
        %v8733 = vsel %vm2196, %v8194, %v8621
        %v8734 = vsel %vm2196, %v8199, %v8623
        %v8735 = vsel %vm2196, %v8202, %v8625
        %v8736 = vsel %vm2196, %v8207, %v8627
        %v8737 = vsel %vm2196, %v8210, %v8629
        %v8738 = vsel %vm2196, %v8215, %v8631
        %v8739 = vsel %vm2196, %v8218, %v8633
        %v8740 = vsel %vm2196, %v8223, %v8635
        %v8741 = vsel %vm2196, %v8226, %v8637
        %v8742 = vsel %vm2196, %v8231, %v8639
        %v8743 = vsel %vm2196, %v8234, %v8641
        %v8744 = vsel %vm2196, %v8239, %v8643
        %v8745 = vsel %vm2196, %v8242, %v8645
        %v8746 = vsel %vm2196, %v8247, %v8647
        %v8747 = vsel %vm2196, %v8250, %v8649
        %v8748 = vsel %vm2196, %v8255, %v8651
        %v8749 = vsel %vm2196, %v8258, %v8653
        %v8750 = vpack.c.bf16 %v8687, %v8686
        %v8751 = vpack.c.bf16 %v8719, %v8718
        %v8752 = vpack.c.bf16 %v8689, %v8688
        %v8753 = vpack.c.bf16 %v8721, %v8720
        %v8754 = vpack.c.bf16 %v8691, %v8690
        %v8755 = vpack.c.bf16 %v8723, %v8722
        %v8756 = vpack.c.bf16 %v8693, %v8692
        %v8757 = vpack.c.bf16 %v8725, %v8724
        %v8758 = vpack.c.bf16 %v8695, %v8694
        %v8759 = vpack.c.bf16 %v8727, %v8726
        %v8760 = vpack.c.bf16 %v8697, %v8696
        %v8761 = vpack.c.bf16 %v8729, %v8728
        %v8762 = vpack.c.bf16 %v8699, %v8698
        %v8763 = vpack.c.bf16 %v8731, %v8730
        %v8764 = vpack.c.bf16 %v8701, %v8700
        %v8765 = vpack.c.bf16 %v8733, %v8732
        %v8766 = vpack.c.bf16 %v8703, %v8702
        %v8767 = vpack.c.bf16 %v8735, %v8734
        %v8768 = vpack.c.bf16 %v8705, %v8704
        %v8769 = vpack.c.bf16 %v8737, %v8736
        %v8770 = vpack.c.bf16 %v8707, %v8706
        %v8771 = vpack.c.bf16 %v8739, %v8738
        %v8772 = vpack.c.bf16 %v8709, %v8708
        %v8773 = vpack.c.bf16 %v8741, %v8740
        %v8774 = vpack.c.bf16 %v8711, %v8710
        %v8775 = vpack.c.bf16 %v8743, %v8742
        %v8776 = vpack.c.bf16 %v8713, %v8712
        %v8777 = vpack.c.bf16 %v8745, %v8744
        %v8778 = vpack.c.bf16 %v8715, %v8714
        %v8779 = vpack.c.bf16 %v8747, %v8746
        %v8780 = vpack.c.bf16 %v8717, %v8716
        %v8781 = vpack.c.bf16 %v8749, %v8748
        %v8782 = vadd.f32 %v2070, %v2074
        %v8783 = vadd.f32 %v8782, %v2080
        %v8784 = vadd.f32 %v8783, %v2084
        %v8785 = vadd.f32 %v8784, %v2090
        %v8786 = vadd.f32 %v8785, %v2094
        %v8787 = vadd.f32 %v8786, %v2100
        %v8788 = vadd.f32 %v8787, %v2104
        %v8789 = vadd.f32 %v8788, %v2110
        %v8790 = vadd.f32 %v8789, %v2114
        %v8791 = vadd.f32 %v8790, %v2120
        %v8792 = vadd.f32 %v8791, %v2124
        %v8793 = vadd.f32 %v8792, %v2130
        %v8794 = vadd.f32 %v8793, %v2134
        %v8795 = vadd.f32 %v8794, %v2140
        %v8796 = vadd.f32 %v8795, %v2144
        %v8797 = vrot.slane %v8796, 4
        %v8798 = vadd.f32 %v8796, %v8797
        %v8799 = vrot.slane %v8798, 2
        %v8800 = vadd.f32 %v8798, %v8799
        %v8801 = vrot.slane %v8800, 1
        %v8802 = vadd.f32 %v8800, %v8801
        %v8803 = vadd.f32 %v2072, %v2076
        %v8804 = vadd.f32 %v8803, %v2082
        %v8805 = vadd.f32 %v8804, %v2086
        %v8806 = vadd.f32 %v8805, %v2092
        %v8807 = vadd.f32 %v8806, %v2096
        %v8808 = vadd.f32 %v8807, %v2102
        %v8809 = vadd.f32 %v8808, %v2106
        %v8810 = vadd.f32 %v8809, %v2112
        %v8811 = vadd.f32 %v8810, %v2116
        %v8812 = vadd.f32 %v8811, %v2122
        %v8813 = vadd.f32 %v8812, %v2126
        %v8814 = vadd.f32 %v8813, %v2132
        %v8815 = vadd.f32 %v8814, %v2136
        %v8816 = vadd.f32 %v8815, %v2142
        %v8817 = vadd.f32 %v8816, %v2146
        %v8818 = vrot.slane %v8817, 4
        %v8819 = vadd.f32 %v8817, %v8818
        %v8820 = vrot.slane %v8819, 2
        %v8821 = vadd.f32 %v8819, %v8820
        %v8822 = vrot.slane %v8821, 1
        %v8823 = vadd.f32 %v8821, %v8822
        %v8824 = vld [vmem:[#allocation7] sm:$0xff]
        %v8825 = vld [vmem:[#allocation7 + $0x8] sm:$0xff]
        %v8826 = vld [vmem:[#allocation7 + $0x10] sm:$0xff]
        %v8827 = vld [vmem:[#allocation7 + $0x18] sm:$0xff]
        %v8828 = vld [vmem:[#allocation7 + $0x20] sm:$0xff]
        %v8829 = vld [vmem:[#allocation7 + $0x28] sm:$0xff]
        %v8830 = vld [vmem:[#allocation7 + $0x30] sm:$0xff]
        %v8831 = vld [vmem:[#allocation7 + $0x38] sm:$0xff]
        %v8832 = vld [vmem:[#allocation7 + $0x40] sm:$0xff]
        %v8833 = vld [vmem:[#allocation7 + $0x48] sm:$0xff]
        %v8834 = vld [vmem:[#allocation7 + $0x50] sm:$0xff]
        %v8835 = vld [vmem:[#allocation7 + $0x58] sm:$0xff]
        %v8836 = vld [vmem:[#allocation7 + $0x60] sm:$0xff]
        %v8837 = vld [vmem:[#allocation7 + $0x68] sm:$0xff]
        %v8838 = vld [vmem:[#allocation7 + $0x70] sm:$0xff]
        %v8839 = vld [vmem:[#allocation7 + $0x78] sm:$0xff]
        %v8840 = vld [vmem:[#allocation7 + $0x80] sm:$0xff]
        %v8841 = vld [vmem:[#allocation7 + $0x88] sm:$0xff]
        %v8842 = vld [vmem:[#allocation7 + $0x90] sm:$0xff]
        %v8843 = vld [vmem:[#allocation7 + $0x98] sm:$0xff]
        %v8844 = vld [vmem:[#allocation7 + $0xa0] sm:$0xff]
        %v8845 = vld [vmem:[#allocation7 + $0xa8] sm:$0xff]
        %v8846 = vld [vmem:[#allocation7 + $0xb0] sm:$0xff]
        %v8847 = vld [vmem:[#allocation7 + $0xb8] sm:$0xff]
        %v8848 = vld [vmem:[#allocation7 + $0xc0] sm:$0xff]
        %v8849 = vld [vmem:[#allocation7 + $0xc8] sm:$0xff]
        %v8850 = vld [vmem:[#allocation7 + $0xd0] sm:$0xff]
        %v8851 = vld [vmem:[#allocation7 + $0xd8] sm:$0xff]
        %v8852 = vld [vmem:[#allocation7 + $0xe0] sm:$0xff]
        %v8853 = vld [vmem:[#allocation7 + $0xe8] sm:$0xff]
        %v8854 = vld [vmem:[#allocation7 + $0xf0] sm:$0xff]
        %v8855 = vld [vmem:[#allocation7 + $0xf8] sm:$0xff]
        %v8856 = vld [vmem:[#allocation7 + $0x100] sm:$0xff]
        %v8857 = vld [vmem:[#allocation7 + $0x108] sm:$0xff]
        %v8858 = vld [vmem:[#allocation7 + $0x110] sm:$0xff]
        %v8859 = vld [vmem:[#allocation7 + $0x118] sm:$0xff]
        %v8860 = vld [vmem:[#allocation7 + $0x120] sm:$0xff]
        %v8861 = vld [vmem:[#allocation7 + $0x128] sm:$0xff]
        %v8862 = vld [vmem:[#allocation7 + $0x130] sm:$0xff]
        %v8863 = vld [vmem:[#allocation7 + $0x138] sm:$0xff]
        %v8864 = vld [vmem:[#allocation7 + $0x140] sm:$0xff]
        %v8865 = vld [vmem:[#allocation7 + $0x148] sm:$0xff]
        %v8866 = vld [vmem:[#allocation7 + $0x150] sm:$0xff]
        %v8867 = vld [vmem:[#allocation7 + $0x158] sm:$0xff]
        %v8868 = vld [vmem:[#allocation7 + $0x160] sm:$0xff]
        %v8869 = vld [vmem:[#allocation7 + $0x168] sm:$0xff]
        %v8870 = vld [vmem:[#allocation7 + $0x170] sm:$0xff]
        %v8871 = vld [vmem:[#allocation7 + $0x178] sm:$0xff]
        %v8872 = vld [vmem:[#allocation7 + $0x180] sm:$0xff]
        %v8873 = vld [vmem:[#allocation7 + $0x188] sm:$0xff]
        %v8874 = vld [vmem:[#allocation7 + $0x190] sm:$0xff]
        %v8875 = vld [vmem:[#allocation7 + $0x198] sm:$0xff]
        %v8876 = vld [vmem:[#allocation7 + $0x1a0] sm:$0xff]
        %v8877 = vld [vmem:[#allocation7 + $0x1a8] sm:$0xff]
        %v8878 = vld [vmem:[#allocation7 + $0x1b0] sm:$0xff]
        %v8879 = vld [vmem:[#allocation7 + $0x1b8] sm:$0xff]
        %v8880 = vld [vmem:[#allocation7 + $0x1c0] sm:$0xff]
        %v8881 = vld [vmem:[#allocation7 + $0x1c8] sm:$0xff]
        %v8882 = vld [vmem:[#allocation7 + $0x1d0] sm:$0xff]
        %v8883 = vld [vmem:[#allocation7 + $0x1d8] sm:$0xff]
        %v8884 = vld [vmem:[#allocation7 + $0x1e0] sm:$0xff]
        %v8885 = vld [vmem:[#allocation7 + $0x1e8] sm:$0xff]
        %v8886 = vld [vmem:[#allocation7 + $0x1f0] sm:$0xff]
        %v8887 = vld [vmem:[#allocation7 + $0x1f8] sm:$0xff]
        %v8888 = vld [vmem:[%s7] sm:$0xff]
        %v8889 = vld [vmem:[%s7 + $0x8] sm:$0xff]
        %v8890 = vld [vmem:[%s7 + $0x10] sm:$0xff]
        %v8891 = vld [vmem:[%s7 + $0x18] sm:$0xff]
        %v8892 = vld [vmem:[%s7 + $0x20] sm:$0xff]
        %v8893 = vld [vmem:[%s7 + $0x28] sm:$0xff]
        %v8894 = vld [vmem:[%s7 + $0x30] sm:$0xff]
        %v8895 = vld [vmem:[%s7 + $0x38] sm:$0xff]
        %v8896 = vld [vmem:[%s7 + $0x40] sm:$0xff]
        %v8897 = vld [vmem:[%s7 + $0x48] sm:$0xff]
        %v8898 = vld [vmem:[%s7 + $0x50] sm:$0xff]
        %v8899 = vld [vmem:[%s7 + $0x58] sm:$0xff]
        %v8900 = vld [vmem:[%s7 + $0x60] sm:$0xff]
        %v8901 = vld [vmem:[%s7 + $0x68] sm:$0xff]
        %v8902 = vld [vmem:[%s7 + $0x70] sm:$0xff]
        %v8903 = vld [vmem:[%s7 + $0x78] sm:$0xff]
        %v8904 = vld [vmem:[%s7 + $0x80] sm:$0xff]
        %v8905 = vld [vmem:[%s7 + $0x88] sm:$0xff]
        %v8906 = vld [vmem:[%s7 + $0x90] sm:$0xff]
        %v8907 = vld [vmem:[%s7 + $0x98] sm:$0xff]
        %v8908 = vld [vmem:[%s7 + $0xa0] sm:$0xff]
        %v8909 = vld [vmem:[%s7 + $0xa8] sm:$0xff]
        %v8910 = vld [vmem:[%s7 + $0xb0] sm:$0xff]
        %v8911 = vld [vmem:[%s7 + $0xb8] sm:$0xff]
        %v8912 = vld [vmem:[%s7 + $0xc0] sm:$0xff]
        %v8913 = vld [vmem:[%s7 + $0xc8] sm:$0xff]
        %v8914 = vld [vmem:[%s7 + $0xd0] sm:$0xff]
        %v8915 = vld [vmem:[%s7 + $0xd8] sm:$0xff]
        %v8916 = vld [vmem:[%s7 + $0xe0] sm:$0xff]
        %v8917 = vld [vmem:[%s7 + $0xe8] sm:$0xff]
        %v8918 = vld [vmem:[%s7 + $0xf0] sm:$0xff]
        %v8919 = vld [vmem:[%s7 + $0xf8] sm:$0xff]
        %v8920 = vld [vmem:[%s7 + $0x100] sm:$0xff]
        %v8921 = vld [vmem:[%s7 + $0x108] sm:$0xff]
        %v8922 = vld [vmem:[%s7 + $0x110] sm:$0xff]
        %v8923 = vld [vmem:[%s7 + $0x118] sm:$0xff]
        %v8924 = vld [vmem:[%s7 + $0x120] sm:$0xff]
        %v8925 = vld [vmem:[%s7 + $0x128] sm:$0xff]
        %v8926 = vld [vmem:[%s7 + $0x130] sm:$0xff]
        %v8927 = vld [vmem:[%s7 + $0x138] sm:$0xff]
        %v8928 = vld [vmem:[%s7 + $0x140] sm:$0xff]
        %v8929 = vld [vmem:[%s7 + $0x148] sm:$0xff]
        %v8930 = vld [vmem:[%s7 + $0x150] sm:$0xff]
        %v8931 = vld [vmem:[%s7 + $0x158] sm:$0xff]
        %v8932 = vld [vmem:[%s7 + $0x160] sm:$0xff]
        %v8933 = vld [vmem:[%s7 + $0x168] sm:$0xff]
        %v8934 = vld [vmem:[%s7 + $0x170] sm:$0xff]
        %v8935 = vld [vmem:[%s7 + $0x178] sm:$0xff]
        %v8936 = vld [vmem:[%s7 + $0x180] sm:$0xff]
        %v8937 = vld [vmem:[%s7 + $0x188] sm:$0xff]
        %v8938 = vld [vmem:[%s7 + $0x190] sm:$0xff]
        %v8939 = vld [vmem:[%s7 + $0x198] sm:$0xff]
        %v8940 = vld [vmem:[%s7 + $0x1a0] sm:$0xff]
        %v8941 = vld [vmem:[%s7 + $0x1a8] sm:$0xff]
        %v8942 = vld [vmem:[%s7 + $0x1b0] sm:$0xff]
        %v8943 = vld [vmem:[%s7 + $0x1b8] sm:$0xff]
        %v8944 = vld [vmem:[%s7 + $0x1c0] sm:$0xff]
        %v8945 = vld [vmem:[%s7 + $0x1c8] sm:$0xff]
        %v8946 = vld [vmem:[%s7 + $0x1d0] sm:$0xff]
        %v8947 = vld [vmem:[%s7 + $0x1d8] sm:$0xff]
        %v8948 = vld [vmem:[%s7 + $0x1e0] sm:$0xff]
        %v8949 = vld [vmem:[%s7 + $0x1e8] sm:$0xff]
        %v8950 = vld [vmem:[%s7 + $0x1f0] sm:$0xff]
        %v8951 = vld [vmem:[%s7 + $0x1f8] sm:$0xff]
        %8953 = vset.pattern.permute.xlu0 0
        %8954 = vperm.xlu0 %8953, %v8888
        %v8955 = vpop.permute.xlu0 %8954
        %8958 = vset.pattern.permute.xlu0 0
        %8959 = vperm.xlu0 %8958, %v8889
        %v8960 = vpop.permute.xlu0 %8959
        %8963 = vset.pattern.permute.xlu0 0
        %8964 = vperm.xlu0 %8963, %v8890
        %v8965 = vpop.permute.xlu0 %8964
        %8968 = vset.pattern.permute.xlu0 0
        %8969 = vperm.xlu0 %8968, %v8891
        %v8970 = vpop.permute.xlu0 %8969
        %8973 = vset.pattern.permute.xlu0 0
        %8974 = vperm.xlu0 %8973, %v8892
        %v8975 = vpop.permute.xlu0 %8974
        %8978 = vset.pattern.permute.xlu0 0
        %8979 = vperm.xlu0 %8978, %v8893
        %v8980 = vpop.permute.xlu0 %8979
        %8983 = vset.pattern.permute.xlu0 0
        %8984 = vperm.xlu0 %8983, %v8894
        %v8985 = vpop.permute.xlu0 %8984
        %8988 = vset.pattern.permute.xlu0 0
        %8989 = vperm.xlu0 %8988, %v8895
        %v8990 = vpop.permute.xlu0 %8989
        %8993 = vset.pattern.permute.xlu0 0
        %8994 = vperm.xlu0 %8993, %v8896
        %v8995 = vpop.permute.xlu0 %8994
        %8998 = vset.pattern.permute.xlu0 0
        %8999 = vperm.xlu0 %8998, %v8897
        %v9000 = vpop.permute.xlu0 %8999
        %9003 = vset.pattern.permute.xlu0 0
        %9004 = vperm.xlu0 %9003, %v8898
        %v9005 = vpop.permute.xlu0 %9004
        %9008 = vset.pattern.permute.xlu0 0
        %9009 = vperm.xlu0 %9008, %v8899
        %v9010 = vpop.permute.xlu0 %9009
        %9013 = vset.pattern.permute.xlu0 0
        %9014 = vperm.xlu0 %9013, %v8900
        %v9015 = vpop.permute.xlu0 %9014
        %9018 = vset.pattern.permute.xlu0 0
        %9019 = vperm.xlu0 %9018, %v8901
        %v9020 = vpop.permute.xlu0 %9019
        %9023 = vset.pattern.permute.xlu0 0
        %9024 = vperm.xlu0 %9023, %v8902
        %v9025 = vpop.permute.xlu0 %9024
        %9028 = vset.pattern.permute.xlu0 0
        %9029 = vperm.xlu0 %9028, %v8903
        %v9030 = vpop.permute.xlu0 %9029
        %9033 = vset.pattern.permute.xlu0 0
        %9034 = vperm.xlu0 %9033, %v8904
        %v9035 = vpop.permute.xlu0 %9034
        %9038 = vset.pattern.permute.xlu0 0
        %9039 = vperm.xlu0 %9038, %v8905
        %v9040 = vpop.permute.xlu0 %9039
        %9043 = vset.pattern.permute.xlu0 0
        %9044 = vperm.xlu0 %9043, %v8906
        %v9045 = vpop.permute.xlu0 %9044
        %9048 = vset.pattern.permute.xlu0 0
        %9049 = vperm.xlu0 %9048, %v8907
        %v9050 = vpop.permute.xlu0 %9049
        %9053 = vset.pattern.permute.xlu0 0
        %9054 = vperm.xlu0 %9053, %v8908
        %v9055 = vpop.permute.xlu0 %9054
        %9058 = vset.pattern.permute.xlu0 0
        %9059 = vperm.xlu0 %9058, %v8909
        %v9060 = vpop.permute.xlu0 %9059
        %9063 = vset.pattern.permute.xlu0 0
        %9064 = vperm.xlu0 %9063, %v8910
        %v9065 = vpop.permute.xlu0 %9064
        %9068 = vset.pattern.permute.xlu0 0
        %9069 = vperm.xlu0 %9068, %v8911
        %v9070 = vpop.permute.xlu0 %9069
        %9073 = vset.pattern.permute.xlu0 0
        %9074 = vperm.xlu0 %9073, %v8912
        %v9075 = vpop.permute.xlu0 %9074
        %9078 = vset.pattern.permute.xlu0 0
        %9079 = vperm.xlu0 %9078, %v8913
        %v9080 = vpop.permute.xlu0 %9079
        %9083 = vset.pattern.permute.xlu0 0
        %9084 = vperm.xlu0 %9083, %v8914
        %v9085 = vpop.permute.xlu0 %9084
        %9088 = vset.pattern.permute.xlu0 0
        %9089 = vperm.xlu0 %9088, %v8915
        %v9090 = vpop.permute.xlu0 %9089
        %9093 = vset.pattern.permute.xlu0 0
        %9094 = vperm.xlu0 %9093, %v8916
        %v9095 = vpop.permute.xlu0 %9094
        %9098 = vset.pattern.permute.xlu0 0
        %9099 = vperm.xlu0 %9098, %v8917
        %v9100 = vpop.permute.xlu0 %9099
        %9103 = vset.pattern.permute.xlu0 0
        %9104 = vperm.xlu0 %9103, %v8918
        %v9105 = vpop.permute.xlu0 %9104
        %9108 = vset.pattern.permute.xlu0 0
        %9109 = vperm.xlu0 %9108, %v8919
        %v9110 = vpop.permute.xlu0 %9109
        %9113 = vset.pattern.permute.xlu0 0
        %9114 = vperm.xlu0 %9113, %v8920
        %v9115 = vpop.permute.xlu0 %9114
        %9118 = vset.pattern.permute.xlu0 0
        %9119 = vperm.xlu0 %9118, %v8921
        %v9120 = vpop.permute.xlu0 %9119
        %9123 = vset.pattern.permute.xlu0 0
        %9124 = vperm.xlu0 %9123, %v8922
        %v9125 = vpop.permute.xlu0 %9124
        %9128 = vset.pattern.permute.xlu0 0
        %9129 = vperm.xlu0 %9128, %v8923
        %v9130 = vpop.permute.xlu0 %9129
        %9133 = vset.pattern.permute.xlu0 0
        %9134 = vperm.xlu0 %9133, %v8924
        %v9135 = vpop.permute.xlu0 %9134
        %9138 = vset.pattern.permute.xlu0 0
        %9139 = vperm.xlu0 %9138, %v8925
        %v9140 = vpop.permute.xlu0 %9139
        %9143 = vset.pattern.permute.xlu0 0
        %9144 = vperm.xlu0 %9143, %v8926
        %v9145 = vpop.permute.xlu0 %9144
        %9148 = vset.pattern.permute.xlu0 0
        %9149 = vperm.xlu0 %9148, %v8927
        %v9150 = vpop.permute.xlu0 %9149
        %9153 = vset.pattern.permute.xlu0 0
        %9154 = vperm.xlu0 %9153, %v8928
        %v9155 = vpop.permute.xlu0 %9154
        %9158 = vset.pattern.permute.xlu0 0
        %9159 = vperm.xlu0 %9158, %v8929
        %v9160 = vpop.permute.xlu0 %9159
        %9163 = vset.pattern.permute.xlu0 0
        %9164 = vperm.xlu0 %9163, %v8930
        %v9165 = vpop.permute.xlu0 %9164
        %9168 = vset.pattern.permute.xlu0 0
        %9169 = vperm.xlu0 %9168, %v8931
        %v9170 = vpop.permute.xlu0 %9169
        %9173 = vset.pattern.permute.xlu0 0
        %9174 = vperm.xlu0 %9173, %v8932
        %v9175 = vpop.permute.xlu0 %9174
        %9178 = vset.pattern.permute.xlu0 0
        %9179 = vperm.xlu0 %9178, %v8933
        %v9180 = vpop.permute.xlu0 %9179
        %9183 = vset.pattern.permute.xlu0 0
        %9184 = vperm.xlu0 %9183, %v8934
        %v9185 = vpop.permute.xlu0 %9184
        %9188 = vset.pattern.permute.xlu0 0
        %9189 = vperm.xlu0 %9188, %v8935
        %v9190 = vpop.permute.xlu0 %9189
        %9193 = vset.pattern.permute.xlu0 0
        %9194 = vperm.xlu0 %9193, %v8936
        %v9195 = vpop.permute.xlu0 %9194
        %9198 = vset.pattern.permute.xlu0 0
        %9199 = vperm.xlu0 %9198, %v8937
        %v9200 = vpop.permute.xlu0 %9199
        %9203 = vset.pattern.permute.xlu0 0
        %9204 = vperm.xlu0 %9203, %v8938
        %v9205 = vpop.permute.xlu0 %9204
        %9208 = vset.pattern.permute.xlu0 0
        %9209 = vperm.xlu0 %9208, %v8939
        %v9210 = vpop.permute.xlu0 %9209
        %9213 = vset.pattern.permute.xlu0 0
        %9214 = vperm.xlu0 %9213, %v8940
        %v9215 = vpop.permute.xlu0 %9214
        %9218 = vset.pattern.permute.xlu0 0
        %9219 = vperm.xlu0 %9218, %v8941
        %v9220 = vpop.permute.xlu0 %9219
        %9223 = vset.pattern.permute.xlu0 0
        %9224 = vperm.xlu0 %9223, %v8942
        %v9225 = vpop.permute.xlu0 %9224
        %9228 = vset.pattern.permute.xlu0 0
        %9229 = vperm.xlu0 %9228, %v8943
        %v9230 = vpop.permute.xlu0 %9229
        %9233 = vset.pattern.permute.xlu0 0
        %9234 = vperm.xlu0 %9233, %v8944
        %v9235 = vpop.permute.xlu0 %9234
        %9238 = vset.pattern.permute.xlu0 0
        %9239 = vperm.xlu0 %9238, %v8945
        %v9240 = vpop.permute.xlu0 %9239
        %9243 = vset.pattern.permute.xlu0 0
        %9244 = vperm.xlu0 %9243, %v8946
        %v9245 = vpop.permute.xlu0 %9244
        %9248 = vset.pattern.permute.xlu0 0
        %9249 = vperm.xlu0 %9248, %v8947
        %v9250 = vpop.permute.xlu0 %9249
        %9253 = vset.pattern.permute.xlu0 0
        %9254 = vperm.xlu0 %9253, %v8948
        %v9255 = vpop.permute.xlu0 %9254
        %9258 = vset.pattern.permute.xlu0 0
        %9259 = vperm.xlu0 %9258, %v8949
        %v9260 = vpop.permute.xlu0 %9259
        %9263 = vset.pattern.permute.xlu0 0
        %9264 = vperm.xlu0 %9263, %v8950
        %v9265 = vpop.permute.xlu0 %9264
        %9268 = vset.pattern.permute.xlu0 0
        %9269 = vperm.xlu0 %9268, %v8951
        %v9270 = vpop.permute.xlu0 %9269
        %v9272 = vmul.f32 %v8955, %v8802
        %v9273 = vmul.f32 %v8955, %v8823
        %v9274 = vmul.f32 %v8960, %v8802
        %v9275 = vmul.f32 %v8960, %v8823
        %v9276 = vmul.f32 %v8965, %v8802
        %v9277 = vmul.f32 %v8965, %v8823
        %v9278 = vmul.f32 %v8970, %v8802
        %v9279 = vmul.f32 %v8970, %v8823
        %v9280 = vmul.f32 %v8975, %v8802
        %v9281 = vmul.f32 %v8975, %v8823
        %v9282 = vmul.f32 %v8980, %v8802
        %v9283 = vmul.f32 %v8980, %v8823
        %v9284 = vmul.f32 %v8985, %v8802
        %v9285 = vmul.f32 %v8985, %v8823
        %v9286 = vmul.f32 %v8990, %v8802
        %v9287 = vmul.f32 %v8990, %v8823
        %v9288 = vmul.f32 %v8995, %v8802
        %v9289 = vmul.f32 %v8995, %v8823
        %v9290 = vmul.f32 %v9000, %v8802
        %v9291 = vmul.f32 %v9000, %v8823
        %v9292 = vmul.f32 %v9005, %v8802
        %v9293 = vmul.f32 %v9005, %v8823
        %v9294 = vmul.f32 %v9010, %v8802
        %v9295 = vmul.f32 %v9010, %v8823
        %v9296 = vmul.f32 %v9015, %v8802
        %v9297 = vmul.f32 %v9015, %v8823
        %v9298 = vmul.f32 %v9020, %v8802
        %v9299 = vmul.f32 %v9020, %v8823
        %v9300 = vmul.f32 %v9025, %v8802
        %v9301 = vmul.f32 %v9025, %v8823
        %v9302 = vmul.f32 %v9030, %v8802
        %v9303 = vmul.f32 %v9030, %v8823
        %v9304 = vmul.f32 %v9035, %v8802
        %v9305 = vmul.f32 %v9035, %v8823
        %v9306 = vmul.f32 %v9040, %v8802
        %v9307 = vmul.f32 %v9040, %v8823
        %v9308 = vmul.f32 %v9045, %v8802
        %v9309 = vmul.f32 %v9045, %v8823
        %v9310 = vmul.f32 %v9050, %v8802
        %v9311 = vmul.f32 %v9050, %v8823
        %v9312 = vmul.f32 %v9055, %v8802
        %v9313 = vmul.f32 %v9055, %v8823
        %v9314 = vmul.f32 %v9060, %v8802
        %v9315 = vmul.f32 %v9060, %v8823
        %v9316 = vmul.f32 %v9065, %v8802
        %v9317 = vmul.f32 %v9065, %v8823
        %v9318 = vmul.f32 %v9070, %v8802
        %v9319 = vmul.f32 %v9070, %v8823
        %v9320 = vmul.f32 %v9075, %v8802
        %v9321 = vmul.f32 %v9075, %v8823
        %v9322 = vmul.f32 %v9080, %v8802
        %v9323 = vmul.f32 %v9080, %v8823
        %v9324 = vmul.f32 %v9085, %v8802
        %v9325 = vmul.f32 %v9085, %v8823
        %v9326 = vmul.f32 %v9090, %v8802
        %v9327 = vmul.f32 %v9090, %v8823
        %v9328 = vmul.f32 %v9095, %v8802
        %v9329 = vmul.f32 %v9095, %v8823
        %v9330 = vmul.f32 %v9100, %v8802
        %v9331 = vmul.f32 %v9100, %v8823
        %v9332 = vmul.f32 %v9105, %v8802
        %v9333 = vmul.f32 %v9105, %v8823
        %v9334 = vmul.f32 %v9110, %v8802
        %v9335 = vmul.f32 %v9110, %v8823
        %v9336 = vmul.f32 %v9115, %v8802
        %v9337 = vmul.f32 %v9115, %v8823
        %v9338 = vmul.f32 %v9120, %v8802
        %v9339 = vmul.f32 %v9120, %v8823
        %v9340 = vmul.f32 %v9125, %v8802
        %v9341 = vmul.f32 %v9125, %v8823
        %v9342 = vmul.f32 %v9130, %v8802
        %v9343 = vmul.f32 %v9130, %v8823
        %v9344 = vmul.f32 %v9135, %v8802
        %v9345 = vmul.f32 %v9135, %v8823
        %v9346 = vmul.f32 %v9140, %v8802
        %v9347 = vmul.f32 %v9140, %v8823
        %v9348 = vmul.f32 %v9145, %v8802
        %v9349 = vmul.f32 %v9145, %v8823
        %v9350 = vmul.f32 %v9150, %v8802
        %v9351 = vmul.f32 %v9150, %v8823
        %v9352 = vmul.f32 %v9155, %v8802
        %v9353 = vmul.f32 %v9155, %v8823
        %v9354 = vmul.f32 %v9160, %v8802
        %v9355 = vmul.f32 %v9160, %v8823
        %v9356 = vmul.f32 %v9165, %v8802
        %v9357 = vmul.f32 %v9165, %v8823
        %v9358 = vmul.f32 %v9170, %v8802
        %v9359 = vmul.f32 %v9170, %v8823
        %v9360 = vmul.f32 %v9175, %v8802
        %v9361 = vmul.f32 %v9175, %v8823
        %v9362 = vmul.f32 %v9180, %v8802
        %v9363 = vmul.f32 %v9180, %v8823
        %v9364 = vmul.f32 %v9185, %v8802
        %v9365 = vmul.f32 %v9185, %v8823
        %v9366 = vmul.f32 %v9190, %v8802
        %v9367 = vmul.f32 %v9190, %v8823
        %v9368 = vmul.f32 %v9195, %v8802
        %v9369 = vmul.f32 %v9195, %v8823
        %v9370 = vmul.f32 %v9200, %v8802
        %v9371 = vmul.f32 %v9200, %v8823
        %v9372 = vmul.f32 %v9205, %v8802
        %v9373 = vmul.f32 %v9205, %v8823
        %v9374 = vmul.f32 %v9210, %v8802
        %v9375 = vmul.f32 %v9210, %v8823
        %v9376 = vmul.f32 %v9215, %v8802
        %v9377 = vmul.f32 %v9215, %v8823
        %v9378 = vmul.f32 %v9220, %v8802
        %v9379 = vmul.f32 %v9220, %v8823
        %v9380 = vmul.f32 %v9225, %v8802
        %v9381 = vmul.f32 %v9225, %v8823
        %v9382 = vmul.f32 %v9230, %v8802
        %v9383 = vmul.f32 %v9230, %v8823
        %v9384 = vmul.f32 %v9235, %v8802
        %v9385 = vmul.f32 %v9235, %v8823
        %v9386 = vmul.f32 %v9240, %v8802
        %v9387 = vmul.f32 %v9240, %v8823
        %v9388 = vmul.f32 %v9245, %v8802
        %v9389 = vmul.f32 %v9245, %v8823
        %v9390 = vmul.f32 %v9250, %v8802
        %v9391 = vmul.f32 %v9250, %v8823
        %v9392 = vmul.f32 %v9255, %v8802
        %v9393 = vmul.f32 %v9255, %v8823
        %v9394 = vmul.f32 %v9260, %v8802
        %v9395 = vmul.f32 %v9260, %v8823
        %v9396 = vmul.f32 %v9265, %v8802
        %v9397 = vmul.f32 %v9265, %v8823
        %v9398 = vmul.f32 %v9270, %v8802
        %v9399 = vmul.f32 %v9270, %v8823
        %v9464 = vunpack.c.l.b16 %v8824
        %v9465 = vunpack.c.h.b16 %v8824
        %v9466 = vunpack.c.l.b16 %v8825
        %v9467 = vunpack.c.h.b16 %v8825
        %v9468 = vunpack.c.l.b16 %v8826
        %v9469 = vunpack.c.h.b16 %v8826
        %v9470 = vunpack.c.l.b16 %v8827
        %v9471 = vunpack.c.h.b16 %v8827
        %v9472 = vunpack.c.l.b16 %v8828
        %v9473 = vunpack.c.h.b16 %v8828
        %v9474 = vunpack.c.l.b16 %v8829
        %v9475 = vunpack.c.h.b16 %v8829
        %v9476 = vunpack.c.l.b16 %v8830
        %v9477 = vunpack.c.h.b16 %v8830
        %v9478 = vunpack.c.l.b16 %v8831
        %v9479 = vunpack.c.h.b16 %v8831
        %v9480 = vunpack.c.l.b16 %v8832
        %v9481 = vunpack.c.h.b16 %v8832
        %v9482 = vunpack.c.l.b16 %v8833
        %v9483 = vunpack.c.h.b16 %v8833
        %v9484 = vunpack.c.l.b16 %v8834
        %v9485 = vunpack.c.h.b16 %v8834
        %v9486 = vunpack.c.l.b16 %v8835
        %v9487 = vunpack.c.h.b16 %v8835
        %v9488 = vunpack.c.l.b16 %v8836
        %v9489 = vunpack.c.h.b16 %v8836
        %v9490 = vunpack.c.l.b16 %v8837
        %v9491 = vunpack.c.h.b16 %v8837
        %v9492 = vunpack.c.l.b16 %v8838
        %v9493 = vunpack.c.h.b16 %v8838
        %v9494 = vunpack.c.l.b16 %v8839
        %v9495 = vunpack.c.h.b16 %v8839
        %v9496 = vunpack.c.l.b16 %v8840
        %v9497 = vunpack.c.h.b16 %v8840
        %v9498 = vunpack.c.l.b16 %v8841
        %v9499 = vunpack.c.h.b16 %v8841
        %v9500 = vunpack.c.l.b16 %v8842
        %v9501 = vunpack.c.h.b16 %v8842
        %v9502 = vunpack.c.l.b16 %v8843
        %v9503 = vunpack.c.h.b16 %v8843
        %v9504 = vunpack.c.l.b16 %v8844
        %v9505 = vunpack.c.h.b16 %v8844
        %v9506 = vunpack.c.l.b16 %v8845
        %v9507 = vunpack.c.h.b16 %v8845
        %v9508 = vunpack.c.l.b16 %v8846
        %v9509 = vunpack.c.h.b16 %v8846
        %v9510 = vunpack.c.l.b16 %v8847
        %v9511 = vunpack.c.h.b16 %v8847
        %v9512 = vunpack.c.l.b16 %v8848
        %v9513 = vunpack.c.h.b16 %v8848
        %v9514 = vunpack.c.l.b16 %v8849
        %v9515 = vunpack.c.h.b16 %v8849
        %v9516 = vunpack.c.l.b16 %v8850
        %v9517 = vunpack.c.h.b16 %v8850
        %v9518 = vunpack.c.l.b16 %v8851
        %v9519 = vunpack.c.h.b16 %v8851
        %v9520 = vunpack.c.l.b16 %v8852
        %v9521 = vunpack.c.h.b16 %v8852
        %v9522 = vunpack.c.l.b16 %v8853
        %v9523 = vunpack.c.h.b16 %v8853
        %v9524 = vunpack.c.l.b16 %v8854
        %v9525 = vunpack.c.h.b16 %v8854
        %v9526 = vunpack.c.l.b16 %v8855
        %v9527 = vunpack.c.h.b16 %v8855
        %v9528 = vunpack.c.l.b16 %v8856
        %v9529 = vunpack.c.h.b16 %v8856
        %v9530 = vunpack.c.l.b16 %v8857
        %v9531 = vunpack.c.h.b16 %v8857
        %v9532 = vunpack.c.l.b16 %v8858
        %v9533 = vunpack.c.h.b16 %v8858
        %v9534 = vunpack.c.l.b16 %v8859
        %v9535 = vunpack.c.h.b16 %v8859
        %v9536 = vunpack.c.l.b16 %v8860
        %v9537 = vunpack.c.h.b16 %v8860
        %v9538 = vunpack.c.l.b16 %v8861
        %v9539 = vunpack.c.h.b16 %v8861
        %v9540 = vunpack.c.l.b16 %v8862
        %v9541 = vunpack.c.h.b16 %v8862
        %v9542 = vunpack.c.l.b16 %v8863
        %v9543 = vunpack.c.h.b16 %v8863
        %v9544 = vunpack.c.l.b16 %v8864
        %v9545 = vunpack.c.h.b16 %v8864
        %v9546 = vunpack.c.l.b16 %v8865
        %v9547 = vunpack.c.h.b16 %v8865
        %v9548 = vunpack.c.l.b16 %v8866
        %v9549 = vunpack.c.h.b16 %v8866
        %v9550 = vunpack.c.l.b16 %v8867
        %v9551 = vunpack.c.h.b16 %v8867
        %v9552 = vunpack.c.l.b16 %v8868
        %v9553 = vunpack.c.h.b16 %v8868
        %v9554 = vunpack.c.l.b16 %v8869
        %v9555 = vunpack.c.h.b16 %v8869
        %v9556 = vunpack.c.l.b16 %v8870
        %v9557 = vunpack.c.h.b16 %v8870
        %v9558 = vunpack.c.l.b16 %v8871
        %v9559 = vunpack.c.h.b16 %v8871
        %v9560 = vunpack.c.l.b16 %v8872
        %v9561 = vunpack.c.h.b16 %v8872
        %v9562 = vunpack.c.l.b16 %v8873
        %v9563 = vunpack.c.h.b16 %v8873
        %v9564 = vunpack.c.l.b16 %v8874
        %v9565 = vunpack.c.h.b16 %v8874
        %v9566 = vunpack.c.l.b16 %v8875
        %v9567 = vunpack.c.h.b16 %v8875
        %v9568 = vunpack.c.l.b16 %v8876
        %v9569 = vunpack.c.h.b16 %v8876
        %v9570 = vunpack.c.l.b16 %v8877
        %v9571 = vunpack.c.h.b16 %v8877
        %v9572 = vunpack.c.l.b16 %v8878
        %v9573 = vunpack.c.h.b16 %v8878
        %v9574 = vunpack.c.l.b16 %v8879
        %v9575 = vunpack.c.h.b16 %v8879
        %v9576 = vunpack.c.l.b16 %v8880
        %v9577 = vunpack.c.h.b16 %v8880
        %v9578 = vunpack.c.l.b16 %v8881
        %v9579 = vunpack.c.h.b16 %v8881
        %v9580 = vunpack.c.l.b16 %v8882
        %v9581 = vunpack.c.h.b16 %v8882
        %v9582 = vunpack.c.l.b16 %v8883
        %v9583 = vunpack.c.h.b16 %v8883
        %v9584 = vunpack.c.l.b16 %v8884
        %v9585 = vunpack.c.h.b16 %v8884
        %v9586 = vunpack.c.l.b16 %v8885
        %v9587 = vunpack.c.h.b16 %v8885
        %v9588 = vunpack.c.l.b16 %v8886
        %v9589 = vunpack.c.h.b16 %v8886
        %v9590 = vunpack.c.l.b16 %v8887
        %v9591 = vunpack.c.h.b16 %v8887
        %v9592 = vpack.c.b16 %v9466, %v9464
        %v9593 = vpack.c.b16 %v9467, %v9465
        %v9594 = vpack.c.b16 %v9470, %v9468
        %v9595 = vpack.c.b16 %v9471, %v9469
        %v9596 = vpack.c.b16 %v9474, %v9472
        %v9597 = vpack.c.b16 %v9475, %v9473
        %v9598 = vpack.c.b16 %v9478, %v9476
        %v9599 = vpack.c.b16 %v9479, %v9477
        %v9600 = vpack.c.b16 %v9482, %v9480
        %v9601 = vpack.c.b16 %v9483, %v9481
        %v9602 = vpack.c.b16 %v9486, %v9484
        %v9603 = vpack.c.b16 %v9487, %v9485
        %v9604 = vpack.c.b16 %v9490, %v9488
        %v9605 = vpack.c.b16 %v9491, %v9489
        %v9606 = vpack.c.b16 %v9494, %v9492
        %v9607 = vpack.c.b16 %v9495, %v9493
        %v9608 = vpack.c.b16 %v9498, %v9496
        %v9609 = vpack.c.b16 %v9499, %v9497
        %v9610 = vpack.c.b16 %v9502, %v9500
        %v9611 = vpack.c.b16 %v9503, %v9501
        %v9612 = vpack.c.b16 %v9506, %v9504
        %v9613 = vpack.c.b16 %v9507, %v9505
        %v9614 = vpack.c.b16 %v9510, %v9508
        %v9615 = vpack.c.b16 %v9511, %v9509
        %v9616 = vpack.c.b16 %v9514, %v9512
        %v9617 = vpack.c.b16 %v9515, %v9513
        %v9618 = vpack.c.b16 %v9518, %v9516
        %v9619 = vpack.c.b16 %v9519, %v9517
        %v9620 = vpack.c.b16 %v9522, %v9520
        %v9621 = vpack.c.b16 %v9523, %v9521
        %v9622 = vpack.c.b16 %v9526, %v9524
        %v9623 = vpack.c.b16 %v9527, %v9525
        %v9624 = vpack.c.b16 %v9530, %v9528
        %v9625 = vpack.c.b16 %v9531, %v9529
        %v9626 = vpack.c.b16 %v9534, %v9532
        %v9627 = vpack.c.b16 %v9535, %v9533
        %v9628 = vpack.c.b16 %v9538, %v9536
        %v9629 = vpack.c.b16 %v9539, %v9537
        %v9630 = vpack.c.b16 %v9542, %v9540
        %v9631 = vpack.c.b16 %v9543, %v9541
        %v9632 = vpack.c.b16 %v9546, %v9544
        %v9633 = vpack.c.b16 %v9547, %v9545
        %v9634 = vpack.c.b16 %v9550, %v9548
        %v9635 = vpack.c.b16 %v9551, %v9549
        %v9636 = vpack.c.b16 %v9554, %v9552
        %v9637 = vpack.c.b16 %v9555, %v9553
        %v9638 = vpack.c.b16 %v9558, %v9556
        %v9639 = vpack.c.b16 %v9559, %v9557
        %v9640 = vpack.c.b16 %v9562, %v9560
        %v9641 = vpack.c.b16 %v9563, %v9561
        %v9642 = vpack.c.b16 %v9566, %v9564
        %v9643 = vpack.c.b16 %v9567, %v9565
        %v9644 = vpack.c.b16 %v9570, %v9568
        %v9645 = vpack.c.b16 %v9571, %v9569
        %v9646 = vpack.c.b16 %v9574, %v9572
        %v9647 = vpack.c.b16 %v9575, %v9573
        %v9648 = vpack.c.b16 %v9578, %v9576
        %v9649 = vpack.c.b16 %v9579, %v9577
        %v9650 = vpack.c.b16 %v9582, %v9580
        %v9651 = vpack.c.b16 %v9583, %v9581
        %v9652 = vpack.c.b16 %v9586, %v9584
        %v9653 = vpack.c.b16 %v9587, %v9585
        %v9654 = vpack.c.b16 %v9590, %v9588
        %v9655 = vpack.c.b16 %v9591, %v9589
        %9720 = vmatprep.subr.bf16.mxu0 %v8751
        %9721 = vmatpush1.bf16.msra.mxu0 %v8750
        %9722 = vmatprep.subr.bf16.mxu0 %v8753
        %9723 = vmatpush1.bf16.msra.mxu0 %v8752
        %9724 = vmatprep.subr.bf16.mxu0 %v8755
        %9725 = vmatpush1.bf16.msra.mxu0 %v8754
        %9726 = vmatprep.subr.bf16.mxu0 %v8757
        %9727 = vmatpush1.bf16.msra.mxu0 %v8756
        %9728 = vmatprep.subr.bf16.mxu0 %v8759
        %9729 = vmatpush1.bf16.msra.mxu0 %v8758
        %9730 = vmatprep.subr.bf16.mxu0 %v8761
        %9731 = vmatpush1.bf16.msra.mxu0 %v8760
        %9732 = vmatprep.subr.bf16.mxu0 %v8763
        %9733 = vmatpush1.bf16.msra.mxu0 %v8762
        %9734 = vmatprep.subr.bf16.mxu0 %v8765
        %9735 = vmatpush1.bf16.msra.mxu0 %v8764
        %9736 = vmatprep.subr.bf16.mxu0 %v8767
        %9737 = vmatpush1.bf16.msra.mxu0 %v8766
        %9738 = vmatprep.subr.bf16.mxu0 %v8769
        %9739 = vmatpush1.bf16.msra.mxu0 %v8768
        %9740 = vmatprep.subr.bf16.mxu0 %v8771
        %9741 = vmatpush1.bf16.msra.mxu0 %v8770
        %9742 = vmatprep.subr.bf16.mxu0 %v8773
        %9743 = vmatpush1.bf16.msra.mxu0 %v8772
        %9744 = vmatprep.subr.bf16.mxu0 %v8775
        %9745 = vmatpush1.bf16.msra.mxu0 %v8774
        %9746 = vmatprep.subr.bf16.mxu0 %v8777
        %9747 = vmatpush1.bf16.msra.mxu0 %v8776
        %9748 = vmatprep.subr.bf16.mxu0 %v8779
        %9749 = vmatpush1.bf16.msra.mxu0 %v8778
        %9750 = vmatprep.subr.bf16.mxu0 %v8781
        %9751 = vmatpush1.bf16.msra.mxu0 %v8780
        %9752 = vmatprep.mubr.bf16.mxu0 %v9593
        %9753 = vmatmul.mubr.bf16.gmra.mrb[0].mxu0 %v9592
        %v9754 = vpop.f32.mrb[0].mxu0
        %v9755 = vadd.f32 %v9272, %v9754
        %v9756 = vpop.f32.mrb[0].mxu0
        %v9757 = vadd.f32 %v9273, %v9756
        %v9758 = vpop.f32.mrb[0].mxu0
        %v9759 = vadd.f32 %v9274, %v9758
        %v9760 = vpop.f32.mrb[0].mxu0
        %v9761 = vadd.f32 %v9275, %v9760
        %9762 = vmatprep.mubr.bf16.mxu0 %v9595
        %9763 = vmatmul.mubr.bf16.gmra.mrb[0].mxu0 %v9594
        %v9764 = vpop.f32.mrb[0].mxu0
        %v9765 = vadd.f32 %v9276, %v9764
        %v9766 = vpop.f32.mrb[0].mxu0
        %v9767 = vadd.f32 %v9277, %v9766
        %v9768 = vpop.f32.mrb[0].mxu0
        %v9769 = vadd.f32 %v9278, %v9768
        %v9770 = vpop.f32.mrb[0].mxu0
        %v9771 = vadd.f32 %v9279, %v9770
        %9772 = vmatprep.mubr.bf16.mxu0 %v9597
        %9773 = vmatmul.mubr.bf16.gmra.mrb[0].mxu0 %v9596
        %v9774 = vpop.f32.mrb[0].mxu0
        %v9775 = vadd.f32 %v9280, %v9774
        %v9776 = vpop.f32.mrb[0].mxu0
        %v9777 = vadd.f32 %v9281, %v9776
        %v9778 = vpop.f32.mrb[0].mxu0
        %v9779 = vadd.f32 %v9282, %v9778
        %v9780 = vpop.f32.mrb[0].mxu0
        %v9781 = vadd.f32 %v9283, %v9780
        %9782 = vmatprep.mubr.bf16.mxu0 %v9599
        %9783 = vmatmul.mubr.bf16.gmra.mrb[0].mxu0 %v9598
        %v9784 = vpop.f32.mrb[0].mxu0
        %v9785 = vadd.f32 %v9284, %v9784
        %v9786 = vpop.f32.mrb[0].mxu0
        %v9787 = vadd.f32 %v9285, %v9786
        %v9788 = vpop.f32.mrb[0].mxu0
        %v9789 = vadd.f32 %v9286, %v9788
        %v9790 = vpop.f32.mrb[0].mxu0
        %v9791 = vadd.f32 %v9287, %v9790
        %9792 = vmatprep.mubr.bf16.mxu0 %v9601
        %9793 = vmatmul.mubr.bf16.gmra.mrb[0].mxu0 %v9600
        %v9794 = vpop.f32.mrb[0].mxu0
        %v9795 = vadd.f32 %v9288, %v9794
        %v9796 = vpop.f32.mrb[0].mxu0
        %v9797 = vadd.f32 %v9289, %v9796
        %v9798 = vpop.f32.mrb[0].mxu0
        %v9799 = vadd.f32 %v9290, %v9798
        %v9800 = vpop.f32.mrb[0].mxu0
        %v9801 = vadd.f32 %v9291, %v9800
        %9802 = vmatprep.mubr.bf16.mxu0 %v9603
        %9803 = vmatmul.mubr.bf16.gmra.mrb[0].mxu0 %v9602
        %v9804 = vpop.f32.mrb[0].mxu0
        %v9805 = vadd.f32 %v9292, %v9804
        %v9806 = vpop.f32.mrb[0].mxu0
        %v9807 = vadd.f32 %v9293, %v9806
        %v9808 = vpop.f32.mrb[0].mxu0
        %v9809 = vadd.f32 %v9294, %v9808
        %v9810 = vpop.f32.mrb[0].mxu0
        %v9811 = vadd.f32 %v9295, %v9810
        %9812 = vmatprep.mubr.bf16.mxu0 %v9605
        %9813 = vmatmul.mubr.bf16.gmra.mrb[0].mxu0 %v9604
        %v9814 = vpop.f32.mrb[0].mxu0
        %v9815 = vadd.f32 %v9296, %v9814
        %v9816 = vpop.f32.mrb[0].mxu0
        %v9817 = vadd.f32 %v9297, %v9816
        %v9818 = vpop.f32.mrb[0].mxu0
        %v9819 = vadd.f32 %v9298, %v9818
        %v9820 = vpop.f32.mrb[0].mxu0
        %v9821 = vadd.f32 %v9299, %v9820
        %9822 = vmatprep.mubr.bf16.mxu0 %v9607
        %9823 = vmatmul.mubr.bf16.gmra.mrb[0].mxu0 %v9606
        %v9824 = vpop.f32.mrb[0].mxu0
        %v9825 = vadd.f32 %v9300, %v9824
        %v9826 = vpop.f32.mrb[0].mxu0
        %v9827 = vadd.f32 %v9301, %v9826
        %v9828 = vpop.f32.mrb[0].mxu0
        %v9829 = vadd.f32 %v9302, %v9828
        %v9830 = vpop.f32.mrb[0].mxu0
        %v9831 = vadd.f32 %v9303, %v9830
        %9832 = vmatprep.mubr.bf16.mxu0 %v9609
        %9833 = vmatmul.mubr.bf16.gmra.mrb[0].mxu0 %v9608
        %v9834 = vpop.f32.mrb[0].mxu0
        %v9835 = vadd.f32 %v9304, %v9834
        %v9836 = vpop.f32.mrb[0].mxu0
        %v9837 = vadd.f32 %v9305, %v9836
        %v9838 = vpop.f32.mrb[0].mxu0
        %v9839 = vadd.f32 %v9306, %v9838
        %v9840 = vpop.f32.mrb[0].mxu0
        %v9841 = vadd.f32 %v9307, %v9840
        %9842 = vmatprep.mubr.bf16.mxu0 %v9611
        %9843 = vmatmul.mubr.bf16.gmra.mrb[0].mxu0 %v9610
        %v9844 = vpop.f32.mrb[0].mxu0
        %v9845 = vadd.f32 %v9308, %v9844
        %v9846 = vpop.f32.mrb[0].mxu0
        %v9847 = vadd.f32 %v9309, %v9846
        %v9848 = vpop.f32.mrb[0].mxu0
        %v9849 = vadd.f32 %v9310, %v9848
        %v9850 = vpop.f32.mrb[0].mxu0
        %v9851 = vadd.f32 %v9311, %v9850
        %9852 = vmatprep.mubr.bf16.mxu0 %v9613
        %9853 = vmatmul.mubr.bf16.gmra.mrb[0].mxu0 %v9612
        %v9854 = vpop.f32.mrb[0].mxu0
        %v9855 = vadd.f32 %v9312, %v9854
        %v9856 = vpop.f32.mrb[0].mxu0
        %v9857 = vadd.f32 %v9313, %v9856
        %v9858 = vpop.f32.mrb[0].mxu0
        %v9859 = vadd.f32 %v9314, %v9858
        %v9860 = vpop.f32.mrb[0].mxu0
        %v9861 = vadd.f32 %v9315, %v9860
        %9862 = vmatprep.mubr.bf16.mxu0 %v9615
        %9863 = vmatmul.mubr.bf16.gmra.mrb[0].mxu0 %v9614
        %v9864 = vpop.f32.mrb[0].mxu0
        %v9865 = vadd.f32 %v9316, %v9864
        %v9866 = vpop.f32.mrb[0].mxu0
        %v9867 = vadd.f32 %v9317, %v9866
        %v9868 = vpop.f32.mrb[0].mxu0
        %v9869 = vadd.f32 %v9318, %v9868
        %v9870 = vpop.f32.mrb[0].mxu0
        %v9871 = vadd.f32 %v9319, %v9870
        %9872 = vmatprep.mubr.bf16.mxu0 %v9617
        %9873 = vmatmul.mubr.bf16.gmra.mrb[0].mxu0 %v9616
        %v9874 = vpop.f32.mrb[0].mxu0
        %v9875 = vadd.f32 %v9320, %v9874
        %v9876 = vpop.f32.mrb[0].mxu0
        %v9877 = vadd.f32 %v9321, %v9876
        %v9878 = vpop.f32.mrb[0].mxu0
        %v9879 = vadd.f32 %v9322, %v9878
        %v9880 = vpop.f32.mrb[0].mxu0
        %v9881 = vadd.f32 %v9323, %v9880
        %9882 = vmatprep.mubr.bf16.mxu0 %v9619
        %9883 = vmatmul.mubr.bf16.gmra.mrb[0].mxu0 %v9618
        %v9884 = vpop.f32.mrb[0].mxu0
        %v9885 = vadd.f32 %v9324, %v9884
        %v9886 = vpop.f32.mrb[0].mxu0
        %v9887 = vadd.f32 %v9325, %v9886
        %v9888 = vpop.f32.mrb[0].mxu0
        %v9889 = vadd.f32 %v9326, %v9888
        %v9890 = vpop.f32.mrb[0].mxu0
        %v9891 = vadd.f32 %v9327, %v9890
        %9892 = vmatprep.mubr.bf16.mxu0 %v9621
        %9893 = vmatmul.mubr.bf16.gmra.mrb[0].mxu0 %v9620
        %v9894 = vpop.f32.mrb[0].mxu0
        %v9895 = vadd.f32 %v9328, %v9894
        %v9896 = vpop.f32.mrb[0].mxu0
        %v9897 = vadd.f32 %v9329, %v9896
        %v9898 = vpop.f32.mrb[0].mxu0
        %v9899 = vadd.f32 %v9330, %v9898
        %v9900 = vpop.f32.mrb[0].mxu0
        %v9901 = vadd.f32 %v9331, %v9900
        %9902 = vmatprep.mubr.bf16.mxu0 %v9623
        %9903 = vmatmul.mubr.bf16.gmra.mrb[0].mxu0 %v9622
        %v9904 = vpop.f32.mrb[0].mxu0
        %v9905 = vadd.f32 %v9332, %v9904
        %v9906 = vpop.f32.mrb[0].mxu0
        %v9907 = vadd.f32 %v9333, %v9906
        %v9908 = vpop.f32.mrb[0].mxu0
        %v9909 = vadd.f32 %v9334, %v9908
        %v9910 = vpop.f32.mrb[0].mxu0
        %v9911 = vadd.f32 %v9335, %v9910
        %9912 = vmatprep.mubr.bf16.mxu0 %v9625
        %9913 = vmatmul.mubr.bf16.gmra.mrb[0].mxu0 %v9624
        %v9914 = vpop.f32.mrb[0].mxu0
        %v9915 = vadd.f32 %v9336, %v9914
        %v9916 = vpop.f32.mrb[0].mxu0
        %v9917 = vadd.f32 %v9337, %v9916
        %v9918 = vpop.f32.mrb[0].mxu0
        %v9919 = vadd.f32 %v9338, %v9918
        %v9920 = vpop.f32.mrb[0].mxu0
        %v9921 = vadd.f32 %v9339, %v9920
        %9922 = vmatprep.mubr.bf16.mxu0 %v9627
        %9923 = vmatmul.mubr.bf16.gmra.mrb[0].mxu0 %v9626
        %v9924 = vpop.f32.mrb[0].mxu0
        %v9925 = vadd.f32 %v9340, %v9924
        %v9926 = vpop.f32.mrb[0].mxu0
        %v9927 = vadd.f32 %v9341, %v9926
        %v9928 = vpop.f32.mrb[0].mxu0
        %v9929 = vadd.f32 %v9342, %v9928
        %v9930 = vpop.f32.mrb[0].mxu0
        %v9931 = vadd.f32 %v9343, %v9930
        %9932 = vmatprep.mubr.bf16.mxu0 %v9629
        %9933 = vmatmul.mubr.bf16.gmra.mrb[0].mxu0 %v9628
        %v9934 = vpop.f32.mrb[0].mxu0
        %v9935 = vadd.f32 %v9344, %v9934
        %v9936 = vpop.f32.mrb[0].mxu0
        %v9937 = vadd.f32 %v9345, %v9936
        %v9938 = vpop.f32.mrb[0].mxu0
        %v9939 = vadd.f32 %v9346, %v9938
        %v9940 = vpop.f32.mrb[0].mxu0
        %v9941 = vadd.f32 %v9347, %v9940
        %9942 = vmatprep.mubr.bf16.mxu0 %v9631
        %9943 = vmatmul.mubr.bf16.gmra.mrb[0].mxu0 %v9630
        %v9944 = vpop.f32.mrb[0].mxu0
        %v9945 = vadd.f32 %v9348, %v9944
        %v9946 = vpop.f32.mrb[0].mxu0
        %v9947 = vadd.f32 %v9349, %v9946
        %v9948 = vpop.f32.mrb[0].mxu0
        %v9949 = vadd.f32 %v9350, %v9948
        %v9950 = vpop.f32.mrb[0].mxu0
        %v9951 = vadd.f32 %v9351, %v9950
        %9952 = vmatprep.mubr.bf16.mxu0 %v9633
        %9953 = vmatmul.mubr.bf16.gmra.mrb[0].mxu0 %v9632
        %v9954 = vpop.f32.mrb[0].mxu0
        %v9955 = vadd.f32 %v9352, %v9954
        %v9956 = vpop.f32.mrb[0].mxu0
        %v9957 = vadd.f32 %v9353, %v9956
        %v9958 = vpop.f32.mrb[0].mxu0
        %v9959 = vadd.f32 %v9354, %v9958
        %v9960 = vpop.f32.mrb[0].mxu0
        %v9961 = vadd.f32 %v9355, %v9960
        %9962 = vmatprep.mubr.bf16.mxu0 %v9635
        %9963 = vmatmul.mubr.bf16.gmra.mrb[0].mxu0 %v9634
        %v9964 = vpop.f32.mrb[0].mxu0
        %v9965 = vadd.f32 %v9356, %v9964
        %v9966 = vpop.f32.mrb[0].mxu0
        %v9967 = vadd.f32 %v9357, %v9966
        %v9968 = vpop.f32.mrb[0].mxu0
        %v9969 = vadd.f32 %v9358, %v9968
        %v9970 = vpop.f32.mrb[0].mxu0
        %v9971 = vadd.f32 %v9359, %v9970
        %9972 = vmatprep.mubr.bf16.mxu0 %v9637
        %9973 = vmatmul.mubr.bf16.gmra.mrb[0].mxu0 %v9636
        %v9974 = vpop.f32.mrb[0].mxu0
        %v9975 = vadd.f32 %v9360, %v9974
        %v9976 = vpop.f32.mrb[0].mxu0
        %v9977 = vadd.f32 %v9361, %v9976
        %v9978 = vpop.f32.mrb[0].mxu0
        %v9979 = vadd.f32 %v9362, %v9978
        %v9980 = vpop.f32.mrb[0].mxu0
        %v9981 = vadd.f32 %v9363, %v9980
        %9982 = vmatprep.mubr.bf16.mxu0 %v9639
        %9983 = vmatmul.mubr.bf16.gmra.mrb[0].mxu0 %v9638
        %v9984 = vpop.f32.mrb[0].mxu0
        %v9985 = vadd.f32 %v9364, %v9984
        %v9986 = vpop.f32.mrb[0].mxu0
        %v9987 = vadd.f32 %v9365, %v9986
        %v9988 = vpop.f32.mrb[0].mxu0
        %v9989 = vadd.f32 %v9366, %v9988
        %v9990 = vpop.f32.mrb[0].mxu0
        %v9991 = vadd.f32 %v9367, %v9990
        %9992 = vmatprep.mubr.bf16.mxu0 %v9641
        %9993 = vmatmul.mubr.bf16.gmra.mrb[0].mxu0 %v9640
        %v9994 = vpop.f32.mrb[0].mxu0
        %v9995 = vadd.f32 %v9368, %v9994
        %v9996 = vpop.f32.mrb[0].mxu0
        %v9997 = vadd.f32 %v9369, %v9996
        %v9998 = vpop.f32.mrb[0].mxu0
        %v9999 = vadd.f32 %v9370, %v9998
        %v10000 = vpop.f32.mrb[0].mxu0
        %v10001 = vadd.f32 %v9371, %v10000
        %10002 = vmatprep.mubr.bf16.mxu0 %v9643
        %10003 = vmatmul.mubr.bf16.gmra.mrb[0].mxu0 %v9642
        %v10004 = vpop.f32.mrb[0].mxu0
        %v10005 = vadd.f32 %v9372, %v10004
        %v10006 = vpop.f32.mrb[0].mxu0
        %v10007 = vadd.f32 %v9373, %v10006
        %v10008 = vpop.f32.mrb[0].mxu0
        %v10009 = vadd.f32 %v9374, %v10008
        %v10010 = vpop.f32.mrb[0].mxu0
        %v10011 = vadd.f32 %v9375, %v10010
        %10012 = vmatprep.mubr.bf16.mxu0 %v9645
        %10013 = vmatmul.mubr.bf16.gmra.mrb[0].mxu0 %v9644
        %v10014 = vpop.f32.mrb[0].mxu0
        %v10015 = vadd.f32 %v9376, %v10014
        %v10016 = vpop.f32.mrb[0].mxu0
        %v10017 = vadd.f32 %v9377, %v10016
        %v10018 = vpop.f32.mrb[0].mxu0
        %v10019 = vadd.f32 %v9378, %v10018
        %v10020 = vpop.f32.mrb[0].mxu0
        %v10021 = vadd.f32 %v9379, %v10020
        %10022 = vmatprep.mubr.bf16.mxu0 %v9647
        %10023 = vmatmul.mubr.bf16.gmra.mrb[0].mxu0 %v9646
        %v10024 = vpop.f32.mrb[0].mxu0
        %v10025 = vadd.f32 %v9380, %v10024
        %v10026 = vpop.f32.mrb[0].mxu0
        %v10027 = vadd.f32 %v9381, %v10026
        %v10028 = vpop.f32.mrb[0].mxu0
        %v10029 = vadd.f32 %v9382, %v10028
        %v10030 = vpop.f32.mrb[0].mxu0
        %v10031 = vadd.f32 %v9383, %v10030
        %10032 = vmatprep.mubr.bf16.mxu0 %v9649
        %10033 = vmatmul.mubr.bf16.gmra.mrb[0].mxu0 %v9648
        %v10034 = vpop.f32.mrb[0].mxu0
        %v10035 = vadd.f32 %v9384, %v10034
        %v10036 = vpop.f32.mrb[0].mxu0
        %v10037 = vadd.f32 %v9385, %v10036
        %v10038 = vpop.f32.mrb[0].mxu0
        %v10039 = vadd.f32 %v9386, %v10038
        %v10040 = vpop.f32.mrb[0].mxu0
        %v10041 = vadd.f32 %v9387, %v10040
        %10042 = vmatprep.mubr.bf16.mxu0 %v9651
        %10043 = vmatmul.mubr.bf16.gmra.mrb[0].mxu0 %v9650
        %v10044 = vpop.f32.mrb[0].mxu0
        %v10045 = vadd.f32 %v9388, %v10044
        %v10046 = vpop.f32.mrb[0].mxu0
        %v10047 = vadd.f32 %v9389, %v10046
        %v10048 = vpop.f32.mrb[0].mxu0
        %v10049 = vadd.f32 %v9390, %v10048
        %v10050 = vpop.f32.mrb[0].mxu0
        %v10051 = vadd.f32 %v9391, %v10050
        %10052 = vmatprep.mubr.bf16.mxu0 %v9653
        %10053 = vmatmul.mubr.bf16.gmra.mrb[0].mxu0 %v9652
        %v10054 = vpop.f32.mrb[0].mxu0
        %v10055 = vadd.f32 %v9392, %v10054
        %v10056 = vpop.f32.mrb[0].mxu0
        %v10057 = vadd.f32 %v9393, %v10056
        %v10058 = vpop.f32.mrb[0].mxu0
        %v10059 = vadd.f32 %v9394, %v10058
        %v10060 = vpop.f32.mrb[0].mxu0
        %v10061 = vadd.f32 %v9395, %v10060
        %10062 = vmatprep.mubr.bf16.mxu0 %v9655
        %10063 = vmatmul.mubr.bf16.gmra.mrb[0].mxu0 %v9654
        %v10064 = vpop.f32.mrb[0].mxu0
        %v10065 = vadd.f32 %v9396, %v10064
        %v10066 = vpop.f32.mrb[0].mxu0
        %v10067 = vadd.f32 %v9397, %v10066
        %v10068 = vpop.f32.mrb[0].mxu0
        %v10069 = vadd.f32 %v9398, %v10068
        %v10070 = vpop.f32.mrb[0].mxu0
        %v10071 = vadd.f32 %v9399, %v10070
        %10072 = vdwg.mxu0
        %10073 = vset.pattern.permute.xlu0 1
        %10074 = vperm.xlu0 %10073, %v8888
        %v10075 = vpop.permute.xlu0 %10074
        %10077 = vset.pattern.permute.xlu0 1
        %10078 = vperm.xlu0 %10077, %v8889
        %v10079 = vpop.permute.xlu0 %10078
        %10081 = vset.pattern.permute.xlu0 1
        %10082 = vperm.xlu0 %10081, %v8890
        %v10083 = vpop.permute.xlu0 %10082
        %10085 = vset.pattern.permute.xlu0 1
        %10086 = vperm.xlu0 %10085, %v8891
        %v10087 = vpop.permute.xlu0 %10086
        %10089 = vset.pattern.permute.xlu0 1
        %10090 = vperm.xlu0 %10089, %v8892
        %v10091 = vpop.permute.xlu0 %10090
        %10093 = vset.pattern.permute.xlu0 1
        %10094 = vperm.xlu0 %10093, %v8893
        %v10095 = vpop.permute.xlu0 %10094
        %10097 = vset.pattern.permute.xlu0 1
        %10098 = vperm.xlu0 %10097, %v8894
        %v10099 = vpop.permute.xlu0 %10098
        %10101 = vset.pattern.permute.xlu0 1
        %10102 = vperm.xlu0 %10101, %v8895
        %v10103 = vpop.permute.xlu0 %10102
        %10105 = vset.pattern.permute.xlu0 1
        %10106 = vperm.xlu0 %10105, %v8896
        %v10107 = vpop.permute.xlu0 %10106
        %10109 = vset.pattern.permute.xlu0 1
        %10110 = vperm.xlu0 %10109, %v8897
        %v10111 = vpop.permute.xlu0 %10110
        %10113 = vset.pattern.permute.xlu0 1
        %10114 = vperm.xlu0 %10113, %v8898
        %v10115 = vpop.permute.xlu0 %10114
        %10117 = vset.pattern.permute.xlu0 1
        %10118 = vperm.xlu0 %10117, %v8899
        %v10119 = vpop.permute.xlu0 %10118
        %10121 = vset.pattern.permute.xlu0 1
        %10122 = vperm.xlu0 %10121, %v8900
        %v10123 = vpop.permute.xlu0 %10122
        %10125 = vset.pattern.permute.xlu0 1
        %10126 = vperm.xlu0 %10125, %v8901
        %v10127 = vpop.permute.xlu0 %10126
        %10129 = vset.pattern.permute.xlu0 1
        %10130 = vperm.xlu0 %10129, %v8902
        %v10131 = vpop.permute.xlu0 %10130
        %10133 = vset.pattern.permute.xlu0 1
        %10134 = vperm.xlu0 %10133, %v8903
        %v10135 = vpop.permute.xlu0 %10134
        %10137 = vset.pattern.permute.xlu0 1
        %10138 = vperm.xlu0 %10137, %v8904
        %v10139 = vpop.permute.xlu0 %10138
        %10141 = vset.pattern.permute.xlu0 1
        %10142 = vperm.xlu0 %10141, %v8905
        %v10143 = vpop.permute.xlu0 %10142
        %10145 = vset.pattern.permute.xlu0 1
        %10146 = vperm.xlu0 %10145, %v8906
        %v10147 = vpop.permute.xlu0 %10146
        %10149 = vset.pattern.permute.xlu0 1
        %10150 = vperm.xlu0 %10149, %v8907
        %v10151 = vpop.permute.xlu0 %10150
        %10153 = vset.pattern.permute.xlu0 1
        %10154 = vperm.xlu0 %10153, %v8908
        %v10155 = vpop.permute.xlu0 %10154
        %10157 = vset.pattern.permute.xlu0 1
        %10158 = vperm.xlu0 %10157, %v8909
        %v10159 = vpop.permute.xlu0 %10158
        %10161 = vset.pattern.permute.xlu0 1
        %10162 = vperm.xlu0 %10161, %v8910
        %v10163 = vpop.permute.xlu0 %10162
        %10165 = vset.pattern.permute.xlu0 1
        %10166 = vperm.xlu0 %10165, %v8911
        %v10167 = vpop.permute.xlu0 %10166
        %10169 = vset.pattern.permute.xlu0 1
        %10170 = vperm.xlu0 %10169, %v8912
        %v10171 = vpop.permute.xlu0 %10170
        %10173 = vset.pattern.permute.xlu0 1
        %10174 = vperm.xlu0 %10173, %v8913
        %v10175 = vpop.permute.xlu0 %10174
        %10177 = vset.pattern.permute.xlu0 1
        %10178 = vperm.xlu0 %10177, %v8914
        %v10179 = vpop.permute.xlu0 %10178
        %10181 = vset.pattern.permute.xlu0 1
        %10182 = vperm.xlu0 %10181, %v8915
        %v10183 = vpop.permute.xlu0 %10182
        %10185 = vset.pattern.permute.xlu0 1
        %10186 = vperm.xlu0 %10185, %v8916
        %v10187 = vpop.permute.xlu0 %10186
        %10189 = vset.pattern.permute.xlu0 1
        %10190 = vperm.xlu0 %10189, %v8917
        %v10191 = vpop.permute.xlu0 %10190
        %10193 = vset.pattern.permute.xlu0 1
        %10194 = vperm.xlu0 %10193, %v8918
        %v10195 = vpop.permute.xlu0 %10194
        %10197 = vset.pattern.permute.xlu0 1
        %10198 = vperm.xlu0 %10197, %v8919
        %v10199 = vpop.permute.xlu0 %10198
        %10201 = vset.pattern.permute.xlu0 1
        %10202 = vperm.xlu0 %10201, %v8920
        %v10203 = vpop.permute.xlu0 %10202
        %10205 = vset.pattern.permute.xlu0 1
        %10206 = vperm.xlu0 %10205, %v8921
        %v10207 = vpop.permute.xlu0 %10206
        %10209 = vset.pattern.permute.xlu0 1
        %10210 = vperm.xlu0 %10209, %v8922
        %v10211 = vpop.permute.xlu0 %10210
        %10213 = vset.pattern.permute.xlu0 1
        %10214 = vperm.xlu0 %10213, %v8923
        %v10215 = vpop.permute.xlu0 %10214
        %10217 = vset.pattern.permute.xlu0 1
        %10218 = vperm.xlu0 %10217, %v8924
        %v10219 = vpop.permute.xlu0 %10218
        %10221 = vset.pattern.permute.xlu0 1
        %10222 = vperm.xlu0 %10221, %v8925
        %v10223 = vpop.permute.xlu0 %10222
        %10225 = vset.pattern.permute.xlu0 1
        %10226 = vperm.xlu0 %10225, %v8926
        %v10227 = vpop.permute.xlu0 %10226
        %10229 = vset.pattern.permute.xlu0 1
        %10230 = vperm.xlu0 %10229, %v8927
        %v10231 = vpop.permute.xlu0 %10230
        %10233 = vset.pattern.permute.xlu0 1
        %10234 = vperm.xlu0 %10233, %v8928
        %v10235 = vpop.permute.xlu0 %10234
        %10237 = vset.pattern.permute.xlu0 1
        %10238 = vperm.xlu0 %10237, %v8929
        %v10239 = vpop.permute.xlu0 %10238
        %10241 = vset.pattern.permute.xlu0 1
        %10242 = vperm.xlu0 %10241, %v8930
        %v10243 = vpop.permute.xlu0 %10242
        %10245 = vset.pattern.permute.xlu0 1
        %10246 = vperm.xlu0 %10245, %v8931
        %v10247 = vpop.permute.xlu0 %10246
        %10249 = vset.pattern.permute.xlu0 1
        %10250 = vperm.xlu0 %10249, %v8932
        %v10251 = vpop.permute.xlu0 %10250
        %10253 = vset.pattern.permute.xlu0 1
        %10254 = vperm.xlu0 %10253, %v8933
        %v10255 = vpop.permute.xlu0 %10254
        %10257 = vset.pattern.permute.xlu0 1
        %10258 = vperm.xlu0 %10257, %v8934
        %v10259 = vpop.permute.xlu0 %10258
        %10261 = vset.pattern.permute.xlu0 1
        %10262 = vperm.xlu0 %10261, %v8935
        %v10263 = vpop.permute.xlu0 %10262
        %10265 = vset.pattern.permute.xlu0 1
        %10266 = vperm.xlu0 %10265, %v8936
        %v10267 = vpop.permute.xlu0 %10266
        %10269 = vset.pattern.permute.xlu0 1
        %10270 = vperm.xlu0 %10269, %v8937
        %v10271 = vpop.permute.xlu0 %10270
        %10273 = vset.pattern.permute.xlu0 1
        %10274 = vperm.xlu0 %10273, %v8938
        %v10275 = vpop.permute.xlu0 %10274
        %10277 = vset.pattern.permute.xlu0 1
        %10278 = vperm.xlu0 %10277, %v8939
        %v10279 = vpop.permute.xlu0 %10278
        %10281 = vset.pattern.permute.xlu0 1
        %10282 = vperm.xlu0 %10281, %v8940
        %v10283 = vpop.permute.xlu0 %10282
        %10285 = vset.pattern.permute.xlu0 1
        %10286 = vperm.xlu0 %10285, %v8941
        %v10287 = vpop.permute.xlu0 %10286
        %10289 = vset.pattern.permute.xlu0 1
        %10290 = vperm.xlu0 %10289, %v8942
        %v10291 = vpop.permute.xlu0 %10290
        %10293 = vset.pattern.permute.xlu0 1
        %10294 = vperm.xlu0 %10293, %v8943
        %v10295 = vpop.permute.xlu0 %10294
        %10297 = vset.pattern.permute.xlu0 1
        %10298 = vperm.xlu0 %10297, %v8944
        %v10299 = vpop.permute.xlu0 %10298
        %10301 = vset.pattern.permute.xlu0 1
        %10302 = vperm.xlu0 %10301, %v8945
        %v10303 = vpop.permute.xlu0 %10302
        %10305 = vset.pattern.permute.xlu0 1
        %10306 = vperm.xlu0 %10305, %v8946
        %v10307 = vpop.permute.xlu0 %10306
        %10309 = vset.pattern.permute.xlu0 1
        %10310 = vperm.xlu0 %10309, %v8947
        %v10311 = vpop.permute.xlu0 %10310
        %10313 = vset.pattern.permute.xlu0 1
        %10314 = vperm.xlu0 %10313, %v8948
        %v10315 = vpop.permute.xlu0 %10314
        %10317 = vset.pattern.permute.xlu0 1
        %10318 = vperm.xlu0 %10317, %v8949
        %v10319 = vpop.permute.xlu0 %10318
        %10321 = vset.pattern.permute.xlu0 1
        %10322 = vperm.xlu0 %10321, %v8950
        %v10323 = vpop.permute.xlu0 %10322
        %10325 = vset.pattern.permute.xlu0 1
        %10326 = vperm.xlu0 %10325, %v8951
        %v10327 = vpop.permute.xlu0 %10326
        %v10329 = vadd.f32 %v9755, %v10075
        %v10330 = vadd.f32 %v9757, %v10075
        %v10331 = vadd.f32 %v9759, %v10079
        %v10332 = vadd.f32 %v9761, %v10079
        %v10333 = vadd.f32 %v9765, %v10083
        %v10334 = vadd.f32 %v9767, %v10083
        %v10335 = vadd.f32 %v9769, %v10087
        %v10336 = vadd.f32 %v9771, %v10087
        %v10337 = vadd.f32 %v9775, %v10091
        %v10338 = vadd.f32 %v9777, %v10091
        %v10339 = vadd.f32 %v9779, %v10095
        %v10340 = vadd.f32 %v9781, %v10095
        %v10341 = vadd.f32 %v9785, %v10099
        %v10342 = vadd.f32 %v9787, %v10099
        %v10343 = vadd.f32 %v9789, %v10103
        %v10344 = vadd.f32 %v9791, %v10103
        %v10345 = vadd.f32 %v9795, %v10107
        %v10346 = vadd.f32 %v9797, %v10107
        %v10347 = vadd.f32 %v9799, %v10111
        %v10348 = vadd.f32 %v9801, %v10111
        %v10349 = vadd.f32 %v9805, %v10115
        %v10350 = vadd.f32 %v9807, %v10115
        %v10351 = vadd.f32 %v9809, %v10119
        %v10352 = vadd.f32 %v9811, %v10119
        %v10353 = vadd.f32 %v9815, %v10123
        %v10354 = vadd.f32 %v9817, %v10123
        %v10355 = vadd.f32 %v9819, %v10127
        %v10356 = vadd.f32 %v9821, %v10127
        %v10357 = vadd.f32 %v9825, %v10131
        %v10358 = vadd.f32 %v9827, %v10131
        %v10359 = vadd.f32 %v9829, %v10135
        %v10360 = vadd.f32 %v9831, %v10135
        %v10361 = vadd.f32 %v9835, %v10139
        %v10362 = vadd.f32 %v9837, %v10139
        %v10363 = vadd.f32 %v9839, %v10143
        %v10364 = vadd.f32 %v9841, %v10143
        %v10365 = vadd.f32 %v9845, %v10147
        %v10366 = vadd.f32 %v9847, %v10147
        %v10367 = vadd.f32 %v9849, %v10151
        %v10368 = vadd.f32 %v9851, %v10151
        %v10369 = vadd.f32 %v9855, %v10155
        %v10370 = vadd.f32 %v9857, %v10155
        %v10371 = vadd.f32 %v9859, %v10159
        %v10372 = vadd.f32 %v9861, %v10159
        %v10373 = vadd.f32 %v9865, %v10163
        %v10374 = vadd.f32 %v9867, %v10163
        %v10375 = vadd.f32 %v9869, %v10167
        %v10376 = vadd.f32 %v9871, %v10167
        %v10377 = vadd.f32 %v9875, %v10171
        %v10378 = vadd.f32 %v9877, %v10171
        %v10379 = vadd.f32 %v9879, %v10175
        %v10380 = vadd.f32 %v9881, %v10175
        %v10381 = vadd.f32 %v9885, %v10179
        %v10382 = vadd.f32 %v9887, %v10179
        %v10383 = vadd.f32 %v9889, %v10183
        %v10384 = vadd.f32 %v9891, %v10183
        %v10385 = vadd.f32 %v9895, %v10187
        %v10386 = vadd.f32 %v9897, %v10187
        %v10387 = vadd.f32 %v9899, %v10191
        %v10388 = vadd.f32 %v9901, %v10191
        %v10389 = vadd.f32 %v9905, %v10195
        %v10390 = vadd.f32 %v9907, %v10195
        %v10391 = vadd.f32 %v9909, %v10199
        %v10392 = vadd.f32 %v9911, %v10199
        %v10393 = vadd.f32 %v9915, %v10203
        %v10394 = vadd.f32 %v9917, %v10203
        %v10395 = vadd.f32 %v9919, %v10207
        %v10396 = vadd.f32 %v9921, %v10207
        %v10397 = vadd.f32 %v9925, %v10211
        %v10398 = vadd.f32 %v9927, %v10211
        %v10399 = vadd.f32 %v9929, %v10215
        %v10400 = vadd.f32 %v9931, %v10215
        %v10401 = vadd.f32 %v9935, %v10219
        %v10402 = vadd.f32 %v9937, %v10219
        %v10403 = vadd.f32 %v9939, %v10223
        %v10404 = vadd.f32 %v9941, %v10223
        %v10405 = vadd.f32 %v9945, %v10227
        %v10406 = vadd.f32 %v9947, %v10227
        %v10407 = vadd.f32 %v9949, %v10231
        %v10408 = vadd.f32 %v9951, %v10231
        %v10409 = vadd.f32 %v9955, %v10235
        %v10410 = vadd.f32 %v9957, %v10235
        %v10411 = vadd.f32 %v9959, %v10239
        %v10412 = vadd.f32 %v9961, %v10239
        %v10413 = vadd.f32 %v9965, %v10243
        %v10414 = vadd.f32 %v9967, %v10243
        %v10415 = vadd.f32 %v9969, %v10247
        %v10416 = vadd.f32 %v9971, %v10247
        %v10417 = vadd.f32 %v9975, %v10251
        %v10418 = vadd.f32 %v9977, %v10251
        %v10419 = vadd.f32 %v9979, %v10255
        %v10420 = vadd.f32 %v9981, %v10255
        %v10421 = vadd.f32 %v9985, %v10259
        %v10422 = vadd.f32 %v9987, %v10259
        %v10423 = vadd.f32 %v9989, %v10263
        %v10424 = vadd.f32 %v9991, %v10263
        %v10425 = vadd.f32 %v9995, %v10267
        %v10426 = vadd.f32 %v9997, %v10267
        %v10427 = vadd.f32 %v9999, %v10271
        %v10428 = vadd.f32 %v10001, %v10271
        %v10429 = vadd.f32 %v10005, %v10275
        %v10430 = vadd.f32 %v10007, %v10275
        %v10431 = vadd.f32 %v10009, %v10279
        %v10432 = vadd.f32 %v10011, %v10279
        %v10433 = vadd.f32 %v10015, %v10283
        %v10434 = vadd.f32 %v10017, %v10283
        %v10435 = vadd.f32 %v10019, %v10287
        %v10436 = vadd.f32 %v10021, %v10287
        %v10437 = vadd.f32 %v10025, %v10291
        %v10438 = vadd.f32 %v10027, %v10291
        %v10439 = vadd.f32 %v10029, %v10295
        %v10440 = vadd.f32 %v10031, %v10295
        %v10441 = vadd.f32 %v10035, %v10299
        %v10442 = vadd.f32 %v10037, %v10299
        %v10443 = vadd.f32 %v10039, %v10303
        %v10444 = vadd.f32 %v10041, %v10303
        %v10445 = vadd.f32 %v10045, %v10307
        %v10446 = vadd.f32 %v10047, %v10307
        %v10447 = vadd.f32 %v10049, %v10311
        %v10448 = vadd.f32 %v10051, %v10311
        %v10449 = vadd.f32 %v10055, %v10315
        %v10450 = vadd.f32 %v10057, %v10315
        %v10451 = vadd.f32 %v10059, %v10319
        %v10452 = vadd.f32 %v10061, %v10319
        %v10453 = vadd.f32 %v10065, %v10323
        %v10454 = vadd.f32 %v10067, %v10323
        %v10455 = vadd.f32 %v10069, %v10327
        %v10456 = vadd.f32 %v10071, %v10327
        %v10457 = vunpack.c.l.bf16 %v354
        %v10458 = vunpack.c.h.bf16 %v354
        %v10459 = vunpack.c.l.bf16 %v355
        %v10460 = vunpack.c.h.bf16 %v355
        %v10461 = vunpack.c.l.bf16 %v356
        %v10462 = vunpack.c.h.bf16 %v356
        %v10463 = vunpack.c.l.bf16 %v357
        %v10464 = vunpack.c.h.bf16 %v357
        %v10465 = vunpack.c.l.bf16 %v358
        %v10466 = vunpack.c.h.bf16 %v358
        %v10467 = vunpack.c.l.bf16 %v359
        %v10468 = vunpack.c.h.bf16 %v359
        %v10469 = vunpack.c.l.bf16 %v360
        %v10470 = vunpack.c.h.bf16 %v360
        %v10471 = vunpack.c.l.bf16 %v361
        %v10472 = vunpack.c.h.bf16 %v361
        %v10473 = vunpack.c.l.bf16 %v362
        %v10474 = vunpack.c.h.bf16 %v362
        %v10475 = vunpack.c.l.bf16 %v363
        %v10476 = vunpack.c.h.bf16 %v363
        %v10477 = vunpack.c.l.bf16 %v364
        %v10478 = vunpack.c.h.bf16 %v364
        %v10479 = vunpack.c.l.bf16 %v365
        %v10480 = vunpack.c.h.bf16 %v365
        %v10481 = vunpack.c.l.bf16 %v366
        %v10482 = vunpack.c.h.bf16 %v366
        %v10483 = vunpack.c.l.bf16 %v367
        %v10484 = vunpack.c.h.bf16 %v367
        %v10485 = vunpack.c.l.bf16 %v368
        %v10486 = vunpack.c.h.bf16 %v368
        %v10487 = vunpack.c.l.bf16 %v369
        %v10488 = vunpack.c.h.bf16 %v369
        %v10489 = vunpack.c.l.bf16 %v370
        %v10490 = vunpack.c.h.bf16 %v370
        %v10491 = vunpack.c.l.bf16 %v371
        %v10492 = vunpack.c.h.bf16 %v371
        %v10493 = vunpack.c.l.bf16 %v372
        %v10494 = vunpack.c.h.bf16 %v372
        %v10495 = vunpack.c.l.bf16 %v373
        %v10496 = vunpack.c.h.bf16 %v373
        %v10497 = vunpack.c.l.bf16 %v374
        %v10498 = vunpack.c.h.bf16 %v374
        %v10499 = vunpack.c.l.bf16 %v375
        %v10500 = vunpack.c.h.bf16 %v375
        %v10501 = vunpack.c.l.bf16 %v376
        %v10502 = vunpack.c.h.bf16 %v376
        %v10503 = vunpack.c.l.bf16 %v377
        %v10504 = vunpack.c.h.bf16 %v377
        %v10505 = vunpack.c.l.bf16 %v378
        %v10506 = vunpack.c.h.bf16 %v378
        %v10507 = vunpack.c.l.bf16 %v379
        %v10508 = vunpack.c.h.bf16 %v379
        %v10509 = vunpack.c.l.bf16 %v380
        %v10510 = vunpack.c.h.bf16 %v380
        %v10511 = vunpack.c.l.bf16 %v381
        %v10512 = vunpack.c.h.bf16 %v381
        %v10513 = vunpack.c.l.bf16 %v382
        %v10514 = vunpack.c.h.bf16 %v382
        %v10515 = vunpack.c.l.bf16 %v383
        %v10516 = vunpack.c.h.bf16 %v383
        %v10517 = vunpack.c.l.bf16 %v384
        %v10518 = vunpack.c.h.bf16 %v384
        %v10519 = vunpack.c.l.bf16 %v385
        %v10520 = vunpack.c.h.bf16 %v385
        %v10521 = vunpack.c.l.bf16 %v386
        %v10522 = vunpack.c.h.bf16 %v386
        %v10523 = vunpack.c.l.bf16 %v387
        %v10524 = vunpack.c.h.bf16 %v387
        %v10525 = vunpack.c.l.bf16 %v388
        %v10526 = vunpack.c.h.bf16 %v388
        %v10527 = vunpack.c.l.bf16 %v389
        %v10528 = vunpack.c.h.bf16 %v389
        %v10529 = vunpack.c.l.bf16 %v390
        %v10530 = vunpack.c.h.bf16 %v390
        %v10531 = vunpack.c.l.bf16 %v391
        %v10532 = vunpack.c.h.bf16 %v391
        %v10533 = vunpack.c.l.bf16 %v392
        %v10534 = vunpack.c.h.bf16 %v392
        %v10535 = vunpack.c.l.bf16 %v393
        %v10536 = vunpack.c.h.bf16 %v393
        %v10537 = vunpack.c.l.bf16 %v394
        %v10538 = vunpack.c.h.bf16 %v394
        %v10539 = vunpack.c.l.bf16 %v395
        %v10540 = vunpack.c.h.bf16 %v395
        %v10541 = vunpack.c.l.bf16 %v396
        %v10542 = vunpack.c.h.bf16 %v396
        %v10543 = vunpack.c.l.bf16 %v397
        %v10544 = vunpack.c.h.bf16 %v397
        %v10545 = vunpack.c.l.bf16 %v398
        %v10546 = vunpack.c.h.bf16 %v398
        %v10547 = vunpack.c.l.bf16 %v399
        %v10548 = vunpack.c.h.bf16 %v399
        %v10549 = vunpack.c.l.bf16 %v400
        %v10550 = vunpack.c.h.bf16 %v400
        %v10551 = vunpack.c.l.bf16 %v401
        %v10552 = vunpack.c.h.bf16 %v401
        %v10553 = vunpack.c.l.bf16 %v402
        %v10554 = vunpack.c.h.bf16 %v402
        %v10555 = vunpack.c.l.bf16 %v403
        %v10556 = vunpack.c.h.bf16 %v403
        %v10557 = vunpack.c.l.bf16 %v404
        %v10558 = vunpack.c.h.bf16 %v404
        %v10559 = vunpack.c.l.bf16 %v405
        %v10560 = vunpack.c.h.bf16 %v405
        %v10561 = vunpack.c.l.bf16 %v406
        %v10562 = vunpack.c.h.bf16 %v406
        %v10563 = vunpack.c.l.bf16 %v407
        %v10564 = vunpack.c.h.bf16 %v407
        %v10565 = vunpack.c.l.bf16 %v408
        %v10566 = vunpack.c.h.bf16 %v408
        %v10567 = vunpack.c.l.bf16 %v409
        %v10568 = vunpack.c.h.bf16 %v409
        %v10569 = vunpack.c.l.bf16 %v410
        %v10570 = vunpack.c.h.bf16 %v410
        %v10571 = vunpack.c.l.bf16 %v411
        %v10572 = vunpack.c.h.bf16 %v411
        %v10573 = vunpack.c.l.bf16 %v412
        %v10574 = vunpack.c.h.bf16 %v412
        %v10575 = vunpack.c.l.bf16 %v413
        %v10576 = vunpack.c.h.bf16 %v413
        %v10577 = vunpack.c.l.bf16 %v414
        %v10578 = vunpack.c.h.bf16 %v414
        %v10579 = vunpack.c.l.bf16 %v415
        %v10580 = vunpack.c.h.bf16 %v415
        %v10581 = vunpack.c.l.bf16 %v416
        %v10582 = vunpack.c.h.bf16 %v416
        %v10583 = vunpack.c.l.bf16 %v417
        %v10584 = vunpack.c.h.bf16 %v417
        %v10585 = vadd.f32 %v10457, %v10329
        %v10586 = vadd.f32 %v10458, %v10330
        %v10587 = vadd.f32 %v10459, %v10331
        %v10588 = vadd.f32 %v10460, %v10332
        %v10589 = vadd.f32 %v10461, %v10333
        %v10590 = vadd.f32 %v10462, %v10334
        %v10591 = vadd.f32 %v10463, %v10335
        %v10592 = vadd.f32 %v10464, %v10336
        %v10593 = vadd.f32 %v10465, %v10337
        %v10594 = vadd.f32 %v10466, %v10338
        %v10595 = vadd.f32 %v10467, %v10339
        %v10596 = vadd.f32 %v10468, %v10340
        %v10597 = vadd.f32 %v10469, %v10341
        %v10598 = vadd.f32 %v10470, %v10342
        %v10599 = vadd.f32 %v10471, %v10343
        %v10600 = vadd.f32 %v10472, %v10344
        %v10601 = vadd.f32 %v10473, %v10345
        %v10602 = vadd.f32 %v10474, %v10346
        %v10603 = vadd.f32 %v10475, %v10347
        %v10604 = vadd.f32 %v10476, %v10348
        %v10605 = vadd.f32 %v10477, %v10349
        %v10606 = vadd.f32 %v10478, %v10350
        %v10607 = vadd.f32 %v10479, %v10351
        %v10608 = vadd.f32 %v10480, %v10352
        %v10609 = vadd.f32 %v10481, %v10353
        %v10610 = vadd.f32 %v10482, %v10354
        %v10611 = vadd.f32 %v10483, %v10355
        %v10612 = vadd.f32 %v10484, %v10356
        %v10613 = vadd.f32 %v10485, %v10357
        %v10614 = vadd.f32 %v10486, %v10358
        %v10615 = vadd.f32 %v10487, %v10359
        %v10616 = vadd.f32 %v10488, %v10360
        %v10617 = vadd.f32 %v10489, %v10361
        %v10618 = vadd.f32 %v10490, %v10362
        %v10619 = vadd.f32 %v10491, %v10363
        %v10620 = vadd.f32 %v10492, %v10364
        %v10621 = vadd.f32 %v10493, %v10365
        %v10622 = vadd.f32 %v10494, %v10366
        %v10623 = vadd.f32 %v10495, %v10367
        %v10624 = vadd.f32 %v10496, %v10368
        %v10625 = vadd.f32 %v10497, %v10369
        %v10626 = vadd.f32 %v10498, %v10370
        %v10627 = vadd.f32 %v10499, %v10371
        %v10628 = vadd.f32 %v10500, %v10372
        %v10629 = vadd.f32 %v10501, %v10373
        %v10630 = vadd.f32 %v10502, %v10374
        %v10631 = vadd.f32 %v10503, %v10375
        %v10632 = vadd.f32 %v10504, %v10376
        %v10633 = vadd.f32 %v10505, %v10377
        %v10634 = vadd.f32 %v10506, %v10378
        %v10635 = vadd.f32 %v10507, %v10379
        %v10636 = vadd.f32 %v10508, %v10380
        %v10637 = vadd.f32 %v10509, %v10381
        %v10638 = vadd.f32 %v10510, %v10382
        %v10639 = vadd.f32 %v10511, %v10383
        %v10640 = vadd.f32 %v10512, %v10384
        %v10641 = vadd.f32 %v10513, %v10385
        %v10642 = vadd.f32 %v10514, %v10386
        %v10643 = vadd.f32 %v10515, %v10387
        %v10644 = vadd.f32 %v10516, %v10388
        %v10645 = vadd.f32 %v10517, %v10389
        %v10646 = vadd.f32 %v10518, %v10390
        %v10647 = vadd.f32 %v10519, %v10391
        %v10648 = vadd.f32 %v10520, %v10392
        %v10649 = vadd.f32 %v10521, %v10393
        %v10650 = vadd.f32 %v10522, %v10394
        %v10651 = vadd.f32 %v10523, %v10395
        %v10652 = vadd.f32 %v10524, %v10396
        %v10653 = vadd.f32 %v10525, %v10397
        %v10654 = vadd.f32 %v10526, %v10398
        %v10655 = vadd.f32 %v10527, %v10399
        %v10656 = vadd.f32 %v10528, %v10400
        %v10657 = vadd.f32 %v10529, %v10401
        %v10658 = vadd.f32 %v10530, %v10402
        %v10659 = vadd.f32 %v10531, %v10403
        %v10660 = vadd.f32 %v10532, %v10404
        %v10661 = vadd.f32 %v10533, %v10405
        %v10662 = vadd.f32 %v10534, %v10406
        %v10663 = vadd.f32 %v10535, %v10407
        %v10664 = vadd.f32 %v10536, %v10408
        %v10665 = vadd.f32 %v10537, %v10409
        %v10666 = vadd.f32 %v10538, %v10410
        %v10667 = vadd.f32 %v10539, %v10411
        %v10668 = vadd.f32 %v10540, %v10412
        %v10669 = vadd.f32 %v10541, %v10413
        %v10670 = vadd.f32 %v10542, %v10414
        %v10671 = vadd.f32 %v10543, %v10415
        %v10672 = vadd.f32 %v10544, %v10416
        %v10673 = vadd.f32 %v10545, %v10417
        %v10674 = vadd.f32 %v10546, %v10418
        %v10675 = vadd.f32 %v10547, %v10419
        %v10676 = vadd.f32 %v10548, %v10420
        %v10677 = vadd.f32 %v10549, %v10421
        %v10678 = vadd.f32 %v10550, %v10422
        %v10679 = vadd.f32 %v10551, %v10423
        %v10680 = vadd.f32 %v10552, %v10424
        %v10681 = vadd.f32 %v10553, %v10425
        %v10682 = vadd.f32 %v10554, %v10426
        %v10683 = vadd.f32 %v10555, %v10427
        %v10684 = vadd.f32 %v10556, %v10428
        %v10685 = vadd.f32 %v10557, %v10429
        %v10686 = vadd.f32 %v10558, %v10430
        %v10687 = vadd.f32 %v10559, %v10431
        %v10688 = vadd.f32 %v10560, %v10432
        %v10689 = vadd.f32 %v10561, %v10433
        %v10690 = vadd.f32 %v10562, %v10434
        %v10691 = vadd.f32 %v10563, %v10435
        %v10692 = vadd.f32 %v10564, %v10436
        %v10693 = vadd.f32 %v10565, %v10437
        %v10694 = vadd.f32 %v10566, %v10438
        %v10695 = vadd.f32 %v10567, %v10439
        %v10696 = vadd.f32 %v10568, %v10440
        %v10697 = vadd.f32 %v10569, %v10441
        %v10698 = vadd.f32 %v10570, %v10442
        %v10699 = vadd.f32 %v10571, %v10443
        %v10700 = vadd.f32 %v10572, %v10444
        %v10701 = vadd.f32 %v10573, %v10445
        %v10702 = vadd.f32 %v10574, %v10446
        %v10703 = vadd.f32 %v10575, %v10447
        %v10704 = vadd.f32 %v10576, %v10448
        %v10705 = vadd.f32 %v10577, %v10449
        %v10706 = vadd.f32 %v10578, %v10450
        %v10707 = vadd.f32 %v10579, %v10451
        %v10708 = vadd.f32 %v10580, %v10452
        %v10709 = vadd.f32 %v10581, %v10453
        %v10710 = vadd.f32 %v10582, %v10454
        %v10711 = vadd.f32 %v10583, %v10455
        %v10712 = vadd.f32 %v10584, %v10456
        %v10713 = vmax.f32 %v10585, 0.0
        %v10714 = vmax.f32 %v10586, 0.0
        %v10715 = vmax.f32 %v10587, 0.0
        %v10716 = vmax.f32 %v10588, 0.0
        %v10717 = vmax.f32 %v10589, 0.0
        %v10718 = vmax.f32 %v10590, 0.0
        %v10719 = vmax.f32 %v10591, 0.0
        %v10720 = vmax.f32 %v10592, 0.0
        %v10721 = vmax.f32 %v10593, 0.0
        %v10722 = vmax.f32 %v10594, 0.0
        %v10723 = vmax.f32 %v10595, 0.0
        %v10724 = vmax.f32 %v10596, 0.0
        %v10725 = vmax.f32 %v10597, 0.0
        %v10726 = vmax.f32 %v10598, 0.0
        %v10727 = vmax.f32 %v10599, 0.0
        %v10728 = vmax.f32 %v10600, 0.0
        %v10729 = vmax.f32 %v10601, 0.0
        %v10730 = vmax.f32 %v10602, 0.0
        %v10731 = vmax.f32 %v10603, 0.0
        %v10732 = vmax.f32 %v10604, 0.0
        %v10733 = vmax.f32 %v10605, 0.0
        %v10734 = vmax.f32 %v10606, 0.0
        %v10735 = vmax.f32 %v10607, 0.0
        %v10736 = vmax.f32 %v10608, 0.0
        %v10737 = vmax.f32 %v10609, 0.0
        %v10738 = vmax.f32 %v10610, 0.0
        %v10739 = vmax.f32 %v10611, 0.0
        %v10740 = vmax.f32 %v10612, 0.0
        %v10741 = vmax.f32 %v10613, 0.0
        %v10742 = vmax.f32 %v10614, 0.0
        %v10743 = vmax.f32 %v10615, 0.0
        %v10744 = vmax.f32 %v10616, 0.0
        %v10745 = vmax.f32 %v10617, 0.0
        %v10746 = vmax.f32 %v10618, 0.0
        %v10747 = vmax.f32 %v10619, 0.0
        %v10748 = vmax.f32 %v10620, 0.0
        %v10749 = vmax.f32 %v10621, 0.0
        %v10750 = vmax.f32 %v10622, 0.0
        %v10751 = vmax.f32 %v10623, 0.0
        %v10752 = vmax.f32 %v10624, 0.0
        %v10753 = vmax.f32 %v10625, 0.0
        %v10754 = vmax.f32 %v10626, 0.0
        %v10755 = vmax.f32 %v10627, 0.0
        %v10756 = vmax.f32 %v10628, 0.0
        %v10757 = vmax.f32 %v10629, 0.0
        %v10758 = vmax.f32 %v10630, 0.0
        %v10759 = vmax.f32 %v10631, 0.0
        %v10760 = vmax.f32 %v10632, 0.0
        %v10761 = vmax.f32 %v10633, 0.0
        %v10762 = vmax.f32 %v10634, 0.0
        %v10763 = vmax.f32 %v10635, 0.0
        %v10764 = vmax.f32 %v10636, 0.0
        %v10765 = vmax.f32 %v10637, 0.0
        %v10766 = vmax.f32 %v10638, 0.0
        %v10767 = vmax.f32 %v10639, 0.0
        %v10768 = vmax.f32 %v10640, 0.0
        %v10769 = vmax.f32 %v10641, 0.0
        %v10770 = vmax.f32 %v10642, 0.0
        %v10771 = vmax.f32 %v10643, 0.0
        %v10772 = vmax.f32 %v10644, 0.0
        %v10773 = vmax.f32 %v10645, 0.0
        %v10774 = vmax.f32 %v10646, 0.0
        %v10775 = vmax.f32 %v10647, 0.0
        %v10776 = vmax.f32 %v10648, 0.0
        %v10777 = vmax.f32 %v10649, 0.0
        %v10778 = vmax.f32 %v10650, 0.0
        %v10779 = vmax.f32 %v10651, 0.0
        %v10780 = vmax.f32 %v10652, 0.0
        %v10781 = vmax.f32 %v10653, 0.0
        %v10782 = vmax.f32 %v10654, 0.0
        %v10783 = vmax.f32 %v10655, 0.0
        %v10784 = vmax.f32 %v10656, 0.0
        %v10785 = vmax.f32 %v10657, 0.0
        %v10786 = vmax.f32 %v10658, 0.0
        %v10787 = vmax.f32 %v10659, 0.0
        %v10788 = vmax.f32 %v10660, 0.0
        %v10789 = vmax.f32 %v10661, 0.0
        %v10790 = vmax.f32 %v10662, 0.0
        %v10791 = vmax.f32 %v10663, 0.0
        %v10792 = vmax.f32 %v10664, 0.0
        %v10793 = vmax.f32 %v10665, 0.0
        %v10794 = vmax.f32 %v10666, 0.0
        %v10795 = vmax.f32 %v10667, 0.0
        %v10796 = vmax.f32 %v10668, 0.0
        %v10797 = vmax.f32 %v10669, 0.0
        %v10798 = vmax.f32 %v10670, 0.0
        %v10799 = vmax.f32 %v10671, 0.0
        %v10800 = vmax.f32 %v10672, 0.0
        %v10801 = vmax.f32 %v10673, 0.0
        %v10802 = vmax.f32 %v10674, 0.0
        %v10803 = vmax.f32 %v10675, 0.0
        %v10804 = vmax.f32 %v10676, 0.0
        %v10805 = vmax.f32 %v10677, 0.0
        %v10806 = vmax.f32 %v10678, 0.0
        %v10807 = vmax.f32 %v10679, 0.0
        %v10808 = vmax.f32 %v10680, 0.0
        %v10809 = vmax.f32 %v10681, 0.0
        %v10810 = vmax.f32 %v10682, 0.0
        %v10811 = vmax.f32 %v10683, 0.0
        %v10812 = vmax.f32 %v10684, 0.0
        %v10813 = vmax.f32 %v10685, 0.0
        %v10814 = vmax.f32 %v10686, 0.0
        %v10815 = vmax.f32 %v10687, 0.0
        %v10816 = vmax.f32 %v10688, 0.0
        %v10817 = vmax.f32 %v10689, 0.0
        %v10818 = vmax.f32 %v10690, 0.0
        %v10819 = vmax.f32 %v10691, 0.0
        %v10820 = vmax.f32 %v10692, 0.0
        %v10821 = vmax.f32 %v10693, 0.0
        %v10822 = vmax.f32 %v10694, 0.0
        %v10823 = vmax.f32 %v10695, 0.0
        %v10824 = vmax.f32 %v10696, 0.0
        %v10825 = vmax.f32 %v10697, 0.0
        %v10826 = vmax.f32 %v10698, 0.0
        %v10827 = vmax.f32 %v10699, 0.0
        %v10828 = vmax.f32 %v10700, 0.0
        %v10829 = vmax.f32 %v10701, 0.0
        %v10830 = vmax.f32 %v10702, 0.0
        %v10831 = vmax.f32 %v10703, 0.0
        %v10832 = vmax.f32 %v10704, 0.0
        %v10833 = vmax.f32 %v10705, 0.0
        %v10834 = vmax.f32 %v10706, 0.0
        %v10835 = vmax.f32 %v10707, 0.0
        %v10836 = vmax.f32 %v10708, 0.0
        %v10837 = vmax.f32 %v10709, 0.0
        %v10838 = vmax.f32 %v10710, 0.0
        %v10839 = vmax.f32 %v10711, 0.0
        %v10840 = vmax.f32 %v10712, 0.0
        %10841 = vst [vmem:[%s352] sm:$0xff] %v10713
        %10842 = vst [vmem:[%s352 + $0x8] sm:$0xff] %v10714
        %10843 = vst [vmem:[%s352 + $0x10] sm:$0xff] %v10715
        %10844 = vst [vmem:[%s352 + $0x18] sm:$0xff] %v10716
        %10845 = vst [vmem:[%s352 + $0x20] sm:$0xff] %v10717
        %10846 = vst [vmem:[%s352 + $0x28] sm:$0xff] %v10718
        %10847 = vst [vmem:[%s352 + $0x30] sm:$0xff] %v10719
        %10848 = vst [vmem:[%s352 + $0x38] sm:$0xff] %v10720
        %10849 = vst [vmem:[%s352 + $0x40] sm:$0xff] %v10721
        %10850 = vst [vmem:[%s352 + $0x48] sm:$0xff] %v10722
        %10851 = vst [vmem:[%s352 + $0x50] sm:$0xff] %v10723
        %10852 = vst [vmem:[%s352 + $0x58] sm:$0xff] %v10724
        %10853 = vst [vmem:[%s352 + $0x60] sm:$0xff] %v10725
        %10854 = vst [vmem:[%s352 + $0x68] sm:$0xff] %v10726
        %10855 = vst [vmem:[%s352 + $0x70] sm:$0xff] %v10727
        %10856 = vst [vmem:[%s352 + $0x78] sm:$0xff] %v10728
        %10857 = vst [vmem:[%s352 + $0x80] sm:$0xff] %v10729
        %10858 = vst [vmem:[%s352 + $0x88] sm:$0xff] %v10730
        %10859 = vst [vmem:[%s352 + $0x90] sm:$0xff] %v10731
        %10860 = vst [vmem:[%s352 + $0x98] sm:$0xff] %v10732
        %10861 = vst [vmem:[%s352 + $0xa0] sm:$0xff] %v10733
        %10862 = vst [vmem:[%s352 + $0xa8] sm:$0xff] %v10734
        %10863 = vst [vmem:[%s352 + $0xb0] sm:$0xff] %v10735
        %10864 = vst [vmem:[%s352 + $0xb8] sm:$0xff] %v10736
        %10865 = vst [vmem:[%s352 + $0xc0] sm:$0xff] %v10737
        %10866 = vst [vmem:[%s352 + $0xc8] sm:$0xff] %v10738
        %10867 = vst [vmem:[%s352 + $0xd0] sm:$0xff] %v10739
        %10868 = vst [vmem:[%s352 + $0xd8] sm:$0xff] %v10740
        %10869 = vst [vmem:[%s352 + $0xe0] sm:$0xff] %v10741
        %10870 = vst [vmem:[%s352 + $0xe8] sm:$0xff] %v10742
        %10871 = vst [vmem:[%s352 + $0xf0] sm:$0xff] %v10743
        %10872 = vst [vmem:[%s352 + $0xf8] sm:$0xff] %v10744
        %10873 = vst [vmem:[%s352 + $0x100] sm:$0xff] %v10745
        %10874 = vst [vmem:[%s352 + $0x108] sm:$0xff] %v10746
        %10875 = vst [vmem:[%s352 + $0x110] sm:$0xff] %v10747
        %10876 = vst [vmem:[%s352 + $0x118] sm:$0xff] %v10748
        %10877 = vst [vmem:[%s352 + $0x120] sm:$0xff] %v10749
        %10878 = vst [vmem:[%s352 + $0x128] sm:$0xff] %v10750
        %10879 = vst [vmem:[%s352 + $0x130] sm:$0xff] %v10751
        %10880 = vst [vmem:[%s352 + $0x138] sm:$0xff] %v10752
        %10881 = vst [vmem:[%s352 + $0x140] sm:$0xff] %v10753
        %10882 = vst [vmem:[%s352 + $0x148] sm:$0xff] %v10754
        %10883 = vst [vmem:[%s352 + $0x150] sm:$0xff] %v10755
        %10884 = vst [vmem:[%s352 + $0x158] sm:$0xff] %v10756
        %10885 = vst [vmem:[%s352 + $0x160] sm:$0xff] %v10757
        %10886 = vst [vmem:[%s352 + $0x168] sm:$0xff] %v10758
        %10887 = vst [vmem:[%s352 + $0x170] sm:$0xff] %v10759
        %10888 = vst [vmem:[%s352 + $0x178] sm:$0xff] %v10760
        %10889 = vst [vmem:[%s352 + $0x180] sm:$0xff] %v10761
        %10890 = vst [vmem:[%s352 + $0x188] sm:$0xff] %v10762
        %10891 = vst [vmem:[%s352 + $0x190] sm:$0xff] %v10763
        %10892 = vst [vmem:[%s352 + $0x198] sm:$0xff] %v10764
        %10893 = vst [vmem:[%s352 + $0x1a0] sm:$0xff] %v10765
        %10894 = vst [vmem:[%s352 + $0x1a8] sm:$0xff] %v10766
        %10895 = vst [vmem:[%s352 + $0x1b0] sm:$0xff] %v10767
        %10896 = vst [vmem:[%s352 + $0x1b8] sm:$0xff] %v10768
        %10897 = vst [vmem:[%s352 + $0x1c0] sm:$0xff] %v10769
        %10898 = vst [vmem:[%s352 + $0x1c8] sm:$0xff] %v10770
        %10899 = vst [vmem:[%s352 + $0x1d0] sm:$0xff] %v10771
        %10900 = vst [vmem:[%s352 + $0x1d8] sm:$0xff] %v10772
        %10901 = vst [vmem:[%s352 + $0x1e0] sm:$0xff] %v10773
        %10902 = vst [vmem:[%s352 + $0x1e8] sm:$0xff] %v10774
        %10903 = vst [vmem:[%s352 + $0x1f0] sm:$0xff] %v10775
        %10904 = vst [vmem:[%s352 + $0x1f8] sm:$0xff] %v10776
        %10905 = vst [vmem:[%s352 + $0x200] sm:$0xff] %v10777
        %10906 = vst [vmem:[%s352 + $0x208] sm:$0xff] %v10778
        %10907 = vst [vmem:[%s352 + $0x210] sm:$0xff] %v10779
        %10908 = vst [vmem:[%s352 + $0x218] sm:$0xff] %v10780
        %10909 = vst [vmem:[%s352 + $0x220] sm:$0xff] %v10781
        %10910 = vst [vmem:[%s352 + $0x228] sm:$0xff] %v10782
        %10911 = vst [vmem:[%s352 + $0x230] sm:$0xff] %v10783
        %10912 = vst [vmem:[%s352 + $0x238] sm:$0xff] %v10784
        %10913 = vst [vmem:[%s352 + $0x240] sm:$0xff] %v10785
        %10914 = vst [vmem:[%s352 + $0x248] sm:$0xff] %v10786
        %10915 = vst [vmem:[%s352 + $0x250] sm:$0xff] %v10787
        %10916 = vst [vmem:[%s352 + $0x258] sm:$0xff] %v10788
        %10917 = vst [vmem:[%s352 + $0x260] sm:$0xff] %v10789
        %10918 = vst [vmem:[%s352 + $0x268] sm:$0xff] %v10790
        %10919 = vst [vmem:[%s352 + $0x270] sm:$0xff] %v10791
        %10920 = vst [vmem:[%s352 + $0x278] sm:$0xff] %v10792
        %10921 = vst [vmem:[%s352 + $0x280] sm:$0xff] %v10793
        %10922 = vst [vmem:[%s352 + $0x288] sm:$0xff] %v10794
        %10923 = vst [vmem:[%s352 + $0x290] sm:$0xff] %v10795
        %10924 = vst [vmem:[%s352 + $0x298] sm:$0xff] %v10796
        %10925 = vst [vmem:[%s352 + $0x2a0] sm:$0xff] %v10797
        %10926 = vst [vmem:[%s352 + $0x2a8] sm:$0xff] %v10798
        %10927 = vst [vmem:[%s352 + $0x2b0] sm:$0xff] %v10799
        %10928 = vst [vmem:[%s352 + $0x2b8] sm:$0xff] %v10800
        %10929 = vst [vmem:[%s352 + $0x2c0] sm:$0xff] %v10801
        %10930 = vst [vmem:[%s352 + $0x2c8] sm:$0xff] %v10802
        %10931 = vst [vmem:[%s352 + $0x2d0] sm:$0xff] %v10803
        %10932 = vst [vmem:[%s352 + $0x2d8] sm:$0xff] %v10804
        %10933 = vst [vmem:[%s352 + $0x2e0] sm:$0xff] %v10805
        %10934 = vst [vmem:[%s352 + $0x2e8] sm:$0xff] %v10806
        %10935 = vst [vmem:[%s352 + $0x2f0] sm:$0xff] %v10807
        %10936 = vst [vmem:[%s352 + $0x2f8] sm:$0xff] %v10808
        %10937 = vst [vmem:[%s352 + $0x300] sm:$0xff] %v10809
        %10938 = vst [vmem:[%s352 + $0x308] sm:$0xff] %v10810
        %10939 = vst [vmem:[%s352 + $0x310] sm:$0xff] %v10811
        %10940 = vst [vmem:[%s352 + $0x318] sm:$0xff] %v10812
        %10941 = vst [vmem:[%s352 + $0x320] sm:$0xff] %v10813
        %10942 = vst [vmem:[%s352 + $0x328] sm:$0xff] %v10814
        %10943 = vst [vmem:[%s352 + $0x330] sm:$0xff] %v10815
        %10944 = vst [vmem:[%s352 + $0x338] sm:$0xff] %v10816
        %10945 = vst [vmem:[%s352 + $0x340] sm:$0xff] %v10817
        %10946 = vst [vmem:[%s352 + $0x348] sm:$0xff] %v10818
        %10947 = vst [vmem:[%s352 + $0x350] sm:$0xff] %v10819
        %10948 = vst [vmem:[%s352 + $0x358] sm:$0xff] %v10820
        %10949 = vst [vmem:[%s352 + $0x360] sm:$0xff] %v10821
        %10950 = vst [vmem:[%s352 + $0x368] sm:$0xff] %v10822
        %10951 = vst [vmem:[%s352 + $0x370] sm:$0xff] %v10823
        %10952 = vst [vmem:[%s352 + $0x378] sm:$0xff] %v10824
        %10953 = vst [vmem:[%s352 + $0x380] sm:$0xff] %v10825
        %10954 = vst [vmem:[%s352 + $0x388] sm:$0xff] %v10826
        %10955 = vst [vmem:[%s352 + $0x390] sm:$0xff] %v10827
        %10956 = vst [vmem:[%s352 + $0x398] sm:$0xff] %v10828
        %10957 = vst [vmem:[%s352 + $0x3a0] sm:$0xff] %v10829
        %10958 = vst [vmem:[%s352 + $0x3a8] sm:$0xff] %v10830
        %10959 = vst [vmem:[%s352 + $0x3b0] sm:$0xff] %v10831
        %10960 = vst [vmem:[%s352 + $0x3b8] sm:$0xff] %v10832
        %10961 = vst [vmem:[%s352 + $0x3c0] sm:$0xff] %v10833
        %10962 = vst [vmem:[%s352 + $0x3c8] sm:$0xff] %v10834
        %10963 = vst [vmem:[%s352 + $0x3d0] sm:$0xff] %v10835
        %10964 = vst [vmem:[%s352 + $0x3d8] sm:$0xff] %v10836
        %10965 = vst [vmem:[%s352 + $0x3e0] sm:$0xff] %v10837
        %10966 = vst [vmem:[%s352 + $0x3e8] sm:$0xff] %v10838
        %10967 = vst [vmem:[%s352 + $0x3f0] sm:$0xff] %v10839
        %10968 = vst [vmem:[%s352 + $0x3f8] sm:$0xff] %v10840
        %s10969 = sand.u32 %s207, 1
        %s10970 = scalar_lea.sflag [#allocation4], %s10969
        %s10971 = sand.u32 %s207, 1
        %s10972 = smul.addr %s10971, 1024
        %s10973 = scalar_lea.vmem [#allocation8], %s10972
        // Predicated region
        $region65: #{tpu_custom_call.1} parent=51 // pred_check
          %p10974 = pneg %p217
        $region66: #{tpu_custom_call.1} parent=51 // pred_check_branch
          %10976 = sbr.rel (%p10974) target = $region68
        $region67: #{tpu_custom_call.1} parent=51 // pred_region
          %s10978 = ssub.s32 16384, 16384
          %10979 = vsyncadd %s10970, %s10978
          %s10980 = smul.addr %s26, 128
          %s10981 = smul.addr %s10980, 128
          %s10982 = scalar_lea.hbm %s8, %s10981
          %s10983 = sshll.u32 %s10973, 4
          %s10984 = int_to_ptr.vmem [resolvable:$true] %s10983
          %10989 = dma.vmem_to_hbm [thread:$0]  %s10984, 16384, %s10982, %s10970, 256, 256, 16
        $region68: #{tpu_custom_call.1} parent=51 // pred_fallthru
          _
      $region52: #{tpu_custom_call.1} parent=5 // pred_fallthru
        _
      %p10990 = scmp.le.s32.totalorder 2, %s21
      // Predicated region
      $region69: #{tpu_custom_call.1} parent=5 // pred_check
        %p10991 = pneg %p10990
      $region70: #{tpu_custom_call.1} parent=5 // pred_check_branch
        %10993 = sbr.rel (%p10991) target = $region72
      $region71: #{tpu_custom_call.1} parent=5 // pred_region
        %s10994 = ssub.s32 %s21, 2
        // Predicated region
        $region73: #{tpu_custom_call.1} parent=71 // pred_check
          %p10995 = pneg %p223
        $region74: #{tpu_custom_call.1} parent=71 // pred_check_branch
          %10997 = sbr.rel (%p10995) target = $region76
        $region75: #{tpu_custom_call.1} parent=71 // pred_region
          %s10998 = sand.u32 %s208, 1
          %s10999 = scalar_lea.sflag [#allocation4], %s10998
          %s11000 = sand.u32 %s208, 1
          %s11001 = smul.addr %s11000, 1024
          %s11002 = scalar_lea.vmem [#allocation8], %s11001
          %11003 = dma.done %s10999, 16384
        $region76: #{tpu_custom_call.1} parent=71 // pred_fallthru
          _
      $region72: #{tpu_custom_call.1} parent=5 // pred_fallthru
        _
    $region6: #{tpu_custom_call.1} parent=1 // loop_footer
      %s25 = sadd.s32 1, %s21
    $region7: #{tpu_custom_call.1} parent=1 // loop_footer_branch
      %20 = sbr.rel target = $region3
    $region8: #{tpu_custom_call.1} parent=1 // loop_exit
      _
    %11004 = vsyncpa [#allocation3], 1
    %s11005 = scalar_lea.sflag [#allocation3], 1
    %11006 = vsyncpa %s11005, 1
    %11007 = vsyncpa [#allocation6], 1
    %11008 = vsyncpa [#allocation4], 1
    %s11009 = scalar_lea.sflag [#allocation4], 1
    %11010 = vsyncpa %s11009, 1

</llo_original>
